<compile_context>
chip_gen: v6e
topology: v6e:2x2x1
jax: 0.10.0
libtpu: 0.0.40
codegen_flags: <defaults>
</compile_context>

<pallas_src>
import functools

import jax
import jax.numpy as jnp
from jax.experimental import pallas as pl
from jax.experimental.pallas import tpu as pltpu

BN_EPS = 1e-5


def _round_up(x, m):
    return (x + m - 1) // m * m


# ---------------------------------------------------------------------------
# Kernel 1: tiled point-wise conv (+ optional fused input BN-affine + ReLU)
#           writes raw matmul output z and per-batch channel sum / sumsq.
# ---------------------------------------------------------------------------
def _conv_stats_kernel(x_ref, w_ref, s_ref, t_ref,
                       z_ref, sum_ref, sq_ref,
                       *, n_valid, tn, fuse_input_bn, per_batch_w):
    g = pl.program_id(1)

    if fuse_input_bn:
        x = x_ref[0].astype(jnp.float32)
        x = jnp.maximum(x * s_ref[...] + t_ref[...], 0.0).astype(jnp.bfloat16)
    else:
        x = x_ref[0]

    w = w_ref[0] if per_batch_w else w_ref[...]
    z = jnp.dot(x, w, preferred_element_type=jnp.float32)          # (tn, Cout) f32

    z_ref[0] = z.astype(z_ref.dtype)

    # mask rows that are padding (N padded up to a multiple of tn)
    row = jax.lax.broadcasted_iota(jnp.int32, (tn, 1), 0) + g * tn
    valid = row < n_valid
    zm = jnp.where(valid, z, 0.0)

    @pl.when(g == 0)
    def _():
        sum_ref[...] = jnp.zeros_like(sum_ref)
        sq_ref[...] = jnp.zeros_like(sq_ref)

    sum_ref[0] += jnp.sum(zm, axis=0, keepdims=True)
    sq_ref[0] += jnp.sum(zm * zm, axis=0, keepdims=True)


def conv_bn_stats(x, w, n_valid, in_scale=None, in_shift=None, *, tn):
    """x: (B, Np, Cin) bf16 (rows >= n_valid are zero padding).
       w: (Cin, Cout) shared or (B, Cin, Cout) per-batch.
       Returns z (B, Np, Cout) bf16, sums (B,1,Cout) f32, sqs (B,1,Cout) f32."""
    B, Np, Cin = x.shape
    per_batch_w = (w.ndim == 3)
    Cout = w.shape[-1]
    assert Np % tn == 0
    G = Np // tn

    fuse = in_scale is not None
    if fuse:
        in_scale = in_scale.reshape(1, Cin).astype(jnp.float32)
        in_shift = in_shift.reshape(1, Cin).astype(jnp.float32)
    else:
        in_scale = jnp.ones((1, Cin), jnp.float32)
        in_shift = jnp.zeros((1, Cin), jnp.float32)

    kern = functools.partial(_conv_stats_kernel, n_valid=n_valid, tn=tn,
                             fuse_input_bn=fuse, per_batch_w=per_batch_w)
    if per_batch_w:
        w_spec = pl.BlockSpec((1, Cin, Cout), lambda b, g: (b, 0, 0))
    else:
        w_spec = pl.BlockSpec((Cin, Cout), lambda b, g: (0, 0))

    z, sums, sqs = pl.pallas_call(
        kern,
        grid=(B, G),
        in_specs=[
            pl.BlockSpec((1, tn, Cin), lambda b, g: (b, g, 0)),
            w_spec,
            pl.BlockSpec((1, Cin), lambda b, g: (0, 0)),
            pl.BlockSpec((1, Cin), lambda b, g: (0, 0)),
        ],
        out_specs=[
            pl.BlockSpec((1, tn, Cout), lambda b, g: (b, g, 0)),
            pl.BlockSpec((1, 1, Cout), lambda b, g: (b, 0, 0)),
            pl.BlockSpec((1, 1, Cout), lambda b, g: (b, 0, 0)),
        ],
        out_shape=[
            jax.ShapeDtypeStruct((B, Np, Cout), jnp.bfloat16),
            jax.ShapeDtypeStruct((B, 1, Cout), jnp.float32),
            jax.ShapeDtypeStruct((B, 1, Cout), jnp.float32),
        ],
        compiler_params=pltpu.CompilerParams(
            dimension_semantics=("parallel", "arbitrary")),
    )(x.astype(jnp.bfloat16), w.astype(jnp.bfloat16), in_scale, in_shift)
    return z, sums, sqs


# ---------------------------------------------------------------------------
# Kernel 2: conv3 + BN-stats + fused max-over-points.
#           Tracks running per-batch channel max AND min (the BN affine is
#           applied after pooling; min handles negative gamma), never writes
#           the (B*N, 1024) activation to HBM.
# ---------------------------------------------------------------------------
def _conv_maxpool_kernel(x_ref, w_ref, s_ref, t_ref,
                         mx_ref, mn_ref, sum_ref, sq_ref,
                         *, n_valid, tn):
    g = pl.program_id(1)

    x = x_ref[0].astype(jnp.float32)
    x = jnp.maximum(x * s_ref[...] + t_ref[...], 0.0).astype(jnp.bfloat16)
    z = jnp.dot(x, w_ref[...], preferred_element_type=jnp.float32)  # (tn, Cout)

    row = jax.lax.broadcasted_iota(jnp.int32, (tn, 1), 0) + g * tn
    valid = row < n_valid
    zs = jnp.where(valid, z, 0.0)

    @pl.when(g == 0)
    def _():
        mx_ref[...] = jnp.full_like(mx_ref, -jnp.inf)
        mn_ref[...] = jnp.full_like(mn_ref, jnp.inf)
        sum_ref[...] = jnp.zeros_like(sum_ref)
        sq_ref[...] = jnp.zeros_like(sq_ref)

    mx_ref[0] = jnp.maximum(
        mx_ref[0], jnp.max(jnp.where(valid, z, -jnp.inf), axis=0, keepdims=True))
    mn_ref[0] = jnp.minimum(
        mn_ref[0], jnp.min(jnp.where(valid, z, jnp.inf), axis=0, keepdims=True))
    sum_ref[0] += jnp.sum(zs, axis=0, keepdims=True)
    sq_ref[0] += jnp.sum(zs * zs, axis=0, keepdims=True)


def conv_maxpool_stats(x, w, n_valid, in_scale, in_shift, *, tn):
    """x: (B, Np, Cin) bf16, w: (Cin, Cout).
       Returns per-batch running max/min and channel sums/sumsq, all (B,1,Cout)."""
    B, Np, Cin = x.shape
    Cout = w.shape[-1]
    assert Np % tn == 0
    G = Np // tn
    in_scale = in_scale.reshape(1, Cin).astype(jnp.float32)
    in_shift = in_shift.reshape(1, Cin).astype(jnp.float32)

    kern = functools.partial(_conv_maxpool_kernel, n_valid=n_valid, tn=tn)
    stat_spec = pl.BlockSpec((1, 1, Cout), lambda b, g: (b, 0, 0))
    stat_shape = jax.ShapeDtypeStruct((B, 1, Cout), jnp.float32)

    mx, mn, sums, sqs = pl.pallas_call(
        kern,
        grid=(B, G),
        in_specs=[
            pl.BlockSpec((1, tn, Cin), lambda b, g: (b, g, 0)),
            pl.BlockSpec((Cin, Cout), lambda b, g: (0, 0)),
            pl.BlockSpec((1, Cin), lambda b, g: (0, 0)),
            pl.BlockSpec((1, Cin), lambda b, g: (0, 0)),
        ],
        out_specs=[stat_spec, stat_spec, stat_spec, stat_spec],
        out_shape=[stat_shape, stat_shape, stat_shape, stat_shape],
        compiler_params=pltpu.CompilerParams(
            dimension_semantics=("parallel", "arbitrary")),
    )(x.astype(jnp.bfloat16), w.astype(jnp.bfloat16), in_scale, in_shift)
    return mx, mn, sums, sqs


# ---------------------------------------------------------------------------
# Kernel 3: fused STN FC head — fc1+bn4+relu, fc2+bn5+relu, fc3 (+identity).
#           Everything fits in VMEM; BN over the B rows inside the kernel.
# ---------------------------------------------------------------------------
def _stn_fc_head_kernel(x_ref, w1_ref, g1_ref, b1_ref, w2_ref, g2_ref, b2_ref,
                        w3_ref, b3_ref, o_ref):
    def bn_rows(y, gamma, beta):
        mean = jnp.mean(y, axis=0, keepdims=True)
        var = jnp.mean(jnp.square(y - mean), axis=0, keepdims=True)
        return (y - mean) * jax.lax.rsqrt(var + BN_EPS) * gamma + beta

    h = x_ref[...]                                                   # (B, 1024)
    h = jnp.dot(h, w1_ref[...], preferred_element_type=jnp.float32)  # fc1 (bias cancels in BN)
    h = jnp.maximum(bn_rows(h, g1_ref[...], b1_ref[...]), 0.0)
    h = jnp.dot(h, w2_ref[...], preferred_element_type=jnp.float32)  # fc2
    h = jnp.maximum(bn_rows(h, g2_ref[...], b2_ref[...]), 0.0)
    h = jnp.dot(h, w3_ref[...], preferred_element_type=jnp.float32)  # fc3
    o_ref[...] = h + b3_ref[...]          # b3 already includes fc3 bias + identity


# ---------------------------------------------------------------------------
# Glue: BN finalize, pooled-BN finalize, backbone, forward passes
# ---------------------------------------------------------------------------
def _bn_scale_shift(sums, sqs, count, gamma, beta):
    total = jnp.sum(sums, axis=(0, 1))
    total_sq = jnp.sum(sqs, axis=(0, 1))
    mean = total / count
    var = total_sq / count - mean * mean          # biased variance (training mode)
    scale = gamma * jax.lax.rsqrt(var + BN_EPS)
    shift = beta - mean * scale                   # conv bias cancels with mean
    return scale, shift


def _pooled_bn(mx, mn, scale, shift, *, relu):
    # max over points commutes with the per-channel affine only for scale >= 0;
    # use the running min where scale is negative.
    g = jnp.where(scale >= 0, mx[:, 0, :], mn[:, 0, :]) * scale + shift
    if relu:
        g = jnp.maximum(g, 0.0)
    return g                                                        # (B, Cout) f32


def _conv_backbone(xp, n, w1, bn1, w2, bn2, w3, bn3, *, tn):
    """conv1+bn1+relu -> conv2+bn2+relu -> conv3 (+ fused max/min pooling).
       Returns pooled max/min, bn3 scale/shift, and (z1, bn1 scale/shift)."""
    B = xp.shape[0]
    count = B * n
    z1, s1, q1 = conv_bn_stats(xp, w1, n, tn=tn)
    sc1, sh1 = _bn_scale_shift(s1, q1, count, bn1[0], bn1[1])
    z2, s2, q2 = conv_bn_stats(z1, w2, n, sc1, sh1, tn=tn)
    sc2, sh2 = _bn_scale_shift(s2, q2, count, bn2[0], bn2[1])
    mx, mn, s3, q3 = conv_maxpool_stats(z2, w3, n, sc2, sh2, tn=tn)
    sc3, sh3 = _bn_scale_shift(s3, q3, count, bn3[0], bn3[1])
    return mx, mn, sc3, sh3, (z1, sc1, sh1)


def stn3d_forward(p, xp, n, *, tn):
    """xp: (B, Np, C) zero-padded bf16 -> (B, 3, 3)."""
    B = xp.shape[0]
    mx, mn, sc3, sh3, _ = _conv_backbone(
        xp, n,
        p["conv1_w"], (p["bn1_g"], p["bn1_b"]),
        p["conv2_w"], (p["bn2_g"], p["bn2_b"]),
        p["conv3_w"], (p["bn3_g"], p["bn3_b"]), tn=tn)
    g3 = _pooled_bn(mx, mn, sc3, sh3, relu=True)                    # (B, 1024)

    iden = jnp.eye(3, dtype=jnp.float32).reshape(9)
    b3_eff = (p["fc3_b"] + iden).reshape(1, 9)                      # fold identity into bias
    out = pl.pallas_call(
        _stn_fc_head_kernel,
        out_shape=jax.ShapeDtypeStruct((B, 9), jnp.float32),
    )(g3,
      p["fc1_w"], p["bn4_g"].reshape(1, -1), p["bn4_b"].reshape(1, -1),
      p["fc2_w"], p["bn5_g"].reshape(1, -1), p["bn5_b"].reshape(1, -1),
      p["fc3_w"], b3_eff)
    return out.reshape(B, 3, 3)


def pointnet_encoder_forward(params, x, *, global_feat=True,
                             feature_transform=False, tn=512):
    """x: (B, D, N).  Returns (global_or_point_feat, trans, trans_feat)."""
    B, D, N = x.shape
    tn = min(tn, _round_up(N, 8))
    Np = _round_up(N, tn)
    xt = jnp.transpose(x, (0, 2, 1)).astype(jnp.float32)            # (B, N, D)
    xp = jnp.pad(xt, ((0, 0), (0, Np - N), (0, 0))).astype(jnp.bfloat16)

    trans = stn3d_forward(params["stn"], xp, N, tn=tn)              # (B, 3, 3)

    # Fold the 3x3 input transform into conv1: (x @ trans) @ W1 == x @ (trans @ W1)
    w1 = params["conv1_w"]                                          # (D, 64)
    w_xyz = jnp.einsum('bij,jk->bik', trans, w1[:3])                # (B, 3, 64)
    if D > 3:
        w_rest = jnp.broadcast_to(w1[3:], (B, D - 3, w1.shape[1]))
        w_eff = jnp.concatenate([w_xyz, w_rest], axis=1)            # (B, D, 64)
    else:
        w_eff = w_xyz

    if feature_transform:
        # TODO(synk): feature_transform=True path (STNkd / fstn) not implemented
        raise NotImplementedError("feature_transform=True not implemented")
    trans_feat = None

    mx, mn, sc3, sh3, (z1, sc1, sh1) = _conv_backbone(
        xp, N,
        w_eff, (params["bn1_g"], params["bn1_b"]),
        params["conv2_w"], (params["bn2_g"], params["bn2_b"]),
        params["conv3_w"], (params["bn3_g"], params["bn3_b"]), tn=tn)

    g = _pooled_bn(mx, mn, sc3, sh3, relu=False)                    # (B, 1024)

    if global_feat:
        return g, trans, trans_feat
    else:
        pointfeat = jnp.maximum(
            z1[:, :N, :].astype(jnp.float32) * sc1 + sh1, 0.0)      # (B, N, 64)
        pointfeat = jnp.transpose(pointfeat, (0, 2, 1))             # (B, 64, N)
        g_rep = jnp.broadcast_to(g[:, :, None], (B, 1024, N))
        return jnp.concatenate([g_rep, pointfeat], axis=1), trans, trans_feat


# ---------------------------------------------------------------------------
# Parameter construction (deterministic, synthetic)
# ---------------------------------------------------------------------------
def _linear_params(key, cin, cout, scale=0.1):
    kw, kb = jax.random.split(key)
    w = scale * jax.random.normal(kw, (cin, cout), jnp.float32)   # stored (Cin, Cout)
    b = scale * jax.random.normal(kb, (cout,), jnp.float32)
    return w, b


def _bn_params(c):
    return jnp.ones((c,), jnp.float32), jnp.zeros((c,), jnp.float32)


def init_stn3d_params(key, channel=3):
    ks = jax.random.split(key, 6)
    p = {}
    # conv/fc1/fc2 biases are created for module fidelity but are mathematically
    # cancelled by the following training-mode BatchNorm, so kernels skip them.
    p["conv1_w"], p["conv1_b"] = _linear_params(ks[0], channel, 64)
    p["conv2_w"], p["conv2_b"] = _linear_params(ks[1], 64, 128)
    p["conv3_w"], p["conv3_b"] = _linear_params(ks[2], 128, 1024)
    p["fc1_w"], p["fc1_b"] = _linear_params(ks[3], 1024, 512)
    p["fc2_w"], p["fc2_b"] = _linear_params(ks[4], 512, 256)
    p["fc3_w"], p["fc3_b"] = _linear_params(ks[5], 256, 9)
    p["bn1_g"], p["bn1_b"] = _bn_params(64)
    p["bn2_g"], p["bn2_b"] = _bn_params(128)
    p["bn3_g"], p["bn3_b"] = _bn_params(1024)
    p["bn4_g"], p["bn4_b"] = _bn_params(512)
    p["bn5_g"], p["bn5_b"] = _bn_params(256)
    return p


def init_encoder_params(key, channel=3):
    kstn, k1, k2, k3 = jax.random.split(key, 4)
    p = {"stn": init_stn3d_params(kstn, channel)}
    p["conv1_w"], p["conv1_b"] = _linear_params(k1, channel, 64)
    p["conv2_w"], p["conv2_b"] = _linear_params(k2, 64, 128)
    p["conv3_w"], p["conv3_b"] = _linear_params(k3, 128, 1024)
    p["bn1_g"], p["bn1_b"] = _bn_params(64)
    p["bn2_g"], p["bn2_b"] = _bn_params(128)
    p["bn3_g"], p["bn3_b"] = _bn_params(1024)
    return p


# ---------------------------------------------------------------------------
if __name__ == "__main__":
    key = jax.random.PRNGKey(0)
    kx, kp = jax.random.split(key)

    B, C, N = 2, 3, 64                       # batch, xyz channels, number of points
    x = jax.random.normal(kx, (B, C, N), dtype=jnp.float32)
    params = init_encoder_params(kp, channel=C)

    fwd = jax.jit(functools.partial(pointnet_encoder_forward,
                                    global_feat=True, feature_transform=False))
    g, trans, trans_feat = fwd(params, x)
    jax.block_until_ready((g, trans))

    assert g.shape == (B, 1024), g.shape
    assert trans.shape == (B, 3, 3), trans.shape
    assert trans_feat is None
    assert bool(jnp.all(jnp.isfinite(g))) and bool(jnp.all(jnp.isfinite(trans)))
    print("KERNEL_OK")
</pallas_src>

<mosaic_0001>
module attributes {stable_mosaic.version = 11 : i64} {
  func.func @_conv_stats_kernel(%arg0: i32, %arg1: i32, %arg2: memref<1x64x3xbf16, #tpu.memory_space<vmem>>, %arg3: memref<3x64xbf16, #tpu.memory_space<vmem>>, %arg4: memref<1x3xf32, #tpu.memory_space<vmem>>, %arg5: memref<1x3xf32, #tpu.memory_space<vmem>>, %arg6: memref<1x64x64xbf16, #tpu.memory_space<vmem>>, %arg7: memref<1x1x64xf32, #tpu.memory_space<vmem>>, %arg8: memref<1x1x64xf32, #tpu.memory_space<vmem>>) attributes {dimension_semantics = [#tpu.dimension_semantics<parallel>, #tpu.dimension_semantics<arbitrary>], iteration_bounds = array<i64: 2, 1>, scalar_prefetch = 0 : i64, scratch_operands = 0 : i64, tpu.core_type = #tpu.core_type<tc>, window_params = [{transform_indices = @transform_0, window_bounds = array<i64: 1, 64, 3>}, {pipeline_mode = #tpu.pipeline_mode<synchronous>, transform_indices = @transform_1, window_bounds = array<i64: 3, 64>}, {pipeline_mode = #tpu.pipeline_mode<synchronous>, transform_indices = @transform_2, window_bounds = array<i64: 1, 3>}, {pipeline_mode = #tpu.pipeline_mode<synchronous>, transform_indices = @transform_3, window_bounds = array<i64: 1, 3>}, {transform_indices = @transform_4, window_bounds = array<i64: 1, 64, 64>}, {transform_indices = @transform_5, window_bounds = array<i64: 1, 1, 64>}, {transform_indices = @transform_6, window_bounds = array<i64: 1, 1, 64>}]} {
    %c0 = arith.constant 0 : index
    %c0_0 = arith.constant 0 : index
    %c0_1 = arith.constant 0 : index
    %0 = vector.load %arg2[%c0, %c0_0, %c0_1] : memref<1x64x3xbf16, #tpu.memory_space<vmem>>, vector<1x64x3xbf16>
    %1 = vector.shape_cast %0 : vector<1x64x3xbf16> to vector<64x3xbf16>
    %c0_2 = arith.constant 0 : index
    %c0_3 = arith.constant 0 : index
    %2 = vector.load %arg3[%c0_2, %c0_3] : memref<3x64xbf16, #tpu.memory_space<vmem>>, vector<3x64xbf16>
    %cst = arith.constant dense<0.000000e+00> : vector<64x64xf32>
    %3 = tpu.matmul %1, %2, %cst {dimension_numbers = #tpu.dot_dimension_numbers<[1], [0], [0], [1], [0, 0, 1, 1], [], []>} : vector<64x3xbf16>, vector<3x64xbf16>, vector<64x64xf32> -> vector<64x64xf32>
    %4 = arith.truncf %3 : vector<64x64xf32> to vector<64x64xbf16>
    %c0_4 = arith.constant 0 : index
    %c0_5 = arith.constant 0 : index
    %c0_6 = arith.constant 0 : index
    %5 = vector.load %arg6[%c0_4, %c0_5, %c0_6] : memref<1x64x64xbf16, #tpu.memory_space<vmem>>, vector<1x64x64xbf16>
    %6 = vector.shape_cast %5 : vector<1x64x64xbf16> to vector<64x64xbf16>
    %7 = vector.shape_cast %4 : vector<64x64xbf16> to vector<1x64x64xbf16>
    tpu.vector_store %arg6[%c0_4, %c0_5, %c0_6], %7 {strides = array<i32>} : memref<1x64x64xbf16, #tpu.memory_space<vmem>>, vector<1x64x64xbf16>,
    %8 = tpu.iota {dimensions = array<i32: 0>} : vector<64x1xi32>
    %c64_i32 = arith.constant 64 : i32
    %9 = arith.muli %arg1, %c64_i32 : i32
    %10 = vector.broadcast %9 : i32 to vector<64x1xi32>
    %11 = arith.addi %8, %10 : vector<64x1xi32>
    %c64_i32_7 = arith.constant 64 : i32
    %12 = vector.broadcast %c64_i32_7 : i32 to vector<64x1xi32>
    %13 = arith.cmpi slt, %11, %12 : vector<64x1xi32>
    %cst_8 = arith.constant 0.000000e+00 : f32
    %14 = vector.shape_cast %13 : vector<64x1xi1> to vector<64x1xi1>
    %15 = vector.broadcast %14 : vector<64x1xi1> to vector<64x64xi1>
    %16 = vector.broadcast %cst_8 : f32 to vector<64x64xf32>
    %17 = arith.select %15, %3, %16 : vector<64x64xi1>, vector<64x64xf32>
    %c0_i32 = arith.constant 0 : i32
    %18 = arith.cmpi eq, %arg1, %c0_i32 : i32
    %19 = arith.extui %18 : i1 to i32
    %c0_i32_9 = arith.constant 0 : i32
    %20 = arith.cmpi ne, %19, %c0_i32_9 : i32
    scf.if %20 {
      %cst_24 = arith.constant 0.000000e+00 : f32
      %38 = vector.broadcast %cst_24 : f32 to vector<1x1x64xf32>
      %c0_25 = arith.constant 0 : index
      %c0_26 = arith.constant 0 : index
      %c0_27 = arith.constant 0 : index
      %39 = vector.load %arg7[%c0_25, %c0_26, %c0_27] : memref<1x1x64xf32, #tpu.memory_space<vmem>>, vector<1x1x64xf32>
      tpu.vector_store %arg7[%c0_25, %c0_26, %c0_27], %38 {strides = array<i32>} : memref<1x1x64xf32, #tpu.memory_space<vmem>>, vector<1x1x64xf32>,
      %cst_28 = arith.constant 0.000000e+00 : f32
      %40 = vector.broadcast %cst_28 : f32 to vector<1x1x64xf32>
      %c0_29 = arith.constant 0 : index
      %c0_30 = arith.constant 0 : index
      %c0_31 = arith.constant 0 : index
      %41 = vector.load %arg8[%c0_29, %c0_30, %c0_31] : memref<1x1x64xf32, #tpu.memory_space<vmem>>, vector<1x1x64xf32>
      tpu.vector_store %arg8[%c0_29, %c0_30, %c0_31], %40 {strides = array<i32>} : memref<1x1x64xf32, #tpu.memory_space<vmem>>, vector<1x1x64xf32>,
    } else {
    }
    %c0_10 = arith.constant 0 : index
    %c0_11 = arith.constant 0 : index
    %c0_12 = arith.constant 0 : index
    %21 = vector.load %arg7[%c0_10, %c0_11, %c0_12] : memref<1x1x64xf32, #tpu.memory_space<vmem>>, vector<1x1x64xf32>
    %22 = vector.shape_cast %21 : vector<1x1x64xf32> to vector<1x64xf32>
    %cst_13 = arith.constant dense<0.000000e+00> : vector<64xf32>
    %23 = vector.multi_reduction <add>, %17, %cst_13 [0] : vector<64x64xf32> to vector<64xf32>
    %24 = vector.shape_cast %23 : vector<64xf32> to vector<1x64xf32>
    %25 = arith.addf %22, %24 : vector<1x64xf32>
    %c0_14 = arith.constant 0 : index
    %c0_15 = arith.constant 0 : index
    %c0_16 = arith.constant 0 : index
    %26 = vector.load %arg7[%c0_14, %c0_15, %c0_16] : memref<1x1x64xf32, #tpu.memory_space<vmem>>, vector<1x1x64xf32>
    %27 = vector.shape_cast %26 : vector<1x1x64xf32> to vector<1x64xf32>
    %28 = vector.shape_cast %25 : vector<1x64xf32> to vector<1x1x64xf32>
    tpu.vector_store %arg7[%c0_14, %c0_15, %c0_16], %28 {strides = array<i32>} : memref<1x1x64xf32, #tpu.memory_space<vmem>>, vector<1x1x64xf32>,
    %c0_17 = arith.constant 0 : index
    %c0_18 = arith.constant 0 : index
    %c0_19 = arith.constant 0 : index
    %29 = vector.load %arg8[%c0_17, %c0_18, %c0_19] : memref<1x1x64xf32, #tpu.memory_space<vmem>>, vector<1x1x64xf32>
    %30 = vector.shape_cast %29 : vector<1x1x64xf32> to vector<1x64xf32>
    %31 = arith.mulf %17, %17 : vector<64x64xf32>
    %cst_20 = arith.constant dense<0.000000e+00> : vector<64xf32>
    %32 = vector.multi_reduction <add>, %31, %cst_20 [0] : vector<64x64xf32> to vector<64xf32>
    %33 = vector.shape_cast %32 : vector<64xf32> to vector<1x64xf32>
    %34 = arith.addf %30, %33 : vector<1x64xf32>
    %c0_21 = arith.constant 0 : index
    %c0_22 = arith.constant 0 : index
    %c0_23 = arith.constant 0 : index
    %35 = vector.load %arg8[%c0_21, %c0_22, %c0_23] : memref<1x1x64xf32, #tpu.memory_space<vmem>>, vector<1x1x64xf32>
    %36 = vector.shape_cast %35 : vector<1x1x64xf32> to vector<1x64xf32>
    %37 = vector.shape_cast %34 : vector<1x64xf32> to vector<1x1x64xf32>
    tpu.vector_store %arg8[%c0_21, %c0_22, %c0_23], %37 {strides = array<i32>} : memref<1x1x64xf32, #tpu.memory_space<vmem>>, vector<1x1x64xf32>,
    return
  }
  func.func @transform_0(%arg0: i32, %arg1: i32) -> (i32, i32, i32) {
    %c0_i32 = arith.constant 0 : i32
    %c0_i32_0 = arith.constant 0 : i32
    return %arg0, %arg1, %c0_i32 : i32, i32, i32
  }
  func.func @transform_1(%arg0: i32, %arg1: i32) -> (i32, i32) {
    %c0_i32 = arith.constant 0 : i32
    %c0_i32_0 = arith.constant 0 : i32
    %c0_i32_1 = arith.constant 0 : i32
    return %c0_i32, %c0_i32_0 : i32, i32
  }
  func.func @transform_2(%arg0: i32, %arg1: i32) -> (i32, i32) {
    %c0_i32 = arith.constant 0 : i32
    %c0_i32_0 = arith.constant 0 : i32
    %c0_i32_1 = arith.constant 0 : i32
    return %c0_i32, %c0_i32_0 : i32, i32
  }
  func.func @transform_3(%arg0: i32, %arg1: i32) -> (i32, i32) {
    %c0_i32 = arith.constant 0 : i32
    %c0_i32_0 = arith.constant 0 : i32
    %c0_i32_1 = arith.constant 0 : i32
    return %c0_i32, %c0_i32_0 : i32, i32
  }
  func.func @transform_4(%arg0: i32, %arg1: i32) -> (i32, i32, i32) {
    %c0_i32 = arith.constant 0 : i32
    %c0_i32_0 = arith.constant 0 : i32
    return %arg0, %arg1, %c0_i32 : i32, i32, i32
  }
  func.func @transform_5(%arg0: i32, %arg1: i32) -> (i32, i32, i32) {
    %c0_i32 = arith.constant 0 : i32
    %c0_i32_0 = arith.constant 0 : i32
    %c0_i32_1 = arith.constant 0 : i32
    return %arg0, %c0_i32, %c0_i32_0 : i32, i32, i32
  }
  func.func @transform_6(%arg0: i32, %arg1: i32) -> (i32, i32, i32) {
    %c0_i32 = arith.constant 0 : i32
    %c0_i32_0 = arith.constant 0 : i32
    %c0_i32_1 = arith.constant 0 : i32
    return %arg0, %c0_i32, %c0_i32_0 : i32, i32, i32
  }
}

module attributes {stable_mosaic.version = 11 : i64} {
  func.func @_conv_stats_kernel(%arg0: i32, %arg1: i32, %arg2: memref<1x64x64xbf16, #tpu.memory_space<vmem>>, %arg3: memref<64x128xbf16, #tpu.memory_space<vmem>>, %arg4: memref<1x64xf32, #tpu.memory_space<vmem>>, %arg5: memref<1x64xf32, #tpu.memory_space<vmem>>, %arg6: memref<1x64x128xbf16, #tpu.memory_space<vmem>>, %arg7: memref<1x1x128xf32, #tpu.memory_space<vmem>>, %arg8: memref<1x1x128xf32, #tpu.memory_space<vmem>>) attributes {dimension_semantics = [#tpu.dimension_semantics<parallel>, #tpu.dimension_semantics<arbitrary>], iteration_bounds = array<i64: 2, 1>, scalar_prefetch = 0 : i64, scratch_operands = 0 : i64, tpu.core_type = #tpu.core_type<tc>, window_params = [{transform_indices = @transform_0, window_bounds = array<i64: 1, 64, 64>}, {pipeline_mode = #tpu.pipeline_mode<synchronous>, transform_indices = @transform_1, window_bounds = array<i64: 64, 128>}, {pipeline_mode = #tpu.pipeline_mode<synchronous>, transform_indices = @transform_2, window_bounds = array<i64: 1, 64>}, {pipeline_mode = #tpu.pipeline_mode<synchronous>, transform_indices = @transform_3, window_bounds = array<i64: 1, 64>}, {transform_indices = @transform_4, window_bounds = array<i64: 1, 64, 128>}, {transform_indices = @transform_5, window_bounds = array<i64: 1, 1, 128>}, {transform_indices = @transform_6, window_bounds = array<i64: 1, 1, 128>}]} {
    %c0 = arith.constant 0 : index
    %c0_0 = arith.constant 0 : index
    %c0_1 = arith.constant 0 : index
    %0 = vector.load %arg2[%c0, %c0_0, %c0_1] : memref<1x64x64xbf16, #tpu.memory_space<vmem>>, vector<1x64x64xbf16>
    %1 = vector.shape_cast %0 : vector<1x64x64xbf16> to vector<64x64xbf16>
    %2 = arith.extf %1 : vector<64x64xbf16> to vector<64x64xf32>
    %c0_2 = arith.constant 0 : index
    %c0_3 = arith.constant 0 : index
    %3 = vector.load %arg4[%c0_2, %c0_3] : memref<1x64xf32, #tpu.memory_space<vmem>>, vector<1x64xf32>
    %4 = vector.broadcast %3 : vector<1x64xf32> to vector<64x64xf32>
    %5 = arith.mulf %2, %4 : vector<64x64xf32>
    %c0_4 = arith.constant 0 : index
    %c0_5 = arith.constant 0 : index
    %6 = vector.load %arg5[%c0_4, %c0_5] : memref<1x64xf32, #tpu.memory_space<vmem>>, vector<1x64xf32>
    %7 = vector.broadcast %6 : vector<1x64xf32> to vector<64x64xf32>
    %8 = arith.addf %5, %7 : vector<64x64xf32>
    %cst = arith.constant 0.000000e+00 : f32
    %9 = vector.broadcast %cst : f32 to vector<64x64xf32>
    %10 = arith.maximumf %8, %9 : vector<64x64xf32>
    %11 = arith.truncf %10 : vector<64x64xf32> to vector<64x64xbf16>
    %c0_6 = arith.constant 0 : index
    %c0_7 = arith.constant 0 : index
    %12 = vector.load %arg3[%c0_6, %c0_7] : memref<64x128xbf16, #tpu.memory_space<vmem>>, vector<64x128xbf16>
    %cst_8 = arith.constant dense<0.000000e+00> : vector<64x128xf32>
    %13 = tpu.matmul %11, %12, %cst_8 {dimension_numbers = #tpu.dot_dimension_numbers<[1], [0], [0], [1], [0, 0, 1, 1], [], []>} : vector<64x64xbf16>, vector<64x128xbf16>, vector<64x128xf32> -> vector<64x128xf32>
    %14 = arith.truncf %13 : vector<64x128xf32> to vector<64x128xbf16>
    %c0_9 = arith.constant 0 : index
    %c0_10 = arith.constant 0 : index
    %c0_11 = arith.constant 0 : index
    %15 = vector.load %arg6[%c0_9, %c0_10, %c0_11] : memref<1x64x128xbf16, #tpu.memory_space<vmem>>, vector<1x64x128xbf16>
    %16 = vector.shape_cast %15 : vector<1x64x128xbf16> to vector<64x128xbf16>
    %17 = vector.shape_cast %14 : vector<64x128xbf16> to vector<1x64x128xbf16>
    tpu.vector_store %arg6[%c0_9, %c0_10, %c0_11], %17 {strides = array<i32>} : memref<1x64x128xbf16, #tpu.memory_space<vmem>>, vector<1x64x128xbf16>,
    %18 = tpu.iota {dimensions = array<i32: 0>} : vector<64x1xi32>
    %c64_i32 = arith.constant 64 : i32
    %19 = arith.muli %arg1, %c64_i32 : i32
    %20 = vector.broadcast %19 : i32 to vector<64x1xi32>
    %21 = arith.addi %18, %20 : vector<64x1xi32>
    %c64_i32_12 = arith.constant 64 : i32
    %22 = vector.broadcast %c64_i32_12 : i32 to vector<64x1xi32>
    %23 = arith.cmpi slt, %21, %22 : vector<64x1xi32>
    %cst_13 = arith.constant 0.000000e+00 : f32
    %24 = vector.shape_cast %23 : vector<64x1xi1> to vector<64x1xi1>
    %25 = vector.broadcast %24 : vector<64x1xi1> to vector<64x128xi1>
    %26 = vector.broadcast %cst_13 : f32 to vector<64x128xf32>
    %27 = arith.select %25, %13, %26 : vector<64x128xi1>, vector<64x128xf32>
    %c0_i32 = arith.constant 0 : i32
    %28 = arith.cmpi eq, %arg1, %c0_i32 : i32
    %29 = arith.extui %28 : i1 to i32
    %c0_i32_14 = arith.constant 0 : i32
    %30 = arith.cmpi ne, %29, %c0_i32_14 : i32
    scf.if %30 {
      %cst_29 = arith.constant 0.000000e+00 : f32
      %48 = vector.broadcast %cst_29 : f32 to vector<1x1x128xf32>
      %c0_30 = arith.constant 0 : index
      %c0_31 = arith.constant 0 : index
      %c0_32 = arith.constant 0 : index
      %49 = vector.load %arg7[%c0_30, %c0_31, %c0_32] : memref<1x1x128xf32, #tpu.memory_space<vmem>>, vector<1x1x128xf32>
      tpu.vector_store %arg7[%c0_30, %c0_31, %c0_32], %48 {strides = array<i32>} : memref<1x1x128xf32, #tpu.memory_space<vmem>>, vector<1x1x128xf32>,
      %cst_33 = arith.constant 0.000000e+00 : f32
      %50 = vector.broadcast %cst_33 : f32 to vector<1x1x128xf32>
      %c0_34 = arith.constant 0 : index
      %c0_35 = arith.constant 0 : index
      %c0_36 = arith.constant 0 : index
      %51 = vector.load %arg8[%c0_34, %c0_35, %c0_36] : memref<1x1x128xf32, #tpu.memory_space<vmem>>, vector<1x1x128xf32>
      tpu.vector_store %arg8[%c0_34, %c0_35, %c0_36], %50 {strides = array<i32>} : memref<1x1x128xf32, #tpu.memory_space<vmem>>, vector<1x1x128xf32>,
    } else {
    }
    %c0_15 = arith.constant 0 : index
    %c0_16 = arith.constant 0 : index
    %c0_17 = arith.constant 0 : index
    %31 = vector.load %arg7[%c0_15, %c0_16, %c0_17] : memref<1x1x128xf32, #tpu.memory_space<vmem>>, vector<1x1x128xf32>
    %32 = vector.shape_cast %31 : vector<1x1x128xf32> to vector<1x128xf32>
    %cst_18 = arith.constant dense<0.000000e+00> : vector<128xf32>
    %33 = vector.multi_reduction <add>, %27, %cst_18 [0] : vector<64x128xf32> to vector<128xf32>
    %34 = vector.shape_cast %33 : vector<128xf32> to vector<1x128xf32>
    %35 = arith.addf %32, %34 : vector<1x128xf32>
    %c0_19 = arith.constant 0 : index
    %c0_20 = arith.constant 0 : index
    %c0_21 = arith.constant 0 : index
    %36 = vector.load %arg7[%c0_19, %c0_20, %c0_21] : memref<1x1x128xf32, #tpu.memory_space<vmem>>, vector<1x1x128xf32>
    %37 = vector.shape_cast %36 : vector<1x1x128xf32> to vector<1x128xf32>
    %38 = vector.shape_cast %35 : vector<1x128xf32> to vector<1x1x128xf32>
    tpu.vector_store %arg7[%c0_19, %c0_20, %c0_21], %38 {strides = array<i32>} : memref<1x1x128xf32, #tpu.memory_space<vmem>>, vector<1x1x128xf32>,
    %c0_22 = arith.constant 0 : index
    %c0_23 = arith.constant 0 : index
    %c0_24 = arith.constant 0 : index
    %39 = vector.load %arg8[%c0_22, %c0_23, %c0_24] : memref<1x1x128xf32, #tpu.memory_space<vmem>>, vector<1x1x128xf32>
    %40 = vector.shape_cast %39 : vector<1x1x128xf32> to vector<1x128xf32>
    %41 = arith.mulf %27, %27 : vector<64x128xf32>
    %cst_25 = arith.constant dense<0.000000e+00> : vector<128xf32>
    %42 = vector.multi_reduction <add>, %41, %cst_25 [0] : vector<64x128xf32> to vector<128xf32>
    %43 = vector.shape_cast %42 : vector<128xf32> to vector<1x128xf32>
    %44 = arith.addf %40, %43 : vector<1x128xf32>
    %c0_26 = arith.constant 0 : index
    %c0_27 = arith.constant 0 : index
    %c0_28 = arith.constant 0 : index
    %45 = vector.load %arg8[%c0_26, %c0_27, %c0_28] : memref<1x1x128xf32, #tpu.memory_space<vmem>>, vector<1x1x128xf32>
    %46 = vector.shape_cast %45 : vector<1x1x128xf32> to vector<1x128xf32>
    %47 = vector.shape_cast %44 : vector<1x128xf32> to vector<1x1x128xf32>
    tpu.vector_store %arg8[%c0_26, %c0_27, %c0_28], %47 {strides = array<i32>} : memref<1x1x128xf32, #tpu.memory_space<vmem>>, vector<1x1x128xf32>,
    return
  }
  func.func @transform_0(%arg0: i32, %arg1: i32) -> (i32, i32, i32) {
    %c0_i32 = arith.constant 0 : i32
    %c0_i32_0 = arith.constant 0 : i32
    return %arg0, %arg1, %c0_i32 : i32, i32, i32
  }
  func.func @transform_1(%arg0: i32, %arg1: i32) -> (i32, i32) {
    %c0_i32 = arith.constant 0 : i32
    %c0_i32_0 = arith.constant 0 : i32
    %c0_i32_1 = arith.constant 0 : i32
    return %c0_i32, %c0_i32_0 : i32, i32
  }
  func.func @transform_2(%arg0: i32, %arg1: i32) -> (i32, i32) {
    %c0_i32 = arith.constant 0 : i32
    %c0_i32_0 = arith.constant 0 : i32
    %c0_i32_1 = arith.constant 0 : i32
    return %c0_i32, %c0_i32_0 : i32, i32
  }
  func.func @transform_3(%arg0: i32, %arg1: i32) -> (i32, i32) {
    %c0_i32 = arith.constant 0 : i32
    %c0_i32_0 = arith.constant 0 : i32
    %c0_i32_1 = arith.constant 0 : i32
    return %c0_i32, %c0_i32_0 : i32, i32
  }
  func.func @transform_4(%arg0: i32, %arg1: i32) -> (i32, i32, i32) {
    %c0_i32 = arith.constant 0 : i32
    %c0_i32_0 = arith.constant 0 : i32
    return %arg0, %arg1, %c0_i32 : i32, i32, i32
  }
  func.func @transform_5(%arg0: i32, %arg1: i32) -> (i32, i32, i32) {
    %c0_i32 = arith.constant 0 : i32
    %c0_i32_0 = arith.constant 0 : i32
    %c0_i32_1 = arith.constant 0 : i32
    return %arg0, %c0_i32, %c0_i32_0 : i32, i32, i32
  }
  func.func @transform_6(%arg0: i32, %arg1: i32) -> (i32, i32, i32) {
    %c0_i32 = arith.constant 0 : i32
    %c0_i32_0 = arith.constant 0 : i32
    %c0_i32_1 = arith.constant 0 : i32
    return %arg0, %c0_i32, %c0_i32_0 : i32, i32, i32
  }
}

module attributes {stable_mosaic.version = 11 : i64} {
  func.func @_conv_maxpool_kernel(%arg0: i32, %arg1: i32, %arg2: memref<1x64x128xbf16, #tpu.memory_space<vmem>>, %arg3: memref<128x1024xbf16, #tpu.memory_space<vmem>>, %arg4: memref<1x128xf32, #tpu.memory_space<vmem>>, %arg5: memref<1x128xf32, #tpu.memory_space<vmem>>, %arg6: memref<1x1x1024xf32, #tpu.memory_space<vmem>>, %arg7: memref<1x1x1024xf32, #tpu.memory_space<vmem>>, %arg8: memref<1x1x1024xf32, #tpu.memory_space<vmem>>, %arg9: memref<1x1x1024xf32, #tpu.memory_space<vmem>>) attributes {dimension_semantics = [#tpu.dimension_semantics<parallel>, #tpu.dimension_semantics<arbitrary>], iteration_bounds = array<i64: 2, 1>, scalar_prefetch = 0 : i64, scratch_operands = 0 : i64, tpu.core_type = #tpu.core_type<tc>, window_params = [{transform_indices = @transform_0, window_bounds = array<i64: 1, 64, 128>}, {pipeline_mode = #tpu.pipeline_mode<synchronous>, transform_indices = @transform_1, window_bounds = array<i64: 128, 1024>}, {pipeline_mode = #tpu.pipeline_mode<synchronous>, transform_indices = @transform_2, window_bounds = array<i64: 1, 128>}, {pipeline_mode = #tpu.pipeline_mode<synchronous>, transform_indices = @transform_3, window_bounds = array<i64: 1, 128>}, {transform_indices = @transform_4, window_bounds = array<i64: 1, 1, 1024>}, {transform_indices = @transform_5, window_bounds = array<i64: 1, 1, 1024>}, {transform_indices = @transform_6, window_bounds = array<i64: 1, 1, 1024>}, {transform_indices = @transform_7, window_bounds = array<i64: 1, 1, 1024>}]} {
    %c0 = arith.constant 0 : index
    %c0_0 = arith.constant 0 : index
    %c0_1 = arith.constant 0 : index
    %0 = vector.load %arg2[%c0, %c0_0, %c0_1] : memref<1x64x128xbf16, #tpu.memory_space<vmem>>, vector<1x64x128xbf16>
    %1 = vector.shape_cast %0 : vector<1x64x128xbf16> to vector<64x128xbf16>
    %2 = arith.extf %1 : vector<64x128xbf16> to vector<64x128xf32>
    %c0_2 = arith.constant 0 : index
    %c0_3 = arith.constant 0 : index
    %3 = vector.load %arg4[%c0_2, %c0_3] : memref<1x128xf32, #tpu.memory_space<vmem>>, vector<1x128xf32>
    %4 = vector.broadcast %3 : vector<1x128xf32> to vector<64x128xf32>
    %5 = arith.mulf %2, %4 : vector<64x128xf32>
    %c0_4 = arith.constant 0 : index
    %c0_5 = arith.constant 0 : index
    %6 = vector.load %arg5[%c0_4, %c0_5] : memref<1x128xf32, #tpu.memory_space<vmem>>, vector<1x128xf32>
    %7 = vector.broadcast %6 : vector<1x128xf32> to vector<64x128xf32>
    %8 = arith.addf %5, %7 : vector<64x128xf32>
    %cst = arith.constant 0.000000e+00 : f32
    %9 = vector.broadcast %cst : f32 to vector<64x128xf32>
    %10 = arith.maximumf %8, %9 : vector<64x128xf32>
    %11 = arith.truncf %10 : vector<64x128xf32> to vector<64x128xbf16>
    %c0_6 = arith.constant 0 : index
    %c0_7 = arith.constant 0 : index
    %12 = vector.load %arg3[%c0_6, %c0_7] : memref<128x1024xbf16, #tpu.memory_space<vmem>>, vector<128x1024xbf16>
    %cst_8 = arith.constant dense<0.000000e+00> : vector<64x1024xf32>
    %13 = tpu.matmul %11, %12, %cst_8 {dimension_numbers = #tpu.dot_dimension_numbers<[1], [0], [0], [1], [0, 0, 1, 1], [], []>} : vector<64x128xbf16>, vector<128x1024xbf16>, vector<64x1024xf32> -> vector<64x1024xf32>
    %14 = tpu.iota {dimensions = array<i32: 0>} : vector<64x1xi32>
    %c64_i32 = arith.constant 64 : i32
    %15 = arith.muli %arg1, %c64_i32 : i32
    %16 = vector.broadcast %15 : i32 to vector<64x1xi32>
    %17 = arith.addi %14, %16 : vector<64x1xi32>
    %c64_i32_9 = arith.constant 64 : i32
    %18 = vector.broadcast %c64_i32_9 : i32 to vector<64x1xi32>
    %19 = arith.cmpi slt, %17, %18 : vector<64x1xi32>
    %cst_10 = arith.constant 0.000000e+00 : f32
    %20 = vector.shape_cast %19 : vector<64x1xi1> to vector<64x1xi1>
    %21 = vector.broadcast %20 : vector<64x1xi1> to vector<64x1024xi1>
    %22 = vector.broadcast %cst_10 : f32 to vector<64x1024xf32>
    %23 = arith.select %21, %13, %22 : vector<64x1024xi1>, vector<64x1024xf32>
    %c0_i32 = arith.constant 0 : i32
    %24 = arith.cmpi eq, %arg1, %c0_i32 : i32
    %25 = arith.extui %24 : i1 to i32
    %c0_i32_11 = arith.constant 0 : i32
    %26 = arith.cmpi ne, %25, %c0_i32_11 : i32
    scf.if %26 {
      %cst_42 = arith.constant 0xFF800000 : f32
      %68 = vector.broadcast %cst_42 : f32 to vector<1x1x1024xf32>
      %c0_43 = arith.constant 0 : index
      %c0_44 = arith.constant 0 : index
      %c0_45 = arith.constant 0 : index
      %69 = vector.load %arg6[%c0_43, %c0_44, %c0_45] : memref<1x1x1024xf32, #tpu.memory_space<vmem>>, vector<1x1x1024xf32>
      tpu.vector_store %arg6[%c0_43, %c0_44, %c0_45], %68 {strides = array<i32>} : memref<1x1x1024xf32, #tpu.memory_space<vmem>>, vector<1x1x1024xf32>,
      %cst_46 = arith.constant 0x7F800000 : f32
      %70 = vector.broadcast %cst_46 : f32 to vector<1x1x1024xf32>
      %c0_47 = arith.constant 0 : index
      %c0_48 = arith.constant 0 : index
      %c0_49 = arith.constant 0 : index
      %71 = vector.load %arg7[%c0_47, %c0_48, %c0_49] : memref<1x1x1024xf32, #tpu.memory_space<vmem>>, vector<1x1x1024xf32>
      tpu.vector_store %arg7[%c0_47, %c0_48, %c0_49], %70 {strides = array<i32>} : memref<1x1x1024xf32, #tpu.memory_space<vmem>>, vector<1x1x1024xf32>,
      %cst_50 = arith.constant 0.000000e+00 : f32
      %72 = vector.broadcast %cst_50 : f32 to vector<1x1x1024xf32>
      %c0_51 = arith.constant 0 : index
      %c0_52 = arith.constant 0 : index
      %c0_53 = arith.constant 0 : index
      %73 = vector.load %arg8[%c0_51, %c0_52, %c0_53] : memref<1x1x1024xf32, #tpu.memory_space<vmem>>, vector<1x1x1024xf32>
      tpu.vector_store %arg8[%c0_51, %c0_52, %c0_53], %72 {strides = array<i32>} : memref<1x1x1024xf32, #tpu.memory_space<vmem>>, vector<1x1x1024xf32>,
      %cst_54 = arith.constant 0.000000e+00 : f32
      %74 = vector.broadcast %cst_54 : f32 to vector<1x1x1024xf32>
      %c0_55 = arith.constant 0 : index
      %c0_56 = arith.constant 0 : index
      %c0_57 = arith.constant 0 : index
      %75 = vector.load %arg9[%c0_55, %c0_56, %c0_57] : memref<1x1x1024xf32, #tpu.memory_space<vmem>>, vector<1x1x1024xf32>
      tpu.vector_store %arg9[%c0_55, %c0_56, %c0_57], %74 {strides = array<i32>} : memref<1x1x1024xf32, #tpu.memory_space<vmem>>, vector<1x1x1024xf32>,
    } else {
    }
    %c0_12 = arith.constant 0 : index
    %c0_13 = arith.constant 0 : index
    %c0_14 = arith.constant 0 : index
    %27 = vector.load %arg6[%c0_12, %c0_13, %c0_14] : memref<1x1x1024xf32, #tpu.memory_space<vmem>>, vector<1x1x1024xf32>
    %28 = vector.shape_cast %27 : vector<1x1x1024xf32> to vector<1x1024xf32>
    %cst_15 = arith.constant 0xFF800000 : f32
    %29 = vector.shape_cast %19 : vector<64x1xi1> to vector<64x1xi1>
    %30 = vector.broadcast %29 : vector<64x1xi1> to vector<64x1024xi1>
    %31 = vector.broadcast %cst_15 : f32 to vector<64x1024xf32>
    %32 = arith.select %30, %13, %31 : vector<64x1024xi1>, vector<64x1024xf32>
    %cst_16 = arith.constant dense<0xFF800000> : vector<1024xf32>
    %33 = vector.multi_reduction <maximumf>, %32, %cst_16 [0] : vector<64x1024xf32> to vector<1024xf32>
    %34 = vector.shape_cast %33 : vector<1024xf32> to vector<1x1024xf32>
    %35 = arith.maximumf %28, %34 : vector<1x1024xf32>
    %c0_17 = arith.constant 0 : index
    %c0_18 = arith.constant 0 : index
    %c0_19 = arith.constant 0 : index
    %36 = vector.load %arg6[%c0_17, %c0_18, %c0_19] : memref<1x1x1024xf32, #tpu.memory_space<vmem>>, vector<1x1x1024xf32>
    %37 = vector.shape_cast %36 : vector<1x1x1024xf32> to vector<1x1024xf32>
    %38 = vector.shape_cast %35 : vector<1x1024xf32> to vector<1x1x1024xf32>
    tpu.vector_store %arg6[%c0_17, %c0_18, %c0_19], %38 {strides = array<i32>} : memref<1x1x1024xf32, #tpu.memory_space<vmem>>, vector<1x1x1024xf32>,
    %c0_20 = arith.constant 0 : index
    %c0_21 = arith.constant 0 : index
    %c0_22 = arith.constant 0 : index
    %39 = vector.load %arg7[%c0_20, %c0_21, %c0_22] : memref<1x1x1024xf32, #tpu.memory_space<vmem>>, vector<1x1x1024xf32>
    %40 = vector.shape_cast %39 : vector<1x1x1024xf32> to vector<1x1024xf32>
    %cst_23 = arith.constant 0x7F800000 : f32
    %41 = vector.shape_cast %19 : vector<64x1xi1> to vector<64x1xi1>
    %42 = vector.broadcast %41 : vector<64x1xi1> to vector<64x1024xi1>
    %43 = vector.broadcast %cst_23 : f32 to vector<64x1024xf32>
    %44 = arith.select %42, %13, %43 : vector<64x1024xi1>, vector<64x1024xf32>
    %cst_24 = arith.constant dense<0x7F800000> : vector<1024xf32>
    %45 = vector.multi_reduction <minimumf>, %44, %cst_24 [0] : vector<64x1024xf32> to vector<1024xf32>
    %46 = vector.shape_cast %45 : vector<1024xf32> to vector<1x1024xf32>
    %47 = arith.minimumf %40, %46 : vector<1x1024xf32>
    %c0_25 = arith.constant 0 : index
    %c0_26 = arith.constant 0 : index
    %c0_27 = arith.constant 0 : index
    %48 = vector.load %arg7[%c0_25, %c0_26, %c0_27] : memref<1x1x1024xf32, #tpu.memory_space<vmem>>, vector<1x1x1024xf32>
    %49 = vector.shape_cast %48 : vector<1x1x1024xf32> to vector<1x1024xf32>
    %50 = vector.shape_cast %47 : vector<1x1024xf32> to vector<1x1x1024xf32>
    tpu.vector_store %arg7[%c0_25, %c0_26, %c0_27], %50 {strides = array<i32>} : memref<1x1x1024xf32, #tpu.memory_space<vmem>>, vector<1x1x1024xf32>,
    %c0_28 = arith.constant 0 : index
    %c0_29 = arith.constant 0 : index
    %c0_30 = arith.constant 0 : index
    %51 = vector.load %arg8[%c0_28, %c0_29, %c0_30] : memref<1x1x1024xf32, #tpu.memory_space<vmem>>, vector<1x1x1024xf32>
    %52 = vector.shape_cast %51 : vector<1x1x1024xf32> to vector<1x1024xf32>
    %cst_31 = arith.constant dense<0.000000e+00> : vector<1024xf32>
    %53 = vector.multi_reduction <add>, %23, %cst_31 [0] : vector<64x1024xf32> to vector<1024xf32>
    %54 = vector.shape_cast %53 : vector<1024xf32> to vector<1x1024xf32>
    %55 = arith.addf %52, %54 : vector<1x1024xf32>
    %c0_32 = arith.constant 0 : index
    %c0_33 = arith.constant 0 : index
    %c0_34 = arith.constant 0 : index
    %56 = vector.load %arg8[%c0_32, %c0_33, %c0_34] : memref<1x1x1024xf32, #tpu.memory_space<vmem>>, vector<1x1x1024xf32>
    %57 = vector.shape_cast %56 : vector<1x1x1024xf32> to vector<1x1024xf32>
    %58 = vector.shape_cast %55 : vector<1x1024xf32> to vector<1x1x1024xf32>
    tpu.vector_store %arg8[%c0_32, %c0_33, %c0_34], %58 {strides = array<i32>} : memref<1x1x1024xf32, #tpu.memory_space<vmem>>, vector<1x1x1024xf32>,
    %c0_35 = arith.constant 0 : index
    %c0_36 = arith.constant 0 : index
    %c0_37 = arith.constant 0 : index
    %59 = vector.load %arg9[%c0_35, %c0_36, %c0_37] : memref<1x1x1024xf32, #tpu.memory_space<vmem>>, vector<1x1x1024xf32>
    %60 = vector.shape_cast %59 : vector<1x1x1024xf32> to vector<1x1024xf32>
    %61 = arith.mulf %23, %23 : vector<64x1024xf32>
    %cst_38 = arith.constant dense<0.000000e+00> : vector<1024xf32>
    %62 = vector.multi_reduction <add>, %61, %cst_38 [0] : vector<64x1024xf32> to vector<1024xf32>
    %63 = vector.shape_cast %62 : vector<1024xf32> to vector<1x1024xf32>
    %64 = arith.addf %60, %63 : vector<1x1024xf32>
    %c0_39 = arith.constant 0 : index
    %c0_40 = arith.constant 0 : index
    %c0_41 = arith.constant 0 : index
    %65 = vector.load %arg9[%c0_39, %c0_40, %c0_41] : memref<1x1x1024xf32, #tpu.memory_space<vmem>>, vector<1x1x1024xf32>
    %66 = vector.shape_cast %65 : vector<1x1x1024xf32> to vector<1x1024xf32>
    %67 = vector.shape_cast %64 : vector<1x1024xf32> to vector<1x1x1024xf32>
    tpu.vector_store %arg9[%c0_39, %c0_40, %c0_41], %67 {strides = array<i32>} : memref<1x1x1024xf32, #tpu.memory_space<vmem>>, vector<1x1x1024xf32>,
    return
  }
  func.func @transform_0(%arg0: i32, %arg1: i32) -> (i32, i32, i32) {
    %c0_i32 = arith.constant 0 : i32
    %c0_i32_0 = arith.constant 0 : i32
    return %arg0, %arg1, %c0_i32 : i32, i32, i32
  }
  func.func @transform_1(%arg0: i32, %arg1: i32) -> (i32, i32) {
    %c0_i32 = arith.constant 0 : i32
    %c0_i32_0 = arith.constant 0 : i32
    %c0_i32_1 = arith.constant 0 : i32
    return %c0_i32, %c0_i32_0 : i32, i32
  }
  func.func @transform_2(%arg0: i32, %arg1: i32) -> (i32, i32) {
    %c0_i32 = arith.constant 0 : i32
    %c0_i32_0 = arith.constant 0 : i32
    %c0_i32_1 = arith.constant 0 : i32
    return %c0_i32, %c0_i32_0 : i32, i32
  }
  func.func @transform_3(%arg0: i32, %arg1: i32) -> (i32, i32) {
    %c0_i32 = arith.constant 0 : i32
    %c0_i32_0 = arith.constant 0 : i32
    %c0_i32_1 = arith.constant 0 : i32
    return %c0_i32, %c0_i32_0 : i32, i32
  }
  func.func @transform_4(%arg0: i32, %arg1: i32) -> (i32, i32, i32) {
    %c0_i32 = arith.constant 0 : i32
    %c0_i32_0 = arith.constant 0 : i32
    %c0_i32_1 = arith.constant 0 : i32
    return %arg0, %c0_i32, %c0_i32_0 : i32, i32, i32
  }
  func.func @transform_5(%arg0: i32, %arg1: i32) -> (i32, i32, i32) {
    %c0_i32 = arith.constant 0 : i32
    %c0_i32_0 = arith.constant 0 : i32
    %c0_i32_1 = arith.constant 0 : i32
    return %arg0, %c0_i32, %c0_i32_0 : i32, i32, i32
  }
  func.func @transform_6(%arg0: i32, %arg1: i32) -> (i32, i32, i32) {
    %c0_i32 = arith.constant 0 : i32
    %c0_i32_0 = arith.constant 0 : i32
    %c0_i32_1 = arith.constant 0 : i32
    return %arg0, %c0_i32, %c0_i32_0 : i32, i32, i32
  }
  func.func @transform_7(%arg0: i32, %arg1: i32) -> (i32, i32, i32) {
    %c0_i32 = arith.constant 0 : i32
    %c0_i32_0 = arith.constant 0 : i32
    %c0_i32_1 = arith.constant 0 : i32
    return %arg0, %c0_i32, %c0_i32_0 : i32, i32, i32
  }
}

module attributes {stable_mosaic.version = 11 : i64} {
  func.func @_stn_fc_head_kernel(%arg0: memref<2x1024xf32, #tpu.memory_space<vmem>>, %arg1: memref<1024x512xf32, #tpu.memory_space<vmem>>, %arg2: memref<1x512xf32, #tpu.memory_space<vmem>>, %arg3: memref<1x512xf32, #tpu.memory_space<vmem>>, %arg4: memref<512x256xf32, #tpu.memory_space<vmem>>, %arg5: memref<1x256xf32, #tpu.memory_space<vmem>>, %arg6: memref<1x256xf32, #tpu.memory_space<vmem>>, %arg7: memref<256x9xf32, #tpu.memory_space<vmem>>, %arg8: memref<1x9xf32, #tpu.memory_space<vmem>>, %arg9: memref<2x9xf32, #tpu.memory_space<vmem>>) attributes {dimension_semantics = [], scalar_prefetch = 0 : i64, scratch_operands = 0 : i64, tpu.core_type = #tpu.core_type<tc>} {
    %c0 = arith.constant 0 : index
    %c0_0 = arith.constant 0 : index
    %0 = vector.load %arg0[%c0, %c0_0] : memref<2x1024xf32, #tpu.memory_space<vmem>>, vector<2x1024xf32>
    %c0_1 = arith.constant 0 : index
    %c0_2 = arith.constant 0 : index
    %1 = vector.load %arg1[%c0_1, %c0_2] : memref<1024x512xf32, #tpu.memory_space<vmem>>, vector<1024x512xf32>
    %cst = arith.constant dense<0.000000e+00> : vector<2x512xf32>
    %2 = tpu.matmul %0, %1, %cst {dimension_numbers = #tpu.dot_dimension_numbers<[1], [0], [0], [1], [0, 0, 1, 1], [], []>} : vector<2x1024xf32>, vector<1024x512xf32>, vector<2x512xf32> -> vector<2x512xf32>
    %c0_3 = arith.constant 0 : index
    %c0_4 = arith.constant 0 : index
    %3 = vector.load %arg2[%c0_3, %c0_4] : memref<1x512xf32, #tpu.memory_space<vmem>>, vector<1x512xf32>
    %c0_5 = arith.constant 0 : index
    %c0_6 = arith.constant 0 : index
    %4 = vector.load %arg3[%c0_5, %c0_6] : memref<1x512xf32, #tpu.memory_space<vmem>>, vector<1x512xf32>
    %cst_7 = arith.constant dense<0.000000e+00> : vector<512xf32>
    %5 = vector.multi_reduction <add>, %2, %cst_7 [0] : vector<2x512xf32> to vector<512xf32>
    %6 = vector.shape_cast %5 : vector<512xf32> to vector<1x512xf32>
    %cst_8 = arith.constant 2.000000e+00 : f32
    %7 = vector.broadcast %cst_8 : f32 to vector<1x512xf32>
    %8 = arith.divf %6, %7 : vector<1x512xf32>
    %9 = vector.broadcast %8 : vector<1x512xf32> to vector<2x512xf32>
    %10 = arith.subf %2, %9 : vector<2x512xf32>
    %11 = arith.mulf %10, %10 : vector<2x512xf32>
    %cst_9 = arith.constant dense<0.000000e+00> : vector<512xf32>
    %12 = vector.multi_reduction <add>, %11, %cst_9 [0] : vector<2x512xf32> to vector<512xf32>
    %13 = vector.shape_cast %12 : vector<512xf32> to vector<1x512xf32>
    %cst_10 = arith.constant 2.000000e+00 : f32
    %14 = vector.broadcast %cst_10 : f32 to vector<1x512xf32>
    %15 = arith.divf %13, %14 : vector<1x512xf32>
    %16 = vector.broadcast %8 : vector<1x512xf32> to vector<2x512xf32>
    %17 = arith.subf %2, %16 : vector<2x512xf32>
    %cst_11 = arith.constant 9.99999974E-6 : f32
    %18 = vector.broadcast %cst_11 : f32 to vector<1x512xf32>
    %19 = arith.addf %15, %18 : vector<1x512xf32>
    %20 = math.rsqrt %19 : vector<1x512xf32>
    %21 = vector.broadcast %20 : vector<1x512xf32> to vector<2x512xf32>
    %22 = arith.mulf %17, %21 : vector<2x512xf32>
    %23 = vector.broadcast %3 : vector<1x512xf32> to vector<2x512xf32>
    %24 = arith.mulf %22, %23 : vector<2x512xf32>
    %25 = vector.broadcast %4 : vector<1x512xf32> to vector<2x512xf32>
    %26 = arith.addf %24, %25 : vector<2x512xf32>
    %cst_12 = arith.constant 0.000000e+00 : f32
    %27 = vector.broadcast %cst_12 : f32 to vector<2x512xf32>
    %28 = arith.maximumf %26, %27 : vector<2x512xf32>
    %c0_13 = arith.constant 0 : index
    %c0_14 = arith.constant 0 : index
    %29 = vector.load %arg4[%c0_13, %c0_14] : memref<512x256xf32, #tpu.memory_space<vmem>>, vector<512x256xf32>
    %cst_15 = arith.constant dense<0.000000e+00> : vector<2x256xf32>
    %30 = tpu.matmul %28, %29, %cst_15 {dimension_numbers = #tpu.dot_dimension_numbers<[1], [0], [0], [1], [0, 0, 1, 1], [], []>} : vector<2x512xf32>, vector<512x256xf32>, vector<2x256xf32> -> vector<2x256xf32>
    %c0_16 = arith.constant 0 : index
    %c0_17 = arith.constant 0 : index
    %31 = vector.load %arg5[%c0_16, %c0_17] : memref<1x256xf32, #tpu.memory_space<vmem>>, vector<1x256xf32>
    %c0_18 = arith.constant 0 : index
    %c0_19 = arith.constant 0 : index
    %32 = vector.load %arg6[%c0_18, %c0_19] : memref<1x256xf32, #tpu.memory_space<vmem>>, vector<1x256xf32>
    %cst_20 = arith.constant dense<0.000000e+00> : vector<256xf32>
    %33 = vector.multi_reduction <add>, %30, %cst_20 [0] : vector<2x256xf32> to vector<256xf32>
    %34 = vector.shape_cast %33 : vector<256xf32> to vector<1x256xf32>
    %cst_21 = arith.constant 2.000000e+00 : f32
    %35 = vector.broadcast %cst_21 : f32 to vector<1x256xf32>
    %36 = arith.divf %34, %35 : vector<1x256xf32>
    %37 = vector.broadcast %36 : vector<1x256xf32> to vector<2x256xf32>
    %38 = arith.subf %30, %37 : vector<2x256xf32>
    %39 = arith.mulf %38, %38 : vector<2x256xf32>
    %cst_22 = arith.constant dense<0.000000e+00> : vector<256xf32>
    %40 = vector.multi_reduction <add>, %39, %cst_22 [0] : vector<2x256xf32> to vector<256xf32>
    %41 = vector.shape_cast %40 : vector<256xf32> to vector<1x256xf32>
    %cst_23 = arith.constant 2.000000e+00 : f32
    %42 = vector.broadcast %cst_23 : f32 to vector<1x256xf32>
    %43 = arith.divf %41, %42 : vector<1x256xf32>
    %44 = vector.broadcast %36 : vector<1x256xf32> to vector<2x256xf32>
    %45 = arith.subf %30, %44 : vector<2x256xf32>
    %cst_24 = arith.constant 9.99999974E-6 : f32
    %46 = vector.broadcast %cst_24 : f32 to vector<1x256xf32>
    %47 = arith.addf %43, %46 : vector<1x256xf32>
    %48 = math.rsqrt %47 : vector<1x256xf32>
    %49 = vector.broadcast %48 : vector<1x256xf32> to vector<2x256xf32>
    %50 = arith.mulf %45, %49 : vector<2x256xf32>
    %51 = vector.broadcast %31 : vector<1x256xf32> to vector<2x256xf32>
    %52 = arith.mulf %50, %51 : vector<2x256xf32>
    %53 = vector.broadcast %32 : vector<1x256xf32> to vector<2x256xf32>
    %54 = arith.addf %52, %53 : vector<2x256xf32>
    %cst_25 = arith.constant 0.000000e+00 : f32
    %55 = vector.broadcast %cst_25 : f32 to vector<2x256xf32>
    %56 = arith.maximumf %54, %55 : vector<2x256xf32>
    %c0_26 = arith.constant 0 : index
    %c0_27 = arith.constant 0 : index
    %57 = vector.load %arg7[%c0_26, %c0_27] : memref<256x9xf32, #tpu.memory_space<vmem>>, vector<256x9xf32>
    %cst_28 = arith.constant dense<0.000000e+00> : vector<2x9xf32>
    %58 = tpu.matmul %56, %57, %cst_28 {dimension_numbers = #tpu.dot_dimension_numbers<[1], [0], [0], [1], [0, 0, 1, 1], [], []>} : vector<2x256xf32>, vector<256x9xf32>, vector<2x9xf32> -> vector<2x9xf32>
    %c0_29 = arith.constant 0 : index
    %c0_30 = arith.constant 0 : index
    %59 = vector.load %arg8[%c0_29, %c0_30] : memref<1x9xf32, #tpu.memory_space<vmem>>, vector<1x9xf32>
    %60 = vector.broadcast %59 : vector<1x9xf32> to vector<2x9xf32>
    %61 = arith.addf %58, %60 : vector<2x9xf32>
    %c0_31 = arith.constant 0 : index
    %c0_32 = arith.constant 0 : index
    %62 = vector.load %arg9[%c0_31, %c0_32] : memref<2x9xf32, #tpu.memory_space<vmem>>, vector<2x9xf32>
    tpu.vector_store %arg9[%c0_31, %c0_32], %61 {strides = array<i32>} : memref<2x9xf32, #tpu.memory_space<vmem>>, vector<2x9xf32>,
    return
  }
}

module attributes {stable_mosaic.version = 11 : i64} {
  func.func @_conv_stats_kernel(%arg0: i32, %arg1: i32, %arg2: memref<1x64x3xbf16, #tpu.memory_space<vmem>>, %arg3: memref<1x3x64xbf16, #tpu.memory_space<vmem>>, %arg4: memref<1x3xf32, #tpu.memory_space<vmem>>, %arg5: memref<1x3xf32, #tpu.memory_space<vmem>>, %arg6: memref<1x64x64xbf16, #tpu.memory_space<vmem>>, %arg7: memref<1x1x64xf32, #tpu.memory_space<vmem>>, %arg8: memref<1x1x64xf32, #tpu.memory_space<vmem>>) attributes {dimension_semantics = [#tpu.dimension_semantics<parallel>, #tpu.dimension_semantics<arbitrary>], iteration_bounds = array<i64: 2, 1>, scalar_prefetch = 0 : i64, scratch_operands = 0 : i64, tpu.core_type = #tpu.core_type<tc>, window_params = [{transform_indices = @transform_0, window_bounds = array<i64: 1, 64, 3>}, {transform_indices = @transform_1, window_bounds = array<i64: 1, 3, 64>}, {pipeline_mode = #tpu.pipeline_mode<synchronous>, transform_indices = @transform_2, window_bounds = array<i64: 1, 3>}, {pipeline_mode = #tpu.pipeline_mode<synchronous>, transform_indices = @transform_3, window_bounds = array<i64: 1, 3>}, {transform_indices = @transform_4, window_bounds = array<i64: 1, 64, 64>}, {transform_indices = @transform_5, window_bounds = array<i64: 1, 1, 64>}, {transform_indices = @transform_6, window_bounds = array<i64: 1, 1, 64>}]} {
    %c0 = arith.constant 0 : index
    %c0_0 = arith.constant 0 : index
    %c0_1 = arith.constant 0 : index
    %0 = vector.load %arg2[%c0, %c0_0, %c0_1] : memref<1x64x3xbf16, #tpu.memory_space<vmem>>, vector<1x64x3xbf16>
    %1 = vector.shape_cast %0 : vector<1x64x3xbf16> to vector<64x3xbf16>
    %c0_2 = arith.constant 0 : index
    %c0_3 = arith.constant 0 : index
    %c0_4 = arith.constant 0 : index
    %2 = vector.load %arg3[%c0_2, %c0_3, %c0_4] : memref<1x3x64xbf16, #tpu.memory_space<vmem>>, vector<1x3x64xbf16>
    %3 = vector.shape_cast %2 : vector<1x3x64xbf16> to vector<3x64xbf16>
    %cst = arith.constant dense<0.000000e+00> : vector<64x64xf32>
    %4 = tpu.matmul %1, %3, %cst {dimension_numbers = #tpu.dot_dimension_numbers<[1], [0], [0], [1], [0, 0, 1, 1], [], []>} : vector<64x3xbf16>, vector<3x64xbf16>, vector<64x64xf32> -> vector<64x64xf32>
    %5 = arith.truncf %4 : vector<64x64xf32> to vector<64x64xbf16>
    %c0_5 = arith.constant 0 : index
    %c0_6 = arith.constant 0 : index
    %c0_7 = arith.constant 0 : index
    %6 = vector.load %arg6[%c0_5, %c0_6, %c0_7] : memref<1x64x64xbf16, #tpu.memory_space<vmem>>, vector<1x64x64xbf16>
    %7 = vector.shape_cast %6 : vector<1x64x64xbf16> to vector<64x64xbf16>
    %8 = vector.shape_cast %5 : vector<64x64xbf16> to vector<1x64x64xbf16>
    tpu.vector_store %arg6[%c0_5, %c0_6, %c0_7], %8 {strides = array<i32>} : memref<1x64x64xbf16, #tpu.memory_space<vmem>>, vector<1x64x64xbf16>,
    %9 = tpu.iota {dimensions = array<i32: 0>} : vector<64x1xi32>
    %c64_i32 = arith.constant 64 : i32
    %10 = arith.muli %arg1, %c64_i32 : i32
    %11 = vector.broadcast %10 : i32 to vector<64x1xi32>
    %12 = arith.addi %9, %11 : vector<64x1xi32>
    %c64_i32_8 = arith.constant 64 : i32
    %13 = vector.broadcast %c64_i32_8 : i32 to vector<64x1xi32>
    %14 = arith.cmpi slt, %12, %13 : vector<64x1xi32>
    %cst_9 = arith.constant 0.000000e+00 : f32
    %15 = vector.shape_cast %14 : vector<64x1xi1> to vector<64x1xi1>
    %16 = vector.broadcast %15 : vector<64x1xi1> to vector<64x64xi1>
    %17 = vector.broadcast %cst_9 : f32 to vector<64x64xf32>
    %18 = arith.select %16, %4, %17 : vector<64x64xi1>, vector<64x64xf32>
    %c0_i32 = arith.constant 0 : i32
    %19 = arith.cmpi eq, %arg1, %c0_i32 : i32
    %20 = arith.extui %19 : i1 to i32
    %c0_i32_10 = arith.constant 0 : i32
    %21 = arith.cmpi ne, %20, %c0_i32_10 : i32
    scf.if %21 {
      %cst_25 = arith.constant 0.000000e+00 : f32
      %39 = vector.broadcast %cst_25 : f32 to vector<1x1x64xf32>
      %c0_26 = arith.constant 0 : index
      %c0_27 = arith.constant 0 : index
      %c0_28 = arith.constant 0 : index
      %40 = vector.load %arg7[%c0_26, %c0_27, %c0_28] : memref<1x1x64xf32, #tpu.memory_space<vmem>>, vector<1x1x64xf32>
      tpu.vector_store %arg7[%c0_26, %c0_27, %c0_28], %39 {strides = array<i32>} : memref<1x1x64xf32, #tpu.memory_space<vmem>>, vector<1x1x64xf32>,
      %cst_29 = arith.constant 0.000000e+00 : f32
      %41 = vector.broadcast %cst_29 : f32 to vector<1x1x64xf32>
      %c0_30 = arith.constant 0 : index
      %c0_31 = arith.constant 0 : index
      %c0_32 = arith.constant 0 : index
      %42 = vector.load %arg8[%c0_30, %c0_31, %c0_32] : memref<1x1x64xf32, #tpu.memory_space<vmem>>, vector<1x1x64xf32>
      tpu.vector_store %arg8[%c0_30, %c0_31, %c0_32], %41 {strides = array<i32>} : memref<1x1x64xf32, #tpu.memory_space<vmem>>, vector<1x1x64xf32>,
    } else {
    }
    %c0_11 = arith.constant 0 : index
    %c0_12 = arith.constant 0 : index
    %c0_13 = arith.constant 0 : index
    %22 = vector.load %arg7[%c0_11, %c0_12, %c0_13] : memref<1x1x64xf32, #tpu.memory_space<vmem>>, vector<1x1x64xf32>
    %23 = vector.shape_cast %22 : vector<1x1x64xf32> to vector<1x64xf32>
    %cst_14 = arith.constant dense<0.000000e+00> : vector<64xf32>
    %24 = vector.multi_reduction <add>, %18, %cst_14 [0] : vector<64x64xf32> to vector<64xf32>
    %25 = vector.shape_cast %24 : vector<64xf32> to vector<1x64xf32>
    %26 = arith.addf %23, %25 : vector<1x64xf32>
    %c0_15 = arith.constant 0 : index
    %c0_16 = arith.constant 0 : index
    %c0_17 = arith.constant 0 : index
    %27 = vector.load %arg7[%c0_15, %c0_16, %c0_17] : memref<1x1x64xf32, #tpu.memory_space<vmem>>, vector<1x1x64xf32>
    %28 = vector.shape_cast %27 : vector<1x1x64xf32> to vector<1x64xf32>
    %29 = vector.shape_cast %26 : vector<1x64xf32> to vector<1x1x64xf32>
    tpu.vector_store %arg7[%c0_15, %c0_16, %c0_17], %29 {strides = array<i32>} : memref<1x1x64xf32, #tpu.memory_space<vmem>>, vector<1x1x64xf32>,
    %c0_18 = arith.constant 0 : index
    %c0_19 = arith.constant 0 : index
    %c0_20 = arith.constant 0 : index
    %30 = vector.load %arg8[%c0_18, %c0_19, %c0_20] : memref<1x1x64xf32, #tpu.memory_space<vmem>>, vector<1x1x64xf32>
    %31 = vector.shape_cast %30 : vector<1x1x64xf32> to vector<1x64xf32>
    %32 = arith.mulf %18, %18 : vector<64x64xf32>
    %cst_21 = arith.constant dense<0.000000e+00> : vector<64xf32>
    %33 = vector.multi_reduction <add>, %32, %cst_21 [0] : vector<64x64xf32> to vector<64xf32>
    %34 = vector.shape_cast %33 : vector<64xf32> to vector<1x64xf32>
    %35 = arith.addf %31, %34 : vector<1x64xf32>
    %c0_22 = arith.constant 0 : index
    %c0_23 = arith.constant 0 : index
    %c0_24 = arith.constant 0 : index
    %36 = vector.load %arg8[%c0_22, %c0_23, %c0_24] : memref<1x1x64xf32, #tpu.memory_space<vmem>>, vector<1x1x64xf32>
    %37 = vector.shape_cast %36 : vector<1x1x64xf32> to vector<1x64xf32>
    %38 = vector.shape_cast %35 : vector<1x64xf32> to vector<1x1x64xf32>
    tpu.vector_store %arg8[%c0_22, %c0_23, %c0_24], %38 {strides = array<i32>} : memref<1x1x64xf32, #tpu.memory_space<vmem>>, vector<1x1x64xf32>,
    return
  }
  func.func @transform_0(%arg0: i32, %arg1: i32) -> (i32, i32, i32) {
    %c0_i32 = arith.constant 0 : i32
    %c0_i32_0 = arith.constant 0 : i32
    return %arg0, %arg1, %c0_i32 : i32, i32, i32
  }
  func.func @transform_1(%arg0: i32, %arg1: i32) -> (i32, i32, i32) {
    %c0_i32 = arith.constant 0 : i32
    %c0_i32_0 = arith.constant 0 : i32
    %c0_i32_1 = arith.constant 0 : i32
    return %arg0, %c0_i32, %c0_i32_0 : i32, i32, i32
  }
  func.func @transform_2(%arg0: i32, %arg1: i32) -> (i32, i32) {
    %c0_i32 = arith.constant 0 : i32
    %c0_i32_0 = arith.constant 0 : i32
    %c0_i32_1 = arith.constant 0 : i32
    return %c0_i32, %c0_i32_0 : i32, i32
  }
  func.func @transform_3(%arg0: i32, %arg1: i32) -> (i32, i32) {
    %c0_i32 = arith.constant 0 : i32
    %c0_i32_0 = arith.constant 0 : i32
    %c0_i32_1 = arith.constant 0 : i32
    return %c0_i32, %c0_i32_0 : i32, i32
  }
  func.func @transform_4(%arg0: i32, %arg1: i32) -> (i32, i32, i32) {
    %c0_i32 = arith.constant 0 : i32
    %c0_i32_0 = arith.constant 0 : i32
    return %arg0, %arg1, %c0_i32 : i32, i32, i32
  }
  func.func @transform_5(%arg0: i32, %arg1: i32) -> (i32, i32, i32) {
    %c0_i32 = arith.constant 0 : i32
    %c0_i32_0 = arith.constant 0 : i32
    %c0_i32_1 = arith.constant 0 : i32
    return %arg0, %c0_i32, %c0_i32_0 : i32, i32, i32
  }
  func.func @transform_6(%arg0: i32, %arg1: i32) -> (i32, i32, i32) {
    %c0_i32 = arith.constant 0 : i32
    %c0_i32_0 = arith.constant 0 : i32
    %c0_i32_1 = arith.constant 0 : i32
    return %arg0, %c0_i32, %c0_i32_0 : i32, i32, i32
  }
}

</mosaic_0001>

<llo_original>
// kernel: pointnet_encoder_forward.8
$region0: #{pointnet_encoder_forward.8}
  #allocation0 [shape = 'u32[]', space=smem, size = 0x4, offset = 0x4, fixed_abs, tag = 'smem constant byte address 0x4 - core index']
  #allocation1 [shape = 'u32[144,128]{1,0:T(1,128)}', space=vmem, size = 0x12000, scoped, tag = 'internal scratch']
  %s0 = inlined_call_operand.vmem [shape: bf16[2,64,64], index: 0, kind: input, shape index: {}]
  %s1 = inlined_call_operand.vmem [shape: bf16[64,128], index: 1, kind: input, shape index: {}]
  %s2 = inlined_call_operand.vmem [shape: f32[1,64], index: 2, kind: input, shape index: {}]
  %s3 = inlined_call_operand.vmem [shape: f32[1,64], index: 3, kind: input, shape index: {}]
  %s4 = inlined_call_operand.vmem [shape: bf16[2,64,128], index: 4, kind: output, shape index: {0}]
  %s5 = inlined_call_operand.vmem [shape: f32[2,1,128], index: 5, kind: output, shape index: {1}]
  %s6 = inlined_call_operand.vmem [shape: f32[2,1,128], index: 6, kind: output, shape index: {2}]
  %7 = xla_tuple %s4, %s5, %s6
  %s8 = sld [smem:[#allocation0]]
  $region69: #{pointnet_encoder_forward.8} parent=0
    _
  %s10 = ssub.s32 1, %s8
  %s11 = scalar_select 0, %s10, %s8
  loop: start=0, step=1, limit=4
  $region2: #{pointnet_encoder_forward.8} parent=0 // loop_pre_header
    _
  $region3: #{pointnet_encoder_forward.8} parent=0 // loop_header
    %s13 = sphi 0, %s17
    %p14 = scmp.ge.s32.totalorder %s13, 4
    %s20 = sphi 0, %s32
    %s21 = sphi 0, %s28
    %s22 = sphi 0, %s20
    %s23 = sphi 0, %s21
    %s24 = sphi 0, %s22
    %s25 = sphi 0, %s23
    %s37 = sphi 0, %s39
    %s40 = sphi 0, %s37
    %s41 = sphi 0, %s40
    %s57 = sphi 0, %s41
    %s61 = sphi 0, %s61
    %s63 = sphi 0, %s61
    %s64 = sphi 0, %s63
    %s78 = sphi 0, %s64
    %s82 = sphi 0, %s82
    %s84 = sphi 0, %s82
    %s85 = sphi 0, %s84
    %s99 = sphi 0, %s85
    %s103 = sphi 0, %s103
    %s105 = sphi 0, %s103
    %s106 = sphi 0, %s105
    %s120 = sphi 0, %s106
    %s128 = sphi 0, %s130
    %s131 = sphi 0, %s128
    %s132 = sphi 0, %s131
    %s148 = sphi 0, %s132
    %s154 = sphi 0, %s156
    %s157 = sphi 0, %s154
    %s158 = sphi 0, %s157
    %s174 = sphi 0, %s158
    %s180 = sphi 0, %s182
    %s183 = sphi 0, %s180
    %s184 = sphi 0, %s183
    %s200 = sphi 0, %s184
  $region4: #{pointnet_encoder_forward.8} parent=0 // loop_header_branch
    %16 = sbr.rel (%p14) target = $region8
  $region5: #{pointnet_encoder_forward.8} parent=0 // loop_body
    %s18 = ssub.s32 %s13, 1
    %s19 = ssub.s32 %s13, 2
    %s26 = sadd.s32 1, %s21
    %p27 = scmp.ge.s32.totalorder %s26, 1
    %s28 = scalar_select %p27, 0, %s26
    %s29 = sadd.s32 1, %s20
    %s30 = scalar_select %p27, %s29, %s20
    %p31 = scmp.ge.s32.totalorder %s30, 2
    %s32 = scalar_select %p31, 0, %s30
    %s33 = ssub.s32 %s20, %s32
    %s34 = ssub.s32 %s21, %s28
    %s35 = sor.u32 %s33, %s34
    %p36 = scmp.eq.s32.totalorder %s35, 0
    %s38 = sadd.s32 %s37, 1
    %s39 = scalar_select %p36, %s37, %s38
    %p42 = pneg %p36
    %p43 = scmp.eq.s32.totalorder %s13, 1
    %p44 = por %p42, %p43
    %p45 = scmp.ne.s32.totalorder %s37, %s40
    %p46 = scmp.eq.s32.totalorder %s13, 0
    %p47 = por %p45, %p46
    %p48 = scmp.ne.s32.totalorder %s37, %s40
    %p49 = scmp.eq.s32.totalorder %s18, 1
    %p50 = por %p48, %p49
    %p51 = scmp.ne.s32.totalorder %s40, %s41
    %p52 = scmp.eq.s32.totalorder %s18, 0
    %p53 = por %p51, %p52
    %p54 = scmp.ne.s32.totalorder %s40, %s41
    %p55 = scmp.eq.s32.totalorder %s19, 1
    %p56 = por %p54, %p55
    %p58 = scmp.ne.s32.totalorder %s41, %s57
    %p59 = scmp.eq.s32.totalorder %s19, 0
    %p60 = por %p58, %p59
    %s62 = sadd.s32 %s61, 1
    %p65 = scmp.eq.s32.totalorder %s13, 1
    %p66 = scmp.ne.s32.totalorder %s61, %s63
    %p67 = scmp.eq.s32.totalorder %s13, 0
    %p68 = por %p66, %p67
    %p69 = scmp.ne.s32.totalorder %s61, %s63
    %p70 = scmp.eq.s32.totalorder %s18, 1
    %p71 = por %p69, %p70
    %p72 = scmp.ne.s32.totalorder %s63, %s64
    %p73 = scmp.eq.s32.totalorder %s18, 0
    %p74 = por %p72, %p73
    %p75 = scmp.ne.s32.totalorder %s63, %s64
    %p76 = scmp.eq.s32.totalorder %s19, 1
    %p77 = por %p75, %p76
    %p79 = scmp.ne.s32.totalorder %s64, %s78
    %p80 = scmp.eq.s32.totalorder %s19, 0
    %p81 = por %p79, %p80
    %s83 = sadd.s32 %s82, 1
    %p86 = scmp.eq.s32.totalorder %s13, 1
    %p87 = scmp.ne.s32.totalorder %s82, %s84
    %p88 = scmp.eq.s32.totalorder %s13, 0
    %p89 = por %p87, %p88
    %p90 = scmp.ne.s32.totalorder %s82, %s84
    %p91 = scmp.eq.s32.totalorder %s18, 1
    %p92 = por %p90, %p91
    %p93 = scmp.ne.s32.totalorder %s84, %s85
    %p94 = scmp.eq.s32.totalorder %s18, 0
    %p95 = por %p93, %p94
    %p96 = scmp.ne.s32.totalorder %s84, %s85
    %p97 = scmp.eq.s32.totalorder %s19, 1
    %p98 = por %p96, %p97
    %p100 = scmp.ne.s32.totalorder %s85, %s99
    %p101 = scmp.eq.s32.totalorder %s19, 0
    %p102 = por %p100, %p101
    %s104 = sadd.s32 %s103, 1
    %p107 = scmp.eq.s32.totalorder %s13, 1
    %p108 = scmp.ne.s32.totalorder %s103, %s105
    %p109 = scmp.eq.s32.totalorder %s13, 0
    %p110 = por %p108, %p109
    %p111 = scmp.ne.s32.totalorder %s103, %s105
    %p112 = scmp.eq.s32.totalorder %s18, 1
    %p113 = por %p111, %p112
    %p114 = scmp.ne.s32.totalorder %s105, %s106
    %p115 = scmp.eq.s32.totalorder %s18, 0
    %p116 = por %p114, %p115
    %p117 = scmp.ne.s32.totalorder %s105, %s106
    %p118 = scmp.eq.s32.totalorder %s19, 1
    %p119 = por %p117, %p118
    %p121 = scmp.ne.s32.totalorder %s106, %s120
    %p122 = scmp.eq.s32.totalorder %s19, 0
    %p123 = por %p121, %p122
    %s124 = ssub.s32 %s20, %s32
    %s125 = ssub.s32 %s21, %s28
    %s126 = sor.u32 %s124, %s125
    %p127 = scmp.eq.s32.totalorder %s126, 0
    %s129 = sadd.s32 %s128, 1
    %s130 = scalar_select %p127, %s128, %s129
    %p133 = pneg %p127
    %p134 = scmp.eq.s32.totalorder %s13, 1
    %p135 = por %p133, %p134
    %p136 = scmp.ne.s32.totalorder %s128, %s131
    %p137 = scmp.eq.s32.totalorder %s13, 0
    %p138 = por %p136, %p137
    %p139 = scmp.ne.s32.totalorder %s128, %s131
    %p140 = scmp.eq.s32.totalorder %s18, 1
    %p141 = por %p139, %p140
    %p142 = scmp.ne.s32.totalorder %s131, %s132
    %p143 = scmp.eq.s32.totalorder %s18, 0
    %p144 = por %p142, %p143
    %p145 = scmp.ne.s32.totalorder %s131, %s132
    %p146 = scmp.eq.s32.totalorder %s19, 1
    %p147 = por %p145, %p146
    %p149 = scmp.ne.s32.totalorder %s132, %s148
    %p150 = scmp.eq.s32.totalorder %s19, 0
    %p151 = por %p149, %p150
    %s152 = ssub.s32 %s20, %s32
    %p153 = scmp.eq.s32.totalorder %s152, 0
    %s155 = sadd.s32 %s154, 1
    %s156 = scalar_select %p153, %s154, %s155
    %p159 = pneg %p153
    %p160 = scmp.eq.s32.totalorder %s13, 1
    %p161 = por %p159, %p160
    %p162 = scmp.ne.s32.totalorder %s154, %s157
    %p163 = scmp.eq.s32.totalorder %s13, 0
    %p164 = por %p162, %p163
    %p165 = scmp.ne.s32.totalorder %s154, %s157
    %p166 = scmp.eq.s32.totalorder %s18, 1
    %p167 = por %p165, %p166
    %p168 = scmp.ne.s32.totalorder %s157, %s158
    %p169 = scmp.eq.s32.totalorder %s18, 0
    %p170 = por %p168, %p169
    %p171 = scmp.ne.s32.totalorder %s157, %s158
    %p172 = scmp.eq.s32.totalorder %s19, 1
    %p173 = por %p171, %p172
    %p175 = scmp.ne.s32.totalorder %s158, %s174
    %p176 = scmp.eq.s32.totalorder %s19, 0
    %p177 = por %p175, %p176
    %s178 = ssub.s32 %s20, %s32
    %p179 = scmp.eq.s32.totalorder %s178, 0
    %s181 = sadd.s32 %s180, 1
    %s182 = scalar_select %p179, %s180, %s181
    %p185 = pneg %p179
    %p186 = scmp.eq.s32.totalorder %s13, 1
    %p187 = por %p185, %p186
    %p188 = scmp.ne.s32.totalorder %s180, %s183
    %p189 = scmp.eq.s32.totalorder %s13, 0
    %p190 = por %p188, %p189
    %p191 = scmp.ne.s32.totalorder %s180, %s183
    %p192 = scmp.eq.s32.totalorder %s18, 1
    %p193 = por %p191, %p192
    %p194 = scmp.ne.s32.totalorder %s183, %s184
    %p195 = scmp.eq.s32.totalorder %s18, 0
    %p196 = por %p194, %p195
    %p197 = scmp.ne.s32.totalorder %s183, %s184
    %p198 = scmp.eq.s32.totalorder %s19, 1
    %p199 = por %p197, %p198
    %p201 = scmp.ne.s32.totalorder %s184, %s200
    %p202 = scmp.eq.s32.totalorder %s19, 0
    %p203 = por %p201, %p202
    %p204 = scmp.le.s32.totalorder 1, %s13
    %p205 = scmp.lt.s32.totalorder %s13, 3
    %p206 = pnand %p204, %p205
    %p207 = pneg %p206
    // Predicated region
    $region9: #{pointnet_encoder_forward.8} parent=5 // pred_check
      _
    $region10: #{pointnet_encoder_forward.8} parent=5 // pred_check_branch
      %209 = sbr.rel (%p206) target = $region12
    $region11: #{pointnet_encoder_forward.8} parent=5 // pred_region
      %s210 = ssub.s32 %s13, 1
      // Predicated region
      $region13: #{pointnet_encoder_forward.8} parent=11 // pred_check
        %p211 = pneg %p74
      $region14: #{pointnet_encoder_forward.8} parent=11 // pred_check_branch
        %213 = sbr.rel (%p211) target = $region16
      $region15: #{pointnet_encoder_forward.8} parent=11 // pred_region
        _
      $region16: #{pointnet_encoder_forward.8} parent=11 // pred_fallthru
        _
      // Predicated region
      $region17: #{pointnet_encoder_forward.8} parent=11 // pred_check
        %p214 = pneg %p95
      $region18: #{pointnet_encoder_forward.8} parent=11 // pred_check_branch
        %216 = sbr.rel (%p214) target = $region20
      $region19: #{pointnet_encoder_forward.8} parent=11 // pred_region
        _
      $region20: #{pointnet_encoder_forward.8} parent=11 // pred_fallthru
        _
      // Predicated region
      $region21: #{pointnet_encoder_forward.8} parent=11 // pred_check
        %p217 = pneg %p116
      $region22: #{pointnet_encoder_forward.8} parent=11 // pred_check_branch
        %219 = sbr.rel (%p217) target = $region24
      $region23: #{pointnet_encoder_forward.8} parent=11 // pred_region
        _
      $region24: #{pointnet_encoder_forward.8} parent=11 // pred_fallthru
        _
    $region12: #{pointnet_encoder_forward.8} parent=5 // pred_fallthru
      _
    %p220 = scmp.lt.s32.totalorder %s13, 2
    // Predicated region
    $region25: #{pointnet_encoder_forward.8} parent=5 // pred_check
      %p221 = pneg %p220
    $region26: #{pointnet_encoder_forward.8} parent=5 // pred_check_branch
      %223 = sbr.rel (%p221) target = $region28
    $region27: #{pointnet_encoder_forward.8} parent=5 // pred_region
      // Predicated region
      $region29: #{pointnet_encoder_forward.8} parent=27 // pred_check
        %p224 = pneg %p47
      $region30: #{pointnet_encoder_forward.8} parent=27 // pred_check_branch
        %226 = sbr.rel (%p224) target = $region32
      $region31: #{pointnet_encoder_forward.8} parent=27 // pred_region
        %s227 = smul.u32 8, %s21
        %p228 = scmp.lt.s32.totalorder %s20, 1
        %s229 = scalar_select %p228, %s20, 1
        %p230 = scmp.lt.s32.totalorder %s227, 7
        %s231 = scalar_select %p230, %s227, 7
        %s232 = smul.addr %s229, 8
        %s233 = sadd.s32 %s231, %s232
        %s234 = smul.addr %s233, 4
        %s235 = scalar_lea.vmem %s0, %s234
        %s236 = smul.u32 8, %s21
      $region32: #{pointnet_encoder_forward.8} parent=27 // pred_fallthru
        _
    $region28: #{pointnet_encoder_forward.8} parent=5 // pred_fallthru
      _
    %p237 = scmp.le.s32.totalorder 1, %s13
    %p238 = scmp.lt.s32.totalorder %s13, 3
    %p239 = pnand %p237, %p238
    %p240 = pneg %p239
    // Predicated region
    $region33: #{pointnet_encoder_forward.8} parent=5 // pred_check
      _
    $region34: #{pointnet_encoder_forward.8} parent=5 // pred_check_branch
      %242 = sbr.rel (%p239) target = $region36
    $region35: #{pointnet_encoder_forward.8} parent=5 // pred_region
      %s243 = ssub.s32 %s13, 1
      %s244 = smul.u32 8, %s23
      %p245 = scmp.lt.s32.totalorder %s22, 1
      %s246 = scalar_select %p245, %s22, 1
      %p247 = scmp.lt.s32.totalorder %s244, 7
      %s248 = scalar_select %p247, %s244, 7
      %s249 = smul.addr %s246, 8
      %s250 = sadd.s32 %s248, %s249
      %s251 = smul.addr %s250, 4
      %s252 = scalar_lea.vmem %s0, %s251
      %p253 = pneg %p53
      %p254 = pneg %p50
      %p255 = pneg %p74
      %p256 = pneg %p71
      %p257 = pneg %p95
      %p258 = pneg %p92
      %p259 = pneg %p116
      %p260 = pneg %p113
      %p261 = pneg %p144
      %p262 = pneg %p141
      %s263 = smul.u32 8, %s23
      %p264 = scmp.lt.s32.totalorder %s22, 1
      %s265 = scalar_select %p264, %s22, 1
      %p266 = scmp.lt.s32.totalorder %s263, 7
      %s267 = scalar_select %p266, %s263, 7
      %s268 = smul.addr %s265, 8
      %s269 = sadd.s32 %s267, %s268
      %s270 = smul.addr %s269, 4
      %s271 = scalar_lea.vmem %s4, %s270
      %p272 = pneg %p170
      %p273 = pneg %p167
      %p274 = scmp.lt.s32.totalorder %s22, 1
      %s275 = scalar_select %p274, %s22, 1
      %s276 = scalar_lea.vmem %s5, %s275
      %p277 = pneg %p196
      %p278 = pneg %p193
      %p279 = scmp.lt.s32.totalorder %s22, 1
      %s280 = scalar_select %p279, %s22, 1
      %s281 = scalar_lea.vmem %s6, %s280
      %s282 = smul.u32 8, %s23
      %p283 = scmp.lt.s32.totalorder %s22, 1
      %s284 = scalar_select %p283, %s22, 1
      %p285 = scmp.lt.s32.totalorder %s282, 7
      %s286 = scalar_select %p285, %s282, 7
      %s287 = smul.addr %s284, 8
      %s288 = sadd.s32 %s286, %s287
      %s289 = smul.addr %s288, 4
      %s290 = scalar_lea.vmem %s0, %s289
      %s291 = smul.u32 8, %s23
      %s292 = smul.u32 8, %s23
      %p293 = scmp.lt.s32.totalorder %s22, 1
      %s294 = scalar_select %p293, %s22, 1
      %p295 = scmp.lt.s32.totalorder %s292, 7
      %s296 = scalar_select %p295, %s292, 7
      %s297 = smul.addr %s294, 8
      %s298 = sadd.s32 %s296, %s297
      %s299 = smul.addr %s298, 4
      %s300 = scalar_lea.vmem %s4, %s299
      %s301 = smul.u32 8, %s23
      %p302 = scmp.lt.s32.totalorder %s22, 1
      %s303 = scalar_select %p302, %s22, 1
      %s304 = scalar_lea.vmem %s5, %s303
      %p305 = scmp.lt.s32.totalorder %s22, 1
      %s306 = scalar_select %p305, %s22, 1
      %s307 = scalar_lea.vmem %s6, %s306
      %v309 = vld [vmem:[%s290] sm:$0xf]
      %v310 = vld [vmem:[%s290 + $0x4] sm:$0xf]
      %v311 = vld [vmem:[%s290 + $0x8] sm:$0xf]
      %v312 = vld [vmem:[%s290 + $0xc] sm:$0xf]
      %v313 = vld [vmem:[%s290 + $0x10] sm:$0xf]
      %v314 = vld [vmem:[%s290 + $0x14] sm:$0xf]
      %v315 = vld [vmem:[%s290 + $0x18] sm:$0xf]
      %v316 = vld [vmem:[%s290 + $0x1c] sm:$0xf]
      %v317 = vunpack.c.l.bf16 %v309
      %v318 = vunpack.c.l.bf16 %v310
      %v319 = vunpack.c.l.bf16 %v311
      %v320 = vunpack.c.l.bf16 %v312
      %v321 = vunpack.c.l.bf16 %v313
      %v322 = vunpack.c.l.bf16 %v314
      %v323 = vunpack.c.l.bf16 %v315
      %v324 = vunpack.c.l.bf16 %v316
      %v325 = vld [vmem:[%s2] sm:$0x1]
      %v327 = vlaneseq
      %v328 = vshrl.u32 %v327, 7
      %v329 = vsub.s32 0, %v328
      %v330 = vrot.slane %v325, %v329
      %v332 = vmul.f32 %v317, %v330
      %v333 = vmul.f32 %v318, %v330
      %v334 = vmul.f32 %v319, %v330
      %v335 = vmul.f32 %v320, %v330
      %v336 = vmul.f32 %v321, %v330
      %v337 = vmul.f32 %v322, %v330
      %v338 = vmul.f32 %v323, %v330
      %v339 = vmul.f32 %v324, %v330
      %v340 = vld [vmem:[%s3] sm:$0x1]
      %v342 = vlaneseq
      %v343 = vshrl.u32 %v342, 7
      %v344 = vsub.s32 0, %v343
      %v345 = vrot.slane %v340, %v344
      %v347 = vadd.f32 %v332, %v345
      %v348 = vadd.f32 %v333, %v345
      %v349 = vadd.f32 %v334, %v345
      %v350 = vadd.f32 %v335, %v345
      %v351 = vadd.f32 %v336, %v345
      %v352 = vadd.f32 %v337, %v345
      %v353 = vadd.f32 %v338, %v345
      %v354 = vadd.f32 %v339, %v345
      %v355 = vmax.f32 %v347, 0.0
      %v356 = vmax.f32 %v348, 0.0
      %v357 = vmax.f32 %v349, 0.0
      %v358 = vmax.f32 %v350, 0.0
      %v359 = vmax.f32 %v351, 0.0
      %v360 = vmax.f32 %v352, 0.0
      %v361 = vmax.f32 %v353, 0.0
      %v362 = vmax.f32 %v354, 0.0
      %v363 = vpack.c.bf16 %v356, %v355
      %v364 = vpack.c.bf16 %v358, %v357
      %v365 = vpack.c.bf16 %v360, %v359
      %v366 = vpack.c.bf16 %v362, %v361
      %v367 = vld [vmem:[%s1] sm:$0xf]
      %v368 = vld [vmem:[%s1 + $0x4] sm:$0xf]
      %v369 = vld [vmem:[%s1 + $0x8] sm:$0xf]
      %v370 = vld [vmem:[%s1 + $0xc] sm:$0xf]
      %v371 = vld [vmem:[%s1 + $0x10] sm:$0xf]
      %v372 = vld [vmem:[%s1 + $0x14] sm:$0xf]
      %v373 = vld [vmem:[%s1 + $0x18] sm:$0xf]
      %v374 = vld [vmem:[%s1 + $0x1c] sm:$0xf]
      %v383 = vunpack.c.l.b16 %v367
      %v384 = vunpack.c.l.b16 %v368
      %v385 = vunpack.c.l.b16 %v369
      %v386 = vunpack.c.l.b16 %v370
      %v387 = vunpack.c.l.b16 %v371
      %v388 = vunpack.c.l.b16 %v372
      %v389 = vunpack.c.l.b16 %v373
      %v390 = vunpack.c.l.b16 %v374
      %v391 = vpack.c.b16 %v384, %v383
      %v392 = vpack.c.b16 %v386, %v385
      %v393 = vpack.c.b16 %v388, %v387
      %v394 = vpack.c.b16 %v390, %v389
      %vm399 = vcmask 523264
      %v401 = vsel %vm399, %v363, 0
      %v404 = vsel %vm399, %v364, 0
      %v407 = vsel %vm399, %v365, 0
      %v410 = vsel %vm399, %v366, 0
      %412 = vmatprep.subr.bf16.mxu0 0
      %413 = vmatpush1.bf16.msra.mxu0 0
      %414 = vmatprep.subr.bf16.mxu0 0
      %415 = vmatpush1.bf16.msra.mxu0 0
      %416 = vmatprep.subr.bf16.mxu0 0
      %417 = vmatpush1.bf16.msra.mxu0 0
      %418 = vmatprep.subr.bf16.mxu0 0
      %419 = vmatpush1.bf16.msra.mxu0 0
      %420 = vmatprep.subr.bf16.mxu0 0
      %421 = vmatpush1.bf16.msra.mxu0 %v394
      %422 = vmatprep.subr.bf16.mxu0 0
      %423 = vmatpush1.bf16.msra.mxu0 %v393
      %424 = vmatprep.subr.bf16.mxu0 0
      %425 = vmatpush1.bf16.msra.mxu0 %v392
      %426 = vmatprep.subr.bf16.mxu0 0
      %427 = vmatpush1.bf16.msra.mxu0 %v391
      %428 = vmatprep.subr.bf16.mxu0 0
      %429 = vmatpush2.bf16.msra.mxu0 0
      %430 = vmatprep.subr.bf16.mxu0 0
      %431 = vmatpush2.bf16.msra.mxu0 0
      %432 = vmatprep.subr.bf16.mxu0 0
      %433 = vmatpush2.bf16.msra.mxu0 0
      %434 = vmatprep.subr.bf16.mxu0 0
      %435 = vmatpush2.bf16.msra.mxu0 0
      %436 = vmatprep.subr.bf16.mxu0 0
      %437 = vmatpush2.bf16.msra.mxu0 0
      %438 = vmatprep.subr.bf16.mxu0 0
      %439 = vmatpush2.bf16.msra.mxu0 0
      %440 = vmatprep.subr.bf16.mxu0 0
      %441 = vmatpush2.bf16.msra.mxu0 0
      %442 = vmatprep.subr.bf16.mxu0 0
      %443 = vmatpush2.bf16.msra.mxu0 0
      %444 = vmatprep.mubr.bf16.mxu0 0
      %445 = vmatmul.mubr.bf16.gmra.mxu0 %v401
      %v446 = vpop.f32.mrf.mxu0
      %v447 = vadd.f32 0.0, %v446
      %v448 = vpop.f32.mrf.mxu0
      %v449 = vpop.f32.mrf.mxu0
      %v450 = vadd.f32 0.0, %v449
      %v451 = vpop.f32.mrf.mxu0
      %452 = vmatprep.mubr.bf16.mxu0 0
      %453 = vmatmul.mubr.bf16.gmra.mxu0 %v404
      %v454 = vpop.f32.mrf.mxu0
      %v455 = vadd.f32 0.0, %v454
      %v456 = vpop.f32.mrf.mxu0
      %v457 = vpop.f32.mrf.mxu0
      %v458 = vadd.f32 0.0, %v457
      %v459 = vpop.f32.mrf.mxu0
      %460 = vmatprep.mubr.bf16.mxu0 0
      %461 = vmatmul.mubr.bf16.gmra.mxu0 %v407
      %v462 = vpop.f32.mrf.mxu0
      %v463 = vadd.f32 0.0, %v462
      %v464 = vpop.f32.mrf.mxu0
      %v465 = vpop.f32.mrf.mxu0
      %v466 = vadd.f32 0.0, %v465
      %v467 = vpop.f32.mrf.mxu0
      %468 = vmatprep.mubr.bf16.mxu0 0
      %469 = vmatmul.mubr.bf16.gmra.mxu0 %v410
      %v470 = vpop.f32.mrf.mxu0
      %v471 = vadd.f32 0.0, %v470
      %v472 = vpop.f32.mrf.mxu0
      %v473 = vpop.f32.mrf.mxu0
      %v474 = vadd.f32 0.0, %v473
      %v475 = vpop.f32.mrf.mxu0
      %476 = vdwg.mxu0
      %v477 = vpack.c.bf16 %v450, %v447
      %v478 = vpack.c.bf16 %v458, %v455
      %v479 = vpack.c.bf16 %v466, %v463
      %v480 = vpack.c.bf16 %v474, %v471
      %v485 = vunpack.c.l.b16 %v477
      %v486 = vunpack.c.h.b16 %v477
      %v487 = vunpack.c.l.b16 %v478
      %v488 = vunpack.c.h.b16 %v478
      %v489 = vunpack.c.l.b16 %v479
      %v490 = vunpack.c.h.b16 %v479
      %v491 = vunpack.c.l.b16 %v480
      %v492 = vunpack.c.h.b16 %v480
      %v493 = vpack.c.b16 %v485, %v485
      %v494 = vpack.c.b16 %v486, %v486
      %v495 = vpack.c.b16 %v487, %v487
      %v496 = vpack.c.b16 %v488, %v488
      %v497 = vpack.c.b16 %v489, %v489
      %v498 = vpack.c.b16 %v490, %v490
      %v499 = vpack.c.b16 %v491, %v491
      %v500 = vpack.c.b16 %v492, %v492
      %509 = vst [vmem:[%s300] sm:$0xf] %v493
      %510 = vst [vmem:[%s300 + $0x4] sm:$0xf] %v494
      %511 = vst [vmem:[%s300 + $0x8] sm:$0xf] %v495
      %512 = vst [vmem:[%s300 + $0xc] sm:$0xf] %v496
      %513 = vst [vmem:[%s300 + $0x10] sm:$0xf] %v497
      %514 = vst [vmem:[%s300 + $0x14] sm:$0xf] %v498
      %515 = vst [vmem:[%s300 + $0x18] sm:$0xf] %v499
      %516 = vst [vmem:[%s300 + $0x1c] sm:$0xf] %v500
      %v517 = vlaneseq
      %v518 = vshrl.u32 %v517, 7
      %v519 = vadd.s32 %v518, 8
      %v520 = vadd.s32 %v518, 16
      %v521 = vadd.s32 %v518, 24
      %v522 = vadd.s32 %v518, 32
      %v523 = vadd.s32 %v518, 40
      %v524 = vadd.s32 %v518, 48
      %v525 = vadd.s32 %v518, 56
      %s526 = smul.u32 %s23, 64
      %v527 = vstv %s526
      %v528 = vadd.s32 %v518, %v527
      %v529 = vadd.s32 %v519, %v527
      %v530 = vadd.s32 %v520, %v527
      %v531 = vadd.s32 %v521, %v527
      %v532 = vadd.s32 %v522, %v527
      %v533 = vadd.s32 %v523, %v527
      %v534 = vadd.s32 %v524, %v527
      %v535 = vadd.s32 %v525, %v527
      %vm536 = vcmp.lt.s32.totalorder %v528, 64
      %vm537 = vcmp.lt.s32.totalorder %v529, 64
      %vm538 = vcmp.lt.s32.totalorder %v530, 64
      %vm539 = vcmp.lt.s32.totalorder %v531, 64
      %vm540 = vcmp.lt.s32.totalorder %v532, 64
      %vm541 = vcmp.lt.s32.totalorder %v533, 64
      %vm542 = vcmp.lt.s32.totalorder %v534, 64
      %vm543 = vcmp.lt.s32.totalorder %v535, 64
      %v544 = vsel %vm536, 1, 0
      %v545 = vsel %vm537, 1, 0
      %v546 = vsel %vm538, 1, 0
      %v547 = vsel %vm539, 1, 0
      %v548 = vsel %vm540, 1, 0
      %v549 = vsel %vm541, 1, 0
      %v550 = vsel %vm542, 1, 0
      %v551 = vsel %vm543, 1, 0
      %vm552 = vcmp.eq.s32.totalorder %v544, 1
      %vm553 = vcmp.eq.s32.totalorder %v545, 1
      %vm554 = vcmp.eq.s32.totalorder %v546, 1
      %vm555 = vcmp.eq.s32.totalorder %v547, 1
      %vm556 = vcmp.eq.s32.totalorder %v548, 1
      %vm557 = vcmp.eq.s32.totalorder %v549, 1
      %vm558 = vcmp.eq.s32.totalorder %v550, 1
      %vm559 = vcmp.eq.s32.totalorder %v551, 1
      %v560 = vsel %vm552, %v447, 0.0
      %v561 = vsel %vm553, %v450, 0.0
      %v562 = vsel %vm554, %v455, 0.0
      %v563 = vsel %vm555, %v458, 0.0
      %v564 = vsel %vm556, %v463, 0.0
      %v565 = vsel %vm557, %v466, 0.0
      %v566 = vsel %vm558, %v471, 0.0
      %v567 = vsel %vm559, %v474, 0.0
      %p568 = scmp.eq.s32.totalorder %s23, 0
      // Predicated region
      $region37: #{pointnet_encoder_forward.8} parent=35 // pred_check
        %p569 = pneg %p568
      $region38: #{pointnet_encoder_forward.8} parent=35 // pred_check_branch
        %571 = sbr.rel (%p569) target = $region40
      $region39: #{pointnet_encoder_forward.8} parent=35 // pred_region
        %572 = vst [vmem:[%s304] sm:$0x1] 0.0
        %573 = vst [vmem:[%s307] sm:$0x1] 0.0
      $region40: #{pointnet_encoder_forward.8} parent=35 // pred_fallthru
        _
      %v574 = vld [vmem:[%s304] sm:$0x1]
      %v575 = vadd.f32 %v560, %v561
      %v576 = vadd.f32 %v575, %v562
      %v577 = vadd.f32 %v576, %v563
      %v578 = vadd.f32 %v577, %v564
      %v579 = vadd.f32 %v578, %v565
      %v580 = vadd.f32 %v579, %v566
      %v581 = vadd.f32 %v580, %v567
      %v582 = vrot.slane %v581, 4
      %v583 = vadd.f32 %v581, %v582
      %v584 = vrot.slane %v583, 2
      %v585 = vadd.f32 %v583, %v584
      %v586 = vrot.slane %v585, 1
      %v587 = vadd.f32 %v585, %v586
      %v588 = vadd.f32 %v574, %v587
      %589 = vst [vmem:[%s304] sm:$0x1] %v588
      %v590 = vld [vmem:[%s307] sm:$0x1]
      %v591 = vmul.f32 %v560, %v560
      %v592 = vmul.f32 %v561, %v561
      %v593 = vmul.f32 %v562, %v562
      %v594 = vmul.f32 %v563, %v563
      %v595 = vmul.f32 %v564, %v564
      %v596 = vmul.f32 %v565, %v565
      %v597 = vmul.f32 %v566, %v566
      %v598 = vmul.f32 %v567, %v567
      %v599 = vadd.f32 %v591, %v592
      %v600 = vadd.f32 %v599, %v593
      %v601 = vadd.f32 %v600, %v594
      %v602 = vadd.f32 %v601, %v595
      %v603 = vadd.f32 %v602, %v596
      %v604 = vadd.f32 %v603, %v597
      %v605 = vadd.f32 %v604, %v598
      %v606 = vrot.slane %v605, 4
      %v607 = vadd.f32 %v605, %v606
      %v608 = vrot.slane %v607, 2
      %v609 = vadd.f32 %v607, %v608
      %v610 = vrot.slane %v609, 1
      %v611 = vadd.f32 %v609, %v610
      %v612 = vadd.f32 %v590, %v611
      %613 = vst [vmem:[%s307] sm:$0x1] %v612
      %s614 = smul.u32 8, %s23
      %p615 = scmp.lt.s32.totalorder %s22, 1
      %s616 = scalar_select %p615, %s22, 1
      %p617 = scmp.lt.s32.totalorder %s614, 7
      %s618 = scalar_select %p617, %s614, 7
      %s619 = smul.addr %s616, 8
      %s620 = sadd.s32 %s618, %s619
      %s621 = smul.addr %s620, 4
      %s622 = scalar_lea.vmem %s4, %s621
      %p623 = scmp.lt.s32.totalorder %s22, 1
      %s624 = scalar_select %p623, %s22, 1
      %s625 = scalar_lea.vmem %s5, %s624
      %p626 = scmp.lt.s32.totalorder %s22, 1
      %s627 = scalar_select %p626, %s22, 1
      %s628 = scalar_lea.vmem %s6, %s627
      // Predicated region
      $region41: #{pointnet_encoder_forward.8} parent=35 // pred_check
        %p629 = pneg %p141
      $region42: #{pointnet_encoder_forward.8} parent=35 // pred_check_branch
        %631 = sbr.rel (%p629) target = $region44
      $region43: #{pointnet_encoder_forward.8} parent=35 // pred_region
        %s632 = smul.u32 8, %s23
      $region44: #{pointnet_encoder_forward.8} parent=35 // pred_fallthru
        _
      // Predicated region
      $region45: #{pointnet_encoder_forward.8} parent=35 // pred_check
        %p633 = pneg %p167
      $region46: #{pointnet_encoder_forward.8} parent=35 // pred_check_branch
        %635 = sbr.rel (%p633) target = $region48
      $region47: #{pointnet_encoder_forward.8} parent=35 // pred_region
        _
      $region48: #{pointnet_encoder_forward.8} parent=35 // pred_fallthru
        _
      // Predicated region
      $region49: #{pointnet_encoder_forward.8} parent=35 // pred_check
        %p636 = pneg %p193
      $region50: #{pointnet_encoder_forward.8} parent=35 // pred_check_branch
        %638 = sbr.rel (%p636) target = $region52
      $region51: #{pointnet_encoder_forward.8} parent=35 // pred_region
        _
      $region52: #{pointnet_encoder_forward.8} parent=35 // pred_fallthru
        _
    $region36: #{pointnet_encoder_forward.8} parent=5 // pred_fallthru
      _
    %p639 = scmp.le.s32.totalorder 2, %s13
    // Predicated region
    $region53: #{pointnet_encoder_forward.8} parent=5 // pred_check
      %p640 = pneg %p639
    $region54: #{pointnet_encoder_forward.8} parent=5 // pred_check_branch
      %642 = sbr.rel (%p640) target = $region56
    $region55: #{pointnet_encoder_forward.8} parent=5 // pred_region
      %s643 = ssub.s32 %s13, 2
      // Predicated region
      $region57: #{pointnet_encoder_forward.8} parent=55 // pred_check
        %p644 = pneg %p147
      $region58: #{pointnet_encoder_forward.8} parent=55 // pred_check_branch
        %646 = sbr.rel (%p644) target = $region60
      $region59: #{pointnet_encoder_forward.8} parent=55 // pred_region
        %s647 = smul.u32 8, %s25
        %p648 = scmp.lt.s32.totalorder %s24, 1
        %s649 = scalar_select %p648, %s24, 1
        %p650 = scmp.lt.s32.totalorder %s647, 7
        %s651 = scalar_select %p650, %s647, 7
        %s652 = smul.addr %s649, 8
        %s653 = sadd.s32 %s651, %s652
        %s654 = smul.addr %s653, 4
        %s655 = scalar_lea.vmem %s4, %s654
      $region60: #{pointnet_encoder_forward.8} parent=55 // pred_fallthru
        _
      // Predicated region
      $region61: #{pointnet_encoder_forward.8} parent=55 // pred_check
        %p656 = pneg %p173
      $region62: #{pointnet_encoder_forward.8} parent=55 // pred_check_branch
        %658 = sbr.rel (%p656) target = $region64
      $region63: #{pointnet_encoder_forward.8} parent=55 // pred_region
        %p659 = scmp.lt.s32.totalorder %s24, 1
        %s660 = scalar_select %p659, %s24, 1
        %s661 = scalar_lea.vmem %s5, %s660
      $region64: #{pointnet_encoder_forward.8} parent=55 // pred_fallthru
        _
      // Predicated region
      $region65: #{pointnet_encoder_forward.8} parent=55 // pred_check
        %p662 = pneg %p199
      $region66: #{pointnet_encoder_forward.8} parent=55 // pred_check_branch
        %664 = sbr.rel (%p662) target = $region68
      $region67: #{pointnet_encoder_forward.8} parent=55 // pred_region
        %p665 = scmp.lt.s32.totalorder %s24, 1
        %s666 = scalar_select %p665, %s24, 1
        %s667 = scalar_lea.vmem %s6, %s666
      $region68: #{pointnet_encoder_forward.8} parent=55 // pred_fallthru
        _
    $region56: #{pointnet_encoder_forward.8} parent=5 // pred_fallthru
      _
  $region6: #{pointnet_encoder_forward.8} parent=0 // loop_footer
    %s17 = sadd.s32 1, %s13
  $region7: #{pointnet_encoder_forward.8} parent=0 // loop_footer_branch
    %12 = sbr.rel target = $region3
  $region8: #{pointnet_encoder_forward.8} parent=0 // loop_exit
    _

// kernel: pointnet_encoder_forward.7
$region0: #{pointnet_encoder_forward.7}
  #allocation0 [shape = 'u32[]', space=smem, size = 0x4, offset = 0x4, fixed_abs, tag = 'smem constant byte address 0x4 - core index']
  #allocation1 [shape = 'u32[144,128]{1,0:T(1,128)}', space=vmem, size = 0x12000, scoped, tag = 'internal scratch']
  %s0 = inlined_call_operand.vmem [shape: bf16[2,64,3], index: 0, kind: input, shape index: {}]
  %s1 = inlined_call_operand.vmem [shape: bf16[3,64], index: 1, kind: input, shape index: {}]
  %s2 = inlined_call_operand.vmem [shape: f32[1,3], index: 2, kind: input, shape index: {}]
  %s3 = inlined_call_operand.vmem [shape: f32[1,3], index: 3, kind: input, shape index: {}]
  %s4 = inlined_call_operand.vmem [shape: bf16[2,64,64], index: 4, kind: output, shape index: {0}]
  %s5 = inlined_call_operand.vmem [shape: f32[2,1,64], index: 5, kind: output, shape index: {1}]
  %s6 = inlined_call_operand.vmem [shape: f32[2,1,64], index: 6, kind: output, shape index: {2}]
  %7 = xla_tuple %s4, %s5, %s6
  %s8 = sld [smem:[#allocation0]]
  $region69: #{pointnet_encoder_forward.7} parent=0
    _
  %s10 = ssub.s32 1, %s8
  %s11 = scalar_select 0, %s10, %s8
  loop: start=0, step=1, limit=4
  $region2: #{pointnet_encoder_forward.7} parent=0 // loop_pre_header
    _
  $region3: #{pointnet_encoder_forward.7} parent=0 // loop_header
    %s13 = sphi 0, %s17
    %p14 = scmp.ge.s32.totalorder %s13, 4
    %s20 = sphi 0, %s32
    %s21 = sphi 0, %s28
    %s22 = sphi 0, %s20
    %s23 = sphi 0, %s21
    %s24 = sphi 0, %s22
    %s25 = sphi 0, %s23
    %s37 = sphi 0, %s39
    %s40 = sphi 0, %s37
    %s41 = sphi 0, %s40
    %s57 = sphi 0, %s41
    %s61 = sphi 0, %s61
    %s63 = sphi 0, %s61
    %s64 = sphi 0, %s63
    %s78 = sphi 0, %s64
    %s82 = sphi 0, %s82
    %s84 = sphi 0, %s82
    %s85 = sphi 0, %s84
    %s99 = sphi 0, %s85
    %s103 = sphi 0, %s103
    %s105 = sphi 0, %s103
    %s106 = sphi 0, %s105
    %s120 = sphi 0, %s106
    %s128 = sphi 0, %s130
    %s131 = sphi 0, %s128
    %s132 = sphi 0, %s131
    %s148 = sphi 0, %s132
    %s154 = sphi 0, %s156
    %s157 = sphi 0, %s154
    %s158 = sphi 0, %s157
    %s174 = sphi 0, %s158
    %s180 = sphi 0, %s182
    %s183 = sphi 0, %s180
    %s184 = sphi 0, %s183
    %s200 = sphi 0, %s184
  $region4: #{pointnet_encoder_forward.7} parent=0 // loop_header_branch
    %16 = sbr.rel (%p14) target = $region8
  $region5: #{pointnet_encoder_forward.7} parent=0 // loop_body
    %s18 = ssub.s32 %s13, 1
    %s19 = ssub.s32 %s13, 2
    %s26 = sadd.s32 1, %s21
    %p27 = scmp.ge.s32.totalorder %s26, 1
    %s28 = scalar_select %p27, 0, %s26
    %s29 = sadd.s32 1, %s20
    %s30 = scalar_select %p27, %s29, %s20
    %p31 = scmp.ge.s32.totalorder %s30, 2
    %s32 = scalar_select %p31, 0, %s30
    %s33 = ssub.s32 %s20, %s32
    %s34 = ssub.s32 %s21, %s28
    %s35 = sor.u32 %s33, %s34
    %p36 = scmp.eq.s32.totalorder %s35, 0
    %s38 = sadd.s32 %s37, 1
    %s39 = scalar_select %p36, %s37, %s38
    %p42 = pneg %p36
    %p43 = scmp.eq.s32.totalorder %s13, 1
    %p44 = por %p42, %p43
    %p45 = scmp.ne.s32.totalorder %s37, %s40
    %p46 = scmp.eq.s32.totalorder %s13, 0
    %p47 = por %p45, %p46
    %p48 = scmp.ne.s32.totalorder %s37, %s40
    %p49 = scmp.eq.s32.totalorder %s18, 1
    %p50 = por %p48, %p49
    %p51 = scmp.ne.s32.totalorder %s40, %s41
    %p52 = scmp.eq.s32.totalorder %s18, 0
    %p53 = por %p51, %p52
    %p54 = scmp.ne.s32.totalorder %s40, %s41
    %p55 = scmp.eq.s32.totalorder %s19, 1
    %p56 = por %p54, %p55
    %p58 = scmp.ne.s32.totalorder %s41, %s57
    %p59 = scmp.eq.s32.totalorder %s19, 0
    %p60 = por %p58, %p59
    %s62 = sadd.s32 %s61, 1
    %p65 = scmp.eq.s32.totalorder %s13, 1
    %p66 = scmp.ne.s32.totalorder %s61, %s63
    %p67 = scmp.eq.s32.totalorder %s13, 0
    %p68 = por %p66, %p67
    %p69 = scmp.ne.s32.totalorder %s61, %s63
    %p70 = scmp.eq.s32.totalorder %s18, 1
    %p71 = por %p69, %p70
    %p72 = scmp.ne.s32.totalorder %s63, %s64
    %p73 = scmp.eq.s32.totalorder %s18, 0
    %p74 = por %p72, %p73
    %p75 = scmp.ne.s32.totalorder %s63, %s64
    %p76 = scmp.eq.s32.totalorder %s19, 1
    %p77 = por %p75, %p76
    %p79 = scmp.ne.s32.totalorder %s64, %s78
    %p80 = scmp.eq.s32.totalorder %s19, 0
    %p81 = por %p79, %p80
    %s83 = sadd.s32 %s82, 1
    %p86 = scmp.eq.s32.totalorder %s13, 1
    %p87 = scmp.ne.s32.totalorder %s82, %s84
    %p88 = scmp.eq.s32.totalorder %s13, 0
    %p89 = por %p87, %p88
    %p90 = scmp.ne.s32.totalorder %s82, %s84
    %p91 = scmp.eq.s32.totalorder %s18, 1
    %p92 = por %p90, %p91
    %p93 = scmp.ne.s32.totalorder %s84, %s85
    %p94 = scmp.eq.s32.totalorder %s18, 0
    %p95 = por %p93, %p94
    %p96 = scmp.ne.s32.totalorder %s84, %s85
    %p97 = scmp.eq.s32.totalorder %s19, 1
    %p98 = por %p96, %p97
    %p100 = scmp.ne.s32.totalorder %s85, %s99
    %p101 = scmp.eq.s32.totalorder %s19, 0
    %p102 = por %p100, %p101
    %s104 = sadd.s32 %s103, 1
    %p107 = scmp.eq.s32.totalorder %s13, 1
    %p108 = scmp.ne.s32.totalorder %s103, %s105
    %p109 = scmp.eq.s32.totalorder %s13, 0
    %p110 = por %p108, %p109
    %p111 = scmp.ne.s32.totalorder %s103, %s105
    %p112 = scmp.eq.s32.totalorder %s18, 1
    %p113 = por %p111, %p112
    %p114 = scmp.ne.s32.totalorder %s105, %s106
    %p115 = scmp.eq.s32.totalorder %s18, 0
    %p116 = por %p114, %p115
    %p117 = scmp.ne.s32.totalorder %s105, %s106
    %p118 = scmp.eq.s32.totalorder %s19, 1
    %p119 = por %p117, %p118
    %p121 = scmp.ne.s32.totalorder %s106, %s120
    %p122 = scmp.eq.s32.totalorder %s19, 0
    %p123 = por %p121, %p122
    %s124 = ssub.s32 %s20, %s32
    %s125 = ssub.s32 %s21, %s28
    %s126 = sor.u32 %s124, %s125
    %p127 = scmp.eq.s32.totalorder %s126, 0
    %s129 = sadd.s32 %s128, 1
    %s130 = scalar_select %p127, %s128, %s129
    %p133 = pneg %p127
    %p134 = scmp.eq.s32.totalorder %s13, 1
    %p135 = por %p133, %p134
    %p136 = scmp.ne.s32.totalorder %s128, %s131
    %p137 = scmp.eq.s32.totalorder %s13, 0
    %p138 = por %p136, %p137
    %p139 = scmp.ne.s32.totalorder %s128, %s131
    %p140 = scmp.eq.s32.totalorder %s18, 1
    %p141 = por %p139, %p140
    %p142 = scmp.ne.s32.totalorder %s131, %s132
    %p143 = scmp.eq.s32.totalorder %s18, 0
    %p144 = por %p142, %p143
    %p145 = scmp.ne.s32.totalorder %s131, %s132
    %p146 = scmp.eq.s32.totalorder %s19, 1
    %p147 = por %p145, %p146
    %p149 = scmp.ne.s32.totalorder %s132, %s148
    %p150 = scmp.eq.s32.totalorder %s19, 0
    %p151 = por %p149, %p150
    %s152 = ssub.s32 %s20, %s32
    %p153 = scmp.eq.s32.totalorder %s152, 0
    %s155 = sadd.s32 %s154, 1
    %s156 = scalar_select %p153, %s154, %s155
    %p159 = pneg %p153
    %p160 = scmp.eq.s32.totalorder %s13, 1
    %p161 = por %p159, %p160
    %p162 = scmp.ne.s32.totalorder %s154, %s157
    %p163 = scmp.eq.s32.totalorder %s13, 0
    %p164 = por %p162, %p163
    %p165 = scmp.ne.s32.totalorder %s154, %s157
    %p166 = scmp.eq.s32.totalorder %s18, 1
    %p167 = por %p165, %p166
    %p168 = scmp.ne.s32.totalorder %s157, %s158
    %p169 = scmp.eq.s32.totalorder %s18, 0
    %p170 = por %p168, %p169
    %p171 = scmp.ne.s32.totalorder %s157, %s158
    %p172 = scmp.eq.s32.totalorder %s19, 1
    %p173 = por %p171, %p172
    %p175 = scmp.ne.s32.totalorder %s158, %s174
    %p176 = scmp.eq.s32.totalorder %s19, 0
    %p177 = por %p175, %p176
    %s178 = ssub.s32 %s20, %s32
    %p179 = scmp.eq.s32.totalorder %s178, 0
    %s181 = sadd.s32 %s180, 1
    %s182 = scalar_select %p179, %s180, %s181
    %p185 = pneg %p179
    %p186 = scmp.eq.s32.totalorder %s13, 1
    %p187 = por %p185, %p186
    %p188 = scmp.ne.s32.totalorder %s180, %s183
    %p189 = scmp.eq.s32.totalorder %s13, 0
    %p190 = por %p188, %p189
    %p191 = scmp.ne.s32.totalorder %s180, %s183
    %p192 = scmp.eq.s32.totalorder %s18, 1
    %p193 = por %p191, %p192
    %p194 = scmp.ne.s32.totalorder %s183, %s184
    %p195 = scmp.eq.s32.totalorder %s18, 0
    %p196 = por %p194, %p195
    %p197 = scmp.ne.s32.totalorder %s183, %s184
    %p198 = scmp.eq.s32.totalorder %s19, 1
    %p199 = por %p197, %p198
    %p201 = scmp.ne.s32.totalorder %s184, %s200
    %p202 = scmp.eq.s32.totalorder %s19, 0
    %p203 = por %p201, %p202
    %p204 = scmp.le.s32.totalorder 1, %s13
    %p205 = scmp.lt.s32.totalorder %s13, 3
    %p206 = pnand %p204, %p205
    %p207 = pneg %p206
    // Predicated region
    $region9: #{pointnet_encoder_forward.7} parent=5 // pred_check
      _
    $region10: #{pointnet_encoder_forward.7} parent=5 // pred_check_branch
      %209 = sbr.rel (%p206) target = $region12
    $region11: #{pointnet_encoder_forward.7} parent=5 // pred_region
      %s210 = ssub.s32 %s13, 1
      // Predicated region
      $region13: #{pointnet_encoder_forward.7} parent=11 // pred_check
        %p211 = pneg %p74
      $region14: #{pointnet_encoder_forward.7} parent=11 // pred_check_branch
        %213 = sbr.rel (%p211) target = $region16
      $region15: #{pointnet_encoder_forward.7} parent=11 // pred_region
        _
      $region16: #{pointnet_encoder_forward.7} parent=11 // pred_fallthru
        _
      // Predicated region
      $region17: #{pointnet_encoder_forward.7} parent=11 // pred_check
        %p214 = pneg %p95
      $region18: #{pointnet_encoder_forward.7} parent=11 // pred_check_branch
        %216 = sbr.rel (%p214) target = $region20
      $region19: #{pointnet_encoder_forward.7} parent=11 // pred_region
        _
      $region20: #{pointnet_encoder_forward.7} parent=11 // pred_fallthru
        _
      // Predicated region
      $region21: #{pointnet_encoder_forward.7} parent=11 // pred_check
        %p217 = pneg %p116
      $region22: #{pointnet_encoder_forward.7} parent=11 // pred_check_branch
        %219 = sbr.rel (%p217) target = $region24
      $region23: #{pointnet_encoder_forward.7} parent=11 // pred_region
        _
      $region24: #{pointnet_encoder_forward.7} parent=11 // pred_fallthru
        _
    $region12: #{pointnet_encoder_forward.7} parent=5 // pred_fallthru
      _
    %p220 = scmp.lt.s32.totalorder %s13, 2
    // Predicated region
    $region25: #{pointnet_encoder_forward.7} parent=5 // pred_check
      %p221 = pneg %p220
    $region26: #{pointnet_encoder_forward.7} parent=5 // pred_check_branch
      %223 = sbr.rel (%p221) target = $region28
    $region27: #{pointnet_encoder_forward.7} parent=5 // pred_region
      // Predicated region
      $region29: #{pointnet_encoder_forward.7} parent=27 // pred_check
        %p224 = pneg %p47
      $region30: #{pointnet_encoder_forward.7} parent=27 // pred_check_branch
        %226 = sbr.rel (%p224) target = $region32
      $region31: #{pointnet_encoder_forward.7} parent=27 // pred_region
        %s227 = smul.u32 8, %s21
        %p228 = scmp.lt.s32.totalorder %s20, 1
        %s229 = scalar_select %p228, %s20, 1
        %p230 = scmp.lt.s32.totalorder %s227, 7
        %s231 = scalar_select %p230, %s227, 7
        %s232 = smul.addr %s229, 8
        %s233 = sadd.s32 %s231, %s232
        %s234 = smul.addr %s233, 4
        %s235 = scalar_lea.vmem %s0, %s234
        %s236 = smul.u32 8, %s21
      $region32: #{pointnet_encoder_forward.7} parent=27 // pred_fallthru
        _
    $region28: #{pointnet_encoder_forward.7} parent=5 // pred_fallthru
      _
    %p237 = scmp.le.s32.totalorder 1, %s13
    %p238 = scmp.lt.s32.totalorder %s13, 3
    %p239 = pnand %p237, %p238
    %p240 = pneg %p239
    // Predicated region
    $region33: #{pointnet_encoder_forward.7} parent=5 // pred_check
      _
    $region34: #{pointnet_encoder_forward.7} parent=5 // pred_check_branch
      %242 = sbr.rel (%p239) target = $region36
    $region35: #{pointnet_encoder_forward.7} parent=5 // pred_region
      %s243 = ssub.s32 %s13, 1
      %s244 = smul.u32 8, %s23
      %p245 = scmp.lt.s32.totalorder %s22, 1
      %s246 = scalar_select %p245, %s22, 1
      %p247 = scmp.lt.s32.totalorder %s244, 7
      %s248 = scalar_select %p247, %s244, 7
      %s249 = smul.addr %s246, 8
      %s250 = sadd.s32 %s248, %s249
      %s251 = smul.addr %s250, 4
      %s252 = scalar_lea.vmem %s0, %s251
      %p253 = pneg %p53
      %p254 = pneg %p50
      %p255 = pneg %p74
      %p256 = pneg %p71
      %p257 = pneg %p95
      %p258 = pneg %p92
      %p259 = pneg %p116
      %p260 = pneg %p113
      %p261 = pneg %p144
      %p262 = pneg %p141
      %s263 = smul.u32 8, %s23
      %p264 = scmp.lt.s32.totalorder %s22, 1
      %s265 = scalar_select %p264, %s22, 1
      %p266 = scmp.lt.s32.totalorder %s263, 7
      %s267 = scalar_select %p266, %s263, 7
      %s268 = smul.addr %s265, 8
      %s269 = sadd.s32 %s267, %s268
      %s270 = smul.addr %s269, 4
      %s271 = scalar_lea.vmem %s4, %s270
      %p272 = pneg %p170
      %p273 = pneg %p167
      %p274 = scmp.lt.s32.totalorder %s22, 1
      %s275 = scalar_select %p274, %s22, 1
      %s276 = scalar_lea.vmem %s5, %s275
      %p277 = pneg %p196
      %p278 = pneg %p193
      %p279 = scmp.lt.s32.totalorder %s22, 1
      %s280 = scalar_select %p279, %s22, 1
      %s281 = scalar_lea.vmem %s6, %s280
      %s282 = smul.u32 8, %s23
      %p283 = scmp.lt.s32.totalorder %s22, 1
      %s284 = scalar_select %p283, %s22, 1
      %p285 = scmp.lt.s32.totalorder %s282, 7
      %s286 = scalar_select %p285, %s282, 7
      %s287 = smul.addr %s284, 8
      %s288 = sadd.s32 %s286, %s287
      %s289 = smul.addr %s288, 4
      %s290 = scalar_lea.vmem %s0, %s289
      %s291 = smul.u32 8, %s23
      %s292 = smul.u32 8, %s23
      %p293 = scmp.lt.s32.totalorder %s22, 1
      %s294 = scalar_select %p293, %s22, 1
      %p295 = scmp.lt.s32.totalorder %s292, 7
      %s296 = scalar_select %p295, %s292, 7
      %s297 = smul.addr %s294, 8
      %s298 = sadd.s32 %s296, %s297
      %s299 = smul.addr %s298, 4
      %s300 = scalar_lea.vmem %s4, %s299
      %s301 = smul.u32 8, %s23
      %p302 = scmp.lt.s32.totalorder %s22, 1
      %s303 = scalar_select %p302, %s22, 1
      %s304 = scalar_lea.vmem %s5, %s303
      %p305 = scmp.lt.s32.totalorder %s22, 1
      %s306 = scalar_select %p305, %s22, 1
      %s307 = scalar_lea.vmem %s6, %s306
      %v309 = vld [vmem:[%s290] sm:$0xf]
      %v310 = vld [vmem:[%s290 + $0x4] sm:$0xf]
      %v311 = vld [vmem:[%s290 + $0x8] sm:$0xf]
      %v312 = vld [vmem:[%s290 + $0xc] sm:$0xf]
      %v313 = vld [vmem:[%s290 + $0x10] sm:$0xf]
      %v314 = vld [vmem:[%s290 + $0x14] sm:$0xf]
      %v315 = vld [vmem:[%s290 + $0x18] sm:$0xf]
      %v316 = vld [vmem:[%s290 + $0x1c] sm:$0xf]
      %v317 = vld [vmem:[%s1] sm:$0x3]
      %v326 = vunpack.c.l.b16 %v309
      %v327 = vunpack.c.l.b16 %v310
      %v328 = vunpack.c.l.b16 %v311
      %v329 = vunpack.c.l.b16 %v312
      %v330 = vunpack.c.l.b16 %v313
      %v331 = vunpack.c.l.b16 %v314
      %v332 = vunpack.c.l.b16 %v315
      %v333 = vunpack.c.l.b16 %v316
      %v334 = vpack.c.b16 %v327, %v326
      %v335 = vpack.c.b16 %v329, %v328
      %v336 = vpack.c.b16 %v331, %v330
      %v337 = vpack.c.b16 %v333, %v332
      %vm338 = vcmask 23552
      %v340 = vsel %vm338, %v334, 0
      %v343 = vsel %vm338, %v335, 0
      %v346 = vsel %vm338, %v336, 0
      %v349 = vsel %vm338, %v337, 0
      %vm351 = vcmask 1040384
      %vm352 = vcmask 1041408
      %v353 = vsel %vm351, 4294967295, 65535
      %v354 = vsel %vm352, %v353, 0
      %v356 = vand.u32 %v317, %v354
      %358 = vmatprep.subr.bf16.mxu0 0
      %359 = vmatpush1.bf16.msra.mxu0 0
      %360 = vmatprep.subr.bf16.mxu0 0
      %361 = vmatpush1.bf16.msra.mxu0 0
      %362 = vmatprep.subr.bf16.mxu0 0
      %363 = vmatpush1.bf16.msra.mxu0 0
      %364 = vmatprep.subr.bf16.mxu0 0
      %365 = vmatpush1.bf16.msra.mxu0 0
      %366 = vmatprep.subr.bf16.mxu0 0
      %367 = vmatpush1.bf16.msra.mxu0 0
      %368 = vmatprep.subr.bf16.mxu0 0
      %369 = vmatpush1.bf16.msra.mxu0 0
      %370 = vmatprep.subr.bf16.mxu0 0
      %371 = vmatpush1.bf16.msra.mxu0 0
      %372 = vmatprep.subr.bf16.mxu0 0
      %373 = vmatpush1.bf16.msra.mxu0 %v356
      %374 = vmatprep.subr.bf16.mxu0 0
      %375 = vmatpush2.bf16.msra.mxu0 0
      %376 = vmatprep.subr.bf16.mxu0 0
      %377 = vmatpush2.bf16.msra.mxu0 0
      %378 = vmatprep.subr.bf16.mxu0 0
      %379 = vmatpush2.bf16.msra.mxu0 0
      %380 = vmatprep.subr.bf16.mxu0 0
      %381 = vmatpush2.bf16.msra.mxu0 0
      %382 = vmatprep.subr.bf16.mxu0 0
      %383 = vmatpush2.bf16.msra.mxu0 0
      %384 = vmatprep.subr.bf16.mxu0 0
      %385 = vmatpush2.bf16.msra.mxu0 0
      %386 = vmatprep.subr.bf16.mxu0 0
      %387 = vmatpush2.bf16.msra.mxu0 0
      %388 = vmatprep.subr.bf16.mxu0 0
      %389 = vmatpush2.bf16.msra.mxu0 0
      %390 = vmatprep.mubr.bf16.mxu0 0
      %391 = vmatmul.mubr.bf16.gmra.mxu0 %v340
      %v392 = vpop.f32.mrf.mxu0
      %v393 = vadd.f32 0.0, %v392
      %v394 = vpop.f32.mrf.mxu0
      %v395 = vpop.f32.mrf.mxu0
      %v396 = vadd.f32 0.0, %v395
      %v397 = vpop.f32.mrf.mxu0
      %398 = vmatprep.mubr.bf16.mxu0 0
      %399 = vmatmul.mubr.bf16.gmra.mxu0 %v343
      %v400 = vpop.f32.mrf.mxu0
      %v401 = vadd.f32 0.0, %v400
      %v402 = vpop.f32.mrf.mxu0
      %v403 = vpop.f32.mrf.mxu0
      %v404 = vadd.f32 0.0, %v403
      %v405 = vpop.f32.mrf.mxu0
      %406 = vmatprep.mubr.bf16.mxu0 0
      %407 = vmatmul.mubr.bf16.gmra.mxu0 %v346
      %v408 = vpop.f32.mrf.mxu0
      %v409 = vadd.f32 0.0, %v408
      %v410 = vpop.f32.mrf.mxu0
      %v411 = vpop.f32.mrf.mxu0
      %v412 = vadd.f32 0.0, %v411
      %v413 = vpop.f32.mrf.mxu0
      %414 = vmatprep.mubr.bf16.mxu0 0
      %415 = vmatmul.mubr.bf16.gmra.mxu0 %v349
      %v416 = vpop.f32.mrf.mxu0
      %v417 = vadd.f32 0.0, %v416
      %v418 = vpop.f32.mrf.mxu0
      %v419 = vpop.f32.mrf.mxu0
      %v420 = vadd.f32 0.0, %v419
      %v421 = vpop.f32.mrf.mxu0
      %422 = vdwg.mxu0
      %v423 = vpack.c.bf16 %v396, %v393
      %v424 = vpack.c.bf16 %v404, %v401
      %v425 = vpack.c.bf16 %v412, %v409
      %v426 = vpack.c.bf16 %v420, %v417
      %v431 = vunpack.c.l.b16 %v423
      %v432 = vunpack.c.h.b16 %v423
      %v433 = vunpack.c.l.b16 %v424
      %v434 = vunpack.c.h.b16 %v424
      %v435 = vunpack.c.l.b16 %v425
      %v436 = vunpack.c.h.b16 %v425
      %v437 = vunpack.c.l.b16 %v426
      %v438 = vunpack.c.h.b16 %v426
      %v439 = vpack.c.b16 %v431, %v431
      %v440 = vpack.c.b16 %v432, %v432
      %v441 = vpack.c.b16 %v433, %v433
      %v442 = vpack.c.b16 %v434, %v434
      %v443 = vpack.c.b16 %v435, %v435
      %v444 = vpack.c.b16 %v436, %v436
      %v445 = vpack.c.b16 %v437, %v437
      %v446 = vpack.c.b16 %v438, %v438
      %vm455 = vcmask 519168
      %456 = vst.msk [vmem:[%s300] sm:$0xf] %vm455, %v439
      %457 = vst.msk [vmem:[%s300 + $0x4] sm:$0xf] %vm455, %v440
      %458 = vst.msk [vmem:[%s300 + $0x8] sm:$0xf] %vm455, %v441
      %459 = vst.msk [vmem:[%s300 + $0xc] sm:$0xf] %vm455, %v442
      %460 = vst.msk [vmem:[%s300 + $0x10] sm:$0xf] %vm455, %v443
      %461 = vst.msk [vmem:[%s300 + $0x14] sm:$0xf] %vm455, %v444
      %462 = vst.msk [vmem:[%s300 + $0x18] sm:$0xf] %vm455, %v445
      %463 = vst.msk [vmem:[%s300 + $0x1c] sm:$0xf] %vm455, %v446
      %v464 = vlaneseq
      %v465 = vshrl.u32 %v464, 7
      %v466 = vadd.s32 %v465, 8
      %v467 = vadd.s32 %v465, 16
      %v468 = vadd.s32 %v465, 24
      %v469 = vadd.s32 %v465, 32
      %v470 = vadd.s32 %v465, 40
      %v471 = vadd.s32 %v465, 48
      %v472 = vadd.s32 %v465, 56
      %s473 = smul.u32 %s23, 64
      %v474 = vstv %s473
      %v475 = vadd.s32 %v465, %v474
      %v476 = vadd.s32 %v466, %v474
      %v477 = vadd.s32 %v467, %v474
      %v478 = vadd.s32 %v468, %v474
      %v479 = vadd.s32 %v469, %v474
      %v480 = vadd.s32 %v470, %v474
      %v481 = vadd.s32 %v471, %v474
      %v482 = vadd.s32 %v472, %v474
      %vm483 = vcmp.lt.s32.totalorder %v475, 64
      %vm484 = vcmp.lt.s32.totalorder %v476, 64
      %vm485 = vcmp.lt.s32.totalorder %v477, 64
      %vm486 = vcmp.lt.s32.totalorder %v478, 64
      %vm487 = vcmp.lt.s32.totalorder %v479, 64
      %vm488 = vcmp.lt.s32.totalorder %v480, 64
      %vm489 = vcmp.lt.s32.totalorder %v481, 64
      %vm490 = vcmp.lt.s32.totalorder %v482, 64
      %v491 = vsel %vm483, 1, 0
      %v492 = vsel %vm484, 1, 0
      %v493 = vsel %vm485, 1, 0
      %v494 = vsel %vm486, 1, 0
      %v495 = vsel %vm487, 1, 0
      %v496 = vsel %vm488, 1, 0
      %v497 = vsel %vm489, 1, 0
      %v498 = vsel %vm490, 1, 0
      %vm499 = vcmp.eq.s32.totalorder %v491, 1
      %vm500 = vcmp.eq.s32.totalorder %v492, 1
      %vm501 = vcmp.eq.s32.totalorder %v493, 1
      %vm502 = vcmp.eq.s32.totalorder %v494, 1
      %vm503 = vcmp.eq.s32.totalorder %v495, 1
      %vm504 = vcmp.eq.s32.totalorder %v496, 1
      %vm505 = vcmp.eq.s32.totalorder %v497, 1
      %vm506 = vcmp.eq.s32.totalorder %v498, 1
      %v507 = vsel %vm499, %v393, 0.0
      %v508 = vsel %vm500, %v396, 0.0
      %v509 = vsel %vm501, %v401, 0.0
      %v510 = vsel %vm502, %v404, 0.0
      %v511 = vsel %vm503, %v409, 0.0
      %v512 = vsel %vm504, %v412, 0.0
      %v513 = vsel %vm505, %v417, 0.0
      %v514 = vsel %vm506, %v420, 0.0
      %p515 = scmp.eq.s32.totalorder %s23, 0
      // Predicated region
      $region37: #{pointnet_encoder_forward.7} parent=35 // pred_check
        %p516 = pneg %p515
      $region38: #{pointnet_encoder_forward.7} parent=35 // pred_check_branch
        %518 = sbr.rel (%p516) target = $region40
      $region39: #{pointnet_encoder_forward.7} parent=35 // pred_region
        %vm519 = vcmask 516096
        %520 = vst.msk [vmem:[%s304] sm:$0x1] %vm519, 0.0
        %521 = vst.msk [vmem:[%s307] sm:$0x1] %vm519, 0.0
      $region40: #{pointnet_encoder_forward.7} parent=35 // pred_fallthru
        _
      %v522 = vld [vmem:[%s304] sm:$0x1]
      %vm523 = vcmask 523264
      %v524 = vsel %vm523, %v507, 0.0
      %v525 = vsel %vm523, %v508, 0.0
      %v526 = vadd.f32 %v524, %v525
      %v527 = vsel %vm523, %v509, 0.0
      %v528 = vadd.f32 %v526, %v527
      %v529 = vsel %vm523, %v510, 0.0
      %v530 = vadd.f32 %v528, %v529
      %v531 = vsel %vm523, %v511, 0.0
      %v532 = vadd.f32 %v530, %v531
      %v533 = vsel %vm523, %v512, 0.0
      %v534 = vadd.f32 %v532, %v533
      %v535 = vsel %vm523, %v513, 0.0
      %v536 = vadd.f32 %v534, %v535
      %v537 = vsel %vm523, %v514, 0.0
      %v538 = vadd.f32 %v536, %v537
      %v539 = vrot.slane %v538, 4
      %v540 = vadd.f32 %v538, %v539
      %v541 = vrot.slane %v540, 2
      %v542 = vadd.f32 %v540, %v541
      %v543 = vrot.slane %v542, 1
      %v544 = vadd.f32 %v542, %v543
      %v545 = vadd.f32 %v522, %v544
      %vm546 = vcmask 516096
      %547 = vst.msk [vmem:[%s304] sm:$0x1] %vm546, %v545
      %v548 = vld [vmem:[%s307] sm:$0x1]
      %v549 = vmul.f32 %v507, %v507
      %v550 = vmul.f32 %v508, %v508
      %v551 = vmul.f32 %v509, %v509
      %v552 = vmul.f32 %v510, %v510
      %v553 = vmul.f32 %v511, %v511
      %v554 = vmul.f32 %v512, %v512
      %v555 = vmul.f32 %v513, %v513
      %v556 = vmul.f32 %v514, %v514
      %v557 = vsel %vm523, %v549, 0.0
      %v558 = vsel %vm523, %v550, 0.0
      %v559 = vadd.f32 %v557, %v558
      %v560 = vsel %vm523, %v551, 0.0
      %v561 = vadd.f32 %v559, %v560
      %v562 = vsel %vm523, %v552, 0.0
      %v563 = vadd.f32 %v561, %v562
      %v564 = vsel %vm523, %v553, 0.0
      %v565 = vadd.f32 %v563, %v564
      %v566 = vsel %vm523, %v554, 0.0
      %v567 = vadd.f32 %v565, %v566
      %v568 = vsel %vm523, %v555, 0.0
      %v569 = vadd.f32 %v567, %v568
      %v570 = vsel %vm523, %v556, 0.0
      %v571 = vadd.f32 %v569, %v570
      %v572 = vrot.slane %v571, 4
      %v573 = vadd.f32 %v571, %v572
      %v574 = vrot.slane %v573, 2
      %v575 = vadd.f32 %v573, %v574
      %v576 = vrot.slane %v575, 1
      %v577 = vadd.f32 %v575, %v576
      %v578 = vadd.f32 %v548, %v577
      %579 = vst.msk [vmem:[%s307] sm:$0x1] %vm546, %v578
      %s580 = smul.u32 8, %s23
      %p581 = scmp.lt.s32.totalorder %s22, 1
      %s582 = scalar_select %p581, %s22, 1
      %p583 = scmp.lt.s32.totalorder %s580, 7
      %s584 = scalar_select %p583, %s580, 7
      %s585 = smul.addr %s582, 8
      %s586 = sadd.s32 %s584, %s585
      %s587 = smul.addr %s586, 4
      %s588 = scalar_lea.vmem %s4, %s587
      %p589 = scmp.lt.s32.totalorder %s22, 1
      %s590 = scalar_select %p589, %s22, 1
      %s591 = scalar_lea.vmem %s5, %s590
      %p592 = scmp.lt.s32.totalorder %s22, 1
      %s593 = scalar_select %p592, %s22, 1
      %s594 = scalar_lea.vmem %s6, %s593
      // Predicated region
      $region41: #{pointnet_encoder_forward.7} parent=35 // pred_check
        %p595 = pneg %p141
      $region42: #{pointnet_encoder_forward.7} parent=35 // pred_check_branch
        %597 = sbr.rel (%p595) target = $region44
      $region43: #{pointnet_encoder_forward.7} parent=35 // pred_region
        %s598 = smul.u32 8, %s23
      $region44: #{pointnet_encoder_forward.7} parent=35 // pred_fallthru
        _
      // Predicated region
      $region45: #{pointnet_encoder_forward.7} parent=35 // pred_check
        %p599 = pneg %p167
      $region46: #{pointnet_encoder_forward.7} parent=35 // pred_check_branch
        %601 = sbr.rel (%p599) target = $region48
      $region47: #{pointnet_encoder_forward.7} parent=35 // pred_region
        _
      $region48: #{pointnet_encoder_forward.7} parent=35 // pred_fallthru
        _
      // Predicated region
      $region49: #{pointnet_encoder_forward.7} parent=35 // pred_check
        %p602 = pneg %p193
      $region50: #{pointnet_encoder_forward.7} parent=35 // pred_check_branch
        %604 = sbr.rel (%p602) target = $region52
      $region51: #{pointnet_encoder_forward.7} parent=35 // pred_region
        _
      $region52: #{pointnet_encoder_forward.7} parent=35 // pred_fallthru
        _
    $region36: #{pointnet_encoder_forward.7} parent=5 // pred_fallthru
      _
    %p605 = scmp.le.s32.totalorder 2, %s13
    // Predicated region
    $region53: #{pointnet_encoder_forward.7} parent=5 // pred_check
      %p606 = pneg %p605
    $region54: #{pointnet_encoder_forward.7} parent=5 // pred_check_branch
      %608 = sbr.rel (%p606) target = $region56
    $region55: #{pointnet_encoder_forward.7} parent=5 // pred_region
      %s609 = ssub.s32 %s13, 2
      // Predicated region
      $region57: #{pointnet_encoder_forward.7} parent=55 // pred_check
        %p610 = pneg %p147
      $region58: #{pointnet_encoder_forward.7} parent=55 // pred_check_branch
        %612 = sbr.rel (%p610) target = $region60
      $region59: #{pointnet_encoder_forward.7} parent=55 // pred_region
        %s613 = smul.u32 8, %s25
        %p614 = scmp.lt.s32.totalorder %s24, 1
        %s615 = scalar_select %p614, %s24, 1
        %p616 = scmp.lt.s32.totalorder %s613, 7
        %s617 = scalar_select %p616, %s613, 7
        %s618 = smul.addr %s615, 8
        %s619 = sadd.s32 %s617, %s618
        %s620 = smul.addr %s619, 4
        %s621 = scalar_lea.vmem %s4, %s620
      $region60: #{pointnet_encoder_forward.7} parent=55 // pred_fallthru
        _
      // Predicated region
      $region61: #{pointnet_encoder_forward.7} parent=55 // pred_check
        %p622 = pneg %p173
      $region62: #{pointnet_encoder_forward.7} parent=55 // pred_check_branch
        %624 = sbr.rel (%p622) target = $region64
      $region63: #{pointnet_encoder_forward.7} parent=55 // pred_region
        %p625 = scmp.lt.s32.totalorder %s24, 1
        %s626 = scalar_select %p625, %s24, 1
        %s627 = scalar_lea.vmem %s5, %s626
      $region64: #{pointnet_encoder_forward.7} parent=55 // pred_fallthru
        _
      // Predicated region
      $region65: #{pointnet_encoder_forward.7} parent=55 // pred_check
        %p628 = pneg %p199
      $region66: #{pointnet_encoder_forward.7} parent=55 // pred_check_branch
        %630 = sbr.rel (%p628) target = $region68
      $region67: #{pointnet_encoder_forward.7} parent=55 // pred_region
        %p631 = scmp.lt.s32.totalorder %s24, 1
        %s632 = scalar_select %p631, %s24, 1
        %s633 = scalar_lea.vmem %s6, %s632
      $region68: #{pointnet_encoder_forward.7} parent=55 // pred_fallthru
        _
    $region56: #{pointnet_encoder_forward.7} parent=5 // pred_fallthru
      _
  $region6: #{pointnet_encoder_forward.7} parent=0 // loop_footer
    %s17 = sadd.s32 1, %s13
  $region7: #{pointnet_encoder_forward.7} parent=0 // loop_footer_branch
    %12 = sbr.rel target = $region3
  $region8: #{pointnet_encoder_forward.7} parent=0 // loop_exit
    _

// kernel: pointnet_encoder_forward.9
$region0: #{pointnet_encoder_forward.9}
  #allocation0 [shape = 'u32[]', space=smem, size = 0x4, offset = 0x4, fixed_abs, tag = 'smem constant byte address 0x4 - core index']
  #allocation1 [shape = 'u32[144,128]{1,0:T(1,128)}', space=vmem, size = 0x12000, scoped, tag = 'internal scratch']
  %s0 = inlined_call_operand.vmem [shape: bf16[2,64,128], index: 0, kind: input, shape index: {}]
  %s1 = inlined_call_operand.vmem [shape: bf16[128,1024], index: 1, kind: input, shape index: {}]
  %s2 = inlined_call_operand.vmem [shape: f32[1,128], index: 2, kind: input, shape index: {}]
  %s3 = inlined_call_operand.vmem [shape: f32[1,128], index: 3, kind: input, shape index: {}]
  %s4 = inlined_call_operand.vmem [shape: f32[2,1,1024], index: 4, kind: output, shape index: {0}]
  %s5 = inlined_call_operand.vmem [shape: f32[2,1,1024], index: 5, kind: output, shape index: {1}]
  %s6 = inlined_call_operand.vmem [shape: f32[2,1,1024], index: 6, kind: output, shape index: {2}]
  %s7 = inlined_call_operand.vmem [shape: f32[2,1,1024], index: 7, kind: output, shape index: {3}]
  %8 = xla_tuple %s4, %s5, %s6, %s7
  %s9 = sld [smem:[#allocation0]]
  $region77: #{pointnet_encoder_forward.9} parent=0
    _
  %s11 = ssub.s32 1, %s9
  %s12 = scalar_select 0, %s11, %s9
  loop: start=0, step=1, limit=4
  $region2: #{pointnet_encoder_forward.9} parent=0 // loop_pre_header
    _
  $region3: #{pointnet_encoder_forward.9} parent=0 // loop_header
    %s14 = sphi 0, %s18
    %p15 = scmp.ge.s32.totalorder %s14, 4
    %s21 = sphi 0, %s33
    %s22 = sphi 0, %s29
    %s23 = sphi 0, %s21
    %s24 = sphi 0, %s22
    %s25 = sphi 0, %s23
    %s26 = sphi 0, %s24
    %s38 = sphi 0, %s40
    %s41 = sphi 0, %s38
    %s42 = sphi 0, %s41
    %s58 = sphi 0, %s42
    %s62 = sphi 0, %s62
    %s64 = sphi 0, %s62
    %s65 = sphi 0, %s64
    %s79 = sphi 0, %s65
    %s83 = sphi 0, %s83
    %s85 = sphi 0, %s83
    %s86 = sphi 0, %s85
    %s100 = sphi 0, %s86
    %s104 = sphi 0, %s104
    %s106 = sphi 0, %s104
    %s107 = sphi 0, %s106
    %s121 = sphi 0, %s107
    %s127 = sphi 0, %s129
    %s130 = sphi 0, %s127
    %s131 = sphi 0, %s130
    %s147 = sphi 0, %s131
    %s153 = sphi 0, %s155
    %s156 = sphi 0, %s153
    %s157 = sphi 0, %s156
    %s173 = sphi 0, %s157
    %s179 = sphi 0, %s181
    %s182 = sphi 0, %s179
    %s183 = sphi 0, %s182
    %s199 = sphi 0, %s183
    %s205 = sphi 0, %s207
    %s208 = sphi 0, %s205
    %s209 = sphi 0, %s208
    %s225 = sphi 0, %s209
  $region4: #{pointnet_encoder_forward.9} parent=0 // loop_header_branch
    %17 = sbr.rel (%p15) target = $region8
  $region5: #{pointnet_encoder_forward.9} parent=0 // loop_body
    %s19 = ssub.s32 %s14, 1
    %s20 = ssub.s32 %s14, 2
    %s27 = sadd.s32 1, %s22
    %p28 = scmp.ge.s32.totalorder %s27, 1
    %s29 = scalar_select %p28, 0, %s27
    %s30 = sadd.s32 1, %s21
    %s31 = scalar_select %p28, %s30, %s21
    %p32 = scmp.ge.s32.totalorder %s31, 2
    %s33 = scalar_select %p32, 0, %s31
    %s34 = ssub.s32 %s21, %s33
    %s35 = ssub.s32 %s22, %s29
    %s36 = sor.u32 %s34, %s35
    %p37 = scmp.eq.s32.totalorder %s36, 0
    %s39 = sadd.s32 %s38, 1
    %s40 = scalar_select %p37, %s38, %s39
    %p43 = pneg %p37
    %p44 = scmp.eq.s32.totalorder %s14, 1
    %p45 = por %p43, %p44
    %p46 = scmp.ne.s32.totalorder %s38, %s41
    %p47 = scmp.eq.s32.totalorder %s14, 0
    %p48 = por %p46, %p47
    %p49 = scmp.ne.s32.totalorder %s38, %s41
    %p50 = scmp.eq.s32.totalorder %s19, 1
    %p51 = por %p49, %p50
    %p52 = scmp.ne.s32.totalorder %s41, %s42
    %p53 = scmp.eq.s32.totalorder %s19, 0
    %p54 = por %p52, %p53
    %p55 = scmp.ne.s32.totalorder %s41, %s42
    %p56 = scmp.eq.s32.totalorder %s20, 1
    %p57 = por %p55, %p56
    %p59 = scmp.ne.s32.totalorder %s42, %s58
    %p60 = scmp.eq.s32.totalorder %s20, 0
    %p61 = por %p59, %p60
    %s63 = sadd.s32 %s62, 1
    %p66 = scmp.eq.s32.totalorder %s14, 1
    %p67 = scmp.ne.s32.totalorder %s62, %s64
    %p68 = scmp.eq.s32.totalorder %s14, 0
    %p69 = por %p67, %p68
    %p70 = scmp.ne.s32.totalorder %s62, %s64
    %p71 = scmp.eq.s32.totalorder %s19, 1
    %p72 = por %p70, %p71
    %p73 = scmp.ne.s32.totalorder %s64, %s65
    %p74 = scmp.eq.s32.totalorder %s19, 0
    %p75 = por %p73, %p74
    %p76 = scmp.ne.s32.totalorder %s64, %s65
    %p77 = scmp.eq.s32.totalorder %s20, 1
    %p78 = por %p76, %p77
    %p80 = scmp.ne.s32.totalorder %s65, %s79
    %p81 = scmp.eq.s32.totalorder %s20, 0
    %p82 = por %p80, %p81
    %s84 = sadd.s32 %s83, 1
    %p87 = scmp.eq.s32.totalorder %s14, 1
    %p88 = scmp.ne.s32.totalorder %s83, %s85
    %p89 = scmp.eq.s32.totalorder %s14, 0
    %p90 = por %p88, %p89
    %p91 = scmp.ne.s32.totalorder %s83, %s85
    %p92 = scmp.eq.s32.totalorder %s19, 1
    %p93 = por %p91, %p92
    %p94 = scmp.ne.s32.totalorder %s85, %s86
    %p95 = scmp.eq.s32.totalorder %s19, 0
    %p96 = por %p94, %p95
    %p97 = scmp.ne.s32.totalorder %s85, %s86
    %p98 = scmp.eq.s32.totalorder %s20, 1
    %p99 = por %p97, %p98
    %p101 = scmp.ne.s32.totalorder %s86, %s100
    %p102 = scmp.eq.s32.totalorder %s20, 0
    %p103 = por %p101, %p102
    %s105 = sadd.s32 %s104, 1
    %p108 = scmp.eq.s32.totalorder %s14, 1
    %p109 = scmp.ne.s32.totalorder %s104, %s106
    %p110 = scmp.eq.s32.totalorder %s14, 0
    %p111 = por %p109, %p110
    %p112 = scmp.ne.s32.totalorder %s104, %s106
    %p113 = scmp.eq.s32.totalorder %s19, 1
    %p114 = por %p112, %p113
    %p115 = scmp.ne.s32.totalorder %s106, %s107
    %p116 = scmp.eq.s32.totalorder %s19, 0
    %p117 = por %p115, %p116
    %p118 = scmp.ne.s32.totalorder %s106, %s107
    %p119 = scmp.eq.s32.totalorder %s20, 1
    %p120 = por %p118, %p119
    %p122 = scmp.ne.s32.totalorder %s107, %s121
    %p123 = scmp.eq.s32.totalorder %s20, 0
    %p124 = por %p122, %p123
    %s125 = ssub.s32 %s21, %s33
    %p126 = scmp.eq.s32.totalorder %s125, 0
    %s128 = sadd.s32 %s127, 1
    %s129 = scalar_select %p126, %s127, %s128
    %p132 = pneg %p126
    %p133 = scmp.eq.s32.totalorder %s14, 1
    %p134 = por %p132, %p133
    %p135 = scmp.ne.s32.totalorder %s127, %s130
    %p136 = scmp.eq.s32.totalorder %s14, 0
    %p137 = por %p135, %p136
    %p138 = scmp.ne.s32.totalorder %s127, %s130
    %p139 = scmp.eq.s32.totalorder %s19, 1
    %p140 = por %p138, %p139
    %p141 = scmp.ne.s32.totalorder %s130, %s131
    %p142 = scmp.eq.s32.totalorder %s19, 0
    %p143 = por %p141, %p142
    %p144 = scmp.ne.s32.totalorder %s130, %s131
    %p145 = scmp.eq.s32.totalorder %s20, 1
    %p146 = por %p144, %p145
    %p148 = scmp.ne.s32.totalorder %s131, %s147
    %p149 = scmp.eq.s32.totalorder %s20, 0
    %p150 = por %p148, %p149
    %s151 = ssub.s32 %s21, %s33
    %p152 = scmp.eq.s32.totalorder %s151, 0
    %s154 = sadd.s32 %s153, 1
    %s155 = scalar_select %p152, %s153, %s154
    %p158 = pneg %p152
    %p159 = scmp.eq.s32.totalorder %s14, 1
    %p160 = por %p158, %p159
    %p161 = scmp.ne.s32.totalorder %s153, %s156
    %p162 = scmp.eq.s32.totalorder %s14, 0
    %p163 = por %p161, %p162
    %p164 = scmp.ne.s32.totalorder %s153, %s156
    %p165 = scmp.eq.s32.totalorder %s19, 1
    %p166 = por %p164, %p165
    %p167 = scmp.ne.s32.totalorder %s156, %s157
    %p168 = scmp.eq.s32.totalorder %s19, 0
    %p169 = por %p167, %p168
    %p170 = scmp.ne.s32.totalorder %s156, %s157
    %p171 = scmp.eq.s32.totalorder %s20, 1
    %p172 = por %p170, %p171
    %p174 = scmp.ne.s32.totalorder %s157, %s173
    %p175 = scmp.eq.s32.totalorder %s20, 0
    %p176 = por %p174, %p175
    %s177 = ssub.s32 %s21, %s33
    %p178 = scmp.eq.s32.totalorder %s177, 0
    %s180 = sadd.s32 %s179, 1
    %s181 = scalar_select %p178, %s179, %s180
    %p184 = pneg %p178
    %p185 = scmp.eq.s32.totalorder %s14, 1
    %p186 = por %p184, %p185
    %p187 = scmp.ne.s32.totalorder %s179, %s182
    %p188 = scmp.eq.s32.totalorder %s14, 0
    %p189 = por %p187, %p188
    %p190 = scmp.ne.s32.totalorder %s179, %s182
    %p191 = scmp.eq.s32.totalorder %s19, 1
    %p192 = por %p190, %p191
    %p193 = scmp.ne.s32.totalorder %s182, %s183
    %p194 = scmp.eq.s32.totalorder %s19, 0
    %p195 = por %p193, %p194
    %p196 = scmp.ne.s32.totalorder %s182, %s183
    %p197 = scmp.eq.s32.totalorder %s20, 1
    %p198 = por %p196, %p197
    %p200 = scmp.ne.s32.totalorder %s183, %s199
    %p201 = scmp.eq.s32.totalorder %s20, 0
    %p202 = por %p200, %p201
    %s203 = ssub.s32 %s21, %s33
    %p204 = scmp.eq.s32.totalorder %s203, 0
    %s206 = sadd.s32 %s205, 1
    %s207 = scalar_select %p204, %s205, %s206
    %p210 = pneg %p204
    %p211 = scmp.eq.s32.totalorder %s14, 1
    %p212 = por %p210, %p211
    %p213 = scmp.ne.s32.totalorder %s205, %s208
    %p214 = scmp.eq.s32.totalorder %s14, 0
    %p215 = por %p213, %p214
    %p216 = scmp.ne.s32.totalorder %s205, %s208
    %p217 = scmp.eq.s32.totalorder %s19, 1
    %p218 = por %p216, %p217
    %p219 = scmp.ne.s32.totalorder %s208, %s209
    %p220 = scmp.eq.s32.totalorder %s19, 0
    %p221 = por %p219, %p220
    %p222 = scmp.ne.s32.totalorder %s208, %s209
    %p223 = scmp.eq.s32.totalorder %s20, 1
    %p224 = por %p222, %p223
    %p226 = scmp.ne.s32.totalorder %s209, %s225
    %p227 = scmp.eq.s32.totalorder %s20, 0
    %p228 = por %p226, %p227
    %p229 = scmp.le.s32.totalorder 1, %s14
    %p230 = scmp.lt.s32.totalorder %s14, 3
    %p231 = pnand %p229, %p230
    %p232 = pneg %p231
    // Predicated region
    $region9: #{pointnet_encoder_forward.9} parent=5 // pred_check
      _
    $region10: #{pointnet_encoder_forward.9} parent=5 // pred_check_branch
      %234 = sbr.rel (%p231) target = $region12
    $region11: #{pointnet_encoder_forward.9} parent=5 // pred_region
      %s235 = ssub.s32 %s14, 1
      // Predicated region
      $region13: #{pointnet_encoder_forward.9} parent=11 // pred_check
        %p236 = pneg %p75
      $region14: #{pointnet_encoder_forward.9} parent=11 // pred_check_branch
        %238 = sbr.rel (%p236) target = $region16
      $region15: #{pointnet_encoder_forward.9} parent=11 // pred_region
        _
      $region16: #{pointnet_encoder_forward.9} parent=11 // pred_fallthru
        _
      // Predicated region
      $region17: #{pointnet_encoder_forward.9} parent=11 // pred_check
        %p239 = pneg %p96
      $region18: #{pointnet_encoder_forward.9} parent=11 // pred_check_branch
        %241 = sbr.rel (%p239) target = $region20
      $region19: #{pointnet_encoder_forward.9} parent=11 // pred_region
        _
      $region20: #{pointnet_encoder_forward.9} parent=11 // pred_fallthru
        _
      // Predicated region
      $region21: #{pointnet_encoder_forward.9} parent=11 // pred_check
        %p242 = pneg %p117
      $region22: #{pointnet_encoder_forward.9} parent=11 // pred_check_branch
        %244 = sbr.rel (%p242) target = $region24
      $region23: #{pointnet_encoder_forward.9} parent=11 // pred_region
        _
      $region24: #{pointnet_encoder_forward.9} parent=11 // pred_fallthru
        _
    $region12: #{pointnet_encoder_forward.9} parent=5 // pred_fallthru
      _
    %p245 = scmp.lt.s32.totalorder %s14, 2
    // Predicated region
    $region25: #{pointnet_encoder_forward.9} parent=5 // pred_check
      %p246 = pneg %p245
    $region26: #{pointnet_encoder_forward.9} parent=5 // pred_check_branch
      %248 = sbr.rel (%p246) target = $region28
    $region27: #{pointnet_encoder_forward.9} parent=5 // pred_region
      // Predicated region
      $region29: #{pointnet_encoder_forward.9} parent=27 // pred_check
        %p249 = pneg %p48
      $region30: #{pointnet_encoder_forward.9} parent=27 // pred_check_branch
        %251 = sbr.rel (%p249) target = $region32
      $region31: #{pointnet_encoder_forward.9} parent=27 // pred_region
        %s252 = smul.u32 8, %s22
        %p253 = scmp.lt.s32.totalorder %s21, 1
        %s254 = scalar_select %p253, %s21, 1
        %p255 = scmp.lt.s32.totalorder %s252, 7
        %s256 = scalar_select %p255, %s252, 7
        %s257 = smul.addr %s254, 8
        %s258 = sadd.s32 %s256, %s257
        %s259 = smul.addr %s258, 4
        %s260 = scalar_lea.vmem %s0, %s259
        %s261 = smul.u32 8, %s22
      $region32: #{pointnet_encoder_forward.9} parent=27 // pred_fallthru
        _
    $region28: #{pointnet_encoder_forward.9} parent=5 // pred_fallthru
      _
    %p262 = scmp.le.s32.totalorder 1, %s14
    %p263 = scmp.lt.s32.totalorder %s14, 3
    %p264 = pnand %p262, %p263
    %p265 = pneg %p264
    // Predicated region
    $region33: #{pointnet_encoder_forward.9} parent=5 // pred_check
      _
    $region34: #{pointnet_encoder_forward.9} parent=5 // pred_check_branch
      %267 = sbr.rel (%p264) target = $region36
    $region35: #{pointnet_encoder_forward.9} parent=5 // pred_region
      %s268 = ssub.s32 %s14, 1
      %s269 = smul.u32 8, %s24
      %p270 = scmp.lt.s32.totalorder %s23, 1
      %s271 = scalar_select %p270, %s23, 1
      %p272 = scmp.lt.s32.totalorder %s269, 7
      %s273 = scalar_select %p272, %s269, 7
      %s274 = smul.addr %s271, 8
      %s275 = sadd.s32 %s273, %s274
      %s276 = smul.addr %s275, 4
      %s277 = scalar_lea.vmem %s0, %s276
      %p278 = pneg %p54
      %p279 = pneg %p51
      %p280 = pneg %p75
      %p281 = pneg %p72
      %p282 = pneg %p96
      %p283 = pneg %p93
      %p284 = pneg %p117
      %p285 = pneg %p114
      %p286 = pneg %p143
      %p287 = pneg %p140
      %p288 = scmp.lt.s32.totalorder %s23, 1
      %s289 = scalar_select %p288, %s23, 1
      %s290 = smul.addr %s289, 8
      %s291 = scalar_lea.vmem %s4, %s290
      %p292 = pneg %p169
      %p293 = pneg %p166
      %p294 = scmp.lt.s32.totalorder %s23, 1
      %s295 = scalar_select %p294, %s23, 1
      %s296 = smul.addr %s295, 8
      %s297 = scalar_lea.vmem %s5, %s296
      %p298 = pneg %p195
      %p299 = pneg %p192
      %p300 = scmp.lt.s32.totalorder %s23, 1
      %s301 = scalar_select %p300, %s23, 1
      %s302 = smul.addr %s301, 8
      %s303 = scalar_lea.vmem %s6, %s302
      %p304 = pneg %p221
      %p305 = pneg %p218
      %p306 = scmp.lt.s32.totalorder %s23, 1
      %s307 = scalar_select %p306, %s23, 1
      %s308 = smul.addr %s307, 8
      %s309 = scalar_lea.vmem %s7, %s308
      %s310 = smul.u32 8, %s24
      %p311 = scmp.lt.s32.totalorder %s23, 1
      %s312 = scalar_select %p311, %s23, 1
      %p313 = scmp.lt.s32.totalorder %s310, 7
      %s314 = scalar_select %p313, %s310, 7
      %s315 = smul.addr %s312, 8
      %s316 = sadd.s32 %s314, %s315
      %s317 = smul.addr %s316, 4
      %s318 = scalar_lea.vmem %s0, %s317
      %s319 = smul.u32 8, %s24
      %p320 = scmp.lt.s32.totalorder %s23, 1
      %s321 = scalar_select %p320, %s23, 1
      %s322 = smul.addr %s321, 8
      %s323 = scalar_lea.vmem %s4, %s322
      %p324 = scmp.lt.s32.totalorder %s23, 1
      %s325 = scalar_select %p324, %s23, 1
      %s326 = smul.addr %s325, 8
      %s327 = scalar_lea.vmem %s5, %s326
      %p328 = scmp.lt.s32.totalorder %s23, 1
      %s329 = scalar_select %p328, %s23, 1
      %s330 = smul.addr %s329, 8
      %s331 = scalar_lea.vmem %s6, %s330
      %p332 = scmp.lt.s32.totalorder %s23, 1
      %s333 = scalar_select %p332, %s23, 1
      %s334 = smul.addr %s333, 8
      %s335 = scalar_lea.vmem %s7, %s334
      %v337 = vld [vmem:[%s318] sm:$0xf]
      %v338 = vld [vmem:[%s318 + $0x4] sm:$0xf]
      %v339 = vld [vmem:[%s318 + $0x8] sm:$0xf]
      %v340 = vld [vmem:[%s318 + $0xc] sm:$0xf]
      %v341 = vld [vmem:[%s318 + $0x10] sm:$0xf]
      %v342 = vld [vmem:[%s318 + $0x14] sm:$0xf]
      %v343 = vld [vmem:[%s318 + $0x18] sm:$0xf]
      %v344 = vld [vmem:[%s318 + $0x1c] sm:$0xf]
      %v345 = vunpack.c.l.bf16 %v337
      %v346 = vunpack.c.l.bf16 %v338
      %v347 = vunpack.c.l.bf16 %v339
      %v348 = vunpack.c.l.bf16 %v340
      %v349 = vunpack.c.l.bf16 %v341
      %v350 = vunpack.c.l.bf16 %v342
      %v351 = vunpack.c.l.bf16 %v343
      %v352 = vunpack.c.l.bf16 %v344
      %v353 = vld [vmem:[%s2] sm:$0x1]
      %v355 = vlaneseq
      %v356 = vshrl.u32 %v355, 7
      %v357 = vsub.s32 0, %v356
      %v358 = vrot.slane %v353, %v357
      %v360 = vmul.f32 %v345, %v358
      %v361 = vmul.f32 %v346, %v358
      %v362 = vmul.f32 %v347, %v358
      %v363 = vmul.f32 %v348, %v358
      %v364 = vmul.f32 %v349, %v358
      %v365 = vmul.f32 %v350, %v358
      %v366 = vmul.f32 %v351, %v358
      %v367 = vmul.f32 %v352, %v358
      %v368 = vld [vmem:[%s3] sm:$0x1]
      %v370 = vlaneseq
      %v371 = vshrl.u32 %v370, 7
      %v372 = vsub.s32 0, %v371
      %v373 = vrot.slane %v368, %v372
      %v375 = vadd.f32 %v360, %v373
      %v376 = vadd.f32 %v361, %v373
      %v377 = vadd.f32 %v362, %v373
      %v378 = vadd.f32 %v363, %v373
      %v379 = vadd.f32 %v364, %v373
      %v380 = vadd.f32 %v365, %v373
      %v381 = vadd.f32 %v366, %v373
      %v382 = vadd.f32 %v367, %v373
      %v383 = vmax.f32 %v375, 0.0
      %v384 = vmax.f32 %v376, 0.0
      %v385 = vmax.f32 %v377, 0.0
      %v386 = vmax.f32 %v378, 0.0
      %v387 = vmax.f32 %v379, 0.0
      %v388 = vmax.f32 %v380, 0.0
      %v389 = vmax.f32 %v381, 0.0
      %v390 = vmax.f32 %v382, 0.0
      %v391 = vpack.c.bf16 %v384, %v383
      %v392 = vpack.c.bf16 %v386, %v385
      %v393 = vpack.c.bf16 %v388, %v387
      %v394 = vpack.c.bf16 %v390, %v389
      %v395 = vld [vmem:[%s1] sm:$0xff]
      %v396 = vld [vmem:[%s1 + $0x8] sm:$0xff]
      %v397 = vld [vmem:[%s1 + $0x10] sm:$0xff]
      %v398 = vld [vmem:[%s1 + $0x18] sm:$0xff]
      %v399 = vld [vmem:[%s1 + $0x20] sm:$0xff]
      %v400 = vld [vmem:[%s1 + $0x28] sm:$0xff]
      %v401 = vld [vmem:[%s1 + $0x30] sm:$0xff]
      %v402 = vld [vmem:[%s1 + $0x38] sm:$0xff]
      %v403 = vld [vmem:[%s1 + $0x40] sm:$0xff]
      %v404 = vld [vmem:[%s1 + $0x48] sm:$0xff]
      %v405 = vld [vmem:[%s1 + $0x50] sm:$0xff]
      %v406 = vld [vmem:[%s1 + $0x58] sm:$0xff]
      %v407 = vld [vmem:[%s1 + $0x60] sm:$0xff]
      %v408 = vld [vmem:[%s1 + $0x68] sm:$0xff]
      %v409 = vld [vmem:[%s1 + $0x70] sm:$0xff]
      %v410 = vld [vmem:[%s1 + $0x78] sm:$0xff]
      %v411 = vld [vmem:[%s1 + $0x80] sm:$0xff]
      %v412 = vld [vmem:[%s1 + $0x88] sm:$0xff]
      %v413 = vld [vmem:[%s1 + $0x90] sm:$0xff]
      %v414 = vld [vmem:[%s1 + $0x98] sm:$0xff]
      %v415 = vld [vmem:[%s1 + $0xa0] sm:$0xff]
      %v416 = vld [vmem:[%s1 + $0xa8] sm:$0xff]
      %v417 = vld [vmem:[%s1 + $0xb0] sm:$0xff]
      %v418 = vld [vmem:[%s1 + $0xb8] sm:$0xff]
      %v419 = vld [vmem:[%s1 + $0xc0] sm:$0xff]
      %v420 = vld [vmem:[%s1 + $0xc8] sm:$0xff]
      %v421 = vld [vmem:[%s1 + $0xd0] sm:$0xff]
      %v422 = vld [vmem:[%s1 + $0xd8] sm:$0xff]
      %v423 = vld [vmem:[%s1 + $0xe0] sm:$0xff]
      %v424 = vld [vmem:[%s1 + $0xe8] sm:$0xff]
      %v425 = vld [vmem:[%s1 + $0xf0] sm:$0xff]
      %v426 = vld [vmem:[%s1 + $0xf8] sm:$0xff]
      %v427 = vld [vmem:[%s1 + $0x100] sm:$0xff]
      %v428 = vld [vmem:[%s1 + $0x108] sm:$0xff]
      %v429 = vld [vmem:[%s1 + $0x110] sm:$0xff]
      %v430 = vld [vmem:[%s1 + $0x118] sm:$0xff]
      %v431 = vld [vmem:[%s1 + $0x120] sm:$0xff]
      %v432 = vld [vmem:[%s1 + $0x128] sm:$0xff]
      %v433 = vld [vmem:[%s1 + $0x130] sm:$0xff]
      %v434 = vld [vmem:[%s1 + $0x138] sm:$0xff]
      %v435 = vld [vmem:[%s1 + $0x140] sm:$0xff]
      %v436 = vld [vmem:[%s1 + $0x148] sm:$0xff]
      %v437 = vld [vmem:[%s1 + $0x150] sm:$0xff]
      %v438 = vld [vmem:[%s1 + $0x158] sm:$0xff]
      %v439 = vld [vmem:[%s1 + $0x160] sm:$0xff]
      %v440 = vld [vmem:[%s1 + $0x168] sm:$0xff]
      %v441 = vld [vmem:[%s1 + $0x170] sm:$0xff]
      %v442 = vld [vmem:[%s1 + $0x178] sm:$0xff]
      %v443 = vld [vmem:[%s1 + $0x180] sm:$0xff]
      %v444 = vld [vmem:[%s1 + $0x188] sm:$0xff]
      %v445 = vld [vmem:[%s1 + $0x190] sm:$0xff]
      %v446 = vld [vmem:[%s1 + $0x198] sm:$0xff]
      %v447 = vld [vmem:[%s1 + $0x1a0] sm:$0xff]
      %v448 = vld [vmem:[%s1 + $0x1a8] sm:$0xff]
      %v449 = vld [vmem:[%s1 + $0x1b0] sm:$0xff]
      %v450 = vld [vmem:[%s1 + $0x1b8] sm:$0xff]
      %v451 = vld [vmem:[%s1 + $0x1c0] sm:$0xff]
      %v452 = vld [vmem:[%s1 + $0x1c8] sm:$0xff]
      %v453 = vld [vmem:[%s1 + $0x1d0] sm:$0xff]
      %v454 = vld [vmem:[%s1 + $0x1d8] sm:$0xff]
      %v455 = vld [vmem:[%s1 + $0x1e0] sm:$0xff]
      %v456 = vld [vmem:[%s1 + $0x1e8] sm:$0xff]
      %v457 = vld [vmem:[%s1 + $0x1f0] sm:$0xff]
      %v458 = vld [vmem:[%s1 + $0x1f8] sm:$0xff]
      %v523 = vunpack.c.l.b16 %v395
      %v524 = vunpack.c.h.b16 %v395
      %v525 = vunpack.c.l.b16 %v396
      %v526 = vunpack.c.h.b16 %v396
      %v527 = vunpack.c.l.b16 %v397
      %v528 = vunpack.c.h.b16 %v397
      %v529 = vunpack.c.l.b16 %v398
      %v530 = vunpack.c.h.b16 %v398
      %v531 = vunpack.c.l.b16 %v399
      %v532 = vunpack.c.h.b16 %v399
      %v533 = vunpack.c.l.b16 %v400
      %v534 = vunpack.c.h.b16 %v400
      %v535 = vunpack.c.l.b16 %v401
      %v536 = vunpack.c.h.b16 %v401
      %v537 = vunpack.c.l.b16 %v402
      %v538 = vunpack.c.h.b16 %v402
      %v539 = vunpack.c.l.b16 %v403
      %v540 = vunpack.c.h.b16 %v403
      %v541 = vunpack.c.l.b16 %v404
      %v542 = vunpack.c.h.b16 %v404
      %v543 = vunpack.c.l.b16 %v405
      %v544 = vunpack.c.h.b16 %v405
      %v545 = vunpack.c.l.b16 %v406
      %v546 = vunpack.c.h.b16 %v406
      %v547 = vunpack.c.l.b16 %v407
      %v548 = vunpack.c.h.b16 %v407
      %v549 = vunpack.c.l.b16 %v408
      %v550 = vunpack.c.h.b16 %v408
      %v551 = vunpack.c.l.b16 %v409
      %v552 = vunpack.c.h.b16 %v409
      %v553 = vunpack.c.l.b16 %v410
      %v554 = vunpack.c.h.b16 %v410
      %v555 = vunpack.c.l.b16 %v411
      %v556 = vunpack.c.h.b16 %v411
      %v557 = vunpack.c.l.b16 %v412
      %v558 = vunpack.c.h.b16 %v412
      %v559 = vunpack.c.l.b16 %v413
      %v560 = vunpack.c.h.b16 %v413
      %v561 = vunpack.c.l.b16 %v414
      %v562 = vunpack.c.h.b16 %v414
      %v563 = vunpack.c.l.b16 %v415
      %v564 = vunpack.c.h.b16 %v415
      %v565 = vunpack.c.l.b16 %v416
      %v566 = vunpack.c.h.b16 %v416
      %v567 = vunpack.c.l.b16 %v417
      %v568 = vunpack.c.h.b16 %v417
      %v569 = vunpack.c.l.b16 %v418
      %v570 = vunpack.c.h.b16 %v418
      %v571 = vunpack.c.l.b16 %v419
      %v572 = vunpack.c.h.b16 %v419
      %v573 = vunpack.c.l.b16 %v420
      %v574 = vunpack.c.h.b16 %v420
      %v575 = vunpack.c.l.b16 %v421
      %v576 = vunpack.c.h.b16 %v421
      %v577 = vunpack.c.l.b16 %v422
      %v578 = vunpack.c.h.b16 %v422
      %v579 = vunpack.c.l.b16 %v423
      %v580 = vunpack.c.h.b16 %v423
      %v581 = vunpack.c.l.b16 %v424
      %v582 = vunpack.c.h.b16 %v424
      %v583 = vunpack.c.l.b16 %v425
      %v584 = vunpack.c.h.b16 %v425
      %v585 = vunpack.c.l.b16 %v426
      %v586 = vunpack.c.h.b16 %v426
      %v587 = vunpack.c.l.b16 %v427
      %v588 = vunpack.c.h.b16 %v427
      %v589 = vunpack.c.l.b16 %v428
      %v590 = vunpack.c.h.b16 %v428
      %v591 = vunpack.c.l.b16 %v429
      %v592 = vunpack.c.h.b16 %v429
      %v593 = vunpack.c.l.b16 %v430
      %v594 = vunpack.c.h.b16 %v430
      %v595 = vunpack.c.l.b16 %v431
      %v596 = vunpack.c.h.b16 %v431
      %v597 = vunpack.c.l.b16 %v432
      %v598 = vunpack.c.h.b16 %v432
      %v599 = vunpack.c.l.b16 %v433
      %v600 = vunpack.c.h.b16 %v433
      %v601 = vunpack.c.l.b16 %v434
      %v602 = vunpack.c.h.b16 %v434
      %v603 = vunpack.c.l.b16 %v435
      %v604 = vunpack.c.h.b16 %v435
      %v605 = vunpack.c.l.b16 %v436
      %v606 = vunpack.c.h.b16 %v436
      %v607 = vunpack.c.l.b16 %v437
      %v608 = vunpack.c.h.b16 %v437
      %v609 = vunpack.c.l.b16 %v438
      %v610 = vunpack.c.h.b16 %v438
      %v611 = vunpack.c.l.b16 %v439
      %v612 = vunpack.c.h.b16 %v439
      %v613 = vunpack.c.l.b16 %v440
      %v614 = vunpack.c.h.b16 %v440
      %v615 = vunpack.c.l.b16 %v441
      %v616 = vunpack.c.h.b16 %v441
      %v617 = vunpack.c.l.b16 %v442
      %v618 = vunpack.c.h.b16 %v442
      %v619 = vunpack.c.l.b16 %v443
      %v620 = vunpack.c.h.b16 %v443
      %v621 = vunpack.c.l.b16 %v444
      %v622 = vunpack.c.h.b16 %v444
      %v623 = vunpack.c.l.b16 %v445
      %v624 = vunpack.c.h.b16 %v445
      %v625 = vunpack.c.l.b16 %v446
      %v626 = vunpack.c.h.b16 %v446
      %v627 = vunpack.c.l.b16 %v447
      %v628 = vunpack.c.h.b16 %v447
      %v629 = vunpack.c.l.b16 %v448
      %v630 = vunpack.c.h.b16 %v448
      %v631 = vunpack.c.l.b16 %v449
      %v632 = vunpack.c.h.b16 %v449
      %v633 = vunpack.c.l.b16 %v450
      %v634 = vunpack.c.h.b16 %v450
      %v635 = vunpack.c.l.b16 %v451
      %v636 = vunpack.c.h.b16 %v451
      %v637 = vunpack.c.l.b16 %v452
      %v638 = vunpack.c.h.b16 %v452
      %v639 = vunpack.c.l.b16 %v453
      %v640 = vunpack.c.h.b16 %v453
      %v641 = vunpack.c.l.b16 %v454
      %v642 = vunpack.c.h.b16 %v454
      %v643 = vunpack.c.l.b16 %v455
      %v644 = vunpack.c.h.b16 %v455
      %v645 = vunpack.c.l.b16 %v456
      %v646 = vunpack.c.h.b16 %v456
      %v647 = vunpack.c.l.b16 %v457
      %v648 = vunpack.c.h.b16 %v457
      %v649 = vunpack.c.l.b16 %v458
      %v650 = vunpack.c.h.b16 %v458
      %v651 = vpack.c.b16 %v531, %v523
      %v652 = vpack.c.b16 %v532, %v524
      %v653 = vpack.c.b16 %v533, %v525
      %v654 = vpack.c.b16 %v534, %v526
      %v655 = vpack.c.b16 %v535, %v527
      %v656 = vpack.c.b16 %v536, %v528
      %v657 = vpack.c.b16 %v537, %v529
      %v658 = vpack.c.b16 %v538, %v530
      %v659 = vpack.c.b16 %v547, %v539
      %v660 = vpack.c.b16 %v548, %v540
      %v661 = vpack.c.b16 %v549, %v541
      %v662 = vpack.c.b16 %v550, %v542
      %v663 = vpack.c.b16 %v551, %v543
      %v664 = vpack.c.b16 %v552, %v544
      %v665 = vpack.c.b16 %v553, %v545
      %v666 = vpack.c.b16 %v554, %v546
      %v667 = vpack.c.b16 %v563, %v555
      %v668 = vpack.c.b16 %v564, %v556
      %v669 = vpack.c.b16 %v565, %v557
      %v670 = vpack.c.b16 %v566, %v558
      %v671 = vpack.c.b16 %v567, %v559
      %v672 = vpack.c.b16 %v568, %v560
      %v673 = vpack.c.b16 %v569, %v561
      %v674 = vpack.c.b16 %v570, %v562
      %v675 = vpack.c.b16 %v579, %v571
      %v676 = vpack.c.b16 %v580, %v572
      %v677 = vpack.c.b16 %v581, %v573
      %v678 = vpack.c.b16 %v582, %v574
      %v679 = vpack.c.b16 %v583, %v575
      %v680 = vpack.c.b16 %v584, %v576
      %v681 = vpack.c.b16 %v585, %v577
      %v682 = vpack.c.b16 %v586, %v578
      %v683 = vpack.c.b16 %v595, %v587
      %v684 = vpack.c.b16 %v596, %v588
      %v685 = vpack.c.b16 %v597, %v589
      %v686 = vpack.c.b16 %v598, %v590
      %v687 = vpack.c.b16 %v599, %v591
      %v688 = vpack.c.b16 %v600, %v592
      %v689 = vpack.c.b16 %v601, %v593
      %v690 = vpack.c.b16 %v602, %v594
      %v691 = vpack.c.b16 %v611, %v603
      %v692 = vpack.c.b16 %v612, %v604
      %v693 = vpack.c.b16 %v613, %v605
      %v694 = vpack.c.b16 %v614, %v606
      %v695 = vpack.c.b16 %v615, %v607
      %v696 = vpack.c.b16 %v616, %v608
      %v697 = vpack.c.b16 %v617, %v609
      %v698 = vpack.c.b16 %v618, %v610
      %v699 = vpack.c.b16 %v627, %v619
      %v700 = vpack.c.b16 %v628, %v620
      %v701 = vpack.c.b16 %v629, %v621
      %v702 = vpack.c.b16 %v630, %v622
      %v703 = vpack.c.b16 %v631, %v623
      %v704 = vpack.c.b16 %v632, %v624
      %v705 = vpack.c.b16 %v633, %v625
      %v706 = vpack.c.b16 %v634, %v626
      %v707 = vpack.c.b16 %v643, %v635
      %v708 = vpack.c.b16 %v644, %v636
      %v709 = vpack.c.b16 %v645, %v637
      %v710 = vpack.c.b16 %v646, %v638
      %v711 = vpack.c.b16 %v647, %v639
      %v712 = vpack.c.b16 %v648, %v640
      %v713 = vpack.c.b16 %v649, %v641
      %v714 = vpack.c.b16 %v650, %v642
      %779 = vmatprep.subr.bf16.mxu0 %v708
      %780 = vmatpush1.bf16.msra.mxu0 %v707
      %781 = vmatprep.subr.bf16.mxu0 %v700
      %782 = vmatpush1.bf16.msra.mxu0 %v699
      %783 = vmatprep.subr.bf16.mxu0 %v692
      %784 = vmatpush1.bf16.msra.mxu0 %v691
      %785 = vmatprep.subr.bf16.mxu0 %v684
      %786 = vmatpush1.bf16.msra.mxu0 %v683
      %787 = vmatprep.subr.bf16.mxu0 %v676
      %788 = vmatpush1.bf16.msra.mxu0 %v675
      %789 = vmatprep.subr.bf16.mxu0 %v668
      %790 = vmatpush1.bf16.msra.mxu0 %v667
      %791 = vmatprep.subr.bf16.mxu0 %v660
      %792 = vmatpush1.bf16.msra.mxu0 %v659
      %793 = vmatprep.subr.bf16.mxu0 %v652
      %794 = vmatpush1.bf16.msra.mxu0 %v651
      %795 = vmatprep.subr.bf16.mxu0 0
      %796 = vmatpush2.bf16.msra.mxu0 0
      %797 = vmatprep.subr.bf16.mxu0 0
      %798 = vmatpush2.bf16.msra.mxu0 0
      %799 = vmatprep.subr.bf16.mxu0 0
      %800 = vmatpush2.bf16.msra.mxu0 0
      %801 = vmatprep.subr.bf16.mxu0 0
      %802 = vmatpush2.bf16.msra.mxu0 0
      %803 = vmatprep.subr.bf16.mxu0 0
      %804 = vmatpush2.bf16.msra.mxu0 0
      %805 = vmatprep.subr.bf16.mxu0 0
      %806 = vmatpush2.bf16.msra.mxu0 0
      %807 = vmatprep.subr.bf16.mxu0 0
      %808 = vmatpush2.bf16.msra.mxu0 0
      %809 = vmatprep.subr.bf16.mxu0 0
      %810 = vmatpush2.bf16.msra.mxu0 0
      %811 = vmatprep.mubr.bf16.mxu0 0
      %812 = vmatmul.mubr.bf16.gmra.mxu0 %v391
      %v813 = vpop.f32.mrf.mxu0
      %v814 = vadd.f32 0.0, %v813
      %v815 = vpop.f32.mrf.mxu0
      %v816 = vadd.f32 0.0, %v815
      %v817 = vpop.f32.mrf.mxu0
      %v818 = vadd.f32 0.0, %v817
      %v819 = vpop.f32.mrf.mxu0
      %v820 = vadd.f32 0.0, %v819
      %821 = vmatprep.mubr.bf16.mxu0 0
      %822 = vmatmul.mubr.bf16.gmra.mxu0 %v392
      %v823 = vpop.f32.mrf.mxu0
      %v824 = vadd.f32 0.0, %v823
      %v825 = vpop.f32.mrf.mxu0
      %v826 = vadd.f32 0.0, %v825
      %v827 = vpop.f32.mrf.mxu0
      %v828 = vadd.f32 0.0, %v827
      %v829 = vpop.f32.mrf.mxu0
      %v830 = vadd.f32 0.0, %v829
      %831 = vmatprep.mubr.bf16.mxu0 0
      %832 = vmatmul.mubr.bf16.gmra.mxu0 %v393
      %v833 = vpop.f32.mrf.mxu0
      %v834 = vadd.f32 0.0, %v833
      %v835 = vpop.f32.mrf.mxu0
      %v836 = vadd.f32 0.0, %v835
      %v837 = vpop.f32.mrf.mxu0
      %v838 = vadd.f32 0.0, %v837
      %v839 = vpop.f32.mrf.mxu0
      %v840 = vadd.f32 0.0, %v839
      %841 = vmatprep.mubr.bf16.mxu0 0
      %842 = vmatmul.mubr.bf16.gmra.mxu0 %v394
      %v843 = vpop.f32.mrf.mxu0
      %v844 = vadd.f32 0.0, %v843
      %v845 = vpop.f32.mrf.mxu0
      %v846 = vadd.f32 0.0, %v845
      %v847 = vpop.f32.mrf.mxu0
      %v848 = vadd.f32 0.0, %v847
      %v849 = vpop.f32.mrf.mxu0
      %v850 = vadd.f32 0.0, %v849
      %851 = vdwg.mxu0
      %852 = vmatprep.subr.bf16.mxu0 %v710
      %853 = vmatpush1.bf16.msra.mxu0 %v709
      %854 = vmatprep.subr.bf16.mxu0 %v702
      %855 = vmatpush1.bf16.msra.mxu0 %v701
      %856 = vmatprep.subr.bf16.mxu0 %v694
      %857 = vmatpush1.bf16.msra.mxu0 %v693
      %858 = vmatprep.subr.bf16.mxu0 %v686
      %859 = vmatpush1.bf16.msra.mxu0 %v685
      %860 = vmatprep.subr.bf16.mxu0 %v678
      %861 = vmatpush1.bf16.msra.mxu0 %v677
      %862 = vmatprep.subr.bf16.mxu0 %v670
      %863 = vmatpush1.bf16.msra.mxu0 %v669
      %864 = vmatprep.subr.bf16.mxu0 %v662
      %865 = vmatpush1.bf16.msra.mxu0 %v661
      %866 = vmatprep.subr.bf16.mxu0 %v654
      %867 = vmatpush1.bf16.msra.mxu0 %v653
      %868 = vmatprep.subr.bf16.mxu0 0
      %869 = vmatpush2.bf16.msra.mxu0 0
      %870 = vmatprep.subr.bf16.mxu0 0
      %871 = vmatpush2.bf16.msra.mxu0 0
      %872 = vmatprep.subr.bf16.mxu0 0
      %873 = vmatpush2.bf16.msra.mxu0 0
      %874 = vmatprep.subr.bf16.mxu0 0
      %875 = vmatpush2.bf16.msra.mxu0 0
      %876 = vmatprep.subr.bf16.mxu0 0
      %877 = vmatpush2.bf16.msra.mxu0 0
      %878 = vmatprep.subr.bf16.mxu0 0
      %879 = vmatpush2.bf16.msra.mxu0 0
      %880 = vmatprep.subr.bf16.mxu0 0
      %881 = vmatpush2.bf16.msra.mxu0 0
      %882 = vmatprep.subr.bf16.mxu0 0
      %883 = vmatpush2.bf16.msra.mxu0 0
      %884 = vmatprep.mubr.bf16.mxu0 0
      %885 = vmatmul.mubr.bf16.gmra.mxu0 %v391
      %v886 = vpop.f32.mrf.mxu0
      %v887 = vadd.f32 0.0, %v886
      %v888 = vpop.f32.mrf.mxu0
      %v889 = vadd.f32 0.0, %v888
      %v890 = vpop.f32.mrf.mxu0
      %v891 = vadd.f32 0.0, %v890
      %v892 = vpop.f32.mrf.mxu0
      %v893 = vadd.f32 0.0, %v892
      %894 = vmatprep.mubr.bf16.mxu0 0
      %895 = vmatmul.mubr.bf16.gmra.mxu0 %v392
      %v896 = vpop.f32.mrf.mxu0
      %v897 = vadd.f32 0.0, %v896
      %v898 = vpop.f32.mrf.mxu0
      %v899 = vadd.f32 0.0, %v898
      %v900 = vpop.f32.mrf.mxu0
      %v901 = vadd.f32 0.0, %v900
      %v902 = vpop.f32.mrf.mxu0
      %v903 = vadd.f32 0.0, %v902
      %904 = vmatprep.mubr.bf16.mxu0 0
      %905 = vmatmul.mubr.bf16.gmra.mxu0 %v393
      %v906 = vpop.f32.mrf.mxu0
      %v907 = vadd.f32 0.0, %v906
      %v908 = vpop.f32.mrf.mxu0
      %v909 = vadd.f32 0.0, %v908
      %v910 = vpop.f32.mrf.mxu0
      %v911 = vadd.f32 0.0, %v910
      %v912 = vpop.f32.mrf.mxu0
      %v913 = vadd.f32 0.0, %v912
      %914 = vmatprep.mubr.bf16.mxu0 0
      %915 = vmatmul.mubr.bf16.gmra.mxu0 %v394
      %v916 = vpop.f32.mrf.mxu0
      %v917 = vadd.f32 0.0, %v916
      %v918 = vpop.f32.mrf.mxu0
      %v919 = vadd.f32 0.0, %v918
      %v920 = vpop.f32.mrf.mxu0
      %v921 = vadd.f32 0.0, %v920
      %v922 = vpop.f32.mrf.mxu0
      %v923 = vadd.f32 0.0, %v922
      %924 = vdwg.mxu0
      %925 = vmatprep.subr.bf16.mxu0 %v712
      %926 = vmatpush1.bf16.msra.mxu0 %v711
      %927 = vmatprep.subr.bf16.mxu0 %v704
      %928 = vmatpush1.bf16.msra.mxu0 %v703
      %929 = vmatprep.subr.bf16.mxu0 %v696
      %930 = vmatpush1.bf16.msra.mxu0 %v695
      %931 = vmatprep.subr.bf16.mxu0 %v688
      %932 = vmatpush1.bf16.msra.mxu0 %v687
      %933 = vmatprep.subr.bf16.mxu0 %v680
      %934 = vmatpush1.bf16.msra.mxu0 %v679
      %935 = vmatprep.subr.bf16.mxu0 %v672
      %936 = vmatpush1.bf16.msra.mxu0 %v671
      %937 = vmatprep.subr.bf16.mxu0 %v664
      %938 = vmatpush1.bf16.msra.mxu0 %v663
      %939 = vmatprep.subr.bf16.mxu0 %v656
      %940 = vmatpush1.bf16.msra.mxu0 %v655
      %941 = vmatprep.subr.bf16.mxu0 0
      %942 = vmatpush2.bf16.msra.mxu0 0
      %943 = vmatprep.subr.bf16.mxu0 0
      %944 = vmatpush2.bf16.msra.mxu0 0
      %945 = vmatprep.subr.bf16.mxu0 0
      %946 = vmatpush2.bf16.msra.mxu0 0
      %947 = vmatprep.subr.bf16.mxu0 0
      %948 = vmatpush2.bf16.msra.mxu0 0
      %949 = vmatprep.subr.bf16.mxu0 0
      %950 = vmatpush2.bf16.msra.mxu0 0
      %951 = vmatprep.subr.bf16.mxu0 0
      %952 = vmatpush2.bf16.msra.mxu0 0
      %953 = vmatprep.subr.bf16.mxu0 0
      %954 = vmatpush2.bf16.msra.mxu0 0
      %955 = vmatprep.subr.bf16.mxu0 0
      %956 = vmatpush2.bf16.msra.mxu0 0
      %957 = vmatprep.mubr.bf16.mxu0 0
      %958 = vmatmul.mubr.bf16.gmra.mxu0 %v391
      %v959 = vpop.f32.mrf.mxu0
      %v960 = vadd.f32 0.0, %v959
      %v961 = vpop.f32.mrf.mxu0
      %v962 = vadd.f32 0.0, %v961
      %v963 = vpop.f32.mrf.mxu0
      %v964 = vadd.f32 0.0, %v963
      %v965 = vpop.f32.mrf.mxu0
      %v966 = vadd.f32 0.0, %v965
      %967 = vmatprep.mubr.bf16.mxu0 0
      %968 = vmatmul.mubr.bf16.gmra.mxu0 %v392
      %v969 = vpop.f32.mrf.mxu0
      %v970 = vadd.f32 0.0, %v969
      %v971 = vpop.f32.mrf.mxu0
      %v972 = vadd.f32 0.0, %v971
      %v973 = vpop.f32.mrf.mxu0
      %v974 = vadd.f32 0.0, %v973
      %v975 = vpop.f32.mrf.mxu0
      %v976 = vadd.f32 0.0, %v975
      %977 = vmatprep.mubr.bf16.mxu0 0
      %978 = vmatmul.mubr.bf16.gmra.mxu0 %v393
      %v979 = vpop.f32.mrf.mxu0
      %v980 = vadd.f32 0.0, %v979
      %v981 = vpop.f32.mrf.mxu0
      %v982 = vadd.f32 0.0, %v981
      %v983 = vpop.f32.mrf.mxu0
      %v984 = vadd.f32 0.0, %v983
      %v985 = vpop.f32.mrf.mxu0
      %v986 = vadd.f32 0.0, %v985
      %987 = vmatprep.mubr.bf16.mxu0 0
      %988 = vmatmul.mubr.bf16.gmra.mxu0 %v394
      %v989 = vpop.f32.mrf.mxu0
      %v990 = vadd.f32 0.0, %v989
      %v991 = vpop.f32.mrf.mxu0
      %v992 = vadd.f32 0.0, %v991
      %v993 = vpop.f32.mrf.mxu0
      %v994 = vadd.f32 0.0, %v993
      %v995 = vpop.f32.mrf.mxu0
      %v996 = vadd.f32 0.0, %v995
      %997 = vdwg.mxu0
      %998 = vmatprep.subr.bf16.mxu0 %v714
      %999 = vmatpush1.bf16.msra.mxu0 %v713
      %1000 = vmatprep.subr.bf16.mxu0 %v706
      %1001 = vmatpush1.bf16.msra.mxu0 %v705
      %1002 = vmatprep.subr.bf16.mxu0 %v698
      %1003 = vmatpush1.bf16.msra.mxu0 %v697
      %1004 = vmatprep.subr.bf16.mxu0 %v690
      %1005 = vmatpush1.bf16.msra.mxu0 %v689
      %1006 = vmatprep.subr.bf16.mxu0 %v682
      %1007 = vmatpush1.bf16.msra.mxu0 %v681
      %1008 = vmatprep.subr.bf16.mxu0 %v674
      %1009 = vmatpush1.bf16.msra.mxu0 %v673
      %1010 = vmatprep.subr.bf16.mxu0 %v666
      %1011 = vmatpush1.bf16.msra.mxu0 %v665
      %1012 = vmatprep.subr.bf16.mxu0 %v658
      %1013 = vmatpush1.bf16.msra.mxu0 %v657
      %1014 = vmatprep.subr.bf16.mxu0 0
      %1015 = vmatpush2.bf16.msra.mxu0 0
      %1016 = vmatprep.subr.bf16.mxu0 0
      %1017 = vmatpush2.bf16.msra.mxu0 0
      %1018 = vmatprep.subr.bf16.mxu0 0
      %1019 = vmatpush2.bf16.msra.mxu0 0
      %1020 = vmatprep.subr.bf16.mxu0 0
      %1021 = vmatpush2.bf16.msra.mxu0 0
      %1022 = vmatprep.subr.bf16.mxu0 0
      %1023 = vmatpush2.bf16.msra.mxu0 0
      %1024 = vmatprep.subr.bf16.mxu0 0
      %1025 = vmatpush2.bf16.msra.mxu0 0
      %1026 = vmatprep.subr.bf16.mxu0 0
      %1027 = vmatpush2.bf16.msra.mxu0 0
      %1028 = vmatprep.subr.bf16.mxu0 0
      %1029 = vmatpush2.bf16.msra.mxu0 0
      %1030 = vmatprep.mubr.bf16.mxu0 0
      %1031 = vmatmul.mubr.bf16.gmra.mxu0 %v391
      %v1032 = vpop.f32.mrf.mxu0
      %v1033 = vadd.f32 0.0, %v1032
      %v1034 = vpop.f32.mrf.mxu0
      %v1035 = vadd.f32 0.0, %v1034
      %v1036 = vpop.f32.mrf.mxu0
      %v1037 = vadd.f32 0.0, %v1036
      %v1038 = vpop.f32.mrf.mxu0
      %v1039 = vadd.f32 0.0, %v1038
      %1040 = vmatprep.mubr.bf16.mxu0 0
      %1041 = vmatmul.mubr.bf16.gmra.mxu0 %v392
      %v1042 = vpop.f32.mrf.mxu0
      %v1043 = vadd.f32 0.0, %v1042
      %v1044 = vpop.f32.mrf.mxu0
      %v1045 = vadd.f32 0.0, %v1044
      %v1046 = vpop.f32.mrf.mxu0
      %v1047 = vadd.f32 0.0, %v1046
      %v1048 = vpop.f32.mrf.mxu0
      %v1049 = vadd.f32 0.0, %v1048
      %1050 = vmatprep.mubr.bf16.mxu0 0
      %1051 = vmatmul.mubr.bf16.gmra.mxu0 %v393
      %v1052 = vpop.f32.mrf.mxu0
      %v1053 = vadd.f32 0.0, %v1052
      %v1054 = vpop.f32.mrf.mxu0
      %v1055 = vadd.f32 0.0, %v1054
      %v1056 = vpop.f32.mrf.mxu0
      %v1057 = vadd.f32 0.0, %v1056
      %v1058 = vpop.f32.mrf.mxu0
      %v1059 = vadd.f32 0.0, %v1058
      %1060 = vmatprep.mubr.bf16.mxu0 0
      %1061 = vmatmul.mubr.bf16.gmra.mxu0 %v394
      %v1062 = vpop.f32.mrf.mxu0
      %v1063 = vadd.f32 0.0, %v1062
      %v1064 = vpop.f32.mrf.mxu0
      %v1065 = vadd.f32 0.0, %v1064
      %v1066 = vpop.f32.mrf.mxu0
      %v1067 = vadd.f32 0.0, %v1066
      %v1068 = vpop.f32.mrf.mxu0
      %v1069 = vadd.f32 0.0, %v1068
      %1070 = vdwg.mxu0
      %v1071 = vlaneseq
      %v1072 = vshrl.u32 %v1071, 7
      %v1073 = vadd.s32 %v1072, 8
      %v1074 = vadd.s32 %v1072, 16
      %v1075 = vadd.s32 %v1072, 24
      %v1076 = vadd.s32 %v1072, 32
      %v1077 = vadd.s32 %v1072, 40
      %v1078 = vadd.s32 %v1072, 48
      %v1079 = vadd.s32 %v1072, 56
      %s1080 = smul.u32 %s24, 64
      %v1081 = vstv %s1080
      %v1082 = vadd.s32 %v1072, %v1081
      %v1083 = vadd.s32 %v1073, %v1081
      %v1084 = vadd.s32 %v1074, %v1081
      %v1085 = vadd.s32 %v1075, %v1081
      %v1086 = vadd.s32 %v1076, %v1081
      %v1087 = vadd.s32 %v1077, %v1081
      %v1088 = vadd.s32 %v1078, %v1081
      %v1089 = vadd.s32 %v1079, %v1081
      %vm1090 = vcmp.lt.s32.totalorder %v1082, 64
      %vm1091 = vcmp.lt.s32.totalorder %v1083, 64
      %vm1092 = vcmp.lt.s32.totalorder %v1084, 64
      %vm1093 = vcmp.lt.s32.totalorder %v1085, 64
      %vm1094 = vcmp.lt.s32.totalorder %v1086, 64
      %vm1095 = vcmp.lt.s32.totalorder %v1087, 64
      %vm1096 = vcmp.lt.s32.totalorder %v1088, 64
      %vm1097 = vcmp.lt.s32.totalorder %v1089, 64
      %v1098 = vsel %vm1090, 1, 0
      %v1099 = vsel %vm1091, 1, 0
      %v1100 = vsel %vm1092, 1, 0
      %v1101 = vsel %vm1093, 1, 0
      %v1102 = vsel %vm1094, 1, 0
      %v1103 = vsel %vm1095, 1, 0
      %v1104 = vsel %vm1096, 1, 0
      %v1105 = vsel %vm1097, 1, 0
      %vm1106 = vcmp.eq.s32.totalorder %v1098, 1
      %vm1107 = vcmp.eq.s32.totalorder %v1099, 1
      %vm1108 = vcmp.eq.s32.totalorder %v1100, 1
      %vm1109 = vcmp.eq.s32.totalorder %v1101, 1
      %vm1110 = vcmp.eq.s32.totalorder %v1102, 1
      %vm1111 = vcmp.eq.s32.totalorder %v1103, 1
      %vm1112 = vcmp.eq.s32.totalorder %v1104, 1
      %vm1113 = vcmp.eq.s32.totalorder %v1105, 1
      %v1114 = vsel %vm1106, %v814, 0.0
      %v1115 = vsel %vm1106, %v816, 0.0
      %v1116 = vsel %vm1106, %v887, 0.0
      %v1117 = vsel %vm1106, %v889, 0.0
      %v1118 = vsel %vm1106, %v960, 0.0
      %v1119 = vsel %vm1106, %v962, 0.0
      %v1120 = vsel %vm1106, %v1033, 0.0
      %v1121 = vsel %vm1106, %v1035, 0.0
      %v1122 = vsel %vm1107, %v818, 0.0
      %v1123 = vsel %vm1107, %v820, 0.0
      %v1124 = vsel %vm1107, %v891, 0.0
      %v1125 = vsel %vm1107, %v893, 0.0
      %v1126 = vsel %vm1107, %v964, 0.0
      %v1127 = vsel %vm1107, %v966, 0.0
      %v1128 = vsel %vm1107, %v1037, 0.0
      %v1129 = vsel %vm1107, %v1039, 0.0
      %v1130 = vsel %vm1108, %v824, 0.0
      %v1131 = vsel %vm1108, %v826, 0.0
      %v1132 = vsel %vm1108, %v897, 0.0
      %v1133 = vsel %vm1108, %v899, 0.0
      %v1134 = vsel %vm1108, %v970, 0.0
      %v1135 = vsel %vm1108, %v972, 0.0
      %v1136 = vsel %vm1108, %v1043, 0.0
      %v1137 = vsel %vm1108, %v1045, 0.0
      %v1138 = vsel %vm1109, %v828, 0.0
      %v1139 = vsel %vm1109, %v830, 0.0
      %v1140 = vsel %vm1109, %v901, 0.0
      %v1141 = vsel %vm1109, %v903, 0.0
      %v1142 = vsel %vm1109, %v974, 0.0
      %v1143 = vsel %vm1109, %v976, 0.0
      %v1144 = vsel %vm1109, %v1047, 0.0
      %v1145 = vsel %vm1109, %v1049, 0.0
      %v1146 = vsel %vm1110, %v834, 0.0
      %v1147 = vsel %vm1110, %v836, 0.0
      %v1148 = vsel %vm1110, %v907, 0.0
      %v1149 = vsel %vm1110, %v909, 0.0
      %v1150 = vsel %vm1110, %v980, 0.0
      %v1151 = vsel %vm1110, %v982, 0.0
      %v1152 = vsel %vm1110, %v1053, 0.0
      %v1153 = vsel %vm1110, %v1055, 0.0
      %v1154 = vsel %vm1111, %v838, 0.0
      %v1155 = vsel %vm1111, %v840, 0.0
      %v1156 = vsel %vm1111, %v911, 0.0
      %v1157 = vsel %vm1111, %v913, 0.0
      %v1158 = vsel %vm1111, %v984, 0.0
      %v1159 = vsel %vm1111, %v986, 0.0
      %v1160 = vsel %vm1111, %v1057, 0.0
      %v1161 = vsel %vm1111, %v1059, 0.0
      %v1162 = vsel %vm1112, %v844, 0.0
      %v1163 = vsel %vm1112, %v846, 0.0
      %v1164 = vsel %vm1112, %v917, 0.0
      %v1165 = vsel %vm1112, %v919, 0.0
      %v1166 = vsel %vm1112, %v990, 0.0
      %v1167 = vsel %vm1112, %v992, 0.0
      %v1168 = vsel %vm1112, %v1063, 0.0
      %v1169 = vsel %vm1112, %v1065, 0.0
      %v1170 = vsel %vm1113, %v848, 0.0
      %v1171 = vsel %vm1113, %v850, 0.0
      %v1172 = vsel %vm1113, %v921, 0.0
      %v1173 = vsel %vm1113, %v923, 0.0
      %v1174 = vsel %vm1113, %v994, 0.0
      %v1175 = vsel %vm1113, %v996, 0.0
      %v1176 = vsel %vm1113, %v1067, 0.0
      %v1177 = vsel %vm1113, %v1069, 0.0
      %p1178 = scmp.eq.s32.totalorder %s24, 0
      // Predicated region
      $region37: #{pointnet_encoder_forward.9} parent=35 // pred_check
        %p1179 = pneg %p1178
      $region38: #{pointnet_encoder_forward.9} parent=35 // pred_check_branch
        %1181 = sbr.rel (%p1179) target = $region40
      $region39: #{pointnet_encoder_forward.9} parent=35 // pred_region
        %1182 = vst [vmem:[%s323] sm:$0xff] -inf
        %1183 = vst [vmem:[%s327] sm:$0xff] inf
        %1184 = vst [vmem:[%s331] sm:$0xff] 0.0
        %1185 = vst [vmem:[%s335] sm:$0xff] 0.0
      $region40: #{pointnet_encoder_forward.9} parent=35 // pred_fallthru
        _
      %v1186 = vld [vmem:[%s323] sm:$0xff]
      %v1187 = vsel %vm1106, %v814, -inf
      %v1188 = vsel %vm1106, %v816, -inf
      %v1189 = vsel %vm1106, %v887, -inf
      %v1190 = vsel %vm1106, %v889, -inf
      %v1191 = vsel %vm1106, %v960, -inf
      %v1192 = vsel %vm1106, %v962, -inf
      %v1193 = vsel %vm1106, %v1033, -inf
      %v1194 = vsel %vm1106, %v1035, -inf
      %v1195 = vsel %vm1107, %v818, -inf
      %v1196 = vsel %vm1107, %v820, -inf
      %v1197 = vsel %vm1107, %v891, -inf
      %v1198 = vsel %vm1107, %v893, -inf
      %v1199 = vsel %vm1107, %v964, -inf
      %v1200 = vsel %vm1107, %v966, -inf
      %v1201 = vsel %vm1107, %v1037, -inf
      %v1202 = vsel %vm1107, %v1039, -inf
      %v1203 = vsel %vm1108, %v824, -inf
      %v1204 = vsel %vm1108, %v826, -inf
      %v1205 = vsel %vm1108, %v897, -inf
      %v1206 = vsel %vm1108, %v899, -inf
      %v1207 = vsel %vm1108, %v970, -inf
      %v1208 = vsel %vm1108, %v972, -inf
      %v1209 = vsel %vm1108, %v1043, -inf
      %v1210 = vsel %vm1108, %v1045, -inf
      %v1211 = vsel %vm1109, %v828, -inf
      %v1212 = vsel %vm1109, %v830, -inf
      %v1213 = vsel %vm1109, %v901, -inf
      %v1214 = vsel %vm1109, %v903, -inf
      %v1215 = vsel %vm1109, %v974, -inf
      %v1216 = vsel %vm1109, %v976, -inf
      %v1217 = vsel %vm1109, %v1047, -inf
      %v1218 = vsel %vm1109, %v1049, -inf
      %v1219 = vsel %vm1110, %v834, -inf
      %v1220 = vsel %vm1110, %v836, -inf
      %v1221 = vsel %vm1110, %v907, -inf
      %v1222 = vsel %vm1110, %v909, -inf
      %v1223 = vsel %vm1110, %v980, -inf
      %v1224 = vsel %vm1110, %v982, -inf
      %v1225 = vsel %vm1110, %v1053, -inf
      %v1226 = vsel %vm1110, %v1055, -inf
      %v1227 = vsel %vm1111, %v838, -inf
      %v1228 = vsel %vm1111, %v840, -inf
      %v1229 = vsel %vm1111, %v911, -inf
      %v1230 = vsel %vm1111, %v913, -inf
      %v1231 = vsel %vm1111, %v984, -inf
      %v1232 = vsel %vm1111, %v986, -inf
      %v1233 = vsel %vm1111, %v1057, -inf
      %v1234 = vsel %vm1111, %v1059, -inf
      %v1235 = vsel %vm1112, %v844, -inf
      %v1236 = vsel %vm1112, %v846, -inf
      %v1237 = vsel %vm1112, %v917, -inf
      %v1238 = vsel %vm1112, %v919, -inf
      %v1239 = vsel %vm1112, %v990, -inf
      %v1240 = vsel %vm1112, %v992, -inf
      %v1241 = vsel %vm1112, %v1063, -inf
      %v1242 = vsel %vm1112, %v1065, -inf
      %v1243 = vsel %vm1113, %v848, -inf
      %v1244 = vsel %vm1113, %v850, -inf
      %v1245 = vsel %vm1113, %v921, -inf
      %v1246 = vsel %vm1113, %v923, -inf
      %v1247 = vsel %vm1113, %v994, -inf
      %v1248 = vsel %vm1113, %v996, -inf
      %v1249 = vsel %vm1113, %v1067, -inf
      %v1250 = vsel %vm1113, %v1069, -inf
      %v1251 = vmax.f32 %v1187, %v1195
      %v1252 = vmax.f32 %v1251, %v1203
      %v1253 = vmax.f32 %v1252, %v1211
      %v1254 = vmax.f32 %v1253, %v1219
      %v1255 = vmax.f32 %v1254, %v1227
      %v1256 = vmax.f32 %v1255, %v1235
      %v1257 = vmax.f32 %v1256, %v1243
      %v1258 = vrot.slane %v1257, 4
      %v1259 = vmax.f32 %v1257, %v1258
      %v1260 = vrot.slane %v1259, 2
      %v1261 = vmax.f32 %v1259, %v1260
      %v1262 = vrot.slane %v1261, 1
      %v1263 = vmax.f32 %v1261, %v1262
      %v1264 = vmax.f32 %v1188, %v1196
      %v1265 = vmax.f32 %v1264, %v1204
      %v1266 = vmax.f32 %v1265, %v1212
      %v1267 = vmax.f32 %v1266, %v1220
      %v1268 = vmax.f32 %v1267, %v1228
      %v1269 = vmax.f32 %v1268, %v1236
      %v1270 = vmax.f32 %v1269, %v1244
      %v1271 = vrot.slane %v1270, 4
      %v1272 = vmax.f32 %v1270, %v1271
      %v1273 = vrot.slane %v1272, 2
      %v1274 = vmax.f32 %v1272, %v1273
      %v1275 = vrot.slane %v1274, 1
      %v1276 = vmax.f32 %v1274, %v1275
      %v1277 = vmax.f32 %v1189, %v1197
      %v1278 = vmax.f32 %v1277, %v1205
      %v1279 = vmax.f32 %v1278, %v1213
      %v1280 = vmax.f32 %v1279, %v1221
      %v1281 = vmax.f32 %v1280, %v1229
      %v1282 = vmax.f32 %v1281, %v1237
      %v1283 = vmax.f32 %v1282, %v1245
      %v1284 = vrot.slane %v1283, 4
      %v1285 = vmax.f32 %v1283, %v1284
      %v1286 = vrot.slane %v1285, 2
      %v1287 = vmax.f32 %v1285, %v1286
      %v1288 = vrot.slane %v1287, 1
      %v1289 = vmax.f32 %v1287, %v1288
      %v1290 = vmax.f32 %v1190, %v1198
      %v1291 = vmax.f32 %v1290, %v1206
      %v1292 = vmax.f32 %v1291, %v1214
      %v1293 = vmax.f32 %v1292, %v1222
      %v1294 = vmax.f32 %v1293, %v1230
      %v1295 = vmax.f32 %v1294, %v1238
      %v1296 = vmax.f32 %v1295, %v1246
      %v1297 = vrot.slane %v1296, 4
      %v1298 = vmax.f32 %v1296, %v1297
      %v1299 = vrot.slane %v1298, 2
      %v1300 = vmax.f32 %v1298, %v1299
      %v1301 = vrot.slane %v1300, 1
      %v1302 = vmax.f32 %v1300, %v1301
      %v1303 = vmax.f32 %v1191, %v1199
      %v1304 = vmax.f32 %v1303, %v1207
      %v1305 = vmax.f32 %v1304, %v1215
      %v1306 = vmax.f32 %v1305, %v1223
      %v1307 = vmax.f32 %v1306, %v1231
      %v1308 = vmax.f32 %v1307, %v1239
      %v1309 = vmax.f32 %v1308, %v1247
      %v1310 = vrot.slane %v1309, 4
      %v1311 = vmax.f32 %v1309, %v1310
      %v1312 = vrot.slane %v1311, 2
      %v1313 = vmax.f32 %v1311, %v1312
      %v1314 = vrot.slane %v1313, 1
      %v1315 = vmax.f32 %v1313, %v1314
      %v1316 = vmax.f32 %v1192, %v1200
      %v1317 = vmax.f32 %v1316, %v1208
      %v1318 = vmax.f32 %v1317, %v1216
      %v1319 = vmax.f32 %v1318, %v1224
      %v1320 = vmax.f32 %v1319, %v1232
      %v1321 = vmax.f32 %v1320, %v1240
      %v1322 = vmax.f32 %v1321, %v1248
      %v1323 = vrot.slane %v1322, 4
      %v1324 = vmax.f32 %v1322, %v1323
      %v1325 = vrot.slane %v1324, 2
      %v1326 = vmax.f32 %v1324, %v1325
      %v1327 = vrot.slane %v1326, 1
      %v1328 = vmax.f32 %v1326, %v1327
      %v1329 = vmax.f32 %v1193, %v1201
      %v1330 = vmax.f32 %v1329, %v1209
      %v1331 = vmax.f32 %v1330, %v1217
      %v1332 = vmax.f32 %v1331, %v1225
      %v1333 = vmax.f32 %v1332, %v1233
      %v1334 = vmax.f32 %v1333, %v1241
      %v1335 = vmax.f32 %v1334, %v1249
      %v1336 = vrot.slane %v1335, 4
      %v1337 = vmax.f32 %v1335, %v1336
      %v1338 = vrot.slane %v1337, 2
      %v1339 = vmax.f32 %v1337, %v1338
      %v1340 = vrot.slane %v1339, 1
      %v1341 = vmax.f32 %v1339, %v1340
      %v1342 = vmax.f32 %v1194, %v1202
      %v1343 = vmax.f32 %v1342, %v1210
      %v1344 = vmax.f32 %v1343, %v1218
      %v1345 = vmax.f32 %v1344, %v1226
      %v1346 = vmax.f32 %v1345, %v1234
      %v1347 = vmax.f32 %v1346, %v1242
      %v1348 = vmax.f32 %v1347, %v1250
      %v1349 = vrot.slane %v1348, 4
      %v1350 = vmax.f32 %v1348, %v1349
      %v1351 = vrot.slane %v1350, 2
      %v1352 = vmax.f32 %v1350, %v1351
      %v1353 = vrot.slane %v1352, 1
      %v1354 = vmax.f32 %v1352, %v1353
      %v1363 = vcombine.low %v1263, %v1276
      %v1364 = vcombine.low %v1289, %v1302
      %v1365 = vcombine.low %v1315, %v1328
      %v1366 = vcombine.low %v1341, %v1354
      %v1368 = vunpack.c.l.s4 1966171168
      %v1369 = vunpack.c.0.s8 %v1368
      %v1370 = vlaneseq
      %v1371 = vshrl.u32 %v1370, 7
      %v1372 = vsub.s32 %v1369, %v1371
      %v1373 = vrot.slane %v1363, %v1372
      %v1375 = vunpack.c.l.s4 1966171168
      %v1376 = vunpack.c.0.s8 %v1375
      %v1377 = vlaneseq
      %v1378 = vshrl.u32 %v1377, 7
      %v1379 = vsub.s32 %v1376, %v1378
      %v1380 = vrot.slane %v1364, %v1379
      %v1382 = vunpack.c.l.s4 1966171168
      %v1383 = vunpack.c.0.s8 %v1382
      %v1384 = vlaneseq
      %v1385 = vshrl.u32 %v1384, 7
      %v1386 = vsub.s32 %v1383, %v1385
      %v1387 = vrot.slane %v1365, %v1386
      %v1389 = vunpack.c.l.s4 1966171168
      %v1390 = vunpack.c.0.s8 %v1389
      %v1391 = vlaneseq
      %v1392 = vshrl.u32 %v1391, 7
      %v1393 = vsub.s32 %v1390, %v1392
      %v1394 = vrot.slane %v1366, %v1393
      %v1395 = vcombine.low %v1373, %v1380
      %v1396 = vcombine.low %v1387, %v1394
      %v1398 = vunpack.c.l.s4 1966171168
      %v1399 = vunpack.c.0.s8 %v1398
      %v1400 = vlaneseq
      %v1401 = vshrl.u32 %v1400, 7
      %v1402 = vsub.s32 %v1399, %v1401
      %v1403 = vrot.slane %v1395, %v1402
      %v1405 = vunpack.c.l.s4 1966171168
      %v1406 = vunpack.c.0.s8 %v1405
      %v1407 = vlaneseq
      %v1408 = vshrl.u32 %v1407, 7
      %v1409 = vsub.s32 %v1406, %v1408
      %v1410 = vrot.slane %v1396, %v1409
      %v1411 = vcombine.low %v1403, %v1410
      %v1413 = vmax.f32 %v1186, %v1411
      %1414 = vst [vmem:[%s323] sm:$0xff] %v1413
      %v1415 = vld [vmem:[%s327] sm:$0xff]
      %v1416 = vsel %vm1106, %v814, inf
      %v1417 = vsel %vm1106, %v816, inf
      %v1418 = vsel %vm1106, %v887, inf
      %v1419 = vsel %vm1106, %v889, inf
      %v1420 = vsel %vm1106, %v960, inf
      %v1421 = vsel %vm1106, %v962, inf
      %v1422 = vsel %vm1106, %v1033, inf
      %v1423 = vsel %vm1106, %v1035, inf
      %v1424 = vsel %vm1107, %v818, inf
      %v1425 = vsel %vm1107, %v820, inf
      %v1426 = vsel %vm1107, %v891, inf
      %v1427 = vsel %vm1107, %v893, inf
      %v1428 = vsel %vm1107, %v964, inf
      %v1429 = vsel %vm1107, %v966, inf
      %v1430 = vsel %vm1107, %v1037, inf
      %v1431 = vsel %vm1107, %v1039, inf
      %v1432 = vsel %vm1108, %v824, inf
      %v1433 = vsel %vm1108, %v826, inf
      %v1434 = vsel %vm1108, %v897, inf
      %v1435 = vsel %vm1108, %v899, inf
      %v1436 = vsel %vm1108, %v970, inf
      %v1437 = vsel %vm1108, %v972, inf
      %v1438 = vsel %vm1108, %v1043, inf
      %v1439 = vsel %vm1108, %v1045, inf
      %v1440 = vsel %vm1109, %v828, inf
      %v1441 = vsel %vm1109, %v830, inf
      %v1442 = vsel %vm1109, %v901, inf
      %v1443 = vsel %vm1109, %v903, inf
      %v1444 = vsel %vm1109, %v974, inf
      %v1445 = vsel %vm1109, %v976, inf
      %v1446 = vsel %vm1109, %v1047, inf
      %v1447 = vsel %vm1109, %v1049, inf
      %v1448 = vsel %vm1110, %v834, inf
      %v1449 = vsel %vm1110, %v836, inf
      %v1450 = vsel %vm1110, %v907, inf
      %v1451 = vsel %vm1110, %v909, inf
      %v1452 = vsel %vm1110, %v980, inf
      %v1453 = vsel %vm1110, %v982, inf
      %v1454 = vsel %vm1110, %v1053, inf
      %v1455 = vsel %vm1110, %v1055, inf
      %v1456 = vsel %vm1111, %v838, inf
      %v1457 = vsel %vm1111, %v840, inf
      %v1458 = vsel %vm1111, %v911, inf
      %v1459 = vsel %vm1111, %v913, inf
      %v1460 = vsel %vm1111, %v984, inf
      %v1461 = vsel %vm1111, %v986, inf
      %v1462 = vsel %vm1111, %v1057, inf
      %v1463 = vsel %vm1111, %v1059, inf
      %v1464 = vsel %vm1112, %v844, inf
      %v1465 = vsel %vm1112, %v846, inf
      %v1466 = vsel %vm1112, %v917, inf
      %v1467 = vsel %vm1112, %v919, inf
      %v1468 = vsel %vm1112, %v990, inf
      %v1469 = vsel %vm1112, %v992, inf
      %v1470 = vsel %vm1112, %v1063, inf
      %v1471 = vsel %vm1112, %v1065, inf
      %v1472 = vsel %vm1113, %v848, inf
      %v1473 = vsel %vm1113, %v850, inf
      %v1474 = vsel %vm1113, %v921, inf
      %v1475 = vsel %vm1113, %v923, inf
      %v1476 = vsel %vm1113, %v994, inf
      %v1477 = vsel %vm1113, %v996, inf
      %v1478 = vsel %vm1113, %v1067, inf
      %v1479 = vsel %vm1113, %v1069, inf
      %v1480 = vmin.f32 %v1416, %v1424
      %v1481 = vmin.f32 %v1480, %v1432
      %v1482 = vmin.f32 %v1481, %v1440
      %v1483 = vmin.f32 %v1482, %v1448
      %v1484 = vmin.f32 %v1483, %v1456
      %v1485 = vmin.f32 %v1484, %v1464
      %v1486 = vmin.f32 %v1485, %v1472
      %v1487 = vrot.slane %v1486, 4
      %v1488 = vmin.f32 %v1486, %v1487
      %v1489 = vrot.slane %v1488, 2
      %v1490 = vmin.f32 %v1488, %v1489
      %v1491 = vrot.slane %v1490, 1
      %v1492 = vmin.f32 %v1490, %v1491
      %v1493 = vmin.f32 %v1417, %v1425
      %v1494 = vmin.f32 %v1493, %v1433
      %v1495 = vmin.f32 %v1494, %v1441
      %v1496 = vmin.f32 %v1495, %v1449
      %v1497 = vmin.f32 %v1496, %v1457
      %v1498 = vmin.f32 %v1497, %v1465
      %v1499 = vmin.f32 %v1498, %v1473
      %v1500 = vrot.slane %v1499, 4
      %v1501 = vmin.f32 %v1499, %v1500
      %v1502 = vrot.slane %v1501, 2
      %v1503 = vmin.f32 %v1501, %v1502
      %v1504 = vrot.slane %v1503, 1
      %v1505 = vmin.f32 %v1503, %v1504
      %v1506 = vmin.f32 %v1418, %v1426
      %v1507 = vmin.f32 %v1506, %v1434
      %v1508 = vmin.f32 %v1507, %v1442
      %v1509 = vmin.f32 %v1508, %v1450
      %v1510 = vmin.f32 %v1509, %v1458
      %v1511 = vmin.f32 %v1510, %v1466
      %v1512 = vmin.f32 %v1511, %v1474
      %v1513 = vrot.slane %v1512, 4
      %v1514 = vmin.f32 %v1512, %v1513
      %v1515 = vrot.slane %v1514, 2
      %v1516 = vmin.f32 %v1514, %v1515
      %v1517 = vrot.slane %v1516, 1
      %v1518 = vmin.f32 %v1516, %v1517
      %v1519 = vmin.f32 %v1419, %v1427
      %v1520 = vmin.f32 %v1519, %v1435
      %v1521 = vmin.f32 %v1520, %v1443
      %v1522 = vmin.f32 %v1521, %v1451
      %v1523 = vmin.f32 %v1522, %v1459
      %v1524 = vmin.f32 %v1523, %v1467
      %v1525 = vmin.f32 %v1524, %v1475
      %v1526 = vrot.slane %v1525, 4
      %v1527 = vmin.f32 %v1525, %v1526
      %v1528 = vrot.slane %v1527, 2
      %v1529 = vmin.f32 %v1527, %v1528
      %v1530 = vrot.slane %v1529, 1
      %v1531 = vmin.f32 %v1529, %v1530
      %v1532 = vmin.f32 %v1420, %v1428
      %v1533 = vmin.f32 %v1532, %v1436
      %v1534 = vmin.f32 %v1533, %v1444
      %v1535 = vmin.f32 %v1534, %v1452
      %v1536 = vmin.f32 %v1535, %v1460
      %v1537 = vmin.f32 %v1536, %v1468
      %v1538 = vmin.f32 %v1537, %v1476
      %v1539 = vrot.slane %v1538, 4
      %v1540 = vmin.f32 %v1538, %v1539
      %v1541 = vrot.slane %v1540, 2
      %v1542 = vmin.f32 %v1540, %v1541
      %v1543 = vrot.slane %v1542, 1
      %v1544 = vmin.f32 %v1542, %v1543
      %v1545 = vmin.f32 %v1421, %v1429
      %v1546 = vmin.f32 %v1545, %v1437
      %v1547 = vmin.f32 %v1546, %v1445
      %v1548 = vmin.f32 %v1547, %v1453
      %v1549 = vmin.f32 %v1548, %v1461
      %v1550 = vmin.f32 %v1549, %v1469
      %v1551 = vmin.f32 %v1550, %v1477
      %v1552 = vrot.slane %v1551, 4
      %v1553 = vmin.f32 %v1551, %v1552
      %v1554 = vrot.slane %v1553, 2
      %v1555 = vmin.f32 %v1553, %v1554
      %v1556 = vrot.slane %v1555, 1
      %v1557 = vmin.f32 %v1555, %v1556
      %v1558 = vmin.f32 %v1422, %v1430
      %v1559 = vmin.f32 %v1558, %v1438
      %v1560 = vmin.f32 %v1559, %v1446
      %v1561 = vmin.f32 %v1560, %v1454
      %v1562 = vmin.f32 %v1561, %v1462
      %v1563 = vmin.f32 %v1562, %v1470
      %v1564 = vmin.f32 %v1563, %v1478
      %v1565 = vrot.slane %v1564, 4
      %v1566 = vmin.f32 %v1564, %v1565
      %v1567 = vrot.slane %v1566, 2
      %v1568 = vmin.f32 %v1566, %v1567
      %v1569 = vrot.slane %v1568, 1
      %v1570 = vmin.f32 %v1568, %v1569
      %v1571 = vmin.f32 %v1423, %v1431
      %v1572 = vmin.f32 %v1571, %v1439
      %v1573 = vmin.f32 %v1572, %v1447
      %v1574 = vmin.f32 %v1573, %v1455
      %v1575 = vmin.f32 %v1574, %v1463
      %v1576 = vmin.f32 %v1575, %v1471
      %v1577 = vmin.f32 %v1576, %v1479
      %v1578 = vrot.slane %v1577, 4
      %v1579 = vmin.f32 %v1577, %v1578
      %v1580 = vrot.slane %v1579, 2
      %v1581 = vmin.f32 %v1579, %v1580
      %v1582 = vrot.slane %v1581, 1
      %v1583 = vmin.f32 %v1581, %v1582
      %v1592 = vcombine.low %v1492, %v1505
      %v1593 = vcombine.low %v1518, %v1531
      %v1594 = vcombine.low %v1544, %v1557
      %v1595 = vcombine.low %v1570, %v1583
      %v1597 = vunpack.c.l.s4 1966171168
      %v1598 = vunpack.c.0.s8 %v1597
      %v1599 = vlaneseq
      %v1600 = vshrl.u32 %v1599, 7
      %v1601 = vsub.s32 %v1598, %v1600
      %v1602 = vrot.slane %v1592, %v1601
      %v1604 = vunpack.c.l.s4 1966171168
      %v1605 = vunpack.c.0.s8 %v1604
      %v1606 = vlaneseq
      %v1607 = vshrl.u32 %v1606, 7
      %v1608 = vsub.s32 %v1605, %v1607
      %v1609 = vrot.slane %v1593, %v1608
      %v1611 = vunpack.c.l.s4 1966171168
      %v1612 = vunpack.c.0.s8 %v1611
      %v1613 = vlaneseq
      %v1614 = vshrl.u32 %v1613, 7
      %v1615 = vsub.s32 %v1612, %v1614
      %v1616 = vrot.slane %v1594, %v1615
      %v1618 = vunpack.c.l.s4 1966171168
      %v1619 = vunpack.c.0.s8 %v1618
      %v1620 = vlaneseq
      %v1621 = vshrl.u32 %v1620, 7
      %v1622 = vsub.s32 %v1619, %v1621
      %v1623 = vrot.slane %v1595, %v1622
      %v1624 = vcombine.low %v1602, %v1609
      %v1625 = vcombine.low %v1616, %v1623
      %v1627 = vunpack.c.l.s4 1966171168
      %v1628 = vunpack.c.0.s8 %v1627
      %v1629 = vlaneseq
      %v1630 = vshrl.u32 %v1629, 7
      %v1631 = vsub.s32 %v1628, %v1630
      %v1632 = vrot.slane %v1624, %v1631
      %v1634 = vunpack.c.l.s4 1966171168
      %v1635 = vunpack.c.0.s8 %v1634
      %v1636 = vlaneseq
      %v1637 = vshrl.u32 %v1636, 7
      %v1638 = vsub.s32 %v1635, %v1637
      %v1639 = vrot.slane %v1625, %v1638
      %v1640 = vcombine.low %v1632, %v1639
      %v1642 = vmin.f32 %v1415, %v1640
      %1643 = vst [vmem:[%s327] sm:$0xff] %v1642
      %v1644 = vld [vmem:[%s331] sm:$0xff]
      %v1645 = vadd.f32 %v1114, %v1122
      %v1646 = vadd.f32 %v1645, %v1130
      %v1647 = vadd.f32 %v1646, %v1138
      %v1648 = vadd.f32 %v1647, %v1146
      %v1649 = vadd.f32 %v1648, %v1154
      %v1650 = vadd.f32 %v1649, %v1162
      %v1651 = vadd.f32 %v1650, %v1170
      %v1652 = vrot.slane %v1651, 4
      %v1653 = vadd.f32 %v1651, %v1652
      %v1654 = vrot.slane %v1653, 2
      %v1655 = vadd.f32 %v1653, %v1654
      %v1656 = vrot.slane %v1655, 1
      %v1657 = vadd.f32 %v1655, %v1656
      %v1658 = vadd.f32 %v1115, %v1123
      %v1659 = vadd.f32 %v1658, %v1131
      %v1660 = vadd.f32 %v1659, %v1139
      %v1661 = vadd.f32 %v1660, %v1147
      %v1662 = vadd.f32 %v1661, %v1155
      %v1663 = vadd.f32 %v1662, %v1163
      %v1664 = vadd.f32 %v1663, %v1171
      %v1665 = vrot.slane %v1664, 4
      %v1666 = vadd.f32 %v1664, %v1665
      %v1667 = vrot.slane %v1666, 2
      %v1668 = vadd.f32 %v1666, %v1667
      %v1669 = vrot.slane %v1668, 1
      %v1670 = vadd.f32 %v1668, %v1669
      %v1671 = vadd.f32 %v1116, %v1124
      %v1672 = vadd.f32 %v1671, %v1132
      %v1673 = vadd.f32 %v1672, %v1140
      %v1674 = vadd.f32 %v1673, %v1148
      %v1675 = vadd.f32 %v1674, %v1156
      %v1676 = vadd.f32 %v1675, %v1164
      %v1677 = vadd.f32 %v1676, %v1172
      %v1678 = vrot.slane %v1677, 4
      %v1679 = vadd.f32 %v1677, %v1678
      %v1680 = vrot.slane %v1679, 2
      %v1681 = vadd.f32 %v1679, %v1680
      %v1682 = vrot.slane %v1681, 1
      %v1683 = vadd.f32 %v1681, %v1682
      %v1684 = vadd.f32 %v1117, %v1125
      %v1685 = vadd.f32 %v1684, %v1133
      %v1686 = vadd.f32 %v1685, %v1141
      %v1687 = vadd.f32 %v1686, %v1149
      %v1688 = vadd.f32 %v1687, %v1157
      %v1689 = vadd.f32 %v1688, %v1165
      %v1690 = vadd.f32 %v1689, %v1173
      %v1691 = vrot.slane %v1690, 4
      %v1692 = vadd.f32 %v1690, %v1691
      %v1693 = vrot.slane %v1692, 2
      %v1694 = vadd.f32 %v1692, %v1693
      %v1695 = vrot.slane %v1694, 1
      %v1696 = vadd.f32 %v1694, %v1695
      %v1697 = vadd.f32 %v1118, %v1126
      %v1698 = vadd.f32 %v1697, %v1134
      %v1699 = vadd.f32 %v1698, %v1142
      %v1700 = vadd.f32 %v1699, %v1150
      %v1701 = vadd.f32 %v1700, %v1158
      %v1702 = vadd.f32 %v1701, %v1166
      %v1703 = vadd.f32 %v1702, %v1174
      %v1704 = vrot.slane %v1703, 4
      %v1705 = vadd.f32 %v1703, %v1704
      %v1706 = vrot.slane %v1705, 2
      %v1707 = vadd.f32 %v1705, %v1706
      %v1708 = vrot.slane %v1707, 1
      %v1709 = vadd.f32 %v1707, %v1708
      %v1710 = vadd.f32 %v1119, %v1127
      %v1711 = vadd.f32 %v1710, %v1135
      %v1712 = vadd.f32 %v1711, %v1143
      %v1713 = vadd.f32 %v1712, %v1151
      %v1714 = vadd.f32 %v1713, %v1159
      %v1715 = vadd.f32 %v1714, %v1167
      %v1716 = vadd.f32 %v1715, %v1175
      %v1717 = vrot.slane %v1716, 4
      %v1718 = vadd.f32 %v1716, %v1717
      %v1719 = vrot.slane %v1718, 2
      %v1720 = vadd.f32 %v1718, %v1719
      %v1721 = vrot.slane %v1720, 1
      %v1722 = vadd.f32 %v1720, %v1721
      %v1723 = vadd.f32 %v1120, %v1128
      %v1724 = vadd.f32 %v1723, %v1136
      %v1725 = vadd.f32 %v1724, %v1144
      %v1726 = vadd.f32 %v1725, %v1152
      %v1727 = vadd.f32 %v1726, %v1160
      %v1728 = vadd.f32 %v1727, %v1168
      %v1729 = vadd.f32 %v1728, %v1176
      %v1730 = vrot.slane %v1729, 4
      %v1731 = vadd.f32 %v1729, %v1730
      %v1732 = vrot.slane %v1731, 2
      %v1733 = vadd.f32 %v1731, %v1732
      %v1734 = vrot.slane %v1733, 1
      %v1735 = vadd.f32 %v1733, %v1734
      %v1736 = vadd.f32 %v1121, %v1129
      %v1737 = vadd.f32 %v1736, %v1137
      %v1738 = vadd.f32 %v1737, %v1145
      %v1739 = vadd.f32 %v1738, %v1153
      %v1740 = vadd.f32 %v1739, %v1161
      %v1741 = vadd.f32 %v1740, %v1169
      %v1742 = vadd.f32 %v1741, %v1177
      %v1743 = vrot.slane %v1742, 4
      %v1744 = vadd.f32 %v1742, %v1743
      %v1745 = vrot.slane %v1744, 2
      %v1746 = vadd.f32 %v1744, %v1745
      %v1747 = vrot.slane %v1746, 1
      %v1748 = vadd.f32 %v1746, %v1747
      %v1757 = vcombine.low %v1657, %v1670
      %v1758 = vcombine.low %v1683, %v1696
      %v1759 = vcombine.low %v1709, %v1722
      %v1760 = vcombine.low %v1735, %v1748
      %v1762 = vunpack.c.l.s4 1966171168
      %v1763 = vunpack.c.0.s8 %v1762
      %v1764 = vlaneseq
      %v1765 = vshrl.u32 %v1764, 7
      %v1766 = vsub.s32 %v1763, %v1765
      %v1767 = vrot.slane %v1757, %v1766
      %v1769 = vunpack.c.l.s4 1966171168
      %v1770 = vunpack.c.0.s8 %v1769
      %v1771 = vlaneseq
      %v1772 = vshrl.u32 %v1771, 7
      %v1773 = vsub.s32 %v1770, %v1772
      %v1774 = vrot.slane %v1758, %v1773
      %v1776 = vunpack.c.l.s4 1966171168
      %v1777 = vunpack.c.0.s8 %v1776
      %v1778 = vlaneseq
      %v1779 = vshrl.u32 %v1778, 7
      %v1780 = vsub.s32 %v1777, %v1779
      %v1781 = vrot.slane %v1759, %v1780
      %v1783 = vunpack.c.l.s4 1966171168
      %v1784 = vunpack.c.0.s8 %v1783
      %v1785 = vlaneseq
      %v1786 = vshrl.u32 %v1785, 7
      %v1787 = vsub.s32 %v1784, %v1786
      %v1788 = vrot.slane %v1760, %v1787
      %v1789 = vcombine.low %v1767, %v1774
      %v1790 = vcombine.low %v1781, %v1788
      %v1792 = vunpack.c.l.s4 1966171168
      %v1793 = vunpack.c.0.s8 %v1792
      %v1794 = vlaneseq
      %v1795 = vshrl.u32 %v1794, 7
      %v1796 = vsub.s32 %v1793, %v1795
      %v1797 = vrot.slane %v1789, %v1796
      %v1799 = vunpack.c.l.s4 1966171168
      %v1800 = vunpack.c.0.s8 %v1799
      %v1801 = vlaneseq
      %v1802 = vshrl.u32 %v1801, 7
      %v1803 = vsub.s32 %v1800, %v1802
      %v1804 = vrot.slane %v1790, %v1803
      %v1805 = vcombine.low %v1797, %v1804
      %v1807 = vadd.f32 %v1644, %v1805
      %1808 = vst [vmem:[%s331] sm:$0xff] %v1807
      %v1809 = vld [vmem:[%s335] sm:$0xff]
      %v1810 = vmul.f32 %v1114, %v1114
      %v1811 = vmul.f32 %v1115, %v1115
      %v1812 = vmul.f32 %v1116, %v1116
      %v1813 = vmul.f32 %v1117, %v1117
      %v1814 = vmul.f32 %v1118, %v1118
      %v1815 = vmul.f32 %v1119, %v1119
      %v1816 = vmul.f32 %v1120, %v1120
      %v1817 = vmul.f32 %v1121, %v1121
      %v1818 = vmul.f32 %v1122, %v1122
      %v1819 = vmul.f32 %v1123, %v1123
      %v1820 = vmul.f32 %v1124, %v1124
      %v1821 = vmul.f32 %v1125, %v1125
      %v1822 = vmul.f32 %v1126, %v1126
      %v1823 = vmul.f32 %v1127, %v1127
      %v1824 = vmul.f32 %v1128, %v1128
      %v1825 = vmul.f32 %v1129, %v1129
      %v1826 = vmul.f32 %v1130, %v1130
      %v1827 = vmul.f32 %v1131, %v1131
      %v1828 = vmul.f32 %v1132, %v1132
      %v1829 = vmul.f32 %v1133, %v1133
      %v1830 = vmul.f32 %v1134, %v1134
      %v1831 = vmul.f32 %v1135, %v1135
      %v1832 = vmul.f32 %v1136, %v1136
      %v1833 = vmul.f32 %v1137, %v1137
      %v1834 = vmul.f32 %v1138, %v1138
      %v1835 = vmul.f32 %v1139, %v1139
      %v1836 = vmul.f32 %v1140, %v1140
      %v1837 = vmul.f32 %v1141, %v1141
      %v1838 = vmul.f32 %v1142, %v1142
      %v1839 = vmul.f32 %v1143, %v1143
      %v1840 = vmul.f32 %v1144, %v1144
      %v1841 = vmul.f32 %v1145, %v1145
      %v1842 = vmul.f32 %v1146, %v1146
      %v1843 = vmul.f32 %v1147, %v1147
      %v1844 = vmul.f32 %v1148, %v1148
      %v1845 = vmul.f32 %v1149, %v1149
      %v1846 = vmul.f32 %v1150, %v1150
      %v1847 = vmul.f32 %v1151, %v1151
      %v1848 = vmul.f32 %v1152, %v1152
      %v1849 = vmul.f32 %v1153, %v1153
      %v1850 = vmul.f32 %v1154, %v1154
      %v1851 = vmul.f32 %v1155, %v1155
      %v1852 = vmul.f32 %v1156, %v1156
      %v1853 = vmul.f32 %v1157, %v1157
      %v1854 = vmul.f32 %v1158, %v1158
      %v1855 = vmul.f32 %v1159, %v1159
      %v1856 = vmul.f32 %v1160, %v1160
      %v1857 = vmul.f32 %v1161, %v1161
      %v1858 = vmul.f32 %v1162, %v1162
      %v1859 = vmul.f32 %v1163, %v1163
      %v1860 = vmul.f32 %v1164, %v1164
      %v1861 = vmul.f32 %v1165, %v1165
      %v1862 = vmul.f32 %v1166, %v1166
      %v1863 = vmul.f32 %v1167, %v1167
      %v1864 = vmul.f32 %v1168, %v1168
      %v1865 = vmul.f32 %v1169, %v1169
      %v1866 = vmul.f32 %v1170, %v1170
      %v1867 = vmul.f32 %v1171, %v1171
      %v1868 = vmul.f32 %v1172, %v1172
      %v1869 = vmul.f32 %v1173, %v1173
      %v1870 = vmul.f32 %v1174, %v1174
      %v1871 = vmul.f32 %v1175, %v1175
      %v1872 = vmul.f32 %v1176, %v1176
      %v1873 = vmul.f32 %v1177, %v1177
      %v1874 = vadd.f32 %v1810, %v1818
      %v1875 = vadd.f32 %v1874, %v1826
      %v1876 = vadd.f32 %v1875, %v1834
      %v1877 = vadd.f32 %v1876, %v1842
      %v1878 = vadd.f32 %v1877, %v1850
      %v1879 = vadd.f32 %v1878, %v1858
      %v1880 = vadd.f32 %v1879, %v1866
      %v1881 = vrot.slane %v1880, 4
      %v1882 = vadd.f32 %v1880, %v1881
      %v1883 = vrot.slane %v1882, 2
      %v1884 = vadd.f32 %v1882, %v1883
      %v1885 = vrot.slane %v1884, 1
      %v1886 = vadd.f32 %v1884, %v1885
      %v1887 = vadd.f32 %v1811, %v1819
      %v1888 = vadd.f32 %v1887, %v1827
      %v1889 = vadd.f32 %v1888, %v1835
      %v1890 = vadd.f32 %v1889, %v1843
      %v1891 = vadd.f32 %v1890, %v1851
      %v1892 = vadd.f32 %v1891, %v1859
      %v1893 = vadd.f32 %v1892, %v1867
      %v1894 = vrot.slane %v1893, 4
      %v1895 = vadd.f32 %v1893, %v1894
      %v1896 = vrot.slane %v1895, 2
      %v1897 = vadd.f32 %v1895, %v1896
      %v1898 = vrot.slane %v1897, 1
      %v1899 = vadd.f32 %v1897, %v1898
      %v1900 = vadd.f32 %v1812, %v1820
      %v1901 = vadd.f32 %v1900, %v1828
      %v1902 = vadd.f32 %v1901, %v1836
      %v1903 = vadd.f32 %v1902, %v1844
      %v1904 = vadd.f32 %v1903, %v1852
      %v1905 = vadd.f32 %v1904, %v1860
      %v1906 = vadd.f32 %v1905, %v1868
      %v1907 = vrot.slane %v1906, 4
      %v1908 = vadd.f32 %v1906, %v1907
      %v1909 = vrot.slane %v1908, 2
      %v1910 = vadd.f32 %v1908, %v1909
      %v1911 = vrot.slane %v1910, 1
      %v1912 = vadd.f32 %v1910, %v1911
      %v1913 = vadd.f32 %v1813, %v1821
      %v1914 = vadd.f32 %v1913, %v1829
      %v1915 = vadd.f32 %v1914, %v1837
      %v1916 = vadd.f32 %v1915, %v1845
      %v1917 = vadd.f32 %v1916, %v1853
      %v1918 = vadd.f32 %v1917, %v1861
      %v1919 = vadd.f32 %v1918, %v1869
      %v1920 = vrot.slane %v1919, 4
      %v1921 = vadd.f32 %v1919, %v1920
      %v1922 = vrot.slane %v1921, 2
      %v1923 = vadd.f32 %v1921, %v1922
      %v1924 = vrot.slane %v1923, 1
      %v1925 = vadd.f32 %v1923, %v1924
      %v1926 = vadd.f32 %v1814, %v1822
      %v1927 = vadd.f32 %v1926, %v1830
      %v1928 = vadd.f32 %v1927, %v1838
      %v1929 = vadd.f32 %v1928, %v1846
      %v1930 = vadd.f32 %v1929, %v1854
      %v1931 = vadd.f32 %v1930, %v1862
      %v1932 = vadd.f32 %v1931, %v1870
      %v1933 = vrot.slane %v1932, 4
      %v1934 = vadd.f32 %v1932, %v1933
      %v1935 = vrot.slane %v1934, 2
      %v1936 = vadd.f32 %v1934, %v1935
      %v1937 = vrot.slane %v1936, 1
      %v1938 = vadd.f32 %v1936, %v1937
      %v1939 = vadd.f32 %v1815, %v1823
      %v1940 = vadd.f32 %v1939, %v1831
      %v1941 = vadd.f32 %v1940, %v1839
      %v1942 = vadd.f32 %v1941, %v1847
      %v1943 = vadd.f32 %v1942, %v1855
      %v1944 = vadd.f32 %v1943, %v1863
      %v1945 = vadd.f32 %v1944, %v1871
      %v1946 = vrot.slane %v1945, 4
      %v1947 = vadd.f32 %v1945, %v1946
      %v1948 = vrot.slane %v1947, 2
      %v1949 = vadd.f32 %v1947, %v1948
      %v1950 = vrot.slane %v1949, 1
      %v1951 = vadd.f32 %v1949, %v1950
      %v1952 = vadd.f32 %v1816, %v1824
      %v1953 = vadd.f32 %v1952, %v1832
      %v1954 = vadd.f32 %v1953, %v1840
      %v1955 = vadd.f32 %v1954, %v1848
      %v1956 = vadd.f32 %v1955, %v1856
      %v1957 = vadd.f32 %v1956, %v1864
      %v1958 = vadd.f32 %v1957, %v1872
      %v1959 = vrot.slane %v1958, 4
      %v1960 = vadd.f32 %v1958, %v1959
      %v1961 = vrot.slane %v1960, 2
      %v1962 = vadd.f32 %v1960, %v1961
      %v1963 = vrot.slane %v1962, 1
      %v1964 = vadd.f32 %v1962, %v1963
      %v1965 = vadd.f32 %v1817, %v1825
      %v1966 = vadd.f32 %v1965, %v1833
      %v1967 = vadd.f32 %v1966, %v1841
      %v1968 = vadd.f32 %v1967, %v1849
      %v1969 = vadd.f32 %v1968, %v1857
      %v1970 = vadd.f32 %v1969, %v1865
      %v1971 = vadd.f32 %v1970, %v1873
      %v1972 = vrot.slane %v1971, 4
      %v1973 = vadd.f32 %v1971, %v1972
      %v1974 = vrot.slane %v1973, 2
      %v1975 = vadd.f32 %v1973, %v1974
      %v1976 = vrot.slane %v1975, 1
      %v1977 = vadd.f32 %v1975, %v1976
      %v1986 = vcombine.low %v1886, %v1899
      %v1987 = vcombine.low %v1912, %v1925
      %v1988 = vcombine.low %v1938, %v1951
      %v1989 = vcombine.low %v1964, %v1977
      %v1991 = vunpack.c.l.s4 1966171168
      %v1992 = vunpack.c.0.s8 %v1991
      %v1993 = vlaneseq
      %v1994 = vshrl.u32 %v1993, 7
      %v1995 = vsub.s32 %v1992, %v1994
      %v1996 = vrot.slane %v1986, %v1995
      %v1998 = vunpack.c.l.s4 1966171168
      %v1999 = vunpack.c.0.s8 %v1998
      %v2000 = vlaneseq
      %v2001 = vshrl.u32 %v2000, 7
      %v2002 = vsub.s32 %v1999, %v2001
      %v2003 = vrot.slane %v1987, %v2002
      %v2005 = vunpack.c.l.s4 1966171168
      %v2006 = vunpack.c.0.s8 %v2005
      %v2007 = vlaneseq
      %v2008 = vshrl.u32 %v2007, 7
      %v2009 = vsub.s32 %v2006, %v2008
      %v2010 = vrot.slane %v1988, %v2009
      %v2012 = vunpack.c.l.s4 1966171168
      %v2013 = vunpack.c.0.s8 %v2012
      %v2014 = vlaneseq
      %v2015 = vshrl.u32 %v2014, 7
      %v2016 = vsub.s32 %v2013, %v2015
      %v2017 = vrot.slane %v1989, %v2016
      %v2018 = vcombine.low %v1996, %v2003
      %v2019 = vcombine.low %v2010, %v2017
      %v2021 = vunpack.c.l.s4 1966171168
      %v2022 = vunpack.c.0.s8 %v2021
      %v2023 = vlaneseq
      %v2024 = vshrl.u32 %v2023, 7
      %v2025 = vsub.s32 %v2022, %v2024
      %v2026 = vrot.slane %v2018, %v2025
      %v2028 = vunpack.c.l.s4 1966171168
      %v2029 = vunpack.c.0.s8 %v2028
      %v2030 = vlaneseq
      %v2031 = vshrl.u32 %v2030, 7
      %v2032 = vsub.s32 %v2029, %v2031
      %v2033 = vrot.slane %v2019, %v2032
      %v2034 = vcombine.low %v2026, %v2033
      %v2036 = vadd.f32 %v1809, %v2034
      %2037 = vst [vmem:[%s335] sm:$0xff] %v2036
      %p2038 = scmp.lt.s32.totalorder %s23, 1
      %s2039 = scalar_select %p2038, %s23, 1
      %s2040 = smul.addr %s2039, 8
      %s2041 = scalar_lea.vmem %s4, %s2040
      %p2042 = scmp.lt.s32.totalorder %s23, 1
      %s2043 = scalar_select %p2042, %s23, 1
      %s2044 = smul.addr %s2043, 8
      %s2045 = scalar_lea.vmem %s5, %s2044
      %p2046 = scmp.lt.s32.totalorder %s23, 1
      %s2047 = scalar_select %p2046, %s23, 1
      %s2048 = smul.addr %s2047, 8
      %s2049 = scalar_lea.vmem %s6, %s2048
      %p2050 = scmp.lt.s32.totalorder %s23, 1
      %s2051 = scalar_select %p2050, %s23, 1
      %s2052 = smul.addr %s2051, 8
      %s2053 = scalar_lea.vmem %s7, %s2052
      // Predicated region
      $region41: #{pointnet_encoder_forward.9} parent=35 // pred_check
        %p2054 = pneg %p140
      $region42: #{pointnet_encoder_forward.9} parent=35 // pred_check_branch
        %2056 = sbr.rel (%p2054) target = $region44
      $region43: #{pointnet_encoder_forward.9} parent=35 // pred_region
        _
      $region44: #{pointnet_encoder_forward.9} parent=35 // pred_fallthru
        _
      // Predicated region
      $region45: #{pointnet_encoder_forward.9} parent=35 // pred_check
        %p2057 = pneg %p166
      $region46: #{pointnet_encoder_forward.9} parent=35 // pred_check_branch
        %2059 = sbr.rel (%p2057) target = $region48
      $region47: #{pointnet_encoder_forward.9} parent=35 // pred_region
        _
      $region48: #{pointnet_encoder_forward.9} parent=35 // pred_fallthru
        _
      // Predicated region
      $region49: #{pointnet_encoder_forward.9} parent=35 // pred_check
        %p2060 = pneg %p192
      $region50: #{pointnet_encoder_forward.9} parent=35 // pred_check_branch
        %2062 = sbr.rel (%p2060) target = $region52
      $region51: #{pointnet_encoder_forward.9} parent=35 // pred_region
        _
      $region52: #{pointnet_encoder_forward.9} parent=35 // pred_fallthru
        _
      // Predicated region
      $region53: #{pointnet_encoder_forward.9} parent=35 // pred_check
        %p2063 = pneg %p218
      $region54: #{pointnet_encoder_forward.9} parent=35 // pred_check_branch
        %2065 = sbr.rel (%p2063) target = $region56
      $region55: #{pointnet_encoder_forward.9} parent=35 // pred_region
        _
      $region56: #{pointnet_encoder_forward.9} parent=35 // pred_fallthru
        _
    $region36: #{pointnet_encoder_forward.9} parent=5 // pred_fallthru
      _
    %p2066 = scmp.le.s32.totalorder 2, %s14
    // Predicated region
    $region57: #{pointnet_encoder_forward.9} parent=5 // pred_check
      %p2067 = pneg %p2066
    $region58: #{pointnet_encoder_forward.9} parent=5 // pred_check_branch
      %2069 = sbr.rel (%p2067) target = $region60
    $region59: #{pointnet_encoder_forward.9} parent=5 // pred_region
      %s2070 = ssub.s32 %s14, 2
      // Predicated region
      $region61: #{pointnet_encoder_forward.9} parent=59 // pred_check
        %p2071 = pneg %p146
      $region62: #{pointnet_encoder_forward.9} parent=59 // pred_check_branch
        %2073 = sbr.rel (%p2071) target = $region64
      $region63: #{pointnet_encoder_forward.9} parent=59 // pred_region
        %p2074 = scmp.lt.s32.totalorder %s25, 1
        %s2075 = scalar_select %p2074, %s25, 1
        %s2076 = smul.addr %s2075, 8
        %s2077 = scalar_lea.vmem %s4, %s2076
      $region64: #{pointnet_encoder_forward.9} parent=59 // pred_fallthru
        _
      // Predicated region
      $region65: #{pointnet_encoder_forward.9} parent=59 // pred_check
        %p2078 = pneg %p172
      $region66: #{pointnet_encoder_forward.9} parent=59 // pred_check_branch
        %2080 = sbr.rel (%p2078) target = $region68
      $region67: #{pointnet_encoder_forward.9} parent=59 // pred_region
        %p2081 = scmp.lt.s32.totalorder %s25, 1
        %s2082 = scalar_select %p2081, %s25, 1
        %s2083 = smul.addr %s2082, 8
        %s2084 = scalar_lea.vmem %s5, %s2083
      $region68: #{pointnet_encoder_forward.9} parent=59 // pred_fallthru
        _
      // Predicated region
      $region69: #{pointnet_encoder_forward.9} parent=59 // pred_check
        %p2085 = pneg %p198
      $region70: #{pointnet_encoder_forward.9} parent=59 // pred_check_branch
        %2087 = sbr.rel (%p2085) target = $region72
      $region71: #{pointnet_encoder_forward.9} parent=59 // pred_region
        %p2088 = scmp.lt.s32.totalorder %s25, 1
        %s2089 = scalar_select %p2088, %s25, 1
        %s2090 = smul.addr %s2089, 8
        %s2091 = scalar_lea.vmem %s6, %s2090
      $region72: #{pointnet_encoder_forward.9} parent=59 // pred_fallthru
        _
      // Predicated region
      $region73: #{pointnet_encoder_forward.9} parent=59 // pred_check
        %p2092 = pneg %p224
      $region74: #{pointnet_encoder_forward.9} parent=59 // pred_check_branch
        %2094 = sbr.rel (%p2092) target = $region76
      $region75: #{pointnet_encoder_forward.9} parent=59 // pred_region
        %p2095 = scmp.lt.s32.totalorder %s25, 1
        %s2096 = scalar_select %p2095, %s25, 1
        %s2097 = smul.addr %s2096, 8
        %s2098 = scalar_lea.vmem %s7, %s2097
      $region76: #{pointnet_encoder_forward.9} parent=59 // pred_fallthru
        _
    $region60: #{pointnet_encoder_forward.9} parent=5 // pred_fallthru
      _
  $region6: #{pointnet_encoder_forward.9} parent=0 // loop_footer
    %s18 = sadd.s32 1, %s14
  $region7: #{pointnet_encoder_forward.9} parent=0 // loop_footer_branch
    %13 = sbr.rel target = $region3
  $region8: #{pointnet_encoder_forward.9} parent=0 // loop_exit
    _

// kernel: pointnet_encoder_forward.11
$region0: #{pointnet_encoder_forward.11}
  #allocation0 [shape = 'u32[]', space=smem, size = 0x4, offset = 0x4, fixed_abs, tag = 'smem constant byte address 0x4 - core index']
  #allocation1 [shape = 'u32[144,128]{1,0:T(1,128)}', space=vmem, size = 0x12000, scoped, tag = 'internal scratch']
  %s0 = inlined_call_operand.vmem [shape: bf16[2,64,3], index: 0, kind: input, shape index: {}]
  %s1 = inlined_call_operand.vmem [shape: bf16[2,3,64], index: 1, kind: input, shape index: {}]
  %s2 = inlined_call_operand.vmem [shape: f32[1,3], index: 2, kind: input, shape index: {}]
  %s3 = inlined_call_operand.vmem [shape: f32[1,3], index: 3, kind: input, shape index: {}]
  %s4 = inlined_call_operand.vmem [shape: bf16[2,64,64], index: 4, kind: output, shape index: {0}]
  %s5 = inlined_call_operand.vmem [shape: f32[2,1,64], index: 5, kind: output, shape index: {1}]
  %s6 = inlined_call_operand.vmem [shape: f32[2,1,64], index: 6, kind: output, shape index: {2}]
  %7 = xla_tuple %s4, %s5, %s6
  %s8 = sld [smem:[#allocation0]]
  $region69: #{pointnet_encoder_forward.11} parent=0
    _
  %s10 = ssub.s32 1, %s8
  %s11 = scalar_select 0, %s10, %s8
  loop: start=0, step=1, limit=4
  $region2: #{pointnet_encoder_forward.11} parent=0 // loop_pre_header
    _
  $region3: #{pointnet_encoder_forward.11} parent=0 // loop_header
    %s13 = sphi 0, %s17
    %p14 = scmp.ge.s32.totalorder %s13, 4
    %s20 = sphi 0, %s32
    %s21 = sphi 0, %s28
    %s22 = sphi 0, %s20
    %s23 = sphi 0, %s21
    %s24 = sphi 0, %s22
    %s25 = sphi 0, %s23
    %s37 = sphi 0, %s39
    %s40 = sphi 0, %s37
    %s41 = sphi 0, %s40
    %s57 = sphi 0, %s41
    %s63 = sphi 0, %s65
    %s66 = sphi 0, %s63
    %s67 = sphi 0, %s66
    %s83 = sphi 0, %s67
    %s87 = sphi 0, %s87
    %s89 = sphi 0, %s87
    %s90 = sphi 0, %s89
    %s104 = sphi 0, %s90
    %s108 = sphi 0, %s108
    %s110 = sphi 0, %s108
    %s111 = sphi 0, %s110
    %s125 = sphi 0, %s111
    %s133 = sphi 0, %s135
    %s136 = sphi 0, %s133
    %s137 = sphi 0, %s136
    %s153 = sphi 0, %s137
    %s159 = sphi 0, %s161
    %s162 = sphi 0, %s159
    %s163 = sphi 0, %s162
    %s179 = sphi 0, %s163
    %s185 = sphi 0, %s187
    %s188 = sphi 0, %s185
    %s189 = sphi 0, %s188
    %s205 = sphi 0, %s189
  $region4: #{pointnet_encoder_forward.11} parent=0 // loop_header_branch
    %16 = sbr.rel (%p14) target = $region8
  $region5: #{pointnet_encoder_forward.11} parent=0 // loop_body
    %s18 = ssub.s32 %s13, 1
    %s19 = ssub.s32 %s13, 2
    %s26 = sadd.s32 1, %s21
    %p27 = scmp.ge.s32.totalorder %s26, 1
    %s28 = scalar_select %p27, 0, %s26
    %s29 = sadd.s32 1, %s20
    %s30 = scalar_select %p27, %s29, %s20
    %p31 = scmp.ge.s32.totalorder %s30, 2
    %s32 = scalar_select %p31, 0, %s30
    %s33 = ssub.s32 %s20, %s32
    %s34 = ssub.s32 %s21, %s28
    %s35 = sor.u32 %s33, %s34
    %p36 = scmp.eq.s32.totalorder %s35, 0
    %s38 = sadd.s32 %s37, 1
    %s39 = scalar_select %p36, %s37, %s38
    %p42 = pneg %p36
    %p43 = scmp.eq.s32.totalorder %s13, 1
    %p44 = por %p42, %p43
    %p45 = scmp.ne.s32.totalorder %s37, %s40
    %p46 = scmp.eq.s32.totalorder %s13, 0
    %p47 = por %p45, %p46
    %p48 = scmp.ne.s32.totalorder %s37, %s40
    %p49 = scmp.eq.s32.totalorder %s18, 1
    %p50 = por %p48, %p49
    %p51 = scmp.ne.s32.totalorder %s40, %s41
    %p52 = scmp.eq.s32.totalorder %s18, 0
    %p53 = por %p51, %p52
    %p54 = scmp.ne.s32.totalorder %s40, %s41
    %p55 = scmp.eq.s32.totalorder %s19, 1
    %p56 = por %p54, %p55
    %p58 = scmp.ne.s32.totalorder %s41, %s57
    %p59 = scmp.eq.s32.totalorder %s19, 0
    %p60 = por %p58, %p59
    %s61 = ssub.s32 %s20, %s32
    %p62 = scmp.eq.s32.totalorder %s61, 0
    %s64 = sadd.s32 %s63, 1
    %s65 = scalar_select %p62, %s63, %s64
    %p68 = pneg %p62
    %p69 = scmp.eq.s32.totalorder %s13, 1
    %p70 = por %p68, %p69
    %p71 = scmp.ne.s32.totalorder %s63, %s66
    %p72 = scmp.eq.s32.totalorder %s13, 0
    %p73 = por %p71, %p72
    %p74 = scmp.ne.s32.totalorder %s63, %s66
    %p75 = scmp.eq.s32.totalorder %s18, 1
    %p76 = por %p74, %p75
    %p77 = scmp.ne.s32.totalorder %s66, %s67
    %p78 = scmp.eq.s32.totalorder %s18, 0
    %p79 = por %p77, %p78
    %p80 = scmp.ne.s32.totalorder %s66, %s67
    %p81 = scmp.eq.s32.totalorder %s19, 1
    %p82 = por %p80, %p81
    %p84 = scmp.ne.s32.totalorder %s67, %s83
    %p85 = scmp.eq.s32.totalorder %s19, 0
    %p86 = por %p84, %p85
    %s88 = sadd.s32 %s87, 1
    %p91 = scmp.eq.s32.totalorder %s13, 1
    %p92 = scmp.ne.s32.totalorder %s87, %s89
    %p93 = scmp.eq.s32.totalorder %s13, 0
    %p94 = por %p92, %p93
    %p95 = scmp.ne.s32.totalorder %s87, %s89
    %p96 = scmp.eq.s32.totalorder %s18, 1
    %p97 = por %p95, %p96
    %p98 = scmp.ne.s32.totalorder %s89, %s90
    %p99 = scmp.eq.s32.totalorder %s18, 0
    %p100 = por %p98, %p99
    %p101 = scmp.ne.s32.totalorder %s89, %s90
    %p102 = scmp.eq.s32.totalorder %s19, 1
    %p103 = por %p101, %p102
    %p105 = scmp.ne.s32.totalorder %s90, %s104
    %p106 = scmp.eq.s32.totalorder %s19, 0
    %p107 = por %p105, %p106
    %s109 = sadd.s32 %s108, 1
    %p112 = scmp.eq.s32.totalorder %s13, 1
    %p113 = scmp.ne.s32.totalorder %s108, %s110
    %p114 = scmp.eq.s32.totalorder %s13, 0
    %p115 = por %p113, %p114
    %p116 = scmp.ne.s32.totalorder %s108, %s110
    %p117 = scmp.eq.s32.totalorder %s18, 1
    %p118 = por %p116, %p117
    %p119 = scmp.ne.s32.totalorder %s110, %s111
    %p120 = scmp.eq.s32.totalorder %s18, 0
    %p121 = por %p119, %p120
    %p122 = scmp.ne.s32.totalorder %s110, %s111
    %p123 = scmp.eq.s32.totalorder %s19, 1
    %p124 = por %p122, %p123
    %p126 = scmp.ne.s32.totalorder %s111, %s125
    %p127 = scmp.eq.s32.totalorder %s19, 0
    %p128 = por %p126, %p127
    %s129 = ssub.s32 %s20, %s32
    %s130 = ssub.s32 %s21, %s28
    %s131 = sor.u32 %s129, %s130
    %p132 = scmp.eq.s32.totalorder %s131, 0
    %s134 = sadd.s32 %s133, 1
    %s135 = scalar_select %p132, %s133, %s134
    %p138 = pneg %p132
    %p139 = scmp.eq.s32.totalorder %s13, 1
    %p140 = por %p138, %p139
    %p141 = scmp.ne.s32.totalorder %s133, %s136
    %p142 = scmp.eq.s32.totalorder %s13, 0
    %p143 = por %p141, %p142
    %p144 = scmp.ne.s32.totalorder %s133, %s136
    %p145 = scmp.eq.s32.totalorder %s18, 1
    %p146 = por %p144, %p145
    %p147 = scmp.ne.s32.totalorder %s136, %s137
    %p148 = scmp.eq.s32.totalorder %s18, 0
    %p149 = por %p147, %p148
    %p150 = scmp.ne.s32.totalorder %s136, %s137
    %p151 = scmp.eq.s32.totalorder %s19, 1
    %p152 = por %p150, %p151
    %p154 = scmp.ne.s32.totalorder %s137, %s153
    %p155 = scmp.eq.s32.totalorder %s19, 0
    %p156 = por %p154, %p155
    %s157 = ssub.s32 %s20, %s32
    %p158 = scmp.eq.s32.totalorder %s157, 0
    %s160 = sadd.s32 %s159, 1
    %s161 = scalar_select %p158, %s159, %s160
    %p164 = pneg %p158
    %p165 = scmp.eq.s32.totalorder %s13, 1
    %p166 = por %p164, %p165
    %p167 = scmp.ne.s32.totalorder %s159, %s162
    %p168 = scmp.eq.s32.totalorder %s13, 0
    %p169 = por %p167, %p168
    %p170 = scmp.ne.s32.totalorder %s159, %s162
    %p171 = scmp.eq.s32.totalorder %s18, 1
    %p172 = por %p170, %p171
    %p173 = scmp.ne.s32.totalorder %s162, %s163
    %p174 = scmp.eq.s32.totalorder %s18, 0
    %p175 = por %p173, %p174
    %p176 = scmp.ne.s32.totalorder %s162, %s163
    %p177 = scmp.eq.s32.totalorder %s19, 1
    %p178 = por %p176, %p177
    %p180 = scmp.ne.s32.totalorder %s163, %s179
    %p181 = scmp.eq.s32.totalorder %s19, 0
    %p182 = por %p180, %p181
    %s183 = ssub.s32 %s20, %s32
    %p184 = scmp.eq.s32.totalorder %s183, 0
    %s186 = sadd.s32 %s185, 1
    %s187 = scalar_select %p184, %s185, %s186
    %p190 = pneg %p184
    %p191 = scmp.eq.s32.totalorder %s13, 1
    %p192 = por %p190, %p191
    %p193 = scmp.ne.s32.totalorder %s185, %s188
    %p194 = scmp.eq.s32.totalorder %s13, 0
    %p195 = por %p193, %p194
    %p196 = scmp.ne.s32.totalorder %s185, %s188
    %p197 = scmp.eq.s32.totalorder %s18, 1
    %p198 = por %p196, %p197
    %p199 = scmp.ne.s32.totalorder %s188, %s189
    %p200 = scmp.eq.s32.totalorder %s18, 0
    %p201 = por %p199, %p200
    %p202 = scmp.ne.s32.totalorder %s188, %s189
    %p203 = scmp.eq.s32.totalorder %s19, 1
    %p204 = por %p202, %p203
    %p206 = scmp.ne.s32.totalorder %s189, %s205
    %p207 = scmp.eq.s32.totalorder %s19, 0
    %p208 = por %p206, %p207
    %p209 = scmp.le.s32.totalorder 1, %s13
    %p210 = scmp.lt.s32.totalorder %s13, 3
    %p211 = pnand %p209, %p210
    %p212 = pneg %p211
    // Predicated region
    $region9: #{pointnet_encoder_forward.11} parent=5 // pred_check
      _
    $region10: #{pointnet_encoder_forward.11} parent=5 // pred_check_branch
      %214 = sbr.rel (%p211) target = $region12
    $region11: #{pointnet_encoder_forward.11} parent=5 // pred_region
      %s215 = ssub.s32 %s13, 1
      // Predicated region
      $region13: #{pointnet_encoder_forward.11} parent=11 // pred_check
        %p216 = pneg %p100
      $region14: #{pointnet_encoder_forward.11} parent=11 // pred_check_branch
        %218 = sbr.rel (%p216) target = $region16
      $region15: #{pointnet_encoder_forward.11} parent=11 // pred_region
        _
      $region16: #{pointnet_encoder_forward.11} parent=11 // pred_fallthru
        _
      // Predicated region
      $region17: #{pointnet_encoder_forward.11} parent=11 // pred_check
        %p219 = pneg %p121
      $region18: #{pointnet_encoder_forward.11} parent=11 // pred_check_branch
        %221 = sbr.rel (%p219) target = $region20
      $region19: #{pointnet_encoder_forward.11} parent=11 // pred_region
        _
      $region20: #{pointnet_encoder_forward.11} parent=11 // pred_fallthru
        _
    $region12: #{pointnet_encoder_forward.11} parent=5 // pred_fallthru
      _
    %p222 = scmp.lt.s32.totalorder %s13, 2
    // Predicated region
    $region21: #{pointnet_encoder_forward.11} parent=5 // pred_check
      %p223 = pneg %p222
    $region22: #{pointnet_encoder_forward.11} parent=5 // pred_check_branch
      %225 = sbr.rel (%p223) target = $region24
    $region23: #{pointnet_encoder_forward.11} parent=5 // pred_region
      // Predicated region
      $region25: #{pointnet_encoder_forward.11} parent=23 // pred_check
        %p226 = pneg %p47
      $region26: #{pointnet_encoder_forward.11} parent=23 // pred_check_branch
        %228 = sbr.rel (%p226) target = $region28
      $region27: #{pointnet_encoder_forward.11} parent=23 // pred_region
        %s229 = smul.u32 8, %s21
        %p230 = scmp.lt.s32.totalorder %s20, 1
        %s231 = scalar_select %p230, %s20, 1
        %p232 = scmp.lt.s32.totalorder %s229, 7
        %s233 = scalar_select %p232, %s229, 7
        %s234 = smul.addr %s231, 8
        %s235 = sadd.s32 %s233, %s234
        %s236 = smul.addr %s235, 4
        %s237 = scalar_lea.vmem %s0, %s236
        %s238 = smul.u32 8, %s21
      $region28: #{pointnet_encoder_forward.11} parent=23 // pred_fallthru
        _
      // Predicated region
      $region29: #{pointnet_encoder_forward.11} parent=23 // pred_check
        %p239 = pneg %p73
      $region30: #{pointnet_encoder_forward.11} parent=23 // pred_check_branch
        %241 = sbr.rel (%p239) target = $region32
      $region31: #{pointnet_encoder_forward.11} parent=23 // pred_region
        %p242 = scmp.lt.s32.totalorder %s20, 1
        %s243 = scalar_select %p242, %s20, 1
        %s244 = smul.addr %s243, 2
        %s245 = scalar_lea.vmem %s1, %s244
      $region32: #{pointnet_encoder_forward.11} parent=23 // pred_fallthru
        _
    $region24: #{pointnet_encoder_forward.11} parent=5 // pred_fallthru
      _
    %p246 = scmp.le.s32.totalorder 1, %s13
    %p247 = scmp.lt.s32.totalorder %s13, 3
    %p248 = pnand %p246, %p247
    %p249 = pneg %p248
    // Predicated region
    $region33: #{pointnet_encoder_forward.11} parent=5 // pred_check
      _
    $region34: #{pointnet_encoder_forward.11} parent=5 // pred_check_branch
      %251 = sbr.rel (%p248) target = $region36
    $region35: #{pointnet_encoder_forward.11} parent=5 // pred_region
      %s252 = ssub.s32 %s13, 1
      %s253 = smul.u32 8, %s23
      %p254 = scmp.lt.s32.totalorder %s22, 1
      %s255 = scalar_select %p254, %s22, 1
      %p256 = scmp.lt.s32.totalorder %s253, 7
      %s257 = scalar_select %p256, %s253, 7
      %s258 = smul.addr %s255, 8
      %s259 = sadd.s32 %s257, %s258
      %s260 = smul.addr %s259, 4
      %s261 = scalar_lea.vmem %s0, %s260
      %p262 = pneg %p53
      %p263 = pneg %p50
      %p264 = scmp.lt.s32.totalorder %s22, 1
      %s265 = scalar_select %p264, %s22, 1
      %s266 = smul.addr %s265, 2
      %s267 = scalar_lea.vmem %s1, %s266
      %p268 = pneg %p79
      %p269 = pneg %p76
      %p270 = pneg %p100
      %p271 = pneg %p97
      %p272 = pneg %p121
      %p273 = pneg %p118
      %p274 = pneg %p149
      %p275 = pneg %p146
      %s276 = smul.u32 8, %s23
      %p277 = scmp.lt.s32.totalorder %s22, 1
      %s278 = scalar_select %p277, %s22, 1
      %p279 = scmp.lt.s32.totalorder %s276, 7
      %s280 = scalar_select %p279, %s276, 7
      %s281 = smul.addr %s278, 8
      %s282 = sadd.s32 %s280, %s281
      %s283 = smul.addr %s282, 4
      %s284 = scalar_lea.vmem %s4, %s283
      %p285 = pneg %p175
      %p286 = pneg %p172
      %p287 = scmp.lt.s32.totalorder %s22, 1
      %s288 = scalar_select %p287, %s22, 1
      %s289 = scalar_lea.vmem %s5, %s288
      %p290 = pneg %p201
      %p291 = pneg %p198
      %p292 = scmp.lt.s32.totalorder %s22, 1
      %s293 = scalar_select %p292, %s22, 1
      %s294 = scalar_lea.vmem %s6, %s293
      %s295 = smul.u32 8, %s23
      %p296 = scmp.lt.s32.totalorder %s22, 1
      %s297 = scalar_select %p296, %s22, 1
      %p298 = scmp.lt.s32.totalorder %s295, 7
      %s299 = scalar_select %p298, %s295, 7
      %s300 = smul.addr %s297, 8
      %s301 = sadd.s32 %s299, %s300
      %s302 = smul.addr %s301, 4
      %s303 = scalar_lea.vmem %s0, %s302
      %s304 = smul.u32 8, %s23
      %p305 = scmp.lt.s32.totalorder %s22, 1
      %s306 = scalar_select %p305, %s22, 1
      %s307 = smul.addr %s306, 2
      %s308 = scalar_lea.vmem %s1, %s307
      %s309 = smul.u32 8, %s23
      %p310 = scmp.lt.s32.totalorder %s22, 1
      %s311 = scalar_select %p310, %s22, 1
      %p312 = scmp.lt.s32.totalorder %s309, 7
      %s313 = scalar_select %p312, %s309, 7
      %s314 = smul.addr %s311, 8
      %s315 = sadd.s32 %s313, %s314
      %s316 = smul.addr %s315, 4
      %s317 = scalar_lea.vmem %s4, %s316
      %s318 = smul.u32 8, %s23
      %p319 = scmp.lt.s32.totalorder %s22, 1
      %s320 = scalar_select %p319, %s22, 1
      %s321 = scalar_lea.vmem %s5, %s320
      %p322 = scmp.lt.s32.totalorder %s22, 1
      %s323 = scalar_select %p322, %s22, 1
      %s324 = scalar_lea.vmem %s6, %s323
      %v326 = vld [vmem:[%s303] sm:$0xf]
      %v327 = vld [vmem:[%s303 + $0x4] sm:$0xf]
      %v328 = vld [vmem:[%s303 + $0x8] sm:$0xf]
      %v329 = vld [vmem:[%s303 + $0xc] sm:$0xf]
      %v330 = vld [vmem:[%s303 + $0x10] sm:$0xf]
      %v331 = vld [vmem:[%s303 + $0x14] sm:$0xf]
      %v332 = vld [vmem:[%s303 + $0x18] sm:$0xf]
      %v333 = vld [vmem:[%s303 + $0x1c] sm:$0xf]
      %v334 = vld [vmem:[%s308] sm:$0x3]
      %v343 = vunpack.c.l.b16 %v326
      %v344 = vunpack.c.l.b16 %v327
      %v345 = vunpack.c.l.b16 %v328
      %v346 = vunpack.c.l.b16 %v329
      %v347 = vunpack.c.l.b16 %v330
      %v348 = vunpack.c.l.b16 %v331
      %v349 = vunpack.c.l.b16 %v332
      %v350 = vunpack.c.l.b16 %v333
      %v351 = vpack.c.b16 %v344, %v343
      %v352 = vpack.c.b16 %v346, %v345
      %v353 = vpack.c.b16 %v348, %v347
      %v354 = vpack.c.b16 %v350, %v349
      %vm355 = vcmask 23552
      %v357 = vsel %vm355, %v351, 0
      %v360 = vsel %vm355, %v352, 0
      %v363 = vsel %vm355, %v353, 0
      %v366 = vsel %vm355, %v354, 0
      %vm368 = vcmask 1040384
      %vm369 = vcmask 1041408
      %v370 = vsel %vm368, 4294967295, 65535
      %v371 = vsel %vm369, %v370, 0
      %v373 = vand.u32 %v334, %v371
      %375 = vmatprep.subr.bf16.mxu0 0
      %376 = vmatpush1.bf16.msra.mxu0 0
      %377 = vmatprep.subr.bf16.mxu0 0
      %378 = vmatpush1.bf16.msra.mxu0 0
      %379 = vmatprep.subr.bf16.mxu0 0
      %380 = vmatpush1.bf16.msra.mxu0 0
      %381 = vmatprep.subr.bf16.mxu0 0
      %382 = vmatpush1.bf16.msra.mxu0 0
      %383 = vmatprep.subr.bf16.mxu0 0
      %384 = vmatpush1.bf16.msra.mxu0 0
      %385 = vmatprep.subr.bf16.mxu0 0
      %386 = vmatpush1.bf16.msra.mxu0 0
      %387 = vmatprep.subr.bf16.mxu0 0
      %388 = vmatpush1.bf16.msra.mxu0 0
      %389 = vmatprep.subr.bf16.mxu0 0
      %390 = vmatpush1.bf16.msra.mxu0 %v373
      %391 = vmatprep.subr.bf16.mxu0 0
      %392 = vmatpush2.bf16.msra.mxu0 0
      %393 = vmatprep.subr.bf16.mxu0 0
      %394 = vmatpush2.bf16.msra.mxu0 0
      %395 = vmatprep.subr.bf16.mxu0 0
      %396 = vmatpush2.bf16.msra.mxu0 0
      %397 = vmatprep.subr.bf16.mxu0 0
      %398 = vmatpush2.bf16.msra.mxu0 0
      %399 = vmatprep.subr.bf16.mxu0 0
      %400 = vmatpush2.bf16.msra.mxu0 0
      %401 = vmatprep.subr.bf16.mxu0 0
      %402 = vmatpush2.bf16.msra.mxu0 0
      %403 = vmatprep.subr.bf16.mxu0 0
      %404 = vmatpush2.bf16.msra.mxu0 0
      %405 = vmatprep.subr.bf16.mxu0 0
      %406 = vmatpush2.bf16.msra.mxu0 0
      %407 = vmatprep.mubr.bf16.mxu0 0
      %408 = vmatmul.mubr.bf16.gmra.mxu0 %v357
      %v409 = vpop.f32.mrf.mxu0
      %v410 = vadd.f32 0.0, %v409
      %v411 = vpop.f32.mrf.mxu0
      %v412 = vpop.f32.mrf.mxu0
      %v413 = vadd.f32 0.0, %v412
      %v414 = vpop.f32.mrf.mxu0
      %415 = vmatprep.mubr.bf16.mxu0 0
      %416 = vmatmul.mubr.bf16.gmra.mxu0 %v360
      %v417 = vpop.f32.mrf.mxu0
      %v418 = vadd.f32 0.0, %v417
      %v419 = vpop.f32.mrf.mxu0
      %v420 = vpop.f32.mrf.mxu0
      %v421 = vadd.f32 0.0, %v420
      %v422 = vpop.f32.mrf.mxu0
      %423 = vmatprep.mubr.bf16.mxu0 0
      %424 = vmatmul.mubr.bf16.gmra.mxu0 %v363
      %v425 = vpop.f32.mrf.mxu0
      %v426 = vadd.f32 0.0, %v425
      %v427 = vpop.f32.mrf.mxu0
      %v428 = vpop.f32.mrf.mxu0
      %v429 = vadd.f32 0.0, %v428
      %v430 = vpop.f32.mrf.mxu0
      %431 = vmatprep.mubr.bf16.mxu0 0
      %432 = vmatmul.mubr.bf16.gmra.mxu0 %v366
      %v433 = vpop.f32.mrf.mxu0
      %v434 = vadd.f32 0.0, %v433
      %v435 = vpop.f32.mrf.mxu0
      %v436 = vpop.f32.mrf.mxu0
      %v437 = vadd.f32 0.0, %v436
      %v438 = vpop.f32.mrf.mxu0
      %439 = vdwg.mxu0
      %v440 = vpack.c.bf16 %v413, %v410
      %v441 = vpack.c.bf16 %v421, %v418
      %v442 = vpack.c.bf16 %v429, %v426
      %v443 = vpack.c.bf16 %v437, %v434
      %v448 = vunpack.c.l.b16 %v440
      %v449 = vunpack.c.h.b16 %v440
      %v450 = vunpack.c.l.b16 %v441
      %v451 = vunpack.c.h.b16 %v441
      %v452 = vunpack.c.l.b16 %v442
      %v453 = vunpack.c.h.b16 %v442
      %v454 = vunpack.c.l.b16 %v443
      %v455 = vunpack.c.h.b16 %v443
      %v456 = vpack.c.b16 %v448, %v448
      %v457 = vpack.c.b16 %v449, %v449
      %v458 = vpack.c.b16 %v450, %v450
      %v459 = vpack.c.b16 %v451, %v451
      %v460 = vpack.c.b16 %v452, %v452
      %v461 = vpack.c.b16 %v453, %v453
      %v462 = vpack.c.b16 %v454, %v454
      %v463 = vpack.c.b16 %v455, %v455
      %vm472 = vcmask 519168
      %473 = vst.msk [vmem:[%s317] sm:$0xf] %vm472, %v456
      %474 = vst.msk [vmem:[%s317 + $0x4] sm:$0xf] %vm472, %v457
      %475 = vst.msk [vmem:[%s317 + $0x8] sm:$0xf] %vm472, %v458
      %476 = vst.msk [vmem:[%s317 + $0xc] sm:$0xf] %vm472, %v459
      %477 = vst.msk [vmem:[%s317 + $0x10] sm:$0xf] %vm472, %v460
      %478 = vst.msk [vmem:[%s317 + $0x14] sm:$0xf] %vm472, %v461
      %479 = vst.msk [vmem:[%s317 + $0x18] sm:$0xf] %vm472, %v462
      %480 = vst.msk [vmem:[%s317 + $0x1c] sm:$0xf] %vm472, %v463
      %v481 = vlaneseq
      %v482 = vshrl.u32 %v481, 7
      %v483 = vadd.s32 %v482, 8
      %v484 = vadd.s32 %v482, 16
      %v485 = vadd.s32 %v482, 24
      %v486 = vadd.s32 %v482, 32
      %v487 = vadd.s32 %v482, 40
      %v488 = vadd.s32 %v482, 48
      %v489 = vadd.s32 %v482, 56
      %s490 = smul.u32 %s23, 64
      %v491 = vstv %s490
      %v492 = vadd.s32 %v482, %v491
      %v493 = vadd.s32 %v483, %v491
      %v494 = vadd.s32 %v484, %v491
      %v495 = vadd.s32 %v485, %v491
      %v496 = vadd.s32 %v486, %v491
      %v497 = vadd.s32 %v487, %v491
      %v498 = vadd.s32 %v488, %v491
      %v499 = vadd.s32 %v489, %v491
      %vm500 = vcmp.lt.s32.totalorder %v492, 64
      %vm501 = vcmp.lt.s32.totalorder %v493, 64
      %vm502 = vcmp.lt.s32.totalorder %v494, 64
      %vm503 = vcmp.lt.s32.totalorder %v495, 64
      %vm504 = vcmp.lt.s32.totalorder %v496, 64
      %vm505 = vcmp.lt.s32.totalorder %v497, 64
      %vm506 = vcmp.lt.s32.totalorder %v498, 64
      %vm507 = vcmp.lt.s32.totalorder %v499, 64
      %v508 = vsel %vm500, 1, 0
      %v509 = vsel %vm501, 1, 0
      %v510 = vsel %vm502, 1, 0
      %v511 = vsel %vm503, 1, 0
      %v512 = vsel %vm504, 1, 0
      %v513 = vsel %vm505, 1, 0
      %v514 = vsel %vm506, 1, 0
      %v515 = vsel %vm507, 1, 0
      %vm516 = vcmp.eq.s32.totalorder %v508, 1
      %vm517 = vcmp.eq.s32.totalorder %v509, 1
      %vm518 = vcmp.eq.s32.totalorder %v510, 1
      %vm519 = vcmp.eq.s32.totalorder %v511, 1
      %vm520 = vcmp.eq.s32.totalorder %v512, 1
      %vm521 = vcmp.eq.s32.totalorder %v513, 1
      %vm522 = vcmp.eq.s32.totalorder %v514, 1
      %vm523 = vcmp.eq.s32.totalorder %v515, 1
      %v524 = vsel %vm516, %v410, 0.0
      %v525 = vsel %vm517, %v413, 0.0
      %v526 = vsel %vm518, %v418, 0.0
      %v527 = vsel %vm519, %v421, 0.0
      %v528 = vsel %vm520, %v426, 0.0
      %v529 = vsel %vm521, %v429, 0.0
      %v530 = vsel %vm522, %v434, 0.0
      %v531 = vsel %vm523, %v437, 0.0
      %p532 = scmp.eq.s32.totalorder %s23, 0
      // Predicated region
      $region37: #{pointnet_encoder_forward.11} parent=35 // pred_check
        %p533 = pneg %p532
      $region38: #{pointnet_encoder_forward.11} parent=35 // pred_check_branch
        %535 = sbr.rel (%p533) target = $region40
      $region39: #{pointnet_encoder_forward.11} parent=35 // pred_region
        %vm536 = vcmask 516096
        %537 = vst.msk [vmem:[%s321] sm:$0x1] %vm536, 0.0
        %538 = vst.msk [vmem:[%s324] sm:$0x1] %vm536, 0.0
      $region40: #{pointnet_encoder_forward.11} parent=35 // pred_fallthru
        _
      %v539 = vld [vmem:[%s321] sm:$0x1]
      %vm540 = vcmask 523264
      %v541 = vsel %vm540, %v524, 0.0
      %v542 = vsel %vm540, %v525, 0.0
      %v543 = vadd.f32 %v541, %v542
      %v544 = vsel %vm540, %v526, 0.0
      %v545 = vadd.f32 %v543, %v544
      %v546 = vsel %vm540, %v527, 0.0
      %v547 = vadd.f32 %v545, %v546
      %v548 = vsel %vm540, %v528, 0.0
      %v549 = vadd.f32 %v547, %v548
      %v550 = vsel %vm540, %v529, 0.0
      %v551 = vadd.f32 %v549, %v550
      %v552 = vsel %vm540, %v530, 0.0
      %v553 = vadd.f32 %v551, %v552
      %v554 = vsel %vm540, %v531, 0.0
      %v555 = vadd.f32 %v553, %v554
      %v556 = vrot.slane %v555, 4
      %v557 = vadd.f32 %v555, %v556
      %v558 = vrot.slane %v557, 2
      %v559 = vadd.f32 %v557, %v558
      %v560 = vrot.slane %v559, 1
      %v561 = vadd.f32 %v559, %v560
      %v562 = vadd.f32 %v539, %v561
      %vm563 = vcmask 516096
      %564 = vst.msk [vmem:[%s321] sm:$0x1] %vm563, %v562
      %v565 = vld [vmem:[%s324] sm:$0x1]
      %v566 = vmul.f32 %v524, %v524
      %v567 = vmul.f32 %v525, %v525
      %v568 = vmul.f32 %v526, %v526
      %v569 = vmul.f32 %v527, %v527
      %v570 = vmul.f32 %v528, %v528
      %v571 = vmul.f32 %v529, %v529
      %v572 = vmul.f32 %v530, %v530
      %v573 = vmul.f32 %v531, %v531
      %v574 = vsel %vm540, %v566, 0.0
      %v575 = vsel %vm540, %v567, 0.0
      %v576 = vadd.f32 %v574, %v575
      %v577 = vsel %vm540, %v568, 0.0
      %v578 = vadd.f32 %v576, %v577
      %v579 = vsel %vm540, %v569, 0.0
      %v580 = vadd.f32 %v578, %v579
      %v581 = vsel %vm540, %v570, 0.0
      %v582 = vadd.f32 %v580, %v581
      %v583 = vsel %vm540, %v571, 0.0
      %v584 = vadd.f32 %v582, %v583
      %v585 = vsel %vm540, %v572, 0.0
      %v586 = vadd.f32 %v584, %v585
      %v587 = vsel %vm540, %v573, 0.0
      %v588 = vadd.f32 %v586, %v587
      %v589 = vrot.slane %v588, 4
      %v590 = vadd.f32 %v588, %v589
      %v591 = vrot.slane %v590, 2
      %v592 = vadd.f32 %v590, %v591
      %v593 = vrot.slane %v592, 1
      %v594 = vadd.f32 %v592, %v593
      %v595 = vadd.f32 %v565, %v594
      %596 = vst.msk [vmem:[%s324] sm:$0x1] %vm563, %v595
      %s597 = smul.u32 8, %s23
      %p598 = scmp.lt.s32.totalorder %s22, 1
      %s599 = scalar_select %p598, %s22, 1
      %p600 = scmp.lt.s32.totalorder %s597, 7
      %s601 = scalar_select %p600, %s597, 7
      %s602 = smul.addr %s599, 8
      %s603 = sadd.s32 %s601, %s602
      %s604 = smul.addr %s603, 4
      %s605 = scalar_lea.vmem %s4, %s604
      %p606 = scmp.lt.s32.totalorder %s22, 1
      %s607 = scalar_select %p606, %s22, 1
      %s608 = scalar_lea.vmem %s5, %s607
      %p609 = scmp.lt.s32.totalorder %s22, 1
      %s610 = scalar_select %p609, %s22, 1
      %s611 = scalar_lea.vmem %s6, %s610
      // Predicated region
      $region41: #{pointnet_encoder_forward.11} parent=35 // pred_check
        %p612 = pneg %p146
      $region42: #{pointnet_encoder_forward.11} parent=35 // pred_check_branch
        %614 = sbr.rel (%p612) target = $region44
      $region43: #{pointnet_encoder_forward.11} parent=35 // pred_region
        %s615 = smul.u32 8, %s23
      $region44: #{pointnet_encoder_forward.11} parent=35 // pred_fallthru
        _
      // Predicated region
      $region45: #{pointnet_encoder_forward.11} parent=35 // pred_check
        %p616 = pneg %p172
      $region46: #{pointnet_encoder_forward.11} parent=35 // pred_check_branch
        %618 = sbr.rel (%p616) target = $region48
      $region47: #{pointnet_encoder_forward.11} parent=35 // pred_region
        _
      $region48: #{pointnet_encoder_forward.11} parent=35 // pred_fallthru
        _
      // Predicated region
      $region49: #{pointnet_encoder_forward.11} parent=35 // pred_check
        %p619 = pneg %p198
      $region50: #{pointnet_encoder_forward.11} parent=35 // pred_check_branch
        %621 = sbr.rel (%p619) target = $region52
      $region51: #{pointnet_encoder_forward.11} parent=35 // pred_region
        _
      $region52: #{pointnet_encoder_forward.11} parent=35 // pred_fallthru
        _
    $region36: #{pointnet_encoder_forward.11} parent=5 // pred_fallthru
      _
    %p622 = scmp.le.s32.totalorder 2, %s13
    // Predicated region
    $region53: #{pointnet_encoder_forward.11} parent=5 // pred_check
      %p623 = pneg %p622
    $region54: #{pointnet_encoder_forward.11} parent=5 // pred_check_branch
      %625 = sbr.rel (%p623) target = $region56
    $region55: #{pointnet_encoder_forward.11} parent=5 // pred_region
      %s626 = ssub.s32 %s13, 2
      // Predicated region
      $region57: #{pointnet_encoder_forward.11} parent=55 // pred_check
        %p627 = pneg %p152
      $region58: #{pointnet_encoder_forward.11} parent=55 // pred_check_branch
        %629 = sbr.rel (%p627) target = $region60
      $region59: #{pointnet_encoder_forward.11} parent=55 // pred_region
        %s630 = smul.u32 8, %s25
        %p631 = scmp.lt.s32.totalorder %s24, 1
        %s632 = scalar_select %p631, %s24, 1
        %p633 = scmp.lt.s32.totalorder %s630, 7
        %s634 = scalar_select %p633, %s630, 7
        %s635 = smul.addr %s632, 8
        %s636 = sadd.s32 %s634, %s635
        %s637 = smul.addr %s636, 4
        %s638 = scalar_lea.vmem %s4, %s637
      $region60: #{pointnet_encoder_forward.11} parent=55 // pred_fallthru
        _
      // Predicated region
      $region61: #{pointnet_encoder_forward.11} parent=55 // pred_check
        %p639 = pneg %p178
      $region62: #{pointnet_encoder_forward.11} parent=55 // pred_check_branch
        %641 = sbr.rel (%p639) target = $region64
      $region63: #{pointnet_encoder_forward.11} parent=55 // pred_region
        %p642 = scmp.lt.s32.totalorder %s24, 1
        %s643 = scalar_select %p642, %s24, 1
        %s644 = scalar_lea.vmem %s5, %s643
      $region64: #{pointnet_encoder_forward.11} parent=55 // pred_fallthru
        _
      // Predicated region
      $region65: #{pointnet_encoder_forward.11} parent=55 // pred_check
        %p645 = pneg %p204
      $region66: #{pointnet_encoder_forward.11} parent=55 // pred_check_branch
        %647 = sbr.rel (%p645) target = $region68
      $region67: #{pointnet_encoder_forward.11} parent=55 // pred_region
        %p648 = scmp.lt.s32.totalorder %s24, 1
        %s649 = scalar_select %p648, %s24, 1
        %s650 = scalar_lea.vmem %s6, %s649
      $region68: #{pointnet_encoder_forward.11} parent=55 // pred_fallthru
        _
    $region56: #{pointnet_encoder_forward.11} parent=5 // pred_fallthru
      _
  $region6: #{pointnet_encoder_forward.11} parent=0 // loop_footer
    %s17 = sadd.s32 1, %s13
  $region7: #{pointnet_encoder_forward.11} parent=0 // loop_footer_branch
    %12 = sbr.rel target = $region3
  $region8: #{pointnet_encoder_forward.11} parent=0 // loop_exit
    _

// kernel: pointnet_encoder_forward.10
$region0: #{pointnet_encoder_forward.10}
  #allocation0 [shape = 'u32[]', space=smem, size = 0x4, offset = 0x4, fixed_abs, tag = 'smem constant byte address 0x4 - core index']
  #allocation1 [shape = 'u32[144,128]{1,0:T(1,128)}', space=vmem, size = 0x12000, scoped, tag = 'internal scratch']
  %s0 = inlined_call_operand.vmem [shape: f32[2,1024], index: 0, kind: input, shape index: {}]
  %s1 = inlined_call_operand.hbm [shape: f32[1024,512], index: 1, kind: input, shape index: {}]
  %s2 = inlined_call_operand.hbm [shape: f32[1,512], index: 2, kind: input, shape index: {}]
  %s3 = inlined_call_operand.hbm [shape: f32[1,512], index: 3, kind: input, shape index: {}]
  %s4 = inlined_call_operand.hbm [shape: f32[512,256], index: 4, kind: input, shape index: {}]
  %s5 = inlined_call_operand.hbm [shape: f32[1,256], index: 5, kind: input, shape index: {}]
  %s6 = inlined_call_operand.hbm [shape: f32[1,256], index: 6, kind: input, shape index: {}]
  %s7 = inlined_call_operand.vmem [shape: f32[256,9], index: 7, kind: input, shape index: {}]
  %s8 = inlined_call_operand.vmem [shape: f32[1,9], index: 8, kind: input, shape index: {}]
  %s9 = inlined_call_operand.vmem [shape: f32[2,9], index: 9, kind: output, shape index: {}]
  %s10 = sld [smem:[#allocation0]]
  $region70: #{pointnet_encoder_forward.10} parent=0
    _
  %s12 = ssub.s32 1, %s10
  %s13 = scalar_select 0, %s12, %s10
  $region1: #{pointnet_encoder_forward.10} parent=0
    #allocation2 [shape = 'u8[2097152]{0}', space=vmem, size = 0x200000, scoped, tag = 'input window, operand 1, single buffered']
    #allocation3 [shape = 's32[1]{0}', space=sflag, size = 0x4, scoped, tag = 'scoped memory for pointnet_encoder_forward.10']
    #allocation4 [shape = 'u8[2048]{0}', space=vmem, size = 0x800, scoped, tag = 'input window, operand 2, single buffered']
    #allocation5 [shape = 's32[1]{0}', space=sflag, size = 0x4, scoped, tag = 'scoped memory for pointnet_encoder_forward.10']
    #allocation6 [shape = 'u8[2048]{0}', space=vmem, size = 0x800, scoped, tag = 'input window, operand 3, single buffered']
    #allocation7 [shape = 'u8[524288]{0}', space=vmem, size = 0x80000, scoped, tag = 'input window, operand 4, single buffered']
    #allocation8 [shape = 's32[1]{0}', space=sflag, size = 0x4, scoped, tag = 'scoped memory for pointnet_encoder_forward.10']
    #allocation9 [shape = 'u8[1024]{0}', space=vmem, size = 0x400, scoped, tag = 'input window, operand 5, single buffered']
    #allocation10 [shape = 'u8[1024]{0}', space=vmem, size = 0x400, scoped, tag = 'input window, operand 6, single buffered']
    #allocation11 [shape = 's32[1]{0}', space=sflag, size = 0x4, scoped, tag = 'scoped memory for pointnet_encoder_forward.10']
    %14 = vsyncpa [#allocation3], 0
    %15 = vsyncpa [#allocation5], 0
    %16 = vsyncpa [#allocation8], 0
    %17 = vsyncpa [#allocation11], 0
    // Predicated region
    $region2: #{pointnet_encoder_forward.10} parent=1 // pred_check
      _
    $region3: #{pointnet_encoder_forward.10} parent=1 // pred_check_branch
      %19 = sbr.rel (0) target = $region5
    $region4: #{pointnet_encoder_forward.10} parent=1 // pred_region
      _
    $region5: #{pointnet_encoder_forward.10} parent=1 // pred_fallthru
      _
    // Predicated region
    $region6: #{pointnet_encoder_forward.10} parent=1 // pred_check
      _
    $region7: #{pointnet_encoder_forward.10} parent=1 // pred_check_branch
      %21 = sbr.rel (0) target = $region9
    $region8: #{pointnet_encoder_forward.10} parent=1 // pred_region
      %s23 = ssub.s32 65536, 65536
      %24 = vsyncadd [#allocation3], %s23
      %s25 = sshll.u32 [#allocation2], 4
      %s26 = int_to_ptr.vmem [resolvable:$true] %s25
      %31 = dma.hbm_to_vmem [thread:$0]  %s1, 65536, %s26, [#allocation3], 512, 512, 32
    $region9: #{pointnet_encoder_forward.10} parent=1 // pred_fallthru
      _
    // Predicated region
    $region10: #{pointnet_encoder_forward.10} parent=1 // pred_check
      _
    $region11: #{pointnet_encoder_forward.10} parent=1 // pred_check_branch
      %33 = sbr.rel (0) target = $region13
    $region12: #{pointnet_encoder_forward.10} parent=1 // pred_region
      %s35 = ssub.s32 64, 64
      %36 = vsyncadd [#allocation5], %s35
      %s38 = sshll.u32 [#allocation4], 4
      %s39 = int_to_ptr.vmem [resolvable:$true] %s38
      %41 = dma.hbm_to_vmem [thread:$0]  %s2, 64, %s39, [#allocation5]
    $region13: #{pointnet_encoder_forward.10} parent=1 // pred_fallthru
      _
    // Predicated region
    $region14: #{pointnet_encoder_forward.10} parent=1 // pred_check
      _
    $region15: #{pointnet_encoder_forward.10} parent=1 // pred_check_branch
      %43 = sbr.rel (0) target = $region17
    $region16: #{pointnet_encoder_forward.10} parent=1 // pred_region
      %s45 = ssub.s32 64, 64
      %46 = vsyncadd [#allocation5], %s45
      %s48 = sshll.u32 [#allocation6], 4
      %s49 = int_to_ptr.vmem [resolvable:$true] %s48
      %51 = dma.hbm_to_vmem [thread:$0]  %s3, 64, %s49, [#allocation5]
    $region17: #{pointnet_encoder_forward.10} parent=1 // pred_fallthru
      _
    // Predicated region
    $region18: #{pointnet_encoder_forward.10} parent=1 // pred_check
      _
    $region19: #{pointnet_encoder_forward.10} parent=1 // pred_check_branch
      %53 = sbr.rel (0) target = $region21
    $region20: #{pointnet_encoder_forward.10} parent=1 // pred_region
      %s55 = ssub.s32 16384, 16384
      %56 = vsyncadd [#allocation8], %s55
      %s57 = sshll.u32 [#allocation7], 4
      %s58 = int_to_ptr.vmem [resolvable:$true] %s57
      %63 = dma.hbm_to_vmem [thread:$0]  %s4, 16384, %s58, [#allocation8], 256, 256, 16
    $region21: #{pointnet_encoder_forward.10} parent=1 // pred_fallthru
      _
    // Predicated region
    $region22: #{pointnet_encoder_forward.10} parent=1 // pred_check
      _
    $region23: #{pointnet_encoder_forward.10} parent=1 // pred_check_branch
      %65 = sbr.rel (0) target = $region25
    $region24: #{pointnet_encoder_forward.10} parent=1 // pred_region
      %s67 = ssub.s32 32, 32
      %68 = vsyncadd [#allocation8], %s67
      %s70 = sshll.u32 [#allocation9], 4
      %s71 = int_to_ptr.vmem [resolvable:$true] %s70
      %73 = dma.hbm_to_vmem [thread:$0]  %s5, 32, %s71, [#allocation8]
    $region25: #{pointnet_encoder_forward.10} parent=1 // pred_fallthru
      _
    // Predicated region
    $region26: #{pointnet_encoder_forward.10} parent=1 // pred_check
      _
    $region27: #{pointnet_encoder_forward.10} parent=1 // pred_check_branch
      %75 = sbr.rel (0) target = $region29
    $region28: #{pointnet_encoder_forward.10} parent=1 // pred_region
      %s77 = ssub.s32 32, 32
      %78 = vsyncadd [#allocation11], %s77
      %s80 = sshll.u32 [#allocation10], 4
      %s81 = int_to_ptr.vmem [resolvable:$true] %s80
      %83 = dma.hbm_to_vmem [thread:$0]  %s6, 32, %s81, [#allocation11]
    $region29: #{pointnet_encoder_forward.10} parent=1 // pred_fallthru
      _
    // Predicated region
    $region30: #{pointnet_encoder_forward.10} parent=1 // pred_check
      _
    $region31: #{pointnet_encoder_forward.10} parent=1 // pred_check_branch
      %85 = sbr.rel (0) target = $region33
    $region32: #{pointnet_encoder_forward.10} parent=1 // pred_region
      _
    $region33: #{pointnet_encoder_forward.10} parent=1 // pred_fallthru
      _
    // Predicated region
    $region34: #{pointnet_encoder_forward.10} parent=1 // pred_check
      _
    $region35: #{pointnet_encoder_forward.10} parent=1 // pred_check_branch
      %87 = sbr.rel (0) target = $region37
    $region36: #{pointnet_encoder_forward.10} parent=1 // pred_region
      _
    $region37: #{pointnet_encoder_forward.10} parent=1 // pred_fallthru
      _
    // Predicated region
    $region38: #{pointnet_encoder_forward.10} parent=1 // pred_check
      _
    $region39: #{pointnet_encoder_forward.10} parent=1 // pred_check_branch
      %89 = sbr.rel (0) target = $region41
    $region40: #{pointnet_encoder_forward.10} parent=1 // pred_region
      %90 = dma.done [#allocation3], 65536
    $region41: #{pointnet_encoder_forward.10} parent=1 // pred_fallthru
      _
    // Predicated region
    $region42: #{pointnet_encoder_forward.10} parent=1 // pred_check
      _
    $region43: #{pointnet_encoder_forward.10} parent=1 // pred_check_branch
      %92 = sbr.rel (0) target = $region45
    $region44: #{pointnet_encoder_forward.10} parent=1 // pred_region
      %93 = dma.done [#allocation5], 64
    $region45: #{pointnet_encoder_forward.10} parent=1 // pred_fallthru
      _
    // Predicated region
    $region46: #{pointnet_encoder_forward.10} parent=1 // pred_check
      _
    $region47: #{pointnet_encoder_forward.10} parent=1 // pred_check_branch
      %95 = sbr.rel (0) target = $region49
    $region48: #{pointnet_encoder_forward.10} parent=1 // pred_region
      %96 = dma.done [#allocation5], 64
    $region49: #{pointnet_encoder_forward.10} parent=1 // pred_fallthru
      _
    // Predicated region
    $region50: #{pointnet_encoder_forward.10} parent=1 // pred_check
      _
    $region51: #{pointnet_encoder_forward.10} parent=1 // pred_check_branch
      %98 = sbr.rel (0) target = $region53
    $region52: #{pointnet_encoder_forward.10} parent=1 // pred_region
      %99 = dma.done [#allocation8], 16384
    $region53: #{pointnet_encoder_forward.10} parent=1 // pred_fallthru
      _
    // Predicated region
    $region54: #{pointnet_encoder_forward.10} parent=1 // pred_check
      _
    $region55: #{pointnet_encoder_forward.10} parent=1 // pred_check_branch
      %101 = sbr.rel (0) target = $region57
    $region56: #{pointnet_encoder_forward.10} parent=1 // pred_region
      %102 = dma.done [#allocation8], 32
    $region57: #{pointnet_encoder_forward.10} parent=1 // pred_fallthru
      _
    // Predicated region
    $region58: #{pointnet_encoder_forward.10} parent=1 // pred_check
      _
    $region59: #{pointnet_encoder_forward.10} parent=1 // pred_check_branch
      %104 = sbr.rel (0) target = $region61
    $region60: #{pointnet_encoder_forward.10} parent=1 // pred_region
      %105 = dma.done [#allocation11], 32
    $region61: #{pointnet_encoder_forward.10} parent=1 // pred_fallthru
      _
    %v106 = vld [vmem:[%s0] sm:$0xff]
    %v107 = vld [vmem:[%s0 + $0x8] sm:$0xff]
    %v108 = vld [vmem:[#allocation2] sm:$0xff]
    %v109 = vld [vmem:[#allocation2 + $0x8] sm:$0xff]
    %v110 = vld [vmem:[#allocation2 + $0x10] sm:$0xff]
    %v111 = vld [vmem:[#allocation2 + $0x18] sm:$0xff]
    %v112 = vld [vmem:[#allocation2 + $0x20] sm:$0xff]
    %v113 = vld [vmem:[#allocation2 + $0x28] sm:$0xff]
    %v114 = vld [vmem:[#allocation2 + $0x30] sm:$0xff]
    %v115 = vld [vmem:[#allocation2 + $0x38] sm:$0xff]
    %v116 = vld [vmem:[#allocation2 + $0x40] sm:$0xff]
    %v117 = vld [vmem:[#allocation2 + $0x48] sm:$0xff]
    %v118 = vld [vmem:[#allocation2 + $0x50] sm:$0xff]
    %v119 = vld [vmem:[#allocation2 + $0x58] sm:$0xff]
    %v120 = vld [vmem:[#allocation2 + $0x60] sm:$0xff]
    %v121 = vld [vmem:[#allocation2 + $0x68] sm:$0xff]
    %v122 = vld [vmem:[#allocation2 + $0x70] sm:$0xff]
    %v123 = vld [vmem:[#allocation2 + $0x78] sm:$0xff]
    %v124 = vld [vmem:[#allocation2 + $0x80] sm:$0xff]
    %v125 = vld [vmem:[#allocation2 + $0x88] sm:$0xff]
    %v126 = vld [vmem:[#allocation2 + $0x90] sm:$0xff]
    %v127 = vld [vmem:[#allocation2 + $0x98] sm:$0xff]
    %v128 = vld [vmem:[#allocation2 + $0xa0] sm:$0xff]
    %v129 = vld [vmem:[#allocation2 + $0xa8] sm:$0xff]
    %v130 = vld [vmem:[#allocation2 + $0xb0] sm:$0xff]
    %v131 = vld [vmem:[#allocation2 + $0xb8] sm:$0xff]
    %v132 = vld [vmem:[#allocation2 + $0xc0] sm:$0xff]
    %v133 = vld [vmem:[#allocation2 + $0xc8] sm:$0xff]
    %v134 = vld [vmem:[#allocation2 + $0xd0] sm:$0xff]
    %v135 = vld [vmem:[#allocation2 + $0xd8] sm:$0xff]
    %v136 = vld [vmem:[#allocation2 + $0xe0] sm:$0xff]
    %v137 = vld [vmem:[#allocation2 + $0xe8] sm:$0xff]
    %v138 = vld [vmem:[#allocation2 + $0xf0] sm:$0xff]
    %v139 = vld [vmem:[#allocation2 + $0xf8] sm:$0xff]
    %v140 = vld [vmem:[#allocation2 + $0x100] sm:$0xff]
    %v141 = vld [vmem:[#allocation2 + $0x108] sm:$0xff]
    %v142 = vld [vmem:[#allocation2 + $0x110] sm:$0xff]
    %v143 = vld [vmem:[#allocation2 + $0x118] sm:$0xff]
    %v144 = vld [vmem:[#allocation2 + $0x120] sm:$0xff]
    %v145 = vld [vmem:[#allocation2 + $0x128] sm:$0xff]
    %v146 = vld [vmem:[#allocation2 + $0x130] sm:$0xff]
    %v147 = vld [vmem:[#allocation2 + $0x138] sm:$0xff]
    %v148 = vld [vmem:[#allocation2 + $0x140] sm:$0xff]
    %v149 = vld [vmem:[#allocation2 + $0x148] sm:$0xff]
    %v150 = vld [vmem:[#allocation2 + $0x150] sm:$0xff]
    %v151 = vld [vmem:[#allocation2 + $0x158] sm:$0xff]
    %v152 = vld [vmem:[#allocation2 + $0x160] sm:$0xff]
    %v153 = vld [vmem:[#allocation2 + $0x168] sm:$0xff]
    %v154 = vld [vmem:[#allocation2 + $0x170] sm:$0xff]
    %v155 = vld [vmem:[#allocation2 + $0x178] sm:$0xff]
    %v156 = vld [vmem:[#allocation2 + $0x180] sm:$0xff]
    %v157 = vld [vmem:[#allocation2 + $0x188] sm:$0xff]
    %v158 = vld [vmem:[#allocation2 + $0x190] sm:$0xff]
    %v159 = vld [vmem:[#allocation2 + $0x198] sm:$0xff]
    %v160 = vld [vmem:[#allocation2 + $0x1a0] sm:$0xff]
    %v161 = vld [vmem:[#allocation2 + $0x1a8] sm:$0xff]
    %v162 = vld [vmem:[#allocation2 + $0x1b0] sm:$0xff]
    %v163 = vld [vmem:[#allocation2 + $0x1b8] sm:$0xff]
    %v164 = vld [vmem:[#allocation2 + $0x1c0] sm:$0xff]
    %v165 = vld [vmem:[#allocation2 + $0x1c8] sm:$0xff]
    %v166 = vld [vmem:[#allocation2 + $0x1d0] sm:$0xff]
    %v167 = vld [vmem:[#allocation2 + $0x1d8] sm:$0xff]
    %v168 = vld [vmem:[#allocation2 + $0x1e0] sm:$0xff]
    %v169 = vld [vmem:[#allocation2 + $0x1e8] sm:$0xff]
    %v170 = vld [vmem:[#allocation2 + $0x1f0] sm:$0xff]
    %v171 = vld [vmem:[#allocation2 + $0x1f8] sm:$0xff]
    %v172 = vld [vmem:[#allocation2 + $0x200] sm:$0xff]
    %v173 = vld [vmem:[#allocation2 + $0x208] sm:$0xff]
    %v174 = vld [vmem:[#allocation2 + $0x210] sm:$0xff]
    %v175 = vld [vmem:[#allocation2 + $0x218] sm:$0xff]
    %v176 = vld [vmem:[#allocation2 + $0x220] sm:$0xff]
    %v177 = vld [vmem:[#allocation2 + $0x228] sm:$0xff]
    %v178 = vld [vmem:[#allocation2 + $0x230] sm:$0xff]
    %v179 = vld [vmem:[#allocation2 + $0x238] sm:$0xff]
    %v180 = vld [vmem:[#allocation2 + $0x240] sm:$0xff]
    %v181 = vld [vmem:[#allocation2 + $0x248] sm:$0xff]
    %v182 = vld [vmem:[#allocation2 + $0x250] sm:$0xff]
    %v183 = vld [vmem:[#allocation2 + $0x258] sm:$0xff]
    %v184 = vld [vmem:[#allocation2 + $0x260] sm:$0xff]
    %v185 = vld [vmem:[#allocation2 + $0x268] sm:$0xff]
    %v186 = vld [vmem:[#allocation2 + $0x270] sm:$0xff]
    %v187 = vld [vmem:[#allocation2 + $0x278] sm:$0xff]
    %v188 = vld [vmem:[#allocation2 + $0x280] sm:$0xff]
    %v189 = vld [vmem:[#allocation2 + $0x288] sm:$0xff]
    %v190 = vld [vmem:[#allocation2 + $0x290] sm:$0xff]
    %v191 = vld [vmem:[#allocation2 + $0x298] sm:$0xff]
    %v192 = vld [vmem:[#allocation2 + $0x2a0] sm:$0xff]
    %v193 = vld [vmem:[#allocation2 + $0x2a8] sm:$0xff]
    %v194 = vld [vmem:[#allocation2 + $0x2b0] sm:$0xff]
    %v195 = vld [vmem:[#allocation2 + $0x2b8] sm:$0xff]
    %v196 = vld [vmem:[#allocation2 + $0x2c0] sm:$0xff]
    %v197 = vld [vmem:[#allocation2 + $0x2c8] sm:$0xff]
    %v198 = vld [vmem:[#allocation2 + $0x2d0] sm:$0xff]
    %v199 = vld [vmem:[#allocation2 + $0x2d8] sm:$0xff]
    %v200 = vld [vmem:[#allocation2 + $0x2e0] sm:$0xff]
    %v201 = vld [vmem:[#allocation2 + $0x2e8] sm:$0xff]
    %v202 = vld [vmem:[#allocation2 + $0x2f0] sm:$0xff]
    %v203 = vld [vmem:[#allocation2 + $0x2f8] sm:$0xff]
    %v204 = vld [vmem:[#allocation2 + $0x300] sm:$0xff]
    %v205 = vld [vmem:[#allocation2 + $0x308] sm:$0xff]
    %v206 = vld [vmem:[#allocation2 + $0x310] sm:$0xff]
    %v207 = vld [vmem:[#allocation2 + $0x318] sm:$0xff]
    %v208 = vld [vmem:[#allocation2 + $0x320] sm:$0xff]
    %v209 = vld [vmem:[#allocation2 + $0x328] sm:$0xff]
    %v210 = vld [vmem:[#allocation2 + $0x330] sm:$0xff]
    %v211 = vld [vmem:[#allocation2 + $0x338] sm:$0xff]
    %v212 = vld [vmem:[#allocation2 + $0x340] sm:$0xff]
    %v213 = vld [vmem:[#allocation2 + $0x348] sm:$0xff]
    %v214 = vld [vmem:[#allocation2 + $0x350] sm:$0xff]
    %v215 = vld [vmem:[#allocation2 + $0x358] sm:$0xff]
    %v216 = vld [vmem:[#allocation2 + $0x360] sm:$0xff]
    %v217 = vld [vmem:[#allocation2 + $0x368] sm:$0xff]
    %v218 = vld [vmem:[#allocation2 + $0x370] sm:$0xff]
    %v219 = vld [vmem:[#allocation2 + $0x378] sm:$0xff]
    %v220 = vld [vmem:[#allocation2 + $0x380] sm:$0xff]
    %v221 = vld [vmem:[#allocation2 + $0x388] sm:$0xff]
    %v222 = vld [vmem:[#allocation2 + $0x390] sm:$0xff]
    %v223 = vld [vmem:[#allocation2 + $0x398] sm:$0xff]
    %v224 = vld [vmem:[#allocation2 + $0x3a0] sm:$0xff]
    %v225 = vld [vmem:[#allocation2 + $0x3a8] sm:$0xff]
    %v226 = vld [vmem:[#allocation2 + $0x3b0] sm:$0xff]
    %v227 = vld [vmem:[#allocation2 + $0x3b8] sm:$0xff]
    %v228 = vld [vmem:[#allocation2 + $0x3c0] sm:$0xff]
    %v229 = vld [vmem:[#allocation2 + $0x3c8] sm:$0xff]
    %v230 = vld [vmem:[#allocation2 + $0x3d0] sm:$0xff]
    %v231 = vld [vmem:[#allocation2 + $0x3d8] sm:$0xff]
    %v232 = vld [vmem:[#allocation2 + $0x3e0] sm:$0xff]
    %v233 = vld [vmem:[#allocation2 + $0x3e8] sm:$0xff]
    %v234 = vld [vmem:[#allocation2 + $0x3f0] sm:$0xff]
    %v235 = vld [vmem:[#allocation2 + $0x3f8] sm:$0xff]
    %v236 = vld [vmem:[#allocation2 + $0x400] sm:$0xff]
    %v237 = vld [vmem:[#allocation2 + $0x408] sm:$0xff]
    %v238 = vld [vmem:[#allocation2 + $0x410] sm:$0xff]
    %v239 = vld [vmem:[#allocation2 + $0x418] sm:$0xff]
    %v240 = vld [vmem:[#allocation2 + $0x420] sm:$0xff]
    %v241 = vld [vmem:[#allocation2 + $0x428] sm:$0xff]
    %v242 = vld [vmem:[#allocation2 + $0x430] sm:$0xff]
    %v243 = vld [vmem:[#allocation2 + $0x438] sm:$0xff]
    %v244 = vld [vmem:[#allocation2 + $0x440] sm:$0xff]
    %v245 = vld [vmem:[#allocation2 + $0x448] sm:$0xff]
    %v246 = vld [vmem:[#allocation2 + $0x450] sm:$0xff]
    %v247 = vld [vmem:[#allocation2 + $0x458] sm:$0xff]
    %v248 = vld [vmem:[#allocation2 + $0x460] sm:$0xff]
    %v249 = vld [vmem:[#allocation2 + $0x468] sm:$0xff]
    %v250 = vld [vmem:[#allocation2 + $0x470] sm:$0xff]
    %v251 = vld [vmem:[#allocation2 + $0x478] sm:$0xff]
    %v252 = vld [vmem:[#allocation2 + $0x480] sm:$0xff]
    %v253 = vld [vmem:[#allocation2 + $0x488] sm:$0xff]
    %v254 = vld [vmem:[#allocation2 + $0x490] sm:$0xff]
    %v255 = vld [vmem:[#allocation2 + $0x498] sm:$0xff]
    %v256 = vld [vmem:[#allocation2 + $0x4a0] sm:$0xff]
    %v257 = vld [vmem:[#allocation2 + $0x4a8] sm:$0xff]
    %v258 = vld [vmem:[#allocation2 + $0x4b0] sm:$0xff]
    %v259 = vld [vmem:[#allocation2 + $0x4b8] sm:$0xff]
    %v260 = vld [vmem:[#allocation2 + $0x4c0] sm:$0xff]
    %v261 = vld [vmem:[#allocation2 + $0x4c8] sm:$0xff]
    %v262 = vld [vmem:[#allocation2 + $0x4d0] sm:$0xff]
    %v263 = vld [vmem:[#allocation2 + $0x4d8] sm:$0xff]
    %v264 = vld [vmem:[#allocation2 + $0x4e0] sm:$0xff]
    %v265 = vld [vmem:[#allocation2 + $0x4e8] sm:$0xff]
    %v266 = vld [vmem:[#allocation2 + $0x4f0] sm:$0xff]
    %v267 = vld [vmem:[#allocation2 + $0x4f8] sm:$0xff]
    %v268 = vld [vmem:[#allocation2 + $0x500] sm:$0xff]
    %v269 = vld [vmem:[#allocation2 + $0x508] sm:$0xff]
    %v270 = vld [vmem:[#allocation2 + $0x510] sm:$0xff]
    %v271 = vld [vmem:[#allocation2 + $0x518] sm:$0xff]
    %v272 = vld [vmem:[#allocation2 + $0x520] sm:$0xff]
    %v273 = vld [vmem:[#allocation2 + $0x528] sm:$0xff]
    %v274 = vld [vmem:[#allocation2 + $0x530] sm:$0xff]
    %v275 = vld [vmem:[#allocation2 + $0x538] sm:$0xff]
    %v276 = vld [vmem:[#allocation2 + $0x540] sm:$0xff]
    %v277 = vld [vmem:[#allocation2 + $0x548] sm:$0xff]
    %v278 = vld [vmem:[#allocation2 + $0x550] sm:$0xff]
    %v279 = vld [vmem:[#allocation2 + $0x558] sm:$0xff]
    %v280 = vld [vmem:[#allocation2 + $0x560] sm:$0xff]
    %v281 = vld [vmem:[#allocation2 + $0x568] sm:$0xff]
    %v282 = vld [vmem:[#allocation2 + $0x570] sm:$0xff]
    %v283 = vld [vmem:[#allocation2 + $0x578] sm:$0xff]
    %v284 = vld [vmem:[#allocation2 + $0x580] sm:$0xff]
    %v285 = vld [vmem:[#allocation2 + $0x588] sm:$0xff]
    %v286 = vld [vmem:[#allocation2 + $0x590] sm:$0xff]
    %v287 = vld [vmem:[#allocation2 + $0x598] sm:$0xff]
    %v288 = vld [vmem:[#allocation2 + $0x5a0] sm:$0xff]
    %v289 = vld [vmem:[#allocation2 + $0x5a8] sm:$0xff]
    %v290 = vld [vmem:[#allocation2 + $0x5b0] sm:$0xff]
    %v291 = vld [vmem:[#allocation2 + $0x5b8] sm:$0xff]
    %v292 = vld [vmem:[#allocation2 + $0x5c0] sm:$0xff]
    %v293 = vld [vmem:[#allocation2 + $0x5c8] sm:$0xff]
    %v294 = vld [vmem:[#allocation2 + $0x5d0] sm:$0xff]
    %v295 = vld [vmem:[#allocation2 + $0x5d8] sm:$0xff]
    %v296 = vld [vmem:[#allocation2 + $0x5e0] sm:$0xff]
    %v297 = vld [vmem:[#allocation2 + $0x5e8] sm:$0xff]
    %v298 = vld [vmem:[#allocation2 + $0x5f0] sm:$0xff]
    %v299 = vld [vmem:[#allocation2 + $0x5f8] sm:$0xff]
    %v300 = vld [vmem:[#allocation2 + $0x600] sm:$0xff]
    %v301 = vld [vmem:[#allocation2 + $0x608] sm:$0xff]
    %v302 = vld [vmem:[#allocation2 + $0x610] sm:$0xff]
    %v303 = vld [vmem:[#allocation2 + $0x618] sm:$0xff]
    %v304 = vld [vmem:[#allocation2 + $0x620] sm:$0xff]
    %v305 = vld [vmem:[#allocation2 + $0x628] sm:$0xff]
    %v306 = vld [vmem:[#allocation2 + $0x630] sm:$0xff]
    %v307 = vld [vmem:[#allocation2 + $0x638] sm:$0xff]
    %v308 = vld [vmem:[#allocation2 + $0x640] sm:$0xff]
    %v309 = vld [vmem:[#allocation2 + $0x648] sm:$0xff]
    %v310 = vld [vmem:[#allocation2 + $0x650] sm:$0xff]
    %v311 = vld [vmem:[#allocation2 + $0x658] sm:$0xff]
    %v312 = vld [vmem:[#allocation2 + $0x660] sm:$0xff]
    %v313 = vld [vmem:[#allocation2 + $0x668] sm:$0xff]
    %v314 = vld [vmem:[#allocation2 + $0x670] sm:$0xff]
    %v315 = vld [vmem:[#allocation2 + $0x678] sm:$0xff]
    %v316 = vld [vmem:[#allocation2 + $0x680] sm:$0xff]
    %v317 = vld [vmem:[#allocation2 + $0x688] sm:$0xff]
    %v318 = vld [vmem:[#allocation2 + $0x690] sm:$0xff]
    %v319 = vld [vmem:[#allocation2 + $0x698] sm:$0xff]
    %v320 = vld [vmem:[#allocation2 + $0x6a0] sm:$0xff]
    %v321 = vld [vmem:[#allocation2 + $0x6a8] sm:$0xff]
    %v322 = vld [vmem:[#allocation2 + $0x6b0] sm:$0xff]
    %v323 = vld [vmem:[#allocation2 + $0x6b8] sm:$0xff]
    %v324 = vld [vmem:[#allocation2 + $0x6c0] sm:$0xff]
    %v325 = vld [vmem:[#allocation2 + $0x6c8] sm:$0xff]
    %v326 = vld [vmem:[#allocation2 + $0x6d0] sm:$0xff]
    %v327 = vld [vmem:[#allocation2 + $0x6d8] sm:$0xff]
    %v328 = vld [vmem:[#allocation2 + $0x6e0] sm:$0xff]
    %v329 = vld [vmem:[#allocation2 + $0x6e8] sm:$0xff]
    %v330 = vld [vmem:[#allocation2 + $0x6f0] sm:$0xff]
    %v331 = vld [vmem:[#allocation2 + $0x6f8] sm:$0xff]
    %v332 = vld [vmem:[#allocation2 + $0x700] sm:$0xff]
    %v333 = vld [vmem:[#allocation2 + $0x708] sm:$0xff]
    %v334 = vld [vmem:[#allocation2 + $0x710] sm:$0xff]
    %v335 = vld [vmem:[#allocation2 + $0x718] sm:$0xff]
    %v336 = vld [vmem:[#allocation2 + $0x720] sm:$0xff]
    %v337 = vld [vmem:[#allocation2 + $0x728] sm:$0xff]
    %v338 = vld [vmem:[#allocation2 + $0x730] sm:$0xff]
    %v339 = vld [vmem:[#allocation2 + $0x738] sm:$0xff]
    %v340 = vld [vmem:[#allocation2 + $0x740] sm:$0xff]
    %v341 = vld [vmem:[#allocation2 + $0x748] sm:$0xff]
    %v342 = vld [vmem:[#allocation2 + $0x750] sm:$0xff]
    %v343 = vld [vmem:[#allocation2 + $0x758] sm:$0xff]
    %v344 = vld [vmem:[#allocation2 + $0x760] sm:$0xff]
    %v345 = vld [vmem:[#allocation2 + $0x768] sm:$0xff]
    %v346 = vld [vmem:[#allocation2 + $0x770] sm:$0xff]
    %v347 = vld [vmem:[#allocation2 + $0x778] sm:$0xff]
    %v348 = vld [vmem:[#allocation2 + $0x780] sm:$0xff]
    %v349 = vld [vmem:[#allocation2 + $0x788] sm:$0xff]
    %v350 = vld [vmem:[#allocation2 + $0x790] sm:$0xff]
    %v351 = vld [vmem:[#allocation2 + $0x798] sm:$0xff]
    %v352 = vld [vmem:[#allocation2 + $0x7a0] sm:$0xff]
    %v353 = vld [vmem:[#allocation2 + $0x7a8] sm:$0xff]
    %v354 = vld [vmem:[#allocation2 + $0x7b0] sm:$0xff]
    %v355 = vld [vmem:[#allocation2 + $0x7b8] sm:$0xff]
    %v356 = vld [vmem:[#allocation2 + $0x7c0] sm:$0xff]
    %v357 = vld [vmem:[#allocation2 + $0x7c8] sm:$0xff]
    %v358 = vld [vmem:[#allocation2 + $0x7d0] sm:$0xff]
    %v359 = vld [vmem:[#allocation2 + $0x7d8] sm:$0xff]
    %v360 = vld [vmem:[#allocation2 + $0x7e0] sm:$0xff]
    %v361 = vld [vmem:[#allocation2 + $0x7e8] sm:$0xff]
    %v362 = vld [vmem:[#allocation2 + $0x7f0] sm:$0xff]
    %v363 = vld [vmem:[#allocation2 + $0x7f8] sm:$0xff]
    %v364 = vld [vmem:[#allocation2 + $0x800] sm:$0xff]
    %v365 = vld [vmem:[#allocation2 + $0x808] sm:$0xff]
    %v366 = vld [vmem:[#allocation2 + $0x810] sm:$0xff]
    %v367 = vld [vmem:[#allocation2 + $0x818] sm:$0xff]
    %v368 = vld [vmem:[#allocation2 + $0x820] sm:$0xff]
    %v369 = vld [vmem:[#allocation2 + $0x828] sm:$0xff]
    %v370 = vld [vmem:[#allocation2 + $0x830] sm:$0xff]
    %v371 = vld [vmem:[#allocation2 + $0x838] sm:$0xff]
    %v372 = vld [vmem:[#allocation2 + $0x840] sm:$0xff]
    %v373 = vld [vmem:[#allocation2 + $0x848] sm:$0xff]
    %v374 = vld [vmem:[#allocation2 + $0x850] sm:$0xff]
    %v375 = vld [vmem:[#allocation2 + $0x858] sm:$0xff]
    %v376 = vld [vmem:[#allocation2 + $0x860] sm:$0xff]
    %v377 = vld [vmem:[#allocation2 + $0x868] sm:$0xff]
    %v378 = vld [vmem:[#allocation2 + $0x870] sm:$0xff]
    %v379 = vld [vmem:[#allocation2 + $0x878] sm:$0xff]
    %v380 = vld [vmem:[#allocation2 + $0x880] sm:$0xff]
    %v381 = vld [vmem:[#allocation2 + $0x888] sm:$0xff]
    %v382 = vld [vmem:[#allocation2 + $0x890] sm:$0xff]
    %v383 = vld [vmem:[#allocation2 + $0x898] sm:$0xff]
    %v384 = vld [vmem:[#allocation2 + $0x8a0] sm:$0xff]
    %v385 = vld [vmem:[#allocation2 + $0x8a8] sm:$0xff]
    %v386 = vld [vmem:[#allocation2 + $0x8b0] sm:$0xff]
    %v387 = vld [vmem:[#allocation2 + $0x8b8] sm:$0xff]
    %v388 = vld [vmem:[#allocation2 + $0x8c0] sm:$0xff]
    %v389 = vld [vmem:[#allocation2 + $0x8c8] sm:$0xff]
    %v390 = vld [vmem:[#allocation2 + $0x8d0] sm:$0xff]
    %v391 = vld [vmem:[#allocation2 + $0x8d8] sm:$0xff]
    %v392 = vld [vmem:[#allocation2 + $0x8e0] sm:$0xff]
    %v393 = vld [vmem:[#allocation2 + $0x8e8] sm:$0xff]
    %v394 = vld [vmem:[#allocation2 + $0x8f0] sm:$0xff]
    %v395 = vld [vmem:[#allocation2 + $0x8f8] sm:$0xff]
    %v396 = vld [vmem:[#allocation2 + $0x900] sm:$0xff]
    %v397 = vld [vmem:[#allocation2 + $0x908] sm:$0xff]
    %v398 = vld [vmem:[#allocation2 + $0x910] sm:$0xff]
    %v399 = vld [vmem:[#allocation2 + $0x918] sm:$0xff]
    %v400 = vld [vmem:[#allocation2 + $0x920] sm:$0xff]
    %v401 = vld [vmem:[#allocation2 + $0x928] sm:$0xff]
    %v402 = vld [vmem:[#allocation2 + $0x930] sm:$0xff]
    %v403 = vld [vmem:[#allocation2 + $0x938] sm:$0xff]
    %v404 = vld [vmem:[#allocation2 + $0x940] sm:$0xff]
    %v405 = vld [vmem:[#allocation2 + $0x948] sm:$0xff]
    %v406 = vld [vmem:[#allocation2 + $0x950] sm:$0xff]
    %v407 = vld [vmem:[#allocation2 + $0x958] sm:$0xff]
    %v408 = vld [vmem:[#allocation2 + $0x960] sm:$0xff]
    %v409 = vld [vmem:[#allocation2 + $0x968] sm:$0xff]
    %v410 = vld [vmem:[#allocation2 + $0x970] sm:$0xff]
    %v411 = vld [vmem:[#allocation2 + $0x978] sm:$0xff]
    %v412 = vld [vmem:[#allocation2 + $0x980] sm:$0xff]
    %v413 = vld [vmem:[#allocation2 + $0x988] sm:$0xff]
    %v414 = vld [vmem:[#allocation2 + $0x990] sm:$0xff]
    %v415 = vld [vmem:[#allocation2 + $0x998] sm:$0xff]
    %v416 = vld [vmem:[#allocation2 + $0x9a0] sm:$0xff]
    %v417 = vld [vmem:[#allocation2 + $0x9a8] sm:$0xff]
    %v418 = vld [vmem:[#allocation2 + $0x9b0] sm:$0xff]
    %v419 = vld [vmem:[#allocation2 + $0x9b8] sm:$0xff]
    %v420 = vld [vmem:[#allocation2 + $0x9c0] sm:$0xff]
    %v421 = vld [vmem:[#allocation2 + $0x9c8] sm:$0xff]
    %v422 = vld [vmem:[#allocation2 + $0x9d0] sm:$0xff]
    %v423 = vld [vmem:[#allocation2 + $0x9d8] sm:$0xff]
    %v424 = vld [vmem:[#allocation2 + $0x9e0] sm:$0xff]
    %v425 = vld [vmem:[#allocation2 + $0x9e8] sm:$0xff]
    %v426 = vld [vmem:[#allocation2 + $0x9f0] sm:$0xff]
    %v427 = vld [vmem:[#allocation2 + $0x9f8] sm:$0xff]
    %v428 = vld [vmem:[#allocation2 + $0xa00] sm:$0xff]
    %v429 = vld [vmem:[#allocation2 + $0xa08] sm:$0xff]
    %v430 = vld [vmem:[#allocation2 + $0xa10] sm:$0xff]
    %v431 = vld [vmem:[#allocation2 + $0xa18] sm:$0xff]
    %v432 = vld [vmem:[#allocation2 + $0xa20] sm:$0xff]
    %v433 = vld [vmem:[#allocation2 + $0xa28] sm:$0xff]
    %v434 = vld [vmem:[#allocation2 + $0xa30] sm:$0xff]
    %v435 = vld [vmem:[#allocation2 + $0xa38] sm:$0xff]
    %v436 = vld [vmem:[#allocation2 + $0xa40] sm:$0xff]
    %v437 = vld [vmem:[#allocation2 + $0xa48] sm:$0xff]
    %v438 = vld [vmem:[#allocation2 + $0xa50] sm:$0xff]
    %v439 = vld [vmem:[#allocation2 + $0xa58] sm:$0xff]
    %v440 = vld [vmem:[#allocation2 + $0xa60] sm:$0xff]
    %v441 = vld [vmem:[#allocation2 + $0xa68] sm:$0xff]
    %v442 = vld [vmem:[#allocation2 + $0xa70] sm:$0xff]
    %v443 = vld [vmem:[#allocation2 + $0xa78] sm:$0xff]
    %v444 = vld [vmem:[#allocation2 + $0xa80] sm:$0xff]
    %v445 = vld [vmem:[#allocation2 + $0xa88] sm:$0xff]
    %v446 = vld [vmem:[#allocation2 + $0xa90] sm:$0xff]
    %v447 = vld [vmem:[#allocation2 + $0xa98] sm:$0xff]
    %v448 = vld [vmem:[#allocation2 + $0xaa0] sm:$0xff]
    %v449 = vld [vmem:[#allocation2 + $0xaa8] sm:$0xff]
    %v450 = vld [vmem:[#allocation2 + $0xab0] sm:$0xff]
    %v451 = vld [vmem:[#allocation2 + $0xab8] sm:$0xff]
    %v452 = vld [vmem:[#allocation2 + $0xac0] sm:$0xff]
    %v453 = vld [vmem:[#allocation2 + $0xac8] sm:$0xff]
    %v454 = vld [vmem:[#allocation2 + $0xad0] sm:$0xff]
    %v455 = vld [vmem:[#allocation2 + $0xad8] sm:$0xff]
    %v456 = vld [vmem:[#allocation2 + $0xae0] sm:$0xff]
    %v457 = vld [vmem:[#allocation2 + $0xae8] sm:$0xff]
    %v458 = vld [vmem:[#allocation2 + $0xaf0] sm:$0xff]
    %v459 = vld [vmem:[#allocation2 + $0xaf8] sm:$0xff]
    %v460 = vld [vmem:[#allocation2 + $0xb00] sm:$0xff]
    %v461 = vld [vmem:[#allocation2 + $0xb08] sm:$0xff]
    %v462 = vld [vmem:[#allocation2 + $0xb10] sm:$0xff]
    %v463 = vld [vmem:[#allocation2 + $0xb18] sm:$0xff]
    %v464 = vld [vmem:[#allocation2 + $0xb20] sm:$0xff]
    %v465 = vld [vmem:[#allocation2 + $0xb28] sm:$0xff]
    %v466 = vld [vmem:[#allocation2 + $0xb30] sm:$0xff]
    %v467 = vld [vmem:[#allocation2 + $0xb38] sm:$0xff]
    %v468 = vld [vmem:[#allocation2 + $0xb40] sm:$0xff]
    %v469 = vld [vmem:[#allocation2 + $0xb48] sm:$0xff]
    %v470 = vld [vmem:[#allocation2 + $0xb50] sm:$0xff]
    %v471 = vld [vmem:[#allocation2 + $0xb58] sm:$0xff]
    %v472 = vld [vmem:[#allocation2 + $0xb60] sm:$0xff]
    %v473 = vld [vmem:[#allocation2 + $0xb68] sm:$0xff]
    %v474 = vld [vmem:[#allocation2 + $0xb70] sm:$0xff]
    %v475 = vld [vmem:[#allocation2 + $0xb78] sm:$0xff]
    %v476 = vld [vmem:[#allocation2 + $0xb80] sm:$0xff]
    %v477 = vld [vmem:[#allocation2 + $0xb88] sm:$0xff]
    %v478 = vld [vmem:[#allocation2 + $0xb90] sm:$0xff]
    %v479 = vld [vmem:[#allocation2 + $0xb98] sm:$0xff]
    %v480 = vld [vmem:[#allocation2 + $0xba0] sm:$0xff]
    %v481 = vld [vmem:[#allocation2 + $0xba8] sm:$0xff]
    %v482 = vld [vmem:[#allocation2 + $0xbb0] sm:$0xff]
    %v483 = vld [vmem:[#allocation2 + $0xbb8] sm:$0xff]
    %v484 = vld [vmem:[#allocation2 + $0xbc0] sm:$0xff]
    %v485 = vld [vmem:[#allocation2 + $0xbc8] sm:$0xff]
    %v486 = vld [vmem:[#allocation2 + $0xbd0] sm:$0xff]
    %v487 = vld [vmem:[#allocation2 + $0xbd8] sm:$0xff]
    %v488 = vld [vmem:[#allocation2 + $0xbe0] sm:$0xff]
    %v489 = vld [vmem:[#allocation2 + $0xbe8] sm:$0xff]
    %v490 = vld [vmem:[#allocation2 + $0xbf0] sm:$0xff]
    %v491 = vld [vmem:[#allocation2 + $0xbf8] sm:$0xff]
    %v492 = vld [vmem:[#allocation2 + $0xc00] sm:$0xff]
    %v493 = vld [vmem:[#allocation2 + $0xc08] sm:$0xff]
    %v494 = vld [vmem:[#allocation2 + $0xc10] sm:$0xff]
    %v495 = vld [vmem:[#allocation2 + $0xc18] sm:$0xff]
    %v496 = vld [vmem:[#allocation2 + $0xc20] sm:$0xff]
    %v497 = vld [vmem:[#allocation2 + $0xc28] sm:$0xff]
    %v498 = vld [vmem:[#allocation2 + $0xc30] sm:$0xff]
    %v499 = vld [vmem:[#allocation2 + $0xc38] sm:$0xff]
    %v500 = vld [vmem:[#allocation2 + $0xc40] sm:$0xff]
    %v501 = vld [vmem:[#allocation2 + $0xc48] sm:$0xff]
    %v502 = vld [vmem:[#allocation2 + $0xc50] sm:$0xff]
    %v503 = vld [vmem:[#allocation2 + $0xc58] sm:$0xff]
    %v504 = vld [vmem:[#allocation2 + $0xc60] sm:$0xff]
    %v505 = vld [vmem:[#allocation2 + $0xc68] sm:$0xff]
    %v506 = vld [vmem:[#allocation2 + $0xc70] sm:$0xff]
    %v507 = vld [vmem:[#allocation2 + $0xc78] sm:$0xff]
    %v508 = vld [vmem:[#allocation2 + $0xc80] sm:$0xff]
    %v509 = vld [vmem:[#allocation2 + $0xc88] sm:$0xff]
    %v510 = vld [vmem:[#allocation2 + $0xc90] sm:$0xff]
    %v511 = vld [vmem:[#allocation2 + $0xc98] sm:$0xff]
    %v512 = vld [vmem:[#allocation2 + $0xca0] sm:$0xff]
    %v513 = vld [vmem:[#allocation2 + $0xca8] sm:$0xff]
    %v514 = vld [vmem:[#allocation2 + $0xcb0] sm:$0xff]
    %v515 = vld [vmem:[#allocation2 + $0xcb8] sm:$0xff]
    %v516 = vld [vmem:[#allocation2 + $0xcc0] sm:$0xff]
    %v517 = vld [vmem:[#allocation2 + $0xcc8] sm:$0xff]
    %v518 = vld [vmem:[#allocation2 + $0xcd0] sm:$0xff]
    %v519 = vld [vmem:[#allocation2 + $0xcd8] sm:$0xff]
    %v520 = vld [vmem:[#allocation2 + $0xce0] sm:$0xff]
    %v521 = vld [vmem:[#allocation2 + $0xce8] sm:$0xff]
    %v522 = vld [vmem:[#allocation2 + $0xcf0] sm:$0xff]
    %v523 = vld [vmem:[#allocation2 + $0xcf8] sm:$0xff]
    %v524 = vld [vmem:[#allocation2 + $0xd00] sm:$0xff]
    %v525 = vld [vmem:[#allocation2 + $0xd08] sm:$0xff]
    %v526 = vld [vmem:[#allocation2 + $0xd10] sm:$0xff]
    %v527 = vld [vmem:[#allocation2 + $0xd18] sm:$0xff]
    %v528 = vld [vmem:[#allocation2 + $0xd20] sm:$0xff]
    %v529 = vld [vmem:[#allocation2 + $0xd28] sm:$0xff]
    %v530 = vld [vmem:[#allocation2 + $0xd30] sm:$0xff]
    %v531 = vld [vmem:[#allocation2 + $0xd38] sm:$0xff]
    %v532 = vld [vmem:[#allocation2 + $0xd40] sm:$0xff]
    %v533 = vld [vmem:[#allocation2 + $0xd48] sm:$0xff]
    %v534 = vld [vmem:[#allocation2 + $0xd50] sm:$0xff]
    %v535 = vld [vmem:[#allocation2 + $0xd58] sm:$0xff]
    %v536 = vld [vmem:[#allocation2 + $0xd60] sm:$0xff]
    %v537 = vld [vmem:[#allocation2 + $0xd68] sm:$0xff]
    %v538 = vld [vmem:[#allocation2 + $0xd70] sm:$0xff]
    %v539 = vld [vmem:[#allocation2 + $0xd78] sm:$0xff]
    %v540 = vld [vmem:[#allocation2 + $0xd80] sm:$0xff]
    %v541 = vld [vmem:[#allocation2 + $0xd88] sm:$0xff]
    %v542 = vld [vmem:[#allocation2 + $0xd90] sm:$0xff]
    %v543 = vld [vmem:[#allocation2 + $0xd98] sm:$0xff]
    %v544 = vld [vmem:[#allocation2 + $0xda0] sm:$0xff]
    %v545 = vld [vmem:[#allocation2 + $0xda8] sm:$0xff]
    %v546 = vld [vmem:[#allocation2 + $0xdb0] sm:$0xff]
    %v547 = vld [vmem:[#allocation2 + $0xdb8] sm:$0xff]
    %v548 = vld [vmem:[#allocation2 + $0xdc0] sm:$0xff]
    %v549 = vld [vmem:[#allocation2 + $0xdc8] sm:$0xff]
    %v550 = vld [vmem:[#allocation2 + $0xdd0] sm:$0xff]
    %v551 = vld [vmem:[#allocation2 + $0xdd8] sm:$0xff]
    %v552 = vld [vmem:[#allocation2 + $0xde0] sm:$0xff]
    %v553 = vld [vmem:[#allocation2 + $0xde8] sm:$0xff]
    %v554 = vld [vmem:[#allocation2 + $0xdf0] sm:$0xff]
    %v555 = vld [vmem:[#allocation2 + $0xdf8] sm:$0xff]
    %v556 = vld [vmem:[#allocation2 + $0xe00] sm:$0xff]
    %v557 = vld [vmem:[#allocation2 + $0xe08] sm:$0xff]
    %v558 = vld [vmem:[#allocation2 + $0xe10] sm:$0xff]
    %v559 = vld [vmem:[#allocation2 + $0xe18] sm:$0xff]
    %v560 = vld [vmem:[#allocation2 + $0xe20] sm:$0xff]
    %v561 = vld [vmem:[#allocation2 + $0xe28] sm:$0xff]
    %v562 = vld [vmem:[#allocation2 + $0xe30] sm:$0xff]
    %v563 = vld [vmem:[#allocation2 + $0xe38] sm:$0xff]
    %v564 = vld [vmem:[#allocation2 + $0xe40] sm:$0xff]
    %v565 = vld [vmem:[#allocation2 + $0xe48] sm:$0xff]
    %v566 = vld [vmem:[#allocation2 + $0xe50] sm:$0xff]
    %v567 = vld [vmem:[#allocation2 + $0xe58] sm:$0xff]
    %v568 = vld [vmem:[#allocation2 + $0xe60] sm:$0xff]
    %v569 = vld [vmem:[#allocation2 + $0xe68] sm:$0xff]
    %v570 = vld [vmem:[#allocation2 + $0xe70] sm:$0xff]
    %v571 = vld [vmem:[#allocation2 + $0xe78] sm:$0xff]
    %v572 = vld [vmem:[#allocation2 + $0xe80] sm:$0xff]
    %v573 = vld [vmem:[#allocation2 + $0xe88] sm:$0xff]
    %v574 = vld [vmem:[#allocation2 + $0xe90] sm:$0xff]
    %v575 = vld [vmem:[#allocation2 + $0xe98] sm:$0xff]
    %v576 = vld [vmem:[#allocation2 + $0xea0] sm:$0xff]
    %v577 = vld [vmem:[#allocation2 + $0xea8] sm:$0xff]
    %v578 = vld [vmem:[#allocation2 + $0xeb0] sm:$0xff]
    %v579 = vld [vmem:[#allocation2 + $0xeb8] sm:$0xff]
    %v580 = vld [vmem:[#allocation2 + $0xec0] sm:$0xff]
    %v581 = vld [vmem:[#allocation2 + $0xec8] sm:$0xff]
    %v582 = vld [vmem:[#allocation2 + $0xed0] sm:$0xff]
    %v583 = vld [vmem:[#allocation2 + $0xed8] sm:$0xff]
    %v584 = vld [vmem:[#allocation2 + $0xee0] sm:$0xff]
    %v585 = vld [vmem:[#allocation2 + $0xee8] sm:$0xff]
    %v586 = vld [vmem:[#allocation2 + $0xef0] sm:$0xff]
    %v587 = vld [vmem:[#allocation2 + $0xef8] sm:$0xff]
    %v588 = vld [vmem:[#allocation2 + $0xf00] sm:$0xff]
    %v589 = vld [vmem:[#allocation2 + $0xf08] sm:$0xff]
    %v590 = vld [vmem:[#allocation2 + $0xf10] sm:$0xff]
    %v591 = vld [vmem:[#allocation2 + $0xf18] sm:$0xff]
    %v592 = vld [vmem:[#allocation2 + $0xf20] sm:$0xff]
    %v593 = vld [vmem:[#allocation2 + $0xf28] sm:$0xff]
    %v594 = vld [vmem:[#allocation2 + $0xf30] sm:$0xff]
    %v595 = vld [vmem:[#allocation2 + $0xf38] sm:$0xff]
    %v596 = vld [vmem:[#allocation2 + $0xf40] sm:$0xff]
    %v597 = vld [vmem:[#allocation2 + $0xf48] sm:$0xff]
    %v598 = vld [vmem:[#allocation2 + $0xf50] sm:$0xff]
    %v599 = vld [vmem:[#allocation2 + $0xf58] sm:$0xff]
    %v600 = vld [vmem:[#allocation2 + $0xf60] sm:$0xff]
    %v601 = vld [vmem:[#allocation2 + $0xf68] sm:$0xff]
    %v602 = vld [vmem:[#allocation2 + $0xf70] sm:$0xff]
    %v603 = vld [vmem:[#allocation2 + $0xf78] sm:$0xff]
    %v604 = vld [vmem:[#allocation2 + $0xf80] sm:$0xff]
    %v605 = vld [vmem:[#allocation2 + $0xf88] sm:$0xff]
    %v606 = vld [vmem:[#allocation2 + $0xf90] sm:$0xff]
    %v607 = vld [vmem:[#allocation2 + $0xf98] sm:$0xff]
    %v608 = vld [vmem:[#allocation2 + $0xfa0] sm:$0xff]
    %v609 = vld [vmem:[#allocation2 + $0xfa8] sm:$0xff]
    %v610 = vld [vmem:[#allocation2 + $0xfb0] sm:$0xff]
    %v611 = vld [vmem:[#allocation2 + $0xfb8] sm:$0xff]
    %v612 = vld [vmem:[#allocation2 + $0xfc0] sm:$0xff]
    %v613 = vld [vmem:[#allocation2 + $0xfc8] sm:$0xff]
    %v614 = vld [vmem:[#allocation2 + $0xfd0] sm:$0xff]
    %v615 = vld [vmem:[#allocation2 + $0xfd8] sm:$0xff]
    %v616 = vld [vmem:[#allocation2 + $0xfe0] sm:$0xff]
    %v617 = vld [vmem:[#allocation2 + $0xfe8] sm:$0xff]
    %v618 = vld [vmem:[#allocation2 + $0xff0] sm:$0xff]
    %v619 = vld [vmem:[#allocation2 + $0xff8] sm:$0xff]
    %v622 = vcombine.high %v106, %v106
    %v624 = vunpack.c.l.s4 1983009808
    %v625 = vunpack.c.0.s8 %v624
    %v626 = vlaneseq
    %v627 = vshrl.u32 %v626, 7
    %v628 = vsub.s32 %v625, %v627
    %v629 = vrot.slane %v106, %v628
    %v631 = vunpack.c.l.s4 1983009808
    %v632 = vunpack.c.0.s8 %v631
    %v633 = vlaneseq
    %v634 = vshrl.u32 %v633, 7
    %v635 = vsub.s32 %v632, %v634
    %v636 = vrot.slane %v622, %v635
    %v637 = vcombine.high %v629, %v629
    %v638 = vcombine.high %v636, %v636
    %v639 = vcombine.high %v107, %v107
    %v641 = vunpack.c.l.s4 1983009808
    %v642 = vunpack.c.0.s8 %v641
    %v643 = vlaneseq
    %v644 = vshrl.u32 %v643, 7
    %v645 = vsub.s32 %v642, %v644
    %v646 = vrot.slane %v107, %v645
    %v648 = vunpack.c.l.s4 1983009808
    %v649 = vunpack.c.0.s8 %v648
    %v650 = vlaneseq
    %v651 = vshrl.u32 %v650, 7
    %v652 = vsub.s32 %v649, %v651
    %v653 = vrot.slane %v639, %v652
    %v654 = vcombine.high %v646, %v646
    %v655 = vcombine.high %v653, %v653
    %664 = vmatprep.subr.mxu0 %v169
    %665 = vmatpush1.msra.mxu0 %v168
    %666 = vmatprep.subr.mxu0 %v165
    %667 = vmatpush1.msra.mxu0 %v164
    %668 = vmatprep.subr.mxu0 %v161
    %669 = vmatpush1.msra.mxu0 %v160
    %670 = vmatprep.subr.mxu0 %v157
    %671 = vmatpush1.msra.mxu0 %v156
    %672 = vmatprep.subr.mxu0 %v153
    %673 = vmatpush1.msra.mxu0 %v152
    %674 = vmatprep.subr.mxu0 %v149
    %675 = vmatpush1.msra.mxu0 %v148
    %676 = vmatprep.subr.mxu0 %v145
    %677 = vmatpush1.msra.mxu0 %v144
    %678 = vmatprep.subr.mxu0 %v141
    %679 = vmatpush1.msra.mxu0 %v140
    %680 = vmatprep.subr.mxu0 %v137
    %681 = vmatpush1.msra.mxu0 %v136
    %682 = vmatprep.subr.mxu0 %v133
    %683 = vmatpush1.msra.mxu0 %v132
    %684 = vmatprep.subr.mxu0 %v129
    %685 = vmatpush1.msra.mxu0 %v128
    %686 = vmatprep.subr.mxu0 %v125
    %687 = vmatpush1.msra.mxu0 %v124
    %688 = vmatprep.subr.mxu0 %v121
    %689 = vmatpush1.msra.mxu0 %v120
    %690 = vmatprep.subr.mxu0 %v117
    %691 = vmatpush1.msra.mxu0 %v116
    %692 = vmatprep.subr.mxu0 %v113
    %693 = vmatpush1.msra.mxu0 %v112
    %694 = vmatprep.subr.mxu0 %v109
    %695 = vmatpush1.msra.mxu0 %v108
    %696 = vmatprep.subr.mxu0 %v233
    %697 = vmatpush2.msra.mxu0 %v232
    %698 = vmatprep.subr.mxu0 %v229
    %699 = vmatpush2.msra.mxu0 %v228
    %700 = vmatprep.subr.mxu0 %v225
    %701 = vmatpush2.msra.mxu0 %v224
    %702 = vmatprep.subr.mxu0 %v221
    %703 = vmatpush2.msra.mxu0 %v220
    %704 = vmatprep.subr.mxu0 %v217
    %705 = vmatpush2.msra.mxu0 %v216
    %706 = vmatprep.subr.mxu0 %v213
    %707 = vmatpush2.msra.mxu0 %v212
    %708 = vmatprep.subr.mxu0 %v209
    %709 = vmatpush2.msra.mxu0 %v208
    %710 = vmatprep.subr.mxu0 %v205
    %711 = vmatpush2.msra.mxu0 %v204
    %712 = vmatprep.subr.mxu0 %v201
    %713 = vmatpush2.msra.mxu0 %v200
    %714 = vmatprep.subr.mxu0 %v197
    %715 = vmatpush2.msra.mxu0 %v196
    %716 = vmatprep.subr.mxu0 %v193
    %717 = vmatpush2.msra.mxu0 %v192
    %718 = vmatprep.subr.mxu0 %v189
    %719 = vmatpush2.msra.mxu0 %v188
    %720 = vmatprep.subr.mxu0 %v185
    %721 = vmatpush2.msra.mxu0 %v184
    %722 = vmatprep.subr.mxu0 %v181
    %723 = vmatpush2.msra.mxu0 %v180
    %724 = vmatprep.subr.mxu0 %v177
    %725 = vmatpush2.msra.mxu0 %v176
    %726 = vmatprep.subr.mxu0 %v173
    %727 = vmatpush2.msra.mxu0 %v172
    %728 = vmatprep.mubr.f32.mxu0 %v637
    %729 = vmatmul.mubr.f32.gmra.mxu0 %v629
    %v730 = vpop.f32.mrf.mxu0
    %v731 = vadd.f32 0.0, %v730
    %v732 = vpop.f32.mrf.mxu0
    %v733 = vadd.f32 0.0, %v732
    %734 = vdwg.mxu0
    %735 = vmatprep.subr.mxu0 %v297
    %736 = vmatpush1.msra.mxu0 %v296
    %737 = vmatprep.subr.mxu0 %v293
    %738 = vmatpush1.msra.mxu0 %v292
    %739 = vmatprep.subr.mxu0 %v289
    %740 = vmatpush1.msra.mxu0 %v288
    %741 = vmatprep.subr.mxu0 %v285
    %742 = vmatpush1.msra.mxu0 %v284
    %743 = vmatprep.subr.mxu0 %v281
    %744 = vmatpush1.msra.mxu0 %v280
    %745 = vmatprep.subr.mxu0 %v277
    %746 = vmatpush1.msra.mxu0 %v276
    %747 = vmatprep.subr.mxu0 %v273
    %748 = vmatpush1.msra.mxu0 %v272
    %749 = vmatprep.subr.mxu0 %v269
    %750 = vmatpush1.msra.mxu0 %v268
    %751 = vmatprep.subr.mxu0 %v265
    %752 = vmatpush1.msra.mxu0 %v264
    %753 = vmatprep.subr.mxu0 %v261
    %754 = vmatpush1.msra.mxu0 %v260
    %755 = vmatprep.subr.mxu0 %v257
    %756 = vmatpush1.msra.mxu0 %v256
    %757 = vmatprep.subr.mxu0 %v253
    %758 = vmatpush1.msra.mxu0 %v252
    %759 = vmatprep.subr.mxu0 %v249
    %760 = vmatpush1.msra.mxu0 %v248
    %761 = vmatprep.subr.mxu0 %v245
    %762 = vmatpush1.msra.mxu0 %v244
    %763 = vmatprep.subr.mxu0 %v241
    %764 = vmatpush1.msra.mxu0 %v240
    %765 = vmatprep.subr.mxu0 %v237
    %766 = vmatpush1.msra.mxu0 %v236
    %767 = vmatprep.subr.mxu0 %v361
    %768 = vmatpush2.msra.mxu0 %v360
    %769 = vmatprep.subr.mxu0 %v357
    %770 = vmatpush2.msra.mxu0 %v356
    %771 = vmatprep.subr.mxu0 %v353
    %772 = vmatpush2.msra.mxu0 %v352
    %773 = vmatprep.subr.mxu0 %v349
    %774 = vmatpush2.msra.mxu0 %v348
    %775 = vmatprep.subr.mxu0 %v345
    %776 = vmatpush2.msra.mxu0 %v344
    %777 = vmatprep.subr.mxu0 %v341
    %778 = vmatpush2.msra.mxu0 %v340
    %779 = vmatprep.subr.mxu0 %v337
    %780 = vmatpush2.msra.mxu0 %v336
    %781 = vmatprep.subr.mxu0 %v333
    %782 = vmatpush2.msra.mxu0 %v332
    %783 = vmatprep.subr.mxu0 %v329
    %784 = vmatpush2.msra.mxu0 %v328
    %785 = vmatprep.subr.mxu0 %v325
    %786 = vmatpush2.msra.mxu0 %v324
    %787 = vmatprep.subr.mxu0 %v321
    %788 = vmatpush2.msra.mxu0 %v320
    %789 = vmatprep.subr.mxu0 %v317
    %790 = vmatpush2.msra.mxu0 %v316
    %791 = vmatprep.subr.mxu0 %v313
    %792 = vmatpush2.msra.mxu0 %v312
    %793 = vmatprep.subr.mxu0 %v309
    %794 = vmatpush2.msra.mxu0 %v308
    %795 = vmatprep.subr.mxu0 %v305
    %796 = vmatpush2.msra.mxu0 %v304
    %797 = vmatprep.subr.mxu0 %v301
    %798 = vmatpush2.msra.mxu0 %v300
    %799 = vmatprep.mubr.f32.mxu0 %v638
    %800 = vmatmul.mubr.f32.gmra.mxu0 %v636
    %v801 = vpop.f32.mrf.mxu0
    %v802 = vadd.f32 %v731, %v801
    %v803 = vpop.f32.mrf.mxu0
    %v804 = vadd.f32 %v733, %v803
    %805 = vdwg.mxu0
    %806 = vmatprep.subr.mxu0 %v425
    %807 = vmatpush1.msra.mxu0 %v424
    %808 = vmatprep.subr.mxu0 %v421
    %809 = vmatpush1.msra.mxu0 %v420
    %810 = vmatprep.subr.mxu0 %v417
    %811 = vmatpush1.msra.mxu0 %v416
    %812 = vmatprep.subr.mxu0 %v413
    %813 = vmatpush1.msra.mxu0 %v412
    %814 = vmatprep.subr.mxu0 %v409
    %815 = vmatpush1.msra.mxu0 %v408
    %816 = vmatprep.subr.mxu0 %v405
    %817 = vmatpush1.msra.mxu0 %v404
    %818 = vmatprep.subr.mxu0 %v401
    %819 = vmatpush1.msra.mxu0 %v400
    %820 = vmatprep.subr.mxu0 %v397
    %821 = vmatpush1.msra.mxu0 %v396
    %822 = vmatprep.subr.mxu0 %v393
    %823 = vmatpush1.msra.mxu0 %v392
    %824 = vmatprep.subr.mxu0 %v389
    %825 = vmatpush1.msra.mxu0 %v388
    %826 = vmatprep.subr.mxu0 %v385
    %827 = vmatpush1.msra.mxu0 %v384
    %828 = vmatprep.subr.mxu0 %v381
    %829 = vmatpush1.msra.mxu0 %v380
    %830 = vmatprep.subr.mxu0 %v377
    %831 = vmatpush1.msra.mxu0 %v376
    %832 = vmatprep.subr.mxu0 %v373
    %833 = vmatpush1.msra.mxu0 %v372
    %834 = vmatprep.subr.mxu0 %v369
    %835 = vmatpush1.msra.mxu0 %v368
    %836 = vmatprep.subr.mxu0 %v365
    %837 = vmatpush1.msra.mxu0 %v364
    %838 = vmatprep.subr.mxu0 %v489
    %839 = vmatpush2.msra.mxu0 %v488
    %840 = vmatprep.subr.mxu0 %v485
    %841 = vmatpush2.msra.mxu0 %v484
    %842 = vmatprep.subr.mxu0 %v481
    %843 = vmatpush2.msra.mxu0 %v480
    %844 = vmatprep.subr.mxu0 %v477
    %845 = vmatpush2.msra.mxu0 %v476
    %846 = vmatprep.subr.mxu0 %v473
    %847 = vmatpush2.msra.mxu0 %v472
    %848 = vmatprep.subr.mxu0 %v469
    %849 = vmatpush2.msra.mxu0 %v468
    %850 = vmatprep.subr.mxu0 %v465
    %851 = vmatpush2.msra.mxu0 %v464
    %852 = vmatprep.subr.mxu0 %v461
    %853 = vmatpush2.msra.mxu0 %v460
    %854 = vmatprep.subr.mxu0 %v457
    %855 = vmatpush2.msra.mxu0 %v456
    %856 = vmatprep.subr.mxu0 %v453
    %857 = vmatpush2.msra.mxu0 %v452
    %858 = vmatprep.subr.mxu0 %v449
    %859 = vmatpush2.msra.mxu0 %v448
    %860 = vmatprep.subr.mxu0 %v445
    %861 = vmatpush2.msra.mxu0 %v444
    %862 = vmatprep.subr.mxu0 %v441
    %863 = vmatpush2.msra.mxu0 %v440
    %864 = vmatprep.subr.mxu0 %v437
    %865 = vmatpush2.msra.mxu0 %v436
    %866 = vmatprep.subr.mxu0 %v433
    %867 = vmatpush2.msra.mxu0 %v432
    %868 = vmatprep.subr.mxu0 %v429
    %869 = vmatpush2.msra.mxu0 %v428
    %870 = vmatprep.mubr.f32.mxu0 %v654
    %871 = vmatmul.mubr.f32.gmra.mxu0 %v646
    %v872 = vpop.f32.mrf.mxu0
    %v873 = vadd.f32 %v802, %v872
    %v874 = vpop.f32.mrf.mxu0
    %v875 = vadd.f32 %v804, %v874
    %876 = vdwg.mxu0
    %877 = vmatprep.subr.mxu0 %v553
    %878 = vmatpush1.msra.mxu0 %v552
    %879 = vmatprep.subr.mxu0 %v549
    %880 = vmatpush1.msra.mxu0 %v548
    %881 = vmatprep.subr.mxu0 %v545
    %882 = vmatpush1.msra.mxu0 %v544
    %883 = vmatprep.subr.mxu0 %v541
    %884 = vmatpush1.msra.mxu0 %v540
    %885 = vmatprep.subr.mxu0 %v537
    %886 = vmatpush1.msra.mxu0 %v536
    %887 = vmatprep.subr.mxu0 %v533
    %888 = vmatpush1.msra.mxu0 %v532
    %889 = vmatprep.subr.mxu0 %v529
    %890 = vmatpush1.msra.mxu0 %v528
    %891 = vmatprep.subr.mxu0 %v525
    %892 = vmatpush1.msra.mxu0 %v524
    %893 = vmatprep.subr.mxu0 %v521
    %894 = vmatpush1.msra.mxu0 %v520
    %895 = vmatprep.subr.mxu0 %v517
    %896 = vmatpush1.msra.mxu0 %v516
    %897 = vmatprep.subr.mxu0 %v513
    %898 = vmatpush1.msra.mxu0 %v512
    %899 = vmatprep.subr.mxu0 %v509
    %900 = vmatpush1.msra.mxu0 %v508
    %901 = vmatprep.subr.mxu0 %v505
    %902 = vmatpush1.msra.mxu0 %v504
    %903 = vmatprep.subr.mxu0 %v501
    %904 = vmatpush1.msra.mxu0 %v500
    %905 = vmatprep.subr.mxu0 %v497
    %906 = vmatpush1.msra.mxu0 %v496
    %907 = vmatprep.subr.mxu0 %v493
    %908 = vmatpush1.msra.mxu0 %v492
    %909 = vmatprep.subr.mxu0 %v617
    %910 = vmatpush2.msra.mxu0 %v616
    %911 = vmatprep.subr.mxu0 %v613
    %912 = vmatpush2.msra.mxu0 %v612
    %913 = vmatprep.subr.mxu0 %v609
    %914 = vmatpush2.msra.mxu0 %v608
    %915 = vmatprep.subr.mxu0 %v605
    %916 = vmatpush2.msra.mxu0 %v604
    %917 = vmatprep.subr.mxu0 %v601
    %918 = vmatpush2.msra.mxu0 %v600
    %919 = vmatprep.subr.mxu0 %v597
    %920 = vmatpush2.msra.mxu0 %v596
    %921 = vmatprep.subr.mxu0 %v593
    %922 = vmatpush2.msra.mxu0 %v592
    %923 = vmatprep.subr.mxu0 %v589
    %924 = vmatpush2.msra.mxu0 %v588
    %925 = vmatprep.subr.mxu0 %v585
    %926 = vmatpush2.msra.mxu0 %v584
    %927 = vmatprep.subr.mxu0 %v581
    %928 = vmatpush2.msra.mxu0 %v580
    %929 = vmatprep.subr.mxu0 %v577
    %930 = vmatpush2.msra.mxu0 %v576
    %931 = vmatprep.subr.mxu0 %v573
    %932 = vmatpush2.msra.mxu0 %v572
    %933 = vmatprep.subr.mxu0 %v569
    %934 = vmatpush2.msra.mxu0 %v568
    %935 = vmatprep.subr.mxu0 %v565
    %936 = vmatpush2.msra.mxu0 %v564
    %937 = vmatprep.subr.mxu0 %v561
    %938 = vmatpush2.msra.mxu0 %v560
    %939 = vmatprep.subr.mxu0 %v557
    %940 = vmatpush2.msra.mxu0 %v556
    %941 = vmatprep.mubr.f32.mxu0 %v655
    %942 = vmatmul.mubr.f32.gmra.mxu0 %v653
    %v943 = vpop.f32.mrf.mxu0
    %v944 = vadd.f32 %v873, %v943
    %v945 = vpop.f32.mrf.mxu0
    %v946 = vadd.f32 %v875, %v945
    %947 = vdwg.mxu0
    %948 = vmatprep.subr.mxu0 %v171
    %949 = vmatpush1.msra.mxu0 %v170
    %950 = vmatprep.subr.mxu0 %v167
    %951 = vmatpush1.msra.mxu0 %v166
    %952 = vmatprep.subr.mxu0 %v163
    %953 = vmatpush1.msra.mxu0 %v162
    %954 = vmatprep.subr.mxu0 %v159
    %955 = vmatpush1.msra.mxu0 %v158
    %956 = vmatprep.subr.mxu0 %v155
    %957 = vmatpush1.msra.mxu0 %v154
    %958 = vmatprep.subr.mxu0 %v151
    %959 = vmatpush1.msra.mxu0 %v150
    %960 = vmatprep.subr.mxu0 %v147
    %961 = vmatpush1.msra.mxu0 %v146
    %962 = vmatprep.subr.mxu0 %v143
    %963 = vmatpush1.msra.mxu0 %v142
    %964 = vmatprep.subr.mxu0 %v139
    %965 = vmatpush1.msra.mxu0 %v138
    %966 = vmatprep.subr.mxu0 %v135
    %967 = vmatpush1.msra.mxu0 %v134
    %968 = vmatprep.subr.mxu0 %v131
    %969 = vmatpush1.msra.mxu0 %v130
    %970 = vmatprep.subr.mxu0 %v127
    %971 = vmatpush1.msra.mxu0 %v126
    %972 = vmatprep.subr.mxu0 %v123
    %973 = vmatpush1.msra.mxu0 %v122
    %974 = vmatprep.subr.mxu0 %v119
    %975 = vmatpush1.msra.mxu0 %v118
    %976 = vmatprep.subr.mxu0 %v115
    %977 = vmatpush1.msra.mxu0 %v114
    %978 = vmatprep.subr.mxu0 %v111
    %979 = vmatpush1.msra.mxu0 %v110
    %980 = vmatprep.subr.mxu0 %v235
    %981 = vmatpush2.msra.mxu0 %v234
    %982 = vmatprep.subr.mxu0 %v231
    %983 = vmatpush2.msra.mxu0 %v230
    %984 = vmatprep.subr.mxu0 %v227
    %985 = vmatpush2.msra.mxu0 %v226
    %986 = vmatprep.subr.mxu0 %v223
    %987 = vmatpush2.msra.mxu0 %v222
    %988 = vmatprep.subr.mxu0 %v219
    %989 = vmatpush2.msra.mxu0 %v218
    %990 = vmatprep.subr.mxu0 %v215
    %991 = vmatpush2.msra.mxu0 %v214
    %992 = vmatprep.subr.mxu0 %v211
    %993 = vmatpush2.msra.mxu0 %v210
    %994 = vmatprep.subr.mxu0 %v207
    %995 = vmatpush2.msra.mxu0 %v206
    %996 = vmatprep.subr.mxu0 %v203
    %997 = vmatpush2.msra.mxu0 %v202
    %998 = vmatprep.subr.mxu0 %v199
    %999 = vmatpush2.msra.mxu0 %v198
    %1000 = vmatprep.subr.mxu0 %v195
    %1001 = vmatpush2.msra.mxu0 %v194
    %1002 = vmatprep.subr.mxu0 %v191
    %1003 = vmatpush2.msra.mxu0 %v190
    %1004 = vmatprep.subr.mxu0 %v187
    %1005 = vmatpush2.msra.mxu0 %v186
    %1006 = vmatprep.subr.mxu0 %v183
    %1007 = vmatpush2.msra.mxu0 %v182
    %1008 = vmatprep.subr.mxu0 %v179
    %1009 = vmatpush2.msra.mxu0 %v178
    %1010 = vmatprep.subr.mxu0 %v175
    %1011 = vmatpush2.msra.mxu0 %v174
    %1012 = vmatprep.mubr.f32.mxu0 %v637
    %1013 = vmatmul.mubr.f32.gmra.mxu0 %v629
    %v1014 = vpop.f32.mrf.mxu0
    %v1015 = vadd.f32 0.0, %v1014
    %v1016 = vpop.f32.mrf.mxu0
    %v1017 = vadd.f32 0.0, %v1016
    %1018 = vdwg.mxu0
    %1019 = vmatprep.subr.mxu0 %v299
    %1020 = vmatpush1.msra.mxu0 %v298
    %1021 = vmatprep.subr.mxu0 %v295
    %1022 = vmatpush1.msra.mxu0 %v294
    %1023 = vmatprep.subr.mxu0 %v291
    %1024 = vmatpush1.msra.mxu0 %v290
    %1025 = vmatprep.subr.mxu0 %v287
    %1026 = vmatpush1.msra.mxu0 %v286
    %1027 = vmatprep.subr.mxu0 %v283
    %1028 = vmatpush1.msra.mxu0 %v282
    %1029 = vmatprep.subr.mxu0 %v279
    %1030 = vmatpush1.msra.mxu0 %v278
    %1031 = vmatprep.subr.mxu0 %v275
    %1032 = vmatpush1.msra.mxu0 %v274
    %1033 = vmatprep.subr.mxu0 %v271
    %1034 = vmatpush1.msra.mxu0 %v270
    %1035 = vmatprep.subr.mxu0 %v267
    %1036 = vmatpush1.msra.mxu0 %v266
    %1037 = vmatprep.subr.mxu0 %v263
    %1038 = vmatpush1.msra.mxu0 %v262
    %1039 = vmatprep.subr.mxu0 %v259
    %1040 = vmatpush1.msra.mxu0 %v258
    %1041 = vmatprep.subr.mxu0 %v255
    %1042 = vmatpush1.msra.mxu0 %v254
    %1043 = vmatprep.subr.mxu0 %v251
    %1044 = vmatpush1.msra.mxu0 %v250
    %1045 = vmatprep.subr.mxu0 %v247
    %1046 = vmatpush1.msra.mxu0 %v246
    %1047 = vmatprep.subr.mxu0 %v243
    %1048 = vmatpush1.msra.mxu0 %v242
    %1049 = vmatprep.subr.mxu0 %v239
    %1050 = vmatpush1.msra.mxu0 %v238
    %1051 = vmatprep.subr.mxu0 %v363
    %1052 = vmatpush2.msra.mxu0 %v362
    %1053 = vmatprep.subr.mxu0 %v359
    %1054 = vmatpush2.msra.mxu0 %v358
    %1055 = vmatprep.subr.mxu0 %v355
    %1056 = vmatpush2.msra.mxu0 %v354
    %1057 = vmatprep.subr.mxu0 %v351
    %1058 = vmatpush2.msra.mxu0 %v350
    %1059 = vmatprep.subr.mxu0 %v347
    %1060 = vmatpush2.msra.mxu0 %v346
    %1061 = vmatprep.subr.mxu0 %v343
    %1062 = vmatpush2.msra.mxu0 %v342
    %1063 = vmatprep.subr.mxu0 %v339
    %1064 = vmatpush2.msra.mxu0 %v338
    %1065 = vmatprep.subr.mxu0 %v335
    %1066 = vmatpush2.msra.mxu0 %v334
    %1067 = vmatprep.subr.mxu0 %v331
    %1068 = vmatpush2.msra.mxu0 %v330
    %1069 = vmatprep.subr.mxu0 %v327
    %1070 = vmatpush2.msra.mxu0 %v326
    %1071 = vmatprep.subr.mxu0 %v323
    %1072 = vmatpush2.msra.mxu0 %v322
    %1073 = vmatprep.subr.mxu0 %v319
    %1074 = vmatpush2.msra.mxu0 %v318
    %1075 = vmatprep.subr.mxu0 %v315
    %1076 = vmatpush2.msra.mxu0 %v314
    %1077 = vmatprep.subr.mxu0 %v311
    %1078 = vmatpush2.msra.mxu0 %v310
    %1079 = vmatprep.subr.mxu0 %v307
    %1080 = vmatpush2.msra.mxu0 %v306
    %1081 = vmatprep.subr.mxu0 %v303
    %1082 = vmatpush2.msra.mxu0 %v302
    %1083 = vmatprep.mubr.f32.mxu0 %v638
    %1084 = vmatmul.mubr.f32.gmra.mxu0 %v636
    %v1085 = vpop.f32.mrf.mxu0
    %v1086 = vadd.f32 %v1015, %v1085
    %v1087 = vpop.f32.mrf.mxu0
    %v1088 = vadd.f32 %v1017, %v1087
    %1089 = vdwg.mxu0
    %1090 = vmatprep.subr.mxu0 %v427
    %1091 = vmatpush1.msra.mxu0 %v426
    %1092 = vmatprep.subr.mxu0 %v423
    %1093 = vmatpush1.msra.mxu0 %v422
    %1094 = vmatprep.subr.mxu0 %v419
    %1095 = vmatpush1.msra.mxu0 %v418
    %1096 = vmatprep.subr.mxu0 %v415
    %1097 = vmatpush1.msra.mxu0 %v414
    %1098 = vmatprep.subr.mxu0 %v411
    %1099 = vmatpush1.msra.mxu0 %v410
    %1100 = vmatprep.subr.mxu0 %v407
    %1101 = vmatpush1.msra.mxu0 %v406
    %1102 = vmatprep.subr.mxu0 %v403
    %1103 = vmatpush1.msra.mxu0 %v402
    %1104 = vmatprep.subr.mxu0 %v399
    %1105 = vmatpush1.msra.mxu0 %v398
    %1106 = vmatprep.subr.mxu0 %v395
    %1107 = vmatpush1.msra.mxu0 %v394
    %1108 = vmatprep.subr.mxu0 %v391
    %1109 = vmatpush1.msra.mxu0 %v390
    %1110 = vmatprep.subr.mxu0 %v387
    %1111 = vmatpush1.msra.mxu0 %v386
    %1112 = vmatprep.subr.mxu0 %v383
    %1113 = vmatpush1.msra.mxu0 %v382
    %1114 = vmatprep.subr.mxu0 %v379
    %1115 = vmatpush1.msra.mxu0 %v378
    %1116 = vmatprep.subr.mxu0 %v375
    %1117 = vmatpush1.msra.mxu0 %v374
    %1118 = vmatprep.subr.mxu0 %v371
    %1119 = vmatpush1.msra.mxu0 %v370
    %1120 = vmatprep.subr.mxu0 %v367
    %1121 = vmatpush1.msra.mxu0 %v366
    %1122 = vmatprep.subr.mxu0 %v491
    %1123 = vmatpush2.msra.mxu0 %v490
    %1124 = vmatprep.subr.mxu0 %v487
    %1125 = vmatpush2.msra.mxu0 %v486
    %1126 = vmatprep.subr.mxu0 %v483
    %1127 = vmatpush2.msra.mxu0 %v482
    %1128 = vmatprep.subr.mxu0 %v479
    %1129 = vmatpush2.msra.mxu0 %v478
    %1130 = vmatprep.subr.mxu0 %v475
    %1131 = vmatpush2.msra.mxu0 %v474
    %1132 = vmatprep.subr.mxu0 %v471
    %1133 = vmatpush2.msra.mxu0 %v470
    %1134 = vmatprep.subr.mxu0 %v467
    %1135 = vmatpush2.msra.mxu0 %v466
    %1136 = vmatprep.subr.mxu0 %v463
    %1137 = vmatpush2.msra.mxu0 %v462
    %1138 = vmatprep.subr.mxu0 %v459
    %1139 = vmatpush2.msra.mxu0 %v458
    %1140 = vmatprep.subr.mxu0 %v455
    %1141 = vmatpush2.msra.mxu0 %v454
    %1142 = vmatprep.subr.mxu0 %v451
    %1143 = vmatpush2.msra.mxu0 %v450
    %1144 = vmatprep.subr.mxu0 %v447
    %1145 = vmatpush2.msra.mxu0 %v446
    %1146 = vmatprep.subr.mxu0 %v443
    %1147 = vmatpush2.msra.mxu0 %v442
    %1148 = vmatprep.subr.mxu0 %v439
    %1149 = vmatpush2.msra.mxu0 %v438
    %1150 = vmatprep.subr.mxu0 %v435
    %1151 = vmatpush2.msra.mxu0 %v434
    %1152 = vmatprep.subr.mxu0 %v431
    %1153 = vmatpush2.msra.mxu0 %v430
    %1154 = vmatprep.mubr.f32.mxu0 %v654
    %1155 = vmatmul.mubr.f32.gmra.mxu0 %v646
    %v1156 = vpop.f32.mrf.mxu0
    %v1157 = vadd.f32 %v1086, %v1156
    %v1158 = vpop.f32.mrf.mxu0
    %v1159 = vadd.f32 %v1088, %v1158
    %1160 = vdwg.mxu0
    %1161 = vmatprep.subr.mxu0 %v555
    %1162 = vmatpush1.msra.mxu0 %v554
    %1163 = vmatprep.subr.mxu0 %v551
    %1164 = vmatpush1.msra.mxu0 %v550
    %1165 = vmatprep.subr.mxu0 %v547
    %1166 = vmatpush1.msra.mxu0 %v546
    %1167 = vmatprep.subr.mxu0 %v543
    %1168 = vmatpush1.msra.mxu0 %v542
    %1169 = vmatprep.subr.mxu0 %v539
    %1170 = vmatpush1.msra.mxu0 %v538
    %1171 = vmatprep.subr.mxu0 %v535
    %1172 = vmatpush1.msra.mxu0 %v534
    %1173 = vmatprep.subr.mxu0 %v531
    %1174 = vmatpush1.msra.mxu0 %v530
    %1175 = vmatprep.subr.mxu0 %v527
    %1176 = vmatpush1.msra.mxu0 %v526
    %1177 = vmatprep.subr.mxu0 %v523
    %1178 = vmatpush1.msra.mxu0 %v522
    %1179 = vmatprep.subr.mxu0 %v519
    %1180 = vmatpush1.msra.mxu0 %v518
    %1181 = vmatprep.subr.mxu0 %v515
    %1182 = vmatpush1.msra.mxu0 %v514
    %1183 = vmatprep.subr.mxu0 %v511
    %1184 = vmatpush1.msra.mxu0 %v510
    %1185 = vmatprep.subr.mxu0 %v507
    %1186 = vmatpush1.msra.mxu0 %v506
    %1187 = vmatprep.subr.mxu0 %v503
    %1188 = vmatpush1.msra.mxu0 %v502
    %1189 = vmatprep.subr.mxu0 %v499
    %1190 = vmatpush1.msra.mxu0 %v498
    %1191 = vmatprep.subr.mxu0 %v495
    %1192 = vmatpush1.msra.mxu0 %v494
    %1193 = vmatprep.subr.mxu0 %v619
    %1194 = vmatpush2.msra.mxu0 %v618
    %1195 = vmatprep.subr.mxu0 %v615
    %1196 = vmatpush2.msra.mxu0 %v614
    %1197 = vmatprep.subr.mxu0 %v611
    %1198 = vmatpush2.msra.mxu0 %v610
    %1199 = vmatprep.subr.mxu0 %v607
    %1200 = vmatpush2.msra.mxu0 %v606
    %1201 = vmatprep.subr.mxu0 %v603
    %1202 = vmatpush2.msra.mxu0 %v602
    %1203 = vmatprep.subr.mxu0 %v599
    %1204 = vmatpush2.msra.mxu0 %v598
    %1205 = vmatprep.subr.mxu0 %v595
    %1206 = vmatpush2.msra.mxu0 %v594
    %1207 = vmatprep.subr.mxu0 %v591
    %1208 = vmatpush2.msra.mxu0 %v590
    %1209 = vmatprep.subr.mxu0 %v587
    %1210 = vmatpush2.msra.mxu0 %v586
    %1211 = vmatprep.subr.mxu0 %v583
    %1212 = vmatpush2.msra.mxu0 %v582
    %1213 = vmatprep.subr.mxu0 %v579
    %1214 = vmatpush2.msra.mxu0 %v578
    %1215 = vmatprep.subr.mxu0 %v575
    %1216 = vmatpush2.msra.mxu0 %v574
    %1217 = vmatprep.subr.mxu0 %v571
    %1218 = vmatpush2.msra.mxu0 %v570
    %1219 = vmatprep.subr.mxu0 %v567
    %1220 = vmatpush2.msra.mxu0 %v566
    %1221 = vmatprep.subr.mxu0 %v563
    %1222 = vmatpush2.msra.mxu0 %v562
    %1223 = vmatprep.subr.mxu0 %v559
    %1224 = vmatpush2.msra.mxu0 %v558
    %1225 = vmatprep.mubr.f32.mxu0 %v655
    %1226 = vmatmul.mubr.f32.gmra.mxu0 %v653
    %v1227 = vpop.f32.mrf.mxu0
    %v1228 = vadd.f32 %v1157, %v1227
    %v1229 = vpop.f32.mrf.mxu0
    %v1230 = vadd.f32 %v1159, %v1229
    %1231 = vdwg.mxu0
    %v1232 = vld [vmem:[#allocation4] sm:$0xf]
    %v1233 = vld [vmem:[#allocation6] sm:$0xf]
    %vm1234 = vcmask 1041408
    %v1235 = vsel %vm1234, %v944, 0.0
    %v1236 = vrot.slane %v1235, 4
    %v1237 = vadd.f32 %v1235, %v1236
    %v1238 = vrot.slane %v1237, 2
    %v1239 = vadd.f32 %v1237, %v1238
    %v1240 = vrot.slane %v1239, 1
    %v1241 = vadd.f32 %v1239, %v1240
    %v1242 = vsel %vm1234, %v946, 0.0
    %v1243 = vrot.slane %v1242, 4
    %v1244 = vadd.f32 %v1242, %v1243
    %v1245 = vrot.slane %v1244, 2
    %v1246 = vadd.f32 %v1244, %v1245
    %v1247 = vrot.slane %v1246, 1
    %v1248 = vadd.f32 %v1246, %v1247
    %v1249 = vsel %vm1234, %v1228, 0.0
    %v1250 = vrot.slane %v1249, 4
    %v1251 = vadd.f32 %v1249, %v1250
    %v1252 = vrot.slane %v1251, 2
    %v1253 = vadd.f32 %v1251, %v1252
    %v1254 = vrot.slane %v1253, 1
    %v1255 = vadd.f32 %v1253, %v1254
    %v1256 = vsel %vm1234, %v1230, 0.0
    %v1257 = vrot.slane %v1256, 4
    %v1258 = vadd.f32 %v1256, %v1257
    %v1259 = vrot.slane %v1258, 2
    %v1260 = vadd.f32 %v1258, %v1259
    %v1261 = vrot.slane %v1260, 1
    %v1262 = vadd.f32 %v1260, %v1261
    %v1263 = vrcp.pop 2.0
    %v1264 = vmul.f32 %v1241, %v1263
    %v1265 = vmul.f32 %v1248, %v1263
    %v1266 = vmul.f32 %v1255, %v1263
    %v1267 = vmul.f32 %v1262, %v1263
    %v1268 = vsub.f32 %v944, %v1264
    %v1269 = vsub.f32 %v946, %v1265
    %v1270 = vsub.f32 %v1228, %v1266
    %v1271 = vsub.f32 %v1230, %v1267
    %v1272 = vmul.f32 %v1268, %v1268
    %v1273 = vmul.f32 %v1269, %v1269
    %v1274 = vmul.f32 %v1270, %v1270
    %v1275 = vmul.f32 %v1271, %v1271
    %v1276 = vsel %vm1234, %v1272, 0.0
    %v1277 = vrot.slane %v1276, 4
    %v1278 = vadd.f32 %v1276, %v1277
    %v1279 = vrot.slane %v1278, 2
    %v1280 = vadd.f32 %v1278, %v1279
    %v1281 = vrot.slane %v1280, 1
    %v1282 = vadd.f32 %v1280, %v1281
    %v1283 = vsel %vm1234, %v1273, 0.0
    %v1284 = vrot.slane %v1283, 4
    %v1285 = vadd.f32 %v1283, %v1284
    %v1286 = vrot.slane %v1285, 2
    %v1287 = vadd.f32 %v1285, %v1286
    %v1288 = vrot.slane %v1287, 1
    %v1289 = vadd.f32 %v1287, %v1288
    %v1290 = vsel %vm1234, %v1274, 0.0
    %v1291 = vrot.slane %v1290, 4
    %v1292 = vadd.f32 %v1290, %v1291
    %v1293 = vrot.slane %v1292, 2
    %v1294 = vadd.f32 %v1292, %v1293
    %v1295 = vrot.slane %v1294, 1
    %v1296 = vadd.f32 %v1294, %v1295
    %v1297 = vsel %vm1234, %v1275, 0.0
    %v1298 = vrot.slane %v1297, 4
    %v1299 = vadd.f32 %v1297, %v1298
    %v1300 = vrot.slane %v1299, 2
    %v1301 = vadd.f32 %v1299, %v1300
    %v1302 = vrot.slane %v1301, 1
    %v1303 = vadd.f32 %v1301, %v1302
    %v1304 = vmul.f32 %v1282, %v1263
    %v1305 = vmul.f32 %v1289, %v1263
    %v1306 = vmul.f32 %v1296, %v1263
    %v1307 = vmul.f32 %v1303, %v1263
    %v1308 = vadd.f32 %v1304, 1e-05
    %v1309 = vadd.f32 %v1305, 1e-05
    %v1310 = vadd.f32 %v1306, 1e-05
    %v1311 = vadd.f32 %v1307, 1e-05
    %v1312 = vrsqrt.pop %v1308
    %v1313 = vrsqrt.pop %v1309
    %v1314 = vrsqrt.pop %v1310
    %v1315 = vrsqrt.pop %v1311
    %v1316 = vmul.f32 %v1268, %v1312
    %v1317 = vmul.f32 %v1269, %v1313
    %v1318 = vmul.f32 %v1270, %v1314
    %v1319 = vmul.f32 %v1271, %v1315
    %v1321 = vlaneseq
    %v1322 = vshrl.u32 %v1321, 7
    %v1323 = vsub.s32 0, %v1322
    %v1324 = vrot.slane %v1232, %v1323
    %v1325 = vlaneseq
    %v1326 = vshrl.u32 %v1325, 7
    %v1327 = vsub.s32 1, %v1326
    %v1328 = vrot.slane %v1232, %v1327
    %v1329 = vlaneseq
    %v1330 = vshrl.u32 %v1329, 7
    %v1331 = vsub.s32 2, %v1330
    %v1332 = vrot.slane %v1232, %v1331
    %v1333 = vlaneseq
    %v1334 = vshrl.u32 %v1333, 7
    %v1335 = vsub.s32 3, %v1334
    %v1336 = vrot.slane %v1232, %v1335
    %v1341 = vmul.f32 %v1316, %v1324
    %v1342 = vmul.f32 %v1317, %v1328
    %v1343 = vmul.f32 %v1318, %v1332
    %v1344 = vmul.f32 %v1319, %v1336
    %v1346 = vlaneseq
    %v1347 = vshrl.u32 %v1346, 7
    %v1348 = vsub.s32 0, %v1347
    %v1349 = vrot.slane %v1233, %v1348
    %v1350 = vlaneseq
    %v1351 = vshrl.u32 %v1350, 7
    %v1352 = vsub.s32 1, %v1351
    %v1353 = vrot.slane %v1233, %v1352
    %v1354 = vlaneseq
    %v1355 = vshrl.u32 %v1354, 7
    %v1356 = vsub.s32 2, %v1355
    %v1357 = vrot.slane %v1233, %v1356
    %v1358 = vlaneseq
    %v1359 = vshrl.u32 %v1358, 7
    %v1360 = vsub.s32 3, %v1359
    %v1361 = vrot.slane %v1233, %v1360
    %v1366 = vadd.f32 %v1341, %v1349
    %v1367 = vadd.f32 %v1342, %v1353
    %v1368 = vadd.f32 %v1343, %v1357
    %v1369 = vadd.f32 %v1344, %v1361
    %v1370 = vmax.f32 %v1366, 0.0
    %v1371 = vmax.f32 %v1367, 0.0
    %v1372 = vmax.f32 %v1368, 0.0
    %v1373 = vmax.f32 %v1369, 0.0
    %v1374 = vld [vmem:[#allocation7] sm:$0xff]
    %v1375 = vld [vmem:[#allocation7 + $0x8] sm:$0xff]
    %v1376 = vld [vmem:[#allocation7 + $0x10] sm:$0xff]
    %v1377 = vld [vmem:[#allocation7 + $0x18] sm:$0xff]
    %v1378 = vld [vmem:[#allocation7 + $0x20] sm:$0xff]
    %v1379 = vld [vmem:[#allocation7 + $0x28] sm:$0xff]
    %v1380 = vld [vmem:[#allocation7 + $0x30] sm:$0xff]
    %v1381 = vld [vmem:[#allocation7 + $0x38] sm:$0xff]
    %v1382 = vld [vmem:[#allocation7 + $0x40] sm:$0xff]
    %v1383 = vld [vmem:[#allocation7 + $0x48] sm:$0xff]
    %v1384 = vld [vmem:[#allocation7 + $0x50] sm:$0xff]
    %v1385 = vld [vmem:[#allocation7 + $0x58] sm:$0xff]
    %v1386 = vld [vmem:[#allocation7 + $0x60] sm:$0xff]
    %v1387 = vld [vmem:[#allocation7 + $0x68] sm:$0xff]
    %v1388 = vld [vmem:[#allocation7 + $0x70] sm:$0xff]
    %v1389 = vld [vmem:[#allocation7 + $0x78] sm:$0xff]
    %v1390 = vld [vmem:[#allocation7 + $0x80] sm:$0xff]
    %v1391 = vld [vmem:[#allocation7 + $0x88] sm:$0xff]
    %v1392 = vld [vmem:[#allocation7 + $0x90] sm:$0xff]
    %v1393 = vld [vmem:[#allocation7 + $0x98] sm:$0xff]
    %v1394 = vld [vmem:[#allocation7 + $0xa0] sm:$0xff]
    %v1395 = vld [vmem:[#allocation7 + $0xa8] sm:$0xff]
    %v1396 = vld [vmem:[#allocation7 + $0xb0] sm:$0xff]
    %v1397 = vld [vmem:[#allocation7 + $0xb8] sm:$0xff]
    %v1398 = vld [vmem:[#allocation7 + $0xc0] sm:$0xff]
    %v1399 = vld [vmem:[#allocation7 + $0xc8] sm:$0xff]
    %v1400 = vld [vmem:[#allocation7 + $0xd0] sm:$0xff]
    %v1401 = vld [vmem:[#allocation7 + $0xd8] sm:$0xff]
    %v1402 = vld [vmem:[#allocation7 + $0xe0] sm:$0xff]
    %v1403 = vld [vmem:[#allocation7 + $0xe8] sm:$0xff]
    %v1404 = vld [vmem:[#allocation7 + $0xf0] sm:$0xff]
    %v1405 = vld [vmem:[#allocation7 + $0xf8] sm:$0xff]
    %v1406 = vld [vmem:[#allocation7 + $0x100] sm:$0xff]
    %v1407 = vld [vmem:[#allocation7 + $0x108] sm:$0xff]
    %v1408 = vld [vmem:[#allocation7 + $0x110] sm:$0xff]
    %v1409 = vld [vmem:[#allocation7 + $0x118] sm:$0xff]
    %v1410 = vld [vmem:[#allocation7 + $0x120] sm:$0xff]
    %v1411 = vld [vmem:[#allocation7 + $0x128] sm:$0xff]
    %v1412 = vld [vmem:[#allocation7 + $0x130] sm:$0xff]
    %v1413 = vld [vmem:[#allocation7 + $0x138] sm:$0xff]
    %v1414 = vld [vmem:[#allocation7 + $0x140] sm:$0xff]
    %v1415 = vld [vmem:[#allocation7 + $0x148] sm:$0xff]
    %v1416 = vld [vmem:[#allocation7 + $0x150] sm:$0xff]
    %v1417 = vld [vmem:[#allocation7 + $0x158] sm:$0xff]
    %v1418 = vld [vmem:[#allocation7 + $0x160] sm:$0xff]
    %v1419 = vld [vmem:[#allocation7 + $0x168] sm:$0xff]
    %v1420 = vld [vmem:[#allocation7 + $0x170] sm:$0xff]
    %v1421 = vld [vmem:[#allocation7 + $0x178] sm:$0xff]
    %v1422 = vld [vmem:[#allocation7 + $0x180] sm:$0xff]
    %v1423 = vld [vmem:[#allocation7 + $0x188] sm:$0xff]
    %v1424 = vld [vmem:[#allocation7 + $0x190] sm:$0xff]
    %v1425 = vld [vmem:[#allocation7 + $0x198] sm:$0xff]
    %v1426 = vld [vmem:[#allocation7 + $0x1a0] sm:$0xff]
    %v1427 = vld [vmem:[#allocation7 + $0x1a8] sm:$0xff]
    %v1428 = vld [vmem:[#allocation7 + $0x1b0] sm:$0xff]
    %v1429 = vld [vmem:[#allocation7 + $0x1b8] sm:$0xff]
    %v1430 = vld [vmem:[#allocation7 + $0x1c0] sm:$0xff]
    %v1431 = vld [vmem:[#allocation7 + $0x1c8] sm:$0xff]
    %v1432 = vld [vmem:[#allocation7 + $0x1d0] sm:$0xff]
    %v1433 = vld [vmem:[#allocation7 + $0x1d8] sm:$0xff]
    %v1434 = vld [vmem:[#allocation7 + $0x1e0] sm:$0xff]
    %v1435 = vld [vmem:[#allocation7 + $0x1e8] sm:$0xff]
    %v1436 = vld [vmem:[#allocation7 + $0x1f0] sm:$0xff]
    %v1437 = vld [vmem:[#allocation7 + $0x1f8] sm:$0xff]
    %v1438 = vld [vmem:[#allocation7 + $0x200] sm:$0xff]
    %v1439 = vld [vmem:[#allocation7 + $0x208] sm:$0xff]
    %v1440 = vld [vmem:[#allocation7 + $0x210] sm:$0xff]
    %v1441 = vld [vmem:[#allocation7 + $0x218] sm:$0xff]
    %v1442 = vld [vmem:[#allocation7 + $0x220] sm:$0xff]
    %v1443 = vld [vmem:[#allocation7 + $0x228] sm:$0xff]
    %v1444 = vld [vmem:[#allocation7 + $0x230] sm:$0xff]
    %v1445 = vld [vmem:[#allocation7 + $0x238] sm:$0xff]
    %v1446 = vld [vmem:[#allocation7 + $0x240] sm:$0xff]
    %v1447 = vld [vmem:[#allocation7 + $0x248] sm:$0xff]
    %v1448 = vld [vmem:[#allocation7 + $0x250] sm:$0xff]
    %v1449 = vld [vmem:[#allocation7 + $0x258] sm:$0xff]
    %v1450 = vld [vmem:[#allocation7 + $0x260] sm:$0xff]
    %v1451 = vld [vmem:[#allocation7 + $0x268] sm:$0xff]
    %v1452 = vld [vmem:[#allocation7 + $0x270] sm:$0xff]
    %v1453 = vld [vmem:[#allocation7 + $0x278] sm:$0xff]
    %v1454 = vld [vmem:[#allocation7 + $0x280] sm:$0xff]
    %v1455 = vld [vmem:[#allocation7 + $0x288] sm:$0xff]
    %v1456 = vld [vmem:[#allocation7 + $0x290] sm:$0xff]
    %v1457 = vld [vmem:[#allocation7 + $0x298] sm:$0xff]
    %v1458 = vld [vmem:[#allocation7 + $0x2a0] sm:$0xff]
    %v1459 = vld [vmem:[#allocation7 + $0x2a8] sm:$0xff]
    %v1460 = vld [vmem:[#allocation7 + $0x2b0] sm:$0xff]
    %v1461 = vld [vmem:[#allocation7 + $0x2b8] sm:$0xff]
    %v1462 = vld [vmem:[#allocation7 + $0x2c0] sm:$0xff]
    %v1463 = vld [vmem:[#allocation7 + $0x2c8] sm:$0xff]
    %v1464 = vld [vmem:[#allocation7 + $0x2d0] sm:$0xff]
    %v1465 = vld [vmem:[#allocation7 + $0x2d8] sm:$0xff]
    %v1466 = vld [vmem:[#allocation7 + $0x2e0] sm:$0xff]
    %v1467 = vld [vmem:[#allocation7 + $0x2e8] sm:$0xff]
    %v1468 = vld [vmem:[#allocation7 + $0x2f0] sm:$0xff]
    %v1469 = vld [vmem:[#allocation7 + $0x2f8] sm:$0xff]
    %v1470 = vld [vmem:[#allocation7 + $0x300] sm:$0xff]
    %v1471 = vld [vmem:[#allocation7 + $0x308] sm:$0xff]
    %v1472 = vld [vmem:[#allocation7 + $0x310] sm:$0xff]
    %v1473 = vld [vmem:[#allocation7 + $0x318] sm:$0xff]
    %v1474 = vld [vmem:[#allocation7 + $0x320] sm:$0xff]
    %v1475 = vld [vmem:[#allocation7 + $0x328] sm:$0xff]
    %v1476 = vld [vmem:[#allocation7 + $0x330] sm:$0xff]
    %v1477 = vld [vmem:[#allocation7 + $0x338] sm:$0xff]
    %v1478 = vld [vmem:[#allocation7 + $0x340] sm:$0xff]
    %v1479 = vld [vmem:[#allocation7 + $0x348] sm:$0xff]
    %v1480 = vld [vmem:[#allocation7 + $0x350] sm:$0xff]
    %v1481 = vld [vmem:[#allocation7 + $0x358] sm:$0xff]
    %v1482 = vld [vmem:[#allocation7 + $0x360] sm:$0xff]
    %v1483 = vld [vmem:[#allocation7 + $0x368] sm:$0xff]
    %v1484 = vld [vmem:[#allocation7 + $0x370] sm:$0xff]
    %v1485 = vld [vmem:[#allocation7 + $0x378] sm:$0xff]
    %v1486 = vld [vmem:[#allocation7 + $0x380] sm:$0xff]
    %v1487 = vld [vmem:[#allocation7 + $0x388] sm:$0xff]
    %v1488 = vld [vmem:[#allocation7 + $0x390] sm:$0xff]
    %v1489 = vld [vmem:[#allocation7 + $0x398] sm:$0xff]
    %v1490 = vld [vmem:[#allocation7 + $0x3a0] sm:$0xff]
    %v1491 = vld [vmem:[#allocation7 + $0x3a8] sm:$0xff]
    %v1492 = vld [vmem:[#allocation7 + $0x3b0] sm:$0xff]
    %v1493 = vld [vmem:[#allocation7 + $0x3b8] sm:$0xff]
    %v1494 = vld [vmem:[#allocation7 + $0x3c0] sm:$0xff]
    %v1495 = vld [vmem:[#allocation7 + $0x3c8] sm:$0xff]
    %v1496 = vld [vmem:[#allocation7 + $0x3d0] sm:$0xff]
    %v1497 = vld [vmem:[#allocation7 + $0x3d8] sm:$0xff]
    %v1498 = vld [vmem:[#allocation7 + $0x3e0] sm:$0xff]
    %v1499 = vld [vmem:[#allocation7 + $0x3e8] sm:$0xff]
    %v1500 = vld [vmem:[#allocation7 + $0x3f0] sm:$0xff]
    %v1501 = vld [vmem:[#allocation7 + $0x3f8] sm:$0xff]
    %1502 = vmatprep.subr.mxu0 %v1405
    %1503 = vmatpush1.msra.mxu0 %v1404
    %1504 = vmatprep.subr.mxu0 %v1403
    %1505 = vmatpush1.msra.mxu0 %v1402
    %1506 = vmatprep.subr.mxu0 %v1401
    %1507 = vmatpush1.msra.mxu0 %v1400
    %1508 = vmatprep.subr.mxu0 %v1399
    %1509 = vmatpush1.msra.mxu0 %v1398
    %1510 = vmatprep.subr.mxu0 %v1397
    %1511 = vmatpush1.msra.mxu0 %v1396
    %1512 = vmatprep.subr.mxu0 %v1395
    %1513 = vmatpush1.msra.mxu0 %v1394
    %1514 = vmatprep.subr.mxu0 %v1393
    %1515 = vmatpush1.msra.mxu0 %v1392
    %1516 = vmatprep.subr.mxu0 %v1391
    %1517 = vmatpush1.msra.mxu0 %v1390
    %1518 = vmatprep.subr.mxu0 %v1389
    %1519 = vmatpush1.msra.mxu0 %v1388
    %1520 = vmatprep.subr.mxu0 %v1387
    %1521 = vmatpush1.msra.mxu0 %v1386
    %1522 = vmatprep.subr.mxu0 %v1385
    %1523 = vmatpush1.msra.mxu0 %v1384
    %1524 = vmatprep.subr.mxu0 %v1383
    %1525 = vmatpush1.msra.mxu0 %v1382
    %1526 = vmatprep.subr.mxu0 %v1381
    %1527 = vmatpush1.msra.mxu0 %v1380
    %1528 = vmatprep.subr.mxu0 %v1379
    %1529 = vmatpush1.msra.mxu0 %v1378
    %1530 = vmatprep.subr.mxu0 %v1377
    %1531 = vmatpush1.msra.mxu0 %v1376
    %1532 = vmatprep.subr.mxu0 %v1375
    %1533 = vmatpush1.msra.mxu0 %v1374
    %1534 = vmatprep.subr.mxu0 %v1437
    %1535 = vmatpush2.msra.mxu0 %v1436
    %1536 = vmatprep.subr.mxu0 %v1435
    %1537 = vmatpush2.msra.mxu0 %v1434
    %1538 = vmatprep.subr.mxu0 %v1433
    %1539 = vmatpush2.msra.mxu0 %v1432
    %1540 = vmatprep.subr.mxu0 %v1431
    %1541 = vmatpush2.msra.mxu0 %v1430
    %1542 = vmatprep.subr.mxu0 %v1429
    %1543 = vmatpush2.msra.mxu0 %v1428
    %1544 = vmatprep.subr.mxu0 %v1427
    %1545 = vmatpush2.msra.mxu0 %v1426
    %1546 = vmatprep.subr.mxu0 %v1425
    %1547 = vmatpush2.msra.mxu0 %v1424
    %1548 = vmatprep.subr.mxu0 %v1423
    %1549 = vmatpush2.msra.mxu0 %v1422
    %1550 = vmatprep.subr.mxu0 %v1421
    %1551 = vmatpush2.msra.mxu0 %v1420
    %1552 = vmatprep.subr.mxu0 %v1419
    %1553 = vmatpush2.msra.mxu0 %v1418
    %1554 = vmatprep.subr.mxu0 %v1417
    %1555 = vmatpush2.msra.mxu0 %v1416
    %1556 = vmatprep.subr.mxu0 %v1415
    %1557 = vmatpush2.msra.mxu0 %v1414
    %1558 = vmatprep.subr.mxu0 %v1413
    %1559 = vmatpush2.msra.mxu0 %v1412
    %1560 = vmatprep.subr.mxu0 %v1411
    %1561 = vmatpush2.msra.mxu0 %v1410
    %1562 = vmatprep.subr.mxu0 %v1409
    %1563 = vmatpush2.msra.mxu0 %v1408
    %1564 = vmatprep.subr.mxu0 %v1407
    %1565 = vmatpush2.msra.mxu0 %v1406
    %1566 = vmatprep.mubr.f32.mxu0 %v1371
    %1567 = vmatmul.mubr.f32.gmra.mxu0 %v1370
    %v1568 = vpop.f32.mrf.mxu0
    %v1569 = vadd.f32 0.0, %v1568
    %v1570 = vpop.f32.mrf.mxu0
    %v1571 = vadd.f32 0.0, %v1570
    %1572 = vdwg.mxu0
    %1573 = vmatprep.subr.mxu0 %v1469
    %1574 = vmatpush1.msra.mxu0 %v1468
    %1575 = vmatprep.subr.mxu0 %v1467
    %1576 = vmatpush1.msra.mxu0 %v1466
    %1577 = vmatprep.subr.mxu0 %v1465
    %1578 = vmatpush1.msra.mxu0 %v1464
    %1579 = vmatprep.subr.mxu0 %v1463
    %1580 = vmatpush1.msra.mxu0 %v1462
    %1581 = vmatprep.subr.mxu0 %v1461
    %1582 = vmatpush1.msra.mxu0 %v1460
    %1583 = vmatprep.subr.mxu0 %v1459
    %1584 = vmatpush1.msra.mxu0 %v1458
    %1585 = vmatprep.subr.mxu0 %v1457
    %1586 = vmatpush1.msra.mxu0 %v1456
    %1587 = vmatprep.subr.mxu0 %v1455
    %1588 = vmatpush1.msra.mxu0 %v1454
    %1589 = vmatprep.subr.mxu0 %v1453
    %1590 = vmatpush1.msra.mxu0 %v1452
    %1591 = vmatprep.subr.mxu0 %v1451
    %1592 = vmatpush1.msra.mxu0 %v1450
    %1593 = vmatprep.subr.mxu0 %v1449
    %1594 = vmatpush1.msra.mxu0 %v1448
    %1595 = vmatprep.subr.mxu0 %v1447
    %1596 = vmatpush1.msra.mxu0 %v1446
    %1597 = vmatprep.subr.mxu0 %v1445
    %1598 = vmatpush1.msra.mxu0 %v1444
    %1599 = vmatprep.subr.mxu0 %v1443
    %1600 = vmatpush1.msra.mxu0 %v1442
    %1601 = vmatprep.subr.mxu0 %v1441
    %1602 = vmatpush1.msra.mxu0 %v1440
    %1603 = vmatprep.subr.mxu0 %v1439
    %1604 = vmatpush1.msra.mxu0 %v1438
    %1605 = vmatprep.subr.mxu0 %v1501
    %1606 = vmatpush2.msra.mxu0 %v1500
    %1607 = vmatprep.subr.mxu0 %v1499
    %1608 = vmatpush2.msra.mxu0 %v1498
    %1609 = vmatprep.subr.mxu0 %v1497
    %1610 = vmatpush2.msra.mxu0 %v1496
    %1611 = vmatprep.subr.mxu0 %v1495
    %1612 = vmatpush2.msra.mxu0 %v1494
    %1613 = vmatprep.subr.mxu0 %v1493
    %1614 = vmatpush2.msra.mxu0 %v1492
    %1615 = vmatprep.subr.mxu0 %v1491
    %1616 = vmatpush2.msra.mxu0 %v1490
    %1617 = vmatprep.subr.mxu0 %v1489
    %1618 = vmatpush2.msra.mxu0 %v1488
    %1619 = vmatprep.subr.mxu0 %v1487
    %1620 = vmatpush2.msra.mxu0 %v1486
    %1621 = vmatprep.subr.mxu0 %v1485
    %1622 = vmatpush2.msra.mxu0 %v1484
    %1623 = vmatprep.subr.mxu0 %v1483
    %1624 = vmatpush2.msra.mxu0 %v1482
    %1625 = vmatprep.subr.mxu0 %v1481
    %1626 = vmatpush2.msra.mxu0 %v1480
    %1627 = vmatprep.subr.mxu0 %v1479
    %1628 = vmatpush2.msra.mxu0 %v1478
    %1629 = vmatprep.subr.mxu0 %v1477
    %1630 = vmatpush2.msra.mxu0 %v1476
    %1631 = vmatprep.subr.mxu0 %v1475
    %1632 = vmatpush2.msra.mxu0 %v1474
    %1633 = vmatprep.subr.mxu0 %v1473
    %1634 = vmatpush2.msra.mxu0 %v1472
    %1635 = vmatprep.subr.mxu0 %v1471
    %1636 = vmatpush2.msra.mxu0 %v1470
    %1637 = vmatprep.mubr.f32.mxu0 %v1373
    %1638 = vmatmul.mubr.f32.gmra.mxu0 %v1372
    %v1639 = vpop.f32.mrf.mxu0
    %v1640 = vadd.f32 %v1569, %v1639
    %v1641 = vpop.f32.mrf.mxu0
    %v1642 = vadd.f32 %v1571, %v1641
    %1643 = vdwg.mxu0
    %v1644 = vld [vmem:[#allocation9] sm:$0x3]
    %v1645 = vld [vmem:[#allocation10] sm:$0x3]
    %v1646 = vsel %vm1234, %v1640, 0.0
    %v1647 = vrot.slane %v1646, 4
    %v1648 = vadd.f32 %v1646, %v1647
    %v1649 = vrot.slane %v1648, 2
    %v1650 = vadd.f32 %v1648, %v1649
    %v1651 = vrot.slane %v1650, 1
    %v1652 = vadd.f32 %v1650, %v1651
    %v1653 = vsel %vm1234, %v1642, 0.0
    %v1654 = vrot.slane %v1653, 4
    %v1655 = vadd.f32 %v1653, %v1654
    %v1656 = vrot.slane %v1655, 2
    %v1657 = vadd.f32 %v1655, %v1656
    %v1658 = vrot.slane %v1657, 1
    %v1659 = vadd.f32 %v1657, %v1658
    %v1660 = vmul.f32 %v1652, %v1263
    %v1661 = vmul.f32 %v1659, %v1263
    %v1662 = vsub.f32 %v1640, %v1660
    %v1663 = vsub.f32 %v1642, %v1661
    %v1664 = vmul.f32 %v1662, %v1662
    %v1665 = vmul.f32 %v1663, %v1663
    %v1666 = vsel %vm1234, %v1664, 0.0
    %v1667 = vrot.slane %v1666, 4
    %v1668 = vadd.f32 %v1666, %v1667
    %v1669 = vrot.slane %v1668, 2
    %v1670 = vadd.f32 %v1668, %v1669
    %v1671 = vrot.slane %v1670, 1
    %v1672 = vadd.f32 %v1670, %v1671
    %v1673 = vsel %vm1234, %v1665, 0.0
    %v1674 = vrot.slane %v1673, 4
    %v1675 = vadd.f32 %v1673, %v1674
    %v1676 = vrot.slane %v1675, 2
    %v1677 = vadd.f32 %v1675, %v1676
    %v1678 = vrot.slane %v1677, 1
    %v1679 = vadd.f32 %v1677, %v1678
    %v1680 = vmul.f32 %v1672, %v1263
    %v1681 = vmul.f32 %v1679, %v1263
    %v1682 = vadd.f32 %v1680, 1e-05
    %v1683 = vadd.f32 %v1681, 1e-05
    %v1684 = vrsqrt.pop %v1682
    %v1685 = vrsqrt.pop %v1683
    %v1686 = vmul.f32 %v1662, %v1684
    %v1687 = vmul.f32 %v1663, %v1685
    %v1689 = vlaneseq
    %v1690 = vshrl.u32 %v1689, 7
    %v1691 = vsub.s32 0, %v1690
    %v1692 = vrot.slane %v1644, %v1691
    %v1693 = vlaneseq
    %v1694 = vshrl.u32 %v1693, 7
    %v1695 = vsub.s32 1, %v1694
    %v1696 = vrot.slane %v1644, %v1695
    %v1699 = vmul.f32 %v1686, %v1692
    %v1700 = vmul.f32 %v1687, %v1696
    %v1702 = vlaneseq
    %v1703 = vshrl.u32 %v1702, 7
    %v1704 = vsub.s32 0, %v1703
    %v1705 = vrot.slane %v1645, %v1704
    %v1706 = vlaneseq
    %v1707 = vshrl.u32 %v1706, 7
    %v1708 = vsub.s32 1, %v1707
    %v1709 = vrot.slane %v1645, %v1708
    %v1712 = vadd.f32 %v1699, %v1705
    %v1713 = vadd.f32 %v1700, %v1709
    %v1714 = vmax.f32 %v1712, 0.0
    %v1715 = vmax.f32 %v1713, 0.0
    %v1716 = vld [vmem:[%s7] sm:$0xff]
    %v1717 = vld [vmem:[%s7 + $0x8] sm:$0xff]
    %v1718 = vld [vmem:[%s7 + $0x10] sm:$0xff]
    %v1719 = vld [vmem:[%s7 + $0x18] sm:$0xff]
    %v1720 = vld [vmem:[%s7 + $0x20] sm:$0xff]
    %v1721 = vld [vmem:[%s7 + $0x28] sm:$0xff]
    %v1722 = vld [vmem:[%s7 + $0x30] sm:$0xff]
    %v1723 = vld [vmem:[%s7 + $0x38] sm:$0xff]
    %v1724 = vld [vmem:[%s7 + $0x40] sm:$0xff]
    %v1725 = vld [vmem:[%s7 + $0x48] sm:$0xff]
    %v1726 = vld [vmem:[%s7 + $0x50] sm:$0xff]
    %v1727 = vld [vmem:[%s7 + $0x58] sm:$0xff]
    %v1728 = vld [vmem:[%s7 + $0x60] sm:$0xff]
    %v1729 = vld [vmem:[%s7 + $0x68] sm:$0xff]
    %v1730 = vld [vmem:[%s7 + $0x70] sm:$0xff]
    %v1731 = vld [vmem:[%s7 + $0x78] sm:$0xff]
    %v1732 = vld [vmem:[%s7 + $0x80] sm:$0xff]
    %v1733 = vld [vmem:[%s7 + $0x88] sm:$0xff]
    %v1734 = vld [vmem:[%s7 + $0x90] sm:$0xff]
    %v1735 = vld [vmem:[%s7 + $0x98] sm:$0xff]
    %v1736 = vld [vmem:[%s7 + $0xa0] sm:$0xff]
    %v1737 = vld [vmem:[%s7 + $0xa8] sm:$0xff]
    %v1738 = vld [vmem:[%s7 + $0xb0] sm:$0xff]
    %v1739 = vld [vmem:[%s7 + $0xb8] sm:$0xff]
    %v1740 = vld [vmem:[%s7 + $0xc0] sm:$0xff]
    %v1741 = vld [vmem:[%s7 + $0xc8] sm:$0xff]
    %v1742 = vld [vmem:[%s7 + $0xd0] sm:$0xff]
    %v1743 = vld [vmem:[%s7 + $0xd8] sm:$0xff]
    %v1744 = vld [vmem:[%s7 + $0xe0] sm:$0xff]
    %v1745 = vld [vmem:[%s7 + $0xe8] sm:$0xff]
    %v1746 = vld [vmem:[%s7 + $0xf0] sm:$0xff]
    %v1747 = vld [vmem:[%s7 + $0xf8] sm:$0xff]
    %v1748 = vld [vmem:[%s8] sm:$0x1]
    %v1750 = vlaneseq
    %v1751 = vshrl.u32 %v1750, 7
    %v1752 = vsub.s32 0, %v1751
    %v1753 = vrot.slane %v1748, %v1752
    %1755 = vmatprep.subr.mxu0 0.0
    %1756 = vmatpush1.msra.mxu0 %v1731
    %1757 = vmatprep.subr.mxu0 0.0
    %1758 = vmatpush1.msra.mxu0 %v1730
    %1759 = vmatprep.subr.mxu0 0.0
    %1760 = vmatpush1.msra.mxu0 %v1729
    %1761 = vmatprep.subr.mxu0 0.0
    %1762 = vmatpush1.msra.mxu0 %v1728
    %1763 = vmatprep.subr.mxu0 0.0
    %1764 = vmatpush1.msra.mxu0 %v1727
    %1765 = vmatprep.subr.mxu0 0.0
    %1766 = vmatpush1.msra.mxu0 %v1726
    %1767 = vmatprep.subr.mxu0 0.0
    %1768 = vmatpush1.msra.mxu0 %v1725
    %1769 = vmatprep.subr.mxu0 0.0
    %1770 = vmatpush1.msra.mxu0 %v1724
    %1771 = vmatprep.subr.mxu0 0.0
    %1772 = vmatpush1.msra.mxu0 %v1723
    %1773 = vmatprep.subr.mxu0 0.0
    %1774 = vmatpush1.msra.mxu0 %v1722
    %1775 = vmatprep.subr.mxu0 0.0
    %1776 = vmatpush1.msra.mxu0 %v1721
    %1777 = vmatprep.subr.mxu0 0.0
    %1778 = vmatpush1.msra.mxu0 %v1720
    %1779 = vmatprep.subr.mxu0 0.0
    %1780 = vmatpush1.msra.mxu0 %v1719
    %1781 = vmatprep.subr.mxu0 0.0
    %1782 = vmatpush1.msra.mxu0 %v1718
    %1783 = vmatprep.subr.mxu0 0.0
    %1784 = vmatpush1.msra.mxu0 %v1717
    %1785 = vmatprep.subr.mxu0 0.0
    %1786 = vmatpush1.msra.mxu0 %v1716
    %1787 = vmatprep.subr.mxu0 0.0
    %1788 = vmatpush2.msra.mxu0 %v1747
    %1789 = vmatprep.subr.mxu0 0.0
    %1790 = vmatpush2.msra.mxu0 %v1746
    %1791 = vmatprep.subr.mxu0 0.0
    %1792 = vmatpush2.msra.mxu0 %v1745
    %1793 = vmatprep.subr.mxu0 0.0
    %1794 = vmatpush2.msra.mxu0 %v1744
    %1795 = vmatprep.subr.mxu0 0.0
    %1796 = vmatpush2.msra.mxu0 %v1743
    %1797 = vmatprep.subr.mxu0 0.0
    %1798 = vmatpush2.msra.mxu0 %v1742
    %1799 = vmatprep.subr.mxu0 0.0
    %1800 = vmatpush2.msra.mxu0 %v1741
    %1801 = vmatprep.subr.mxu0 0.0
    %1802 = vmatpush2.msra.mxu0 %v1740
    %1803 = vmatprep.subr.mxu0 0.0
    %1804 = vmatpush2.msra.mxu0 %v1739
    %1805 = vmatprep.subr.mxu0 0.0
    %1806 = vmatpush2.msra.mxu0 %v1738
    %1807 = vmatprep.subr.mxu0 0.0
    %1808 = vmatpush2.msra.mxu0 %v1737
    %1809 = vmatprep.subr.mxu0 0.0
    %1810 = vmatpush2.msra.mxu0 %v1736
    %1811 = vmatprep.subr.mxu0 0.0
    %1812 = vmatpush2.msra.mxu0 %v1735
    %1813 = vmatprep.subr.mxu0 0.0
    %1814 = vmatpush2.msra.mxu0 %v1734
    %1815 = vmatprep.subr.mxu0 0.0
    %1816 = vmatpush2.msra.mxu0 %v1733
    %1817 = vmatprep.subr.mxu0 0.0
    %1818 = vmatpush2.msra.mxu0 %v1732
    %1819 = vmatprep.mubr.f32.mxu0 %v1715
    %1820 = vmatmul.mubr.f32.gmra.mxu0 %v1714
    %v1821 = vpop.f32.mrf.mxu0
    %v1822 = vadd.f32 %v1753, %v1821
    %v1823 = vpop.f32.mrf.mxu0
    %1824 = vdwg.mxu0
    %vm1825 = vcmask 66560
    %1826 = vst.msk [vmem:[%s9] sm:$0x3] %vm1825, %v1822
    // Predicated region
    $region62: #{pointnet_encoder_forward.10} parent=1 // pred_check
      _
    $region63: #{pointnet_encoder_forward.10} parent=1 // pred_check_branch
      %1828 = sbr.rel (0) target = $region65
    $region64: #{pointnet_encoder_forward.10} parent=1 // pred_region
      _
    $region65: #{pointnet_encoder_forward.10} parent=1 // pred_fallthru
      _
    // Predicated region
    $region66: #{pointnet_encoder_forward.10} parent=1 // pred_check
      _
    $region67: #{pointnet_encoder_forward.10} parent=1 // pred_check_branch
      %1830 = sbr.rel (0) target = $region69
    $region68: #{pointnet_encoder_forward.10} parent=1 // pred_region
      _
    $region69: #{pointnet_encoder_forward.10} parent=1 // pred_fallthru
      _
    %1831 = vsyncpa [#allocation3], 1
    %1832 = vsyncpa [#allocation5], 1
    %1833 = vsyncpa [#allocation8], 1
    %1834 = vsyncpa [#allocation11], 1

</llo_original>
